<compile_context>
chip_gen: v7x
topology: tpu7x:2x2x1
jax: 0.10.0
libtpu: 0.0.40
codegen_flags: <defaults>
</compile_context>

<pallas_src>
import functools

import jax
import jax.numpy as jnp
from jax.experimental import pallas as pl
from jax.experimental.pallas import tpu as pltpu

BF16 = jnp.bfloat16
LANE = 128
VMEM_LIMIT = 32 * 1024 * 1024   # safe on v5e/v6e/v7x; tiles here are tiny


def _round_up(n, m):
    return (n + m - 1) // m * m


def _choose_tile_m(M, max_tile=512):
    """Largest M-tile that is a multiple of 8, divides M and (when possible)
    leaves >= 2 grid steps so both TensorCores of a v7x chip get work."""
    if M % 8 != 0:
        return M                     # single full-size block (fallback)
    candidates = [t for t in range(8, min(M, max_tile) + 1, 8) if M % t == 0]
    multi = [t for t in candidates if M // t >= 2]
    return (multi or candidates)[-1]


# ---------------------------------------------------------------------------
# Kernel 1: fused matmul + bias (+ReLU), M-tiled, lane-dense N
# ---------------------------------------------------------------------------
def _mm_bias_kernel(x_ref, w_ref, b_ref, o_ref, *, relu):
    acc = jnp.dot(x_ref[...], w_ref[...], preferred_element_type=jnp.float32)
    acc = acc + b_ref[...]                        # (1, N) f32 bias broadcast
    if relu:
        acc = jnp.maximum(acc, 0.0)
    o_ref[...] = acc.astype(o_ref.dtype)


def pallas_matmul_bias(x, w, b, *, relu, out_dtype):
    """x: (M, K) bf16, w: (K, N) bf16, b: (N,) f32 -> (M, N) out_dtype.

    N is zero-padded to a multiple of 128 so stores are lane-dense (full vst);
    the padding is sliced off before returning.
    """
    M, K = x.shape
    N = w.shape[1]
    Np = _round_up(N, LANE)
    if Np != N:
        w = jnp.pad(w, ((0, 0), (0, Np - N)))
        b = jnp.pad(b, ((0, Np - N),))
    b2 = b.reshape(1, Np).astype(jnp.float32)

    tm = _choose_tile_m(M)
    grid = (M // tm,)

    cost = pl.CostEstimate(
        flops=2 * M * K * Np,
        transcendentals=0,
        bytes_accessed=(M * K + K * Np) * 2 + Np * 4
        + M * Np * jnp.dtype(out_dtype).itemsize)

    y = pl.pallas_call(
        functools.partial(_mm_bias_kernel, relu=relu),
        out_shape=jax.ShapeDtypeStruct((M, Np), out_dtype),
        grid=grid,
        in_specs=[
            pl.BlockSpec((tm, K), lambda i: (i, 0)),
            pl.BlockSpec((K, Np), lambda i: (0, 0)),
            pl.BlockSpec((1, Np), lambda i: (0, 0)),
        ],
        out_specs=pl.BlockSpec((tm, Np), lambda i: (i, 0)),
        compiler_params=pltpu.CompilerParams(
            dimension_semantics=("parallel",),
            vmem_limit_bytes=VMEM_LIMIT),
        cost_estimate=cost,
    )(x, w, b2)
    return y[:, :N] if Np != N else y


# ---------------------------------------------------------------------------
# Kernel 2: fused tail = ResBlock + ResBlock + 1x1 conv, per batch element
#           (3x3 convs as 9 shifted matmuls from a zero-halo VMEM scratch)
# ---------------------------------------------------------------------------
def _tail_kernel(x_ref,
                 w1_ref, b1_ref, w2_ref, b2_ref,
                 w3_ref, b3_ref, w4_ref, b4_ref,
                 w5_ref, b5_ref,
                 o_ref, pad_ref, *, HW, W):
    """One batch element.  x_ref: (HW, C) bf16 flat row-major pixels.
    w1..w4: (9, C, C) bf16 (tap k = kh*3+kw), b1..b4: (1, C) f32.
    w5: (C, Np) bf16, b5: (1, Np) f32.
    pad_ref: VMEM scratch (HW + 2W + 2, C) bf16 (zero halo of W+1 rows)."""
    C = x_ref.shape[1]
    halo = W + 1

    # Zero the halo rows once (interior is overwritten before every conv).
    zeros_halo = jnp.zeros((halo, C), pad_ref.dtype)
    pad_ref[pl.ds(0, halo), :] = zeros_halo
    pad_ref[pl.ds(halo + HW, halo), :] = zeros_halo

    # Column-validity masks for the horizontal taps (hoisted, reused 4x).
    col = jax.lax.broadcasted_iota(jnp.int32, (HW, 1), 0) % W
    not_left = col != 0            # kw == 0 taps read column j-1
    not_right = col != (W - 1)     # kw == 2 taps read column j+1

    def conv3x3_relu(src, w_ref, b_ref):
        pad_ref[pl.ds(halo, HW), :] = src
        acc = jnp.zeros((HW, C), jnp.float32)
        for k in range(9):
            kh, kw = divmod(k, 3)
            # tap for output pixel f = i*W+j is padded row f + kh*W + kw,
            # i.e. input pixel (i+kh-1, j+kw-1); halo rows supply the zeros.
            tap = pad_ref[pl.ds(kh * W + kw, HW), :]
            if kw == 0:
                tap = jnp.where(not_left, tap, jnp.zeros_like(tap))
            elif kw == 2:
                tap = jnp.where(not_right, tap, jnp.zeros_like(tap))
            acc = acc + jnp.dot(tap, w_ref[k],
                                preferred_element_type=jnp.float32)
        return jnp.maximum(acc + b_ref[...], 0.0)          # f32 (HW, C)

    def resblock(x_bf16, wa_ref, ba_ref, wb_ref, bb_ref):
        h1 = conv3x3_relu(x_bf16, wa_ref, ba_ref)
        h2 = conv3x3_relu(h1.astype(x_bf16.dtype), wb_ref, bb_ref)
        return (h2 + x_bf16.astype(jnp.float32)).astype(x_bf16.dtype)

    x = x_ref[...]                                          # bf16 (HW, C)
    x = resblock(x, w1_ref, b1_ref, w2_ref, b2_ref)         # layer_3
    x = resblock(x, w3_ref, b3_ref, w4_ref, b4_ref)         # layer_4
    # layer_5: 1x1 conv to 2*latent channels (lane-padded to Np)
    acc = jnp.dot(x, w5_ref[...], preferred_element_type=jnp.float32)
    o_ref[...] = (acc + b5_ref[...]).astype(o_ref.dtype)


def pallas_encoder_tail(x_nhwc, rb3, rb4, w5, b5):
    """Applies ResBlock(layer_3), ResBlock(layer_4) and the 1x1 conv
    (layer_5) in a single fused Pallas kernel, gridded over batch."""
    B, H, W, C = x_nhwc.shape
    HW = H * W                       # must be a multiple of 8 (true here)
    n_out = w5.shape[0]              # 2 * latent_dim
    Np = _round_up(n_out, LANE)

    x_flat = x_nhwc.reshape(B * HW, C).astype(BF16)
    w1t, w2t = _w_to_taps(rb3[0]), _w_to_taps(rb3[2])
    w3t, w4t = _w_to_taps(rb4[0]), _w_to_taps(rb4[2])
    b1r = rb3[1].reshape(1, C).astype(jnp.float32)
    b2r = rb3[3].reshape(1, C).astype(jnp.float32)
    b3r = rb4[1].reshape(1, C).astype(jnp.float32)
    b4r = rb4[3].reshape(1, C).astype(jnp.float32)

    w5m = _w_to_mat(w5)              # (C, n_out) bf16
    b5p = b5
    if Np != n_out:
        w5m = jnp.pad(w5m, ((0, 0), (0, Np - n_out)))
        b5p = jnp.pad(b5, ((0, Np - n_out),))
    b5r = b5p.reshape(1, Np).astype(jnp.float32)

    pad_rows = HW + 2 * W + 2

    cost = pl.CostEstimate(
        flops=2 * B * HW * C * (4 * 9 * C + Np),
        transcendentals=0,
        bytes_accessed=B * HW * C * 2 + 4 * 9 * C * C * 2
        + C * Np * 2 + B * HW * Np * 4)

    wspec = pl.BlockSpec((9, C, C), lambda b: (0, 0, 0))
    bspec = pl.BlockSpec((1, C), lambda b: (0, 0))

    out = pl.pallas_call(
        functools.partial(_tail_kernel, HW=HW, W=W),
        out_shape=jax.ShapeDtypeStruct((B * HW, Np), jnp.float32),
        grid=(B,),
        in_specs=[
            pl.BlockSpec((HW, C), lambda b: (b, 0)),
            wspec, bspec, wspec, bspec,          # layer_3
            wspec, bspec, wspec, bspec,          # layer_4
            pl.BlockSpec((C, Np), lambda b: (0, 0)),
            pl.BlockSpec((1, Np), lambda b: (0, 0)),
        ],
        out_specs=pl.BlockSpec((HW, Np), lambda b: (b, 0)),
        scratch_shapes=[pltpu.VMEM((pad_rows, C), BF16)],
        compiler_params=pltpu.CompilerParams(
            dimension_semantics=("parallel",),
            vmem_limit_bytes=VMEM_LIMIT),
        cost_estimate=cost,
    )(x_flat, w1t, b1r, w2t, b2r, w3t, b3r, w4t, b4r, w5m, b5r)

    out = out.reshape(B, H, W, Np)
    return out[..., :n_out] if Np != n_out else out


# ---------------------------------------------------------------------------
# Layout glue (pure JAX): patchify / weight reshaping
# ---------------------------------------------------------------------------
def _w_to_mat(w):
    # Conv2d weight (Cout, Cin, KH, KW) -> (KH*KW*Cin, Cout) bf16
    cout, cin, kh, kw = w.shape
    return jnp.transpose(w, (2, 3, 1, 0)).reshape(kh * kw * cin, cout).astype(BF16)


def _w_to_taps(w):
    # Conv2d 3x3 weight (C, C, 3, 3) -> (9, Cin, Cout) bf16, tap k = kh*3 + kw
    cout, cin, kh, kw = w.shape
    return jnp.transpose(w, (2, 3, 1, 0)).reshape(kh * kw, cin, cout).astype(BF16)


def _patchify_2x2(x):
    # (B, H, W, C) -> (B*(H/2)*(W/2), 2*2*C), feature order (kh, kw, c)
    B, H, W, C = x.shape
    x = x.reshape(B, H // 2, 2, W // 2, 2, C)
    x = jnp.transpose(x, (0, 1, 3, 2, 4, 5))
    return x.reshape(B * (H // 2) * (W // 2), 4 * C)


# ---------------------------------------------------------------------------
# Layers built on the Pallas kernels
# ---------------------------------------------------------------------------
def conv2x2_s2_relu(x, w, b):
    B, H, W, _ = x.shape
    cout = w.shape[0]
    y = pallas_matmul_bias(_patchify_2x2(x).astype(BF16), _w_to_mat(w), b,
                           relu=True, out_dtype=BF16)
    return y.reshape(B, H // 2, W // 2, cout)


def cvae_encoder_forward(params, x_nchw, label):
    """x_nchw: (B, img_dim, H, W), label: (B,) -> (mu, log_var), each NCHW."""
    x = jnp.transpose(x_nchw, (0, 2, 3, 1))                       # NCHW -> NHWC
    B, H, W, _ = x.shape
    c = jnp.ones((B, H, W, 1), x.dtype) * label[:, None, None, None]
    x = jnp.concatenate([x, c], axis=-1)                          # (B,H,W,img_dim+1)
    x = conv2x2_s2_relu(x, *params["layer_1"])                    # (B,H/2,W/2,64)
    x = conv2x2_s2_relu(x, *params["layer_2"])                    # (B,H/4,W/4,128)
    x = pallas_encoder_tail(x, params["layer_3"], params["layer_4"],
                            *params["layer_5"])                   # (B,H/4,W/4,2L) f32
    x = jnp.transpose(x, (0, 3, 1, 2))                            # back to NCHW
    mu, log_var = jnp.split(x, 2, axis=1)
    return mu, log_var


# ---------------------------------------------------------------------------
# Deterministic parameter init (mimics torch Conv2d.reset_parameters bounds)
# ---------------------------------------------------------------------------
def init_conv_params(key, cout, cin, kh, kw):
    kw_key, kb_key = jax.random.split(key)
    fan_in = cin * kh * kw
    bound = 1.0 / (fan_in ** 0.5)
    w = jax.random.uniform(kw_key, (cout, cin, kh, kw), jnp.float32, -bound, bound)
    b = jax.random.uniform(kb_key, (cout,), jnp.float32, -bound, bound)
    return w, b


# ---------------------------------------------------------------------------
# Pure-JAX f32 reference (lax.conv) for numerical verification
# ---------------------------------------------------------------------------
def _conv_ref(x, w, b, stride, padding):
    y = jax.lax.conv_general_dilated(
        x, w, window_strides=(stride, stride),
        padding=[(padding, padding), (padding, padding)],
        dimension_numbers=("NCHW", "OIHW", "NCHW"))
    return y + b[None, :, None, None]


def reference_forward(params, x, label):
    c = jnp.ones((x.shape[0], 1, x.shape[2], x.shape[3]), x.dtype) * label[:, None, None, None]
    x = jnp.concatenate([x, c], axis=1)
    x = jax.nn.relu(_conv_ref(x, *params["layer_1"], 2, 0))
    x = jax.nn.relu(_conv_ref(x, *params["layer_2"], 2, 0))
    for name in ("layer_3", "layer_4"):
        w1, b1, w2, b2 = params[name]
        h = jax.nn.relu(_conv_ref(x, w1, b1, 1, 1))
        h = jax.nn.relu(_conv_ref(h, w2, b2, 1, 1))
        x = x + h
    x = _conv_ref(x, *params["layer_5"], 1, 0)
    mu, log_var = jnp.split(x, 2, axis=1)
    return mu, log_var


if __name__ == "__main__":
    img_dim, latent_dim = 3, 8
    B, H, W = 2, 16, 16

    key = jax.random.PRNGKey(0)
    k_par, k_x, k_lab = jax.random.split(key, 3)
    ks = jax.random.split(k_par, 7)

    params = {
        "layer_1": init_conv_params(ks[0], 64, img_dim + 1, 2, 2),
        "layer_2": init_conv_params(ks[1], 128, 64, 2, 2),
        "layer_3": init_conv_params(ks[2], 128, 128, 3, 3)
                   + init_conv_params(ks[3], 128, 128, 3, 3),
        "layer_4": init_conv_params(ks[4], 128, 128, 3, 3)
                   + init_conv_params(ks[5], 128, 128, 3, 3),
        "layer_5": init_conv_params(ks[6], 2 * latent_dim, 128, 1, 1),
    }

    x = jax.random.normal(k_x, (B, img_dim, H, W), jnp.float32)
    label = jax.random.randint(k_lab, (B,), 0, 10).astype(jnp.float32)

    mu, log_var = jax.jit(cvae_encoder_forward)(params, x, label)
    jax.block_until_ready((mu, log_var))

    assert mu.shape == (B, latent_dim, H // 4, W // 4)
    assert log_var.shape == (B, latent_dim, H // 4, W // 4)

    mu_ref, lv_ref = reference_forward(params, x, label)

    def rel_err(a, b):
        return float(jnp.max(jnp.abs(a - b)) / (jnp.max(jnp.abs(b)) + 1e-6))

    # 3e-2 tolerance: the Pallas path runs the MXU in bf16 (f32 accumulation),
    # while the reference is pure f32 lax.conv.
    assert rel_err(mu, mu_ref) < 3e-2, rel_err(mu, mu_ref)
    assert rel_err(log_var, lv_ref) < 3e-2, rel_err(log_var, lv_ref)

    print("KERNEL_OK")
</pallas_src>

<mosaic_0001>
module attributes {stable_mosaic.version = 11 : i64} {
  func.func @_mm_bias_kernel(%arg0: i32, %arg1: memref<64x16xbf16, #tpu.memory_space<vmem>>, %arg2: memref<16x128xbf16, #tpu.memory_space<vmem>>, %arg3: memref<1x128xf32, #tpu.memory_space<vmem>>, %arg4: memref<64x128xbf16, #tpu.memory_space<vmem>>) attributes {dimension_semantics = [#tpu.dimension_semantics<parallel>], iteration_bounds = array<i64: 2>, scalar_prefetch = 0 : i64, scratch_operands = 0 : i64, tpu.core_type = #tpu.core_type<tc>, window_params = [{transform_indices = @transform_0, window_bounds = array<i64: 64, 16>}, {pipeline_mode = #tpu.pipeline_mode<synchronous>, transform_indices = @transform_1, window_bounds = array<i64: 16, 128>}, {pipeline_mode = #tpu.pipeline_mode<synchronous>, transform_indices = @transform_2, window_bounds = array<i64: 1, 128>}, {transform_indices = @transform_3, window_bounds = array<i64: 64, 128>}]} {
    %c0 = arith.constant 0 : index
    %c0_0 = arith.constant 0 : index
    %0 = vector.load %arg1[%c0, %c0_0] : memref<64x16xbf16, #tpu.memory_space<vmem>>, vector<64x16xbf16>
    %c0_1 = arith.constant 0 : index
    %c0_2 = arith.constant 0 : index
    %1 = vector.load %arg2[%c0_1, %c0_2] : memref<16x128xbf16, #tpu.memory_space<vmem>>, vector<16x128xbf16>
    %cst = arith.constant dense<0.000000e+00> : vector<64x128xf32>
    %2 = tpu.matmul %0, %1, %cst {dimension_numbers = #tpu.dot_dimension_numbers<[1], [0], [0], [1], [0, 0, 1, 1], [], []>} : vector<64x16xbf16>, vector<16x128xbf16>, vector<64x128xf32> -> vector<64x128xf32>
    %c0_3 = arith.constant 0 : index
    %c0_4 = arith.constant 0 : index
    %3 = vector.load %arg3[%c0_3, %c0_4] : memref<1x128xf32, #tpu.memory_space<vmem>>, vector<1x128xf32>
    %4 = vector.broadcast %3 : vector<1x128xf32> to vector<64x128xf32>
    %5 = arith.addf %2, %4 : vector<64x128xf32>
    %cst_5 = arith.constant 0.000000e+00 : f32
    %6 = vector.broadcast %cst_5 : f32 to vector<64x128xf32>
    %7 = arith.maximumf %5, %6 : vector<64x128xf32>
    %8 = arith.truncf %7 : vector<64x128xf32> to vector<64x128xbf16>
    %c0_6 = arith.constant 0 : index
    %c0_7 = arith.constant 0 : index
    %9 = vector.load %arg4[%c0_6, %c0_7] : memref<64x128xbf16, #tpu.memory_space<vmem>>, vector<64x128xbf16>
    tpu.vector_store %arg4[%c0_6, %c0_7], %8 {strides = array<i32>} : memref<64x128xbf16, #tpu.memory_space<vmem>>, vector<64x128xbf16>,
    return
  }
  func.func @transform_0(%arg0: i32) -> (i32, i32) {
    %c0_i32 = arith.constant 0 : i32
    %c0_i32_0 = arith.constant 0 : i32
    return %arg0, %c0_i32 : i32, i32
  }
  func.func @transform_1(%arg0: i32) -> (i32, i32) {
    %c0_i32 = arith.constant 0 : i32
    %c0_i32_0 = arith.constant 0 : i32
    %c0_i32_1 = arith.constant 0 : i32
    return %c0_i32, %c0_i32_0 : i32, i32
  }
  func.func @transform_2(%arg0: i32) -> (i32, i32) {
    %c0_i32 = arith.constant 0 : i32
    %c0_i32_0 = arith.constant 0 : i32
    %c0_i32_1 = arith.constant 0 : i32
    return %c0_i32, %c0_i32_0 : i32, i32
  }
  func.func @transform_3(%arg0: i32) -> (i32, i32) {
    %c0_i32 = arith.constant 0 : i32
    %c0_i32_0 = arith.constant 0 : i32
    return %arg0, %c0_i32 : i32, i32
  }
}

module attributes {stable_mosaic.version = 11 : i64} {
  func.func @_mm_bias_kernel(%arg0: i32, %arg1: memref<16x256xbf16, #tpu.memory_space<vmem>>, %arg2: memref<256x128xbf16, #tpu.memory_space<vmem>>, %arg3: memref<1x128xf32, #tpu.memory_space<vmem>>, %arg4: memref<16x128xbf16, #tpu.memory_space<vmem>>) attributes {dimension_semantics = [#tpu.dimension_semantics<parallel>], iteration_bounds = array<i64: 2>, scalar_prefetch = 0 : i64, scratch_operands = 0 : i64, tpu.core_type = #tpu.core_type<tc>, window_params = [{transform_indices = @transform_0, window_bounds = array<i64: 16, 256>}, {pipeline_mode = #tpu.pipeline_mode<synchronous>, transform_indices = @transform_1, window_bounds = array<i64: 256, 128>}, {pipeline_mode = #tpu.pipeline_mode<synchronous>, transform_indices = @transform_2, window_bounds = array<i64: 1, 128>}, {transform_indices = @transform_3, window_bounds = array<i64: 16, 128>}]} {
    %c0 = arith.constant 0 : index
    %c0_0 = arith.constant 0 : index
    %0 = vector.load %arg1[%c0, %c0_0] : memref<16x256xbf16, #tpu.memory_space<vmem>>, vector<16x256xbf16>
    %c0_1 = arith.constant 0 : index
    %c0_2 = arith.constant 0 : index
    %1 = vector.load %arg2[%c0_1, %c0_2] : memref<256x128xbf16, #tpu.memory_space<vmem>>, vector<256x128xbf16>
    %cst = arith.constant dense<0.000000e+00> : vector<16x128xf32>
    %2 = tpu.matmul %0, %1, %cst {dimension_numbers = #tpu.dot_dimension_numbers<[1], [0], [0], [1], [0, 0, 1, 1], [], []>} : vector<16x256xbf16>, vector<256x128xbf16>, vector<16x128xf32> -> vector<16x128xf32>
    %c0_3 = arith.constant 0 : index
    %c0_4 = arith.constant 0 : index
    %3 = vector.load %arg3[%c0_3, %c0_4] : memref<1x128xf32, #tpu.memory_space<vmem>>, vector<1x128xf32>
    %4 = vector.broadcast %3 : vector<1x128xf32> to vector<16x128xf32>
    %5 = arith.addf %2, %4 : vector<16x128xf32>
    %cst_5 = arith.constant 0.000000e+00 : f32
    %6 = vector.broadcast %cst_5 : f32 to vector<16x128xf32>
    %7 = arith.maximumf %5, %6 : vector<16x128xf32>
    %8 = arith.truncf %7 : vector<16x128xf32> to vector<16x128xbf16>
    %c0_6 = arith.constant 0 : index
    %c0_7 = arith.constant 0 : index
    %9 = vector.load %arg4[%c0_6, %c0_7] : memref<16x128xbf16, #tpu.memory_space<vmem>>, vector<16x128xbf16>
    tpu.vector_store %arg4[%c0_6, %c0_7], %8 {strides = array<i32>} : memref<16x128xbf16, #tpu.memory_space<vmem>>, vector<16x128xbf16>,
    return
  }
  func.func @transform_0(%arg0: i32) -> (i32, i32) {
    %c0_i32 = arith.constant 0 : i32
    %c0_i32_0 = arith.constant 0 : i32
    return %arg0, %c0_i32 : i32, i32
  }
  func.func @transform_1(%arg0: i32) -> (i32, i32) {
    %c0_i32 = arith.constant 0 : i32
    %c0_i32_0 = arith.constant 0 : i32
    %c0_i32_1 = arith.constant 0 : i32
    return %c0_i32, %c0_i32_0 : i32, i32
  }
  func.func @transform_2(%arg0: i32) -> (i32, i32) {
    %c0_i32 = arith.constant 0 : i32
    %c0_i32_0 = arith.constant 0 : i32
    %c0_i32_1 = arith.constant 0 : i32
    return %c0_i32, %c0_i32_0 : i32, i32
  }
  func.func @transform_3(%arg0: i32) -> (i32, i32) {
    %c0_i32 = arith.constant 0 : i32
    %c0_i32_0 = arith.constant 0 : i32
    return %arg0, %c0_i32 : i32, i32
  }
}

module attributes {stable_mosaic.version = 11 : i64} {
  func.func @_tail_kernel(%arg0: i32, %arg1: memref<16x128xbf16, #tpu.memory_space<vmem>>, %arg2: memref<9x128x128xbf16, #tpu.memory_space<vmem>>, %arg3: memref<1x128xf32, #tpu.memory_space<vmem>>, %arg4: memref<9x128x128xbf16, #tpu.memory_space<vmem>>, %arg5: memref<1x128xf32, #tpu.memory_space<vmem>>, %arg6: memref<9x128x128xbf16, #tpu.memory_space<vmem>>, %arg7: memref<1x128xf32, #tpu.memory_space<vmem>>, %arg8: memref<9x128x128xbf16, #tpu.memory_space<vmem>>, %arg9: memref<1x128xf32, #tpu.memory_space<vmem>>, %arg10: memref<128x128xbf16, #tpu.memory_space<vmem>>, %arg11: memref<1x128xf32, #tpu.memory_space<vmem>>, %arg12: memref<16x128xf32, #tpu.memory_space<vmem>>, %arg13: memref<26x128xbf16, #tpu.memory_space<vmem>>) attributes {dimension_semantics = [#tpu.dimension_semantics<parallel>], iteration_bounds = array<i64: 2>, scalar_prefetch = 0 : i64, scratch_operands = 1 : i64, tpu.core_type = #tpu.core_type<tc>, window_params = [{transform_indices = @transform_0, window_bounds = array<i64: 16, 128>}, {pipeline_mode = #tpu.pipeline_mode<synchronous>, transform_indices = @transform_1, window_bounds = array<i64: 9, 128, 128>}, {pipeline_mode = #tpu.pipeline_mode<synchronous>, transform_indices = @transform_2, window_bounds = array<i64: 1, 128>}, {pipeline_mode = #tpu.pipeline_mode<synchronous>, transform_indices = @transform_3, window_bounds = array<i64: 9, 128, 128>}, {pipeline_mode = #tpu.pipeline_mode<synchronous>, transform_indices = @transform_4, window_bounds = array<i64: 1, 128>}, {pipeline_mode = #tpu.pipeline_mode<synchronous>, transform_indices = @transform_5, window_bounds = array<i64: 9, 128, 128>}, {pipeline_mode = #tpu.pipeline_mode<synchronous>, transform_indices = @transform_6, window_bounds = array<i64: 1, 128>}, {pipeline_mode = #tpu.pipeline_mode<synchronous>, transform_indices = @transform_7, window_bounds = array<i64: 9, 128, 128>}, {pipeline_mode = #tpu.pipeline_mode<synchronous>, transform_indices = @transform_8, window_bounds = array<i64: 1, 128>}, {pipeline_mode = #tpu.pipeline_mode<synchronous>, transform_indices = @transform_9, window_bounds = array<i64: 128, 128>}, {pipeline_mode = #tpu.pipeline_mode<synchronous>, transform_indices = @transform_10, window_bounds = array<i64: 1, 128>}, {transform_indices = @transform_11, window_bounds = array<i64: 16, 128>}]} {
    %cst = arith.constant 0.000000e+00 : bf16
    %0 = vector.broadcast %cst : bf16 to vector<5x128xbf16>
    %c0 = arith.constant 0 : index
    %c0_0 = arith.constant 0 : index
    %1 = vector.load %arg13[%c0, %c0_0] : memref<26x128xbf16, #tpu.memory_space<vmem>>, vector<5x128xbf16>
    tpu.vector_store %arg13[%c0, %c0_0], %0 {strides = array<i32>} : memref<26x128xbf16, #tpu.memory_space<vmem>>, vector<5x128xbf16>,
    %c21 = arith.constant 21 : index
    %c0_1 = arith.constant 0 : index
    %2 = vector.load %arg13[%c21, %c0_1] : memref<26x128xbf16, #tpu.memory_space<vmem>>, vector<5x128xbf16>
    tpu.vector_store %arg13[%c21, %c0_1], %0 {strides = array<i32>} : memref<26x128xbf16, #tpu.memory_space<vmem>>, vector<5x128xbf16>,
    %3 = tpu.iota {dimensions = array<i32: 0>} : vector<16x1xi32>
    %c4_i32 = arith.constant 4 : i32
    %c0_i32 = arith.constant 0 : i32
    %4 = arith.cmpi eq, %c4_i32, %c0_i32 : i32
    %c1_i32 = arith.constant 1 : i32
    %5 = arith.select %4, %c1_i32, %c4_i32 : i32
    %6 = vector.broadcast %5 : i32 to vector<16x1xi32>
    %7 = arith.remsi %3, %6 : vector<16x1xi32>
    %c0_i32_2 = arith.constant 0 : i32
    %8 = vector.broadcast %c0_i32_2 : i32 to vector<16x1xi32>
    %9 = arith.cmpi ne, %7, %8 : vector<16x1xi32>
    %c0_i32_3 = arith.constant 0 : i32
    %10 = vector.broadcast %c0_i32_3 : i32 to vector<16x1xi32>
    %11 = arith.cmpi slt, %7, %10 : vector<16x1xi32>
    %c0_i32_4 = arith.constant 0 : i32
    %12 = arith.cmpi slt, %5, %c0_i32_4 : i32
    %13 = vector.broadcast %12 : i1 to vector<16x1xi1>
    %14 = vector.broadcast %13 : vector<16x1xi1> to vector<16x1xi1>
    %15 = arith.xori %11, %14 : vector<16x1xi1>
    %16 = arith.andi %15, %9 : vector<16x1xi1>
    %17 = vector.broadcast %5 : i32 to vector<16x1xi32>
    %18 = arith.addi %7, %17 : vector<16x1xi32>
    %19 = arith.select %16, %18, %7 : vector<16x1xi1>, vector<16x1xi32>
    %c0_i32_5 = arith.constant 0 : i32
    %20 = vector.broadcast %c0_i32_5 : i32 to vector<16x1xi32>
    %21 = arith.cmpi ne, %19, %20 : vector<16x1xi32>
    %c3_i32 = arith.constant 3 : i32
    %22 = vector.broadcast %c3_i32 : i32 to vector<16x1xi32>
    %23 = arith.cmpi ne, %19, %22 : vector<16x1xi32>
    %c0_6 = arith.constant 0 : index
    %c0_7 = arith.constant 0 : index
    %24 = vector.load %arg1[%c0_6, %c0_7] : memref<16x128xbf16, #tpu.memory_space<vmem>>, vector<16x128xbf16>
    %c5 = arith.constant 5 : index
    %c0_8 = arith.constant 0 : index
    %25 = vector.load %arg13[%c5, %c0_8] : memref<26x128xbf16, #tpu.memory_space<vmem>>, vector<16x128xbf16>
    tpu.vector_store %arg13[%c5, %c0_8], %24 {strides = array<i32>} : memref<26x128xbf16, #tpu.memory_space<vmem>>, vector<16x128xbf16>,
    %cst_9 = arith.constant 0.000000e+00 : f32
    %26 = vector.broadcast %cst_9 : f32 to vector<16x128xf32>
    %c0_10 = arith.constant 0 : index
    %c0_11 = arith.constant 0 : index
    %27 = vector.load %arg13[%c0_10, %c0_11] : memref<26x128xbf16, #tpu.memory_space<vmem>>, vector<16x128xbf16>
    %cst_12 = arith.constant 0.000000e+00 : bf16
    %28 = vector.broadcast %cst_12 : bf16 to vector<16x128xbf16>
    %29 = vector.shape_cast %21 : vector<16x1xi1> to vector<16x1xi1>
    %30 = vector.broadcast %29 : vector<16x1xi1> to vector<16x128xi1>
    %31 = arith.select %30, %27, %28 : vector<16x128xi1>, vector<16x128xbf16>
    %c0_13 = arith.constant 0 : index
    %c0_14 = arith.constant 0 : index
    %c0_15 = arith.constant 0 : index
    %32 = vector.load %arg2[%c0_13, %c0_14, %c0_15] : memref<9x128x128xbf16, #tpu.memory_space<vmem>>, vector<1x128x128xbf16>
    %33 = vector.shape_cast %32 : vector<1x128x128xbf16> to vector<128x128xbf16>
    %cst_16 = arith.constant dense<0.000000e+00> : vector<16x128xf32>
    %34 = tpu.matmul %31, %33, %cst_16 {dimension_numbers = #tpu.dot_dimension_numbers<[1], [0], [0], [1], [0, 0, 1, 1], [], []>} : vector<16x128xbf16>, vector<128x128xbf16>, vector<16x128xf32> -> vector<16x128xf32>
    %35 = arith.addf %26, %34 : vector<16x128xf32>
    %c1 = arith.constant 1 : index
    %c0_17 = arith.constant 0 : index
    %36 = vector.load %arg13[%c1, %c0_17] : memref<26x128xbf16, #tpu.memory_space<vmem>>, vector<16x128xbf16>
    %c1_18 = arith.constant 1 : index
    %c0_19 = arith.constant 0 : index
    %c0_20 = arith.constant 0 : index
    %37 = vector.load %arg2[%c1_18, %c0_19, %c0_20] : memref<9x128x128xbf16, #tpu.memory_space<vmem>>, vector<1x128x128xbf16>
    %38 = vector.shape_cast %37 : vector<1x128x128xbf16> to vector<128x128xbf16>
    %cst_21 = arith.constant dense<0.000000e+00> : vector<16x128xf32>
    %39 = tpu.matmul %36, %38, %cst_21 {dimension_numbers = #tpu.dot_dimension_numbers<[1], [0], [0], [1], [0, 0, 1, 1], [], []>} : vector<16x128xbf16>, vector<128x128xbf16>, vector<16x128xf32> -> vector<16x128xf32>
    %40 = arith.addf %35, %39 : vector<16x128xf32>
    %c2 = arith.constant 2 : index
    %c0_22 = arith.constant 0 : index
    %41 = vector.load %arg13[%c2, %c0_22] : memref<26x128xbf16, #tpu.memory_space<vmem>>, vector<16x128xbf16>
    %cst_23 = arith.constant 0.000000e+00 : bf16
    %42 = vector.broadcast %cst_23 : bf16 to vector<16x128xbf16>
    %43 = vector.shape_cast %23 : vector<16x1xi1> to vector<16x1xi1>
    %44 = vector.broadcast %43 : vector<16x1xi1> to vector<16x128xi1>
    %45 = arith.select %44, %41, %42 : vector<16x128xi1>, vector<16x128xbf16>
    %c2_24 = arith.constant 2 : index
    %c0_25 = arith.constant 0 : index
    %c0_26 = arith.constant 0 : index
    %46 = vector.load %arg2[%c2_24, %c0_25, %c0_26] : memref<9x128x128xbf16, #tpu.memory_space<vmem>>, vector<1x128x128xbf16>
    %47 = vector.shape_cast %46 : vector<1x128x128xbf16> to vector<128x128xbf16>
    %cst_27 = arith.constant dense<0.000000e+00> : vector<16x128xf32>
    %48 = tpu.matmul %45, %47, %cst_27 {dimension_numbers = #tpu.dot_dimension_numbers<[1], [0], [0], [1], [0, 0, 1, 1], [], []>} : vector<16x128xbf16>, vector<128x128xbf16>, vector<16x128xf32> -> vector<16x128xf32>
    %49 = arith.addf %40, %48 : vector<16x128xf32>
    %c4 = arith.constant 4 : index
    %c0_28 = arith.constant 0 : index
    %50 = vector.load %arg13[%c4, %c0_28] : memref<26x128xbf16, #tpu.memory_space<vmem>>, vector<16x128xbf16>
    %cst_29 = arith.constant 0.000000e+00 : bf16
    %51 = vector.broadcast %cst_29 : bf16 to vector<16x128xbf16>
    %52 = vector.shape_cast %21 : vector<16x1xi1> to vector<16x1xi1>
    %53 = vector.broadcast %52 : vector<16x1xi1> to vector<16x128xi1>
    %54 = arith.select %53, %50, %51 : vector<16x128xi1>, vector<16x128xbf16>
    %c3 = arith.constant 3 : index
    %c0_30 = arith.constant 0 : index
    %c0_31 = arith.constant 0 : index
    %55 = vector.load %arg2[%c3, %c0_30, %c0_31] : memref<9x128x128xbf16, #tpu.memory_space<vmem>>, vector<1x128x128xbf16>
    %56 = vector.shape_cast %55 : vector<1x128x128xbf16> to vector<128x128xbf16>
    %cst_32 = arith.constant dense<0.000000e+00> : vector<16x128xf32>
    %57 = tpu.matmul %54, %56, %cst_32 {dimension_numbers = #tpu.dot_dimension_numbers<[1], [0], [0], [1], [0, 0, 1, 1], [], []>} : vector<16x128xbf16>, vector<128x128xbf16>, vector<16x128xf32> -> vector<16x128xf32>
    %58 = arith.addf %49, %57 : vector<16x128xf32>
    %c5_33 = arith.constant 5 : index
    %c0_34 = arith.constant 0 : index
    %59 = vector.load %arg13[%c5_33, %c0_34] : memref<26x128xbf16, #tpu.memory_space<vmem>>, vector<16x128xbf16>
    %c4_35 = arith.constant 4 : index
    %c0_36 = arith.constant 0 : index
    %c0_37 = arith.constant 0 : index
    %60 = vector.load %arg2[%c4_35, %c0_36, %c0_37] : memref<9x128x128xbf16, #tpu.memory_space<vmem>>, vector<1x128x128xbf16>
    %61 = vector.shape_cast %60 : vector<1x128x128xbf16> to vector<128x128xbf16>
    %cst_38 = arith.constant dense<0.000000e+00> : vector<16x128xf32>
    %62 = tpu.matmul %59, %61, %cst_38 {dimension_numbers = #tpu.dot_dimension_numbers<[1], [0], [0], [1], [0, 0, 1, 1], [], []>} : vector<16x128xbf16>, vector<128x128xbf16>, vector<16x128xf32> -> vector<16x128xf32>
    %63 = arith.addf %58, %62 : vector<16x128xf32>
    %c6 = arith.constant 6 : index
    %c0_39 = arith.constant 0 : index
    %64 = vector.load %arg13[%c6, %c0_39] : memref<26x128xbf16, #tpu.memory_space<vmem>>, vector<16x128xbf16>
    %cst_40 = arith.constant 0.000000e+00 : bf16
    %65 = vector.broadcast %cst_40 : bf16 to vector<16x128xbf16>
    %66 = vector.shape_cast %23 : vector<16x1xi1> to vector<16x1xi1>
    %67 = vector.broadcast %66 : vector<16x1xi1> to vector<16x128xi1>
    %68 = arith.select %67, %64, %65 : vector<16x128xi1>, vector<16x128xbf16>
    %c5_41 = arith.constant 5 : index
    %c0_42 = arith.constant 0 : index
    %c0_43 = arith.constant 0 : index
    %69 = vector.load %arg2[%c5_41, %c0_42, %c0_43] : memref<9x128x128xbf16, #tpu.memory_space<vmem>>, vector<1x128x128xbf16>
    %70 = vector.shape_cast %69 : vector<1x128x128xbf16> to vector<128x128xbf16>
    %cst_44 = arith.constant dense<0.000000e+00> : vector<16x128xf32>
    %71 = tpu.matmul %68, %70, %cst_44 {dimension_numbers = #tpu.dot_dimension_numbers<[1], [0], [0], [1], [0, 0, 1, 1], [], []>} : vector<16x128xbf16>, vector<128x128xbf16>, vector<16x128xf32> -> vector<16x128xf32>
    %72 = arith.addf %63, %71 : vector<16x128xf32>
    %c8 = arith.constant 8 : index
    %c0_45 = arith.constant 0 : index
    %73 = vector.load %arg13[%c8, %c0_45] : memref<26x128xbf16, #tpu.memory_space<vmem>>, vector<16x128xbf16>
    %cst_46 = arith.constant 0.000000e+00 : bf16
    %74 = vector.broadcast %cst_46 : bf16 to vector<16x128xbf16>
    %75 = vector.shape_cast %21 : vector<16x1xi1> to vector<16x1xi1>
    %76 = vector.broadcast %75 : vector<16x1xi1> to vector<16x128xi1>
    %77 = arith.select %76, %73, %74 : vector<16x128xi1>, vector<16x128xbf16>
    %c6_47 = arith.constant 6 : index
    %c0_48 = arith.constant 0 : index
    %c0_49 = arith.constant 0 : index
    %78 = vector.load %arg2[%c6_47, %c0_48, %c0_49] : memref<9x128x128xbf16, #tpu.memory_space<vmem>>, vector<1x128x128xbf16>
    %79 = vector.shape_cast %78 : vector<1x128x128xbf16> to vector<128x128xbf16>
    %cst_50 = arith.constant dense<0.000000e+00> : vector<16x128xf32>
    %80 = tpu.matmul %77, %79, %cst_50 {dimension_numbers = #tpu.dot_dimension_numbers<[1], [0], [0], [1], [0, 0, 1, 1], [], []>} : vector<16x128xbf16>, vector<128x128xbf16>, vector<16x128xf32> -> vector<16x128xf32>
    %81 = arith.addf %72, %80 : vector<16x128xf32>
    %c9 = arith.constant 9 : index
    %c0_51 = arith.constant 0 : index
    %82 = vector.load %arg13[%c9, %c0_51] : memref<26x128xbf16, #tpu.memory_space<vmem>>, vector<16x128xbf16>
    %c7 = arith.constant 7 : index
    %c0_52 = arith.constant 0 : index
    %c0_53 = arith.constant 0 : index
    %83 = vector.load %arg2[%c7, %c0_52, %c0_53] : memref<9x128x128xbf16, #tpu.memory_space<vmem>>, vector<1x128x128xbf16>
    %84 = vector.shape_cast %83 : vector<1x128x128xbf16> to vector<128x128xbf16>
    %cst_54 = arith.constant dense<0.000000e+00> : vector<16x128xf32>
    %85 = tpu.matmul %82, %84, %cst_54 {dimension_numbers = #tpu.dot_dimension_numbers<[1], [0], [0], [1], [0, 0, 1, 1], [], []>} : vector<16x128xbf16>, vector<128x128xbf16>, vector<16x128xf32> -> vector<16x128xf32>
    %86 = arith.addf %81, %85 : vector<16x128xf32>
    %c10 = arith.constant 10 : index
    %c0_55 = arith.constant 0 : index
    %87 = vector.load %arg13[%c10, %c0_55] : memref<26x128xbf16, #tpu.memory_space<vmem>>, vector<16x128xbf16>
    %cst_56 = arith.constant 0.000000e+00 : bf16
    %88 = vector.broadcast %cst_56 : bf16 to vector<16x128xbf16>
    %89 = vector.shape_cast %23 : vector<16x1xi1> to vector<16x1xi1>
    %90 = vector.broadcast %89 : vector<16x1xi1> to vector<16x128xi1>
    %91 = arith.select %90, %87, %88 : vector<16x128xi1>, vector<16x128xbf16>
    %c8_57 = arith.constant 8 : index
    %c0_58 = arith.constant 0 : index
    %c0_59 = arith.constant 0 : index
    %92 = vector.load %arg2[%c8_57, %c0_58, %c0_59] : memref<9x128x128xbf16, #tpu.memory_space<vmem>>, vector<1x128x128xbf16>
    %93 = vector.shape_cast %92 : vector<1x128x128xbf16> to vector<128x128xbf16>
    %cst_60 = arith.constant dense<0.000000e+00> : vector<16x128xf32>
    %94 = tpu.matmul %91, %93, %cst_60 {dimension_numbers = #tpu.dot_dimension_numbers<[1], [0], [0], [1], [0, 0, 1, 1], [], []>} : vector<16x128xbf16>, vector<128x128xbf16>, vector<16x128xf32> -> vector<16x128xf32>
    %95 = arith.addf %86, %94 : vector<16x128xf32>
    %c0_61 = arith.constant 0 : index
    %c0_62 = arith.constant 0 : index
    %96 = vector.load %arg3[%c0_61, %c0_62] : memref<1x128xf32, #tpu.memory_space<vmem>>, vector<1x128xf32>
    %97 = vector.broadcast %96 : vector<1x128xf32> to vector<16x128xf32>
    %98 = arith.addf %95, %97 : vector<16x128xf32>
    %cst_63 = arith.constant 0.000000e+00 : f32
    %99 = vector.broadcast %cst_63 : f32 to vector<16x128xf32>
    %100 = arith.maximumf %98, %99 : vector<16x128xf32>
    %101 = arith.truncf %100 : vector<16x128xf32> to vector<16x128xbf16>
    %c5_64 = arith.constant 5 : index
    %c0_65 = arith.constant 0 : index
    %102 = vector.load %arg13[%c5_64, %c0_65] : memref<26x128xbf16, #tpu.memory_space<vmem>>, vector<16x128xbf16>
    tpu.vector_store %arg13[%c5_64, %c0_65], %101 {strides = array<i32>} : memref<26x128xbf16, #tpu.memory_space<vmem>>, vector<16x128xbf16>,
    %cst_66 = arith.constant 0.000000e+00 : f32
    %103 = vector.broadcast %cst_66 : f32 to vector<16x128xf32>
    %c0_67 = arith.constant 0 : index
    %c0_68 = arith.constant 0 : index
    %104 = vector.load %arg13[%c0_67, %c0_68] : memref<26x128xbf16, #tpu.memory_space<vmem>>, vector<16x128xbf16>
    %cst_69 = arith.constant 0.000000e+00 : bf16
    %105 = vector.broadcast %cst_69 : bf16 to vector<16x128xbf16>
    %106 = vector.shape_cast %21 : vector<16x1xi1> to vector<16x1xi1>
    %107 = vector.broadcast %106 : vector<16x1xi1> to vector<16x128xi1>
    %108 = arith.select %107, %104, %105 : vector<16x128xi1>, vector<16x128xbf16>
    %c0_70 = arith.constant 0 : index
    %c0_71 = arith.constant 0 : index
    %c0_72 = arith.constant 0 : index
    %109 = vector.load %arg4[%c0_70, %c0_71, %c0_72] : memref<9x128x128xbf16, #tpu.memory_space<vmem>>, vector<1x128x128xbf16>
    %110 = vector.shape_cast %109 : vector<1x128x128xbf16> to vector<128x128xbf16>
    %cst_73 = arith.constant dense<0.000000e+00> : vector<16x128xf32>
    %111 = tpu.matmul %108, %110, %cst_73 {dimension_numbers = #tpu.dot_dimension_numbers<[1], [0], [0], [1], [0, 0, 1, 1], [], []>} : vector<16x128xbf16>, vector<128x128xbf16>, vector<16x128xf32> -> vector<16x128xf32>
    %112 = arith.addf %103, %111 : vector<16x128xf32>
    %c1_74 = arith.constant 1 : index
    %c0_75 = arith.constant 0 : index
    %113 = vector.load %arg13[%c1_74, %c0_75] : memref<26x128xbf16, #tpu.memory_space<vmem>>, vector<16x128xbf16>
    %c1_76 = arith.constant 1 : index
    %c0_77 = arith.constant 0 : index
    %c0_78 = arith.constant 0 : index
    %114 = vector.load %arg4[%c1_76, %c0_77, %c0_78] : memref<9x128x128xbf16, #tpu.memory_space<vmem>>, vector<1x128x128xbf16>
    %115 = vector.shape_cast %114 : vector<1x128x128xbf16> to vector<128x128xbf16>
    %cst_79 = arith.constant dense<0.000000e+00> : vector<16x128xf32>
    %116 = tpu.matmul %113, %115, %cst_79 {dimension_numbers = #tpu.dot_dimension_numbers<[1], [0], [0], [1], [0, 0, 1, 1], [], []>} : vector<16x128xbf16>, vector<128x128xbf16>, vector<16x128xf32> -> vector<16x128xf32>
    %117 = arith.addf %112, %116 : vector<16x128xf32>
    %c2_80 = arith.constant 2 : index
    %c0_81 = arith.constant 0 : index
    %118 = vector.load %arg13[%c2_80, %c0_81] : memref<26x128xbf16, #tpu.memory_space<vmem>>, vector<16x128xbf16>
    %cst_82 = arith.constant 0.000000e+00 : bf16
    %119 = vector.broadcast %cst_82 : bf16 to vector<16x128xbf16>
    %120 = vector.shape_cast %23 : vector<16x1xi1> to vector<16x1xi1>
    %121 = vector.broadcast %120 : vector<16x1xi1> to vector<16x128xi1>
    %122 = arith.select %121, %118, %119 : vector<16x128xi1>, vector<16x128xbf16>
    %c2_83 = arith.constant 2 : index
    %c0_84 = arith.constant 0 : index
    %c0_85 = arith.constant 0 : index
    %123 = vector.load %arg4[%c2_83, %c0_84, %c0_85] : memref<9x128x128xbf16, #tpu.memory_space<vmem>>, vector<1x128x128xbf16>
    %124 = vector.shape_cast %123 : vector<1x128x128xbf16> to vector<128x128xbf16>
    %cst_86 = arith.constant dense<0.000000e+00> : vector<16x128xf32>
    %125 = tpu.matmul %122, %124, %cst_86 {dimension_numbers = #tpu.dot_dimension_numbers<[1], [0], [0], [1], [0, 0, 1, 1], [], []>} : vector<16x128xbf16>, vector<128x128xbf16>, vector<16x128xf32> -> vector<16x128xf32>
    %126 = arith.addf %117, %125 : vector<16x128xf32>
    %c4_87 = arith.constant 4 : index
    %c0_88 = arith.constant 0 : index
    %127 = vector.load %arg13[%c4_87, %c0_88] : memref<26x128xbf16, #tpu.memory_space<vmem>>, vector<16x128xbf16>
    %cst_89 = arith.constant 0.000000e+00 : bf16
    %128 = vector.broadcast %cst_89 : bf16 to vector<16x128xbf16>
    %129 = vector.shape_cast %21 : vector<16x1xi1> to vector<16x1xi1>
    %130 = vector.broadcast %129 : vector<16x1xi1> to vector<16x128xi1>
    %131 = arith.select %130, %127, %128 : vector<16x128xi1>, vector<16x128xbf16>
    %c3_90 = arith.constant 3 : index
    %c0_91 = arith.constant 0 : index
    %c0_92 = arith.constant 0 : index
    %132 = vector.load %arg4[%c3_90, %c0_91, %c0_92] : memref<9x128x128xbf16, #tpu.memory_space<vmem>>, vector<1x128x128xbf16>
    %133 = vector.shape_cast %132 : vector<1x128x128xbf16> to vector<128x128xbf16>
    %cst_93 = arith.constant dense<0.000000e+00> : vector<16x128xf32>
    %134 = tpu.matmul %131, %133, %cst_93 {dimension_numbers = #tpu.dot_dimension_numbers<[1], [0], [0], [1], [0, 0, 1, 1], [], []>} : vector<16x128xbf16>, vector<128x128xbf16>, vector<16x128xf32> -> vector<16x128xf32>
    %135 = arith.addf %126, %134 : vector<16x128xf32>
    %c5_94 = arith.constant 5 : index
    %c0_95 = arith.constant 0 : index
    %136 = vector.load %arg13[%c5_94, %c0_95] : memref<26x128xbf16, #tpu.memory_space<vmem>>, vector<16x128xbf16>
    %c4_96 = arith.constant 4 : index
    %c0_97 = arith.constant 0 : index
    %c0_98 = arith.constant 0 : index
    %137 = vector.load %arg4[%c4_96, %c0_97, %c0_98] : memref<9x128x128xbf16, #tpu.memory_space<vmem>>, vector<1x128x128xbf16>
    %138 = vector.shape_cast %137 : vector<1x128x128xbf16> to vector<128x128xbf16>
    %cst_99 = arith.constant dense<0.000000e+00> : vector<16x128xf32>
    %139 = tpu.matmul %136, %138, %cst_99 {dimension_numbers = #tpu.dot_dimension_numbers<[1], [0], [0], [1], [0, 0, 1, 1], [], []>} : vector<16x128xbf16>, vector<128x128xbf16>, vector<16x128xf32> -> vector<16x128xf32>
    %140 = arith.addf %135, %139 : vector<16x128xf32>
    %c6_100 = arith.constant 6 : index
    %c0_101 = arith.constant 0 : index
    %141 = vector.load %arg13[%c6_100, %c0_101] : memref<26x128xbf16, #tpu.memory_space<vmem>>, vector<16x128xbf16>
    %cst_102 = arith.constant 0.000000e+00 : bf16
    %142 = vector.broadcast %cst_102 : bf16 to vector<16x128xbf16>
    %143 = vector.shape_cast %23 : vector<16x1xi1> to vector<16x1xi1>
    %144 = vector.broadcast %143 : vector<16x1xi1> to vector<16x128xi1>
    %145 = arith.select %144, %141, %142 : vector<16x128xi1>, vector<16x128xbf16>
    %c5_103 = arith.constant 5 : index
    %c0_104 = arith.constant 0 : index
    %c0_105 = arith.constant 0 : index
    %146 = vector.load %arg4[%c5_103, %c0_104, %c0_105] : memref<9x128x128xbf16, #tpu.memory_space<vmem>>, vector<1x128x128xbf16>
    %147 = vector.shape_cast %146 : vector<1x128x128xbf16> to vector<128x128xbf16>
    %cst_106 = arith.constant dense<0.000000e+00> : vector<16x128xf32>
    %148 = tpu.matmul %145, %147, %cst_106 {dimension_numbers = #tpu.dot_dimension_numbers<[1], [0], [0], [1], [0, 0, 1, 1], [], []>} : vector<16x128xbf16>, vector<128x128xbf16>, vector<16x128xf32> -> vector<16x128xf32>
    %149 = arith.addf %140, %148 : vector<16x128xf32>
    %c8_107 = arith.constant 8 : index
    %c0_108 = arith.constant 0 : index
    %150 = vector.load %arg13[%c8_107, %c0_108] : memref<26x128xbf16, #tpu.memory_space<vmem>>, vector<16x128xbf16>
    %cst_109 = arith.constant 0.000000e+00 : bf16
    %151 = vector.broadcast %cst_109 : bf16 to vector<16x128xbf16>
    %152 = vector.shape_cast %21 : vector<16x1xi1> to vector<16x1xi1>
    %153 = vector.broadcast %152 : vector<16x1xi1> to vector<16x128xi1>
    %154 = arith.select %153, %150, %151 : vector<16x128xi1>, vector<16x128xbf16>
    %c6_110 = arith.constant 6 : index
    %c0_111 = arith.constant 0 : index
    %c0_112 = arith.constant 0 : index
    %155 = vector.load %arg4[%c6_110, %c0_111, %c0_112] : memref<9x128x128xbf16, #tpu.memory_space<vmem>>, vector<1x128x128xbf16>
    %156 = vector.shape_cast %155 : vector<1x128x128xbf16> to vector<128x128xbf16>
    %cst_113 = arith.constant dense<0.000000e+00> : vector<16x128xf32>
    %157 = tpu.matmul %154, %156, %cst_113 {dimension_numbers = #tpu.dot_dimension_numbers<[1], [0], [0], [1], [0, 0, 1, 1], [], []>} : vector<16x128xbf16>, vector<128x128xbf16>, vector<16x128xf32> -> vector<16x128xf32>
    %158 = arith.addf %149, %157 : vector<16x128xf32>
    %c9_114 = arith.constant 9 : index
    %c0_115 = arith.constant 0 : index
    %159 = vector.load %arg13[%c9_114, %c0_115] : memref<26x128xbf16, #tpu.memory_space<vmem>>, vector<16x128xbf16>
    %c7_116 = arith.constant 7 : index
    %c0_117 = arith.constant 0 : index
    %c0_118 = arith.constant 0 : index
    %160 = vector.load %arg4[%c7_116, %c0_117, %c0_118] : memref<9x128x128xbf16, #tpu.memory_space<vmem>>, vector<1x128x128xbf16>
    %161 = vector.shape_cast %160 : vector<1x128x128xbf16> to vector<128x128xbf16>
    %cst_119 = arith.constant dense<0.000000e+00> : vector<16x128xf32>
    %162 = tpu.matmul %159, %161, %cst_119 {dimension_numbers = #tpu.dot_dimension_numbers<[1], [0], [0], [1], [0, 0, 1, 1], [], []>} : vector<16x128xbf16>, vector<128x128xbf16>, vector<16x128xf32> -> vector<16x128xf32>
    %163 = arith.addf %158, %162 : vector<16x128xf32>
    %c10_120 = arith.constant 10 : index
    %c0_121 = arith.constant 0 : index
    %164 = vector.load %arg13[%c10_120, %c0_121] : memref<26x128xbf16, #tpu.memory_space<vmem>>, vector<16x128xbf16>
    %cst_122 = arith.constant 0.000000e+00 : bf16
    %165 = vector.broadcast %cst_122 : bf16 to vector<16x128xbf16>
    %166 = vector.shape_cast %23 : vector<16x1xi1> to vector<16x1xi1>
    %167 = vector.broadcast %166 : vector<16x1xi1> to vector<16x128xi1>
    %168 = arith.select %167, %164, %165 : vector<16x128xi1>, vector<16x128xbf16>
    %c8_123 = arith.constant 8 : index
    %c0_124 = arith.constant 0 : index
    %c0_125 = arith.constant 0 : index
    %169 = vector.load %arg4[%c8_123, %c0_124, %c0_125] : memref<9x128x128xbf16, #tpu.memory_space<vmem>>, vector<1x128x128xbf16>
    %170 = vector.shape_cast %169 : vector<1x128x128xbf16> to vector<128x128xbf16>
    %cst_126 = arith.constant dense<0.000000e+00> : vector<16x128xf32>
    %171 = tpu.matmul %168, %170, %cst_126 {dimension_numbers = #tpu.dot_dimension_numbers<[1], [0], [0], [1], [0, 0, 1, 1], [], []>} : vector<16x128xbf16>, vector<128x128xbf16>, vector<16x128xf32> -> vector<16x128xf32>
    %172 = arith.addf %163, %171 : vector<16x128xf32>
    %c0_127 = arith.constant 0 : index
    %c0_128 = arith.constant 0 : index
    %173 = vector.load %arg5[%c0_127, %c0_128] : memref<1x128xf32, #tpu.memory_space<vmem>>, vector<1x128xf32>
    %174 = vector.broadcast %173 : vector<1x128xf32> to vector<16x128xf32>
    %175 = arith.addf %172, %174 : vector<16x128xf32>
    %cst_129 = arith.constant 0.000000e+00 : f32
    %176 = vector.broadcast %cst_129 : f32 to vector<16x128xf32>
    %177 = arith.maximumf %175, %176 : vector<16x128xf32>
    %178 = arith.extf %24 : vector<16x128xbf16> to vector<16x128xf32>
    %179 = arith.addf %177, %178 : vector<16x128xf32>
    %180 = arith.truncf %179 : vector<16x128xf32> to vector<16x128xbf16>
    %c5_130 = arith.constant 5 : index
    %c0_131 = arith.constant 0 : index
    %181 = vector.load %arg13[%c5_130, %c0_131] : memref<26x128xbf16, #tpu.memory_space<vmem>>, vector<16x128xbf16>
    tpu.vector_store %arg13[%c5_130, %c0_131], %180 {strides = array<i32>} : memref<26x128xbf16, #tpu.memory_space<vmem>>, vector<16x128xbf16>,
    %cst_132 = arith.constant 0.000000e+00 : f32
    %182 = vector.broadcast %cst_132 : f32 to vector<16x128xf32>
    %c0_133 = arith.constant 0 : index
    %c0_134 = arith.constant 0 : index
    %183 = vector.load %arg13[%c0_133, %c0_134] : memref<26x128xbf16, #tpu.memory_space<vmem>>, vector<16x128xbf16>
    %cst_135 = arith.constant 0.000000e+00 : bf16
    %184 = vector.broadcast %cst_135 : bf16 to vector<16x128xbf16>
    %185 = vector.shape_cast %21 : vector<16x1xi1> to vector<16x1xi1>
    %186 = vector.broadcast %185 : vector<16x1xi1> to vector<16x128xi1>
    %187 = arith.select %186, %183, %184 : vector<16x128xi1>, vector<16x128xbf16>
    %c0_136 = arith.constant 0 : index
    %c0_137 = arith.constant 0 : index
    %c0_138 = arith.constant 0 : index
    %188 = vector.load %arg6[%c0_136, %c0_137, %c0_138] : memref<9x128x128xbf16, #tpu.memory_space<vmem>>, vector<1x128x128xbf16>
    %189 = vector.shape_cast %188 : vector<1x128x128xbf16> to vector<128x128xbf16>
    %cst_139 = arith.constant dense<0.000000e+00> : vector<16x128xf32>
    %190 = tpu.matmul %187, %189, %cst_139 {dimension_numbers = #tpu.dot_dimension_numbers<[1], [0], [0], [1], [0, 0, 1, 1], [], []>} : vector<16x128xbf16>, vector<128x128xbf16>, vector<16x128xf32> -> vector<16x128xf32>
    %191 = arith.addf %182, %190 : vector<16x128xf32>
    %c1_140 = arith.constant 1 : index
    %c0_141 = arith.constant 0 : index
    %192 = vector.load %arg13[%c1_140, %c0_141] : memref<26x128xbf16, #tpu.memory_space<vmem>>, vector<16x128xbf16>
    %c1_142 = arith.constant 1 : index
    %c0_143 = arith.constant 0 : index
    %c0_144 = arith.constant 0 : index
    %193 = vector.load %arg6[%c1_142, %c0_143, %c0_144] : memref<9x128x128xbf16, #tpu.memory_space<vmem>>, vector<1x128x128xbf16>
    %194 = vector.shape_cast %193 : vector<1x128x128xbf16> to vector<128x128xbf16>
    %cst_145 = arith.constant dense<0.000000e+00> : vector<16x128xf32>
    %195 = tpu.matmul %192, %194, %cst_145 {dimension_numbers = #tpu.dot_dimension_numbers<[1], [0], [0], [1], [0, 0, 1, 1], [], []>} : vector<16x128xbf16>, vector<128x128xbf16>, vector<16x128xf32> -> vector<16x128xf32>
    %196 = arith.addf %191, %195 : vector<16x128xf32>
    %c2_146 = arith.constant 2 : index
    %c0_147 = arith.constant 0 : index
    %197 = vector.load %arg13[%c2_146, %c0_147] : memref<26x128xbf16, #tpu.memory_space<vmem>>, vector<16x128xbf16>
    %cst_148 = arith.constant 0.000000e+00 : bf16
    %198 = vector.broadcast %cst_148 : bf16 to vector<16x128xbf16>
    %199 = vector.shape_cast %23 : vector<16x1xi1> to vector<16x1xi1>
    %200 = vector.broadcast %199 : vector<16x1xi1> to vector<16x128xi1>
    %201 = arith.select %200, %197, %198 : vector<16x128xi1>, vector<16x128xbf16>
    %c2_149 = arith.constant 2 : index
    %c0_150 = arith.constant 0 : index
    %c0_151 = arith.constant 0 : index
    %202 = vector.load %arg6[%c2_149, %c0_150, %c0_151] : memref<9x128x128xbf16, #tpu.memory_space<vmem>>, vector<1x128x128xbf16>
    %203 = vector.shape_cast %202 : vector<1x128x128xbf16> to vector<128x128xbf16>
    %cst_152 = arith.constant dense<0.000000e+00> : vector<16x128xf32>
    %204 = tpu.matmul %201, %203, %cst_152 {dimension_numbers = #tpu.dot_dimension_numbers<[1], [0], [0], [1], [0, 0, 1, 1], [], []>} : vector<16x128xbf16>, vector<128x128xbf16>, vector<16x128xf32> -> vector<16x128xf32>
    %205 = arith.addf %196, %204 : vector<16x128xf32>
    %c4_153 = arith.constant 4 : index
    %c0_154 = arith.constant 0 : index
    %206 = vector.load %arg13[%c4_153, %c0_154] : memref<26x128xbf16, #tpu.memory_space<vmem>>, vector<16x128xbf16>
    %cst_155 = arith.constant 0.000000e+00 : bf16
    %207 = vector.broadcast %cst_155 : bf16 to vector<16x128xbf16>
    %208 = vector.shape_cast %21 : vector<16x1xi1> to vector<16x1xi1>
    %209 = vector.broadcast %208 : vector<16x1xi1> to vector<16x128xi1>
    %210 = arith.select %209, %206, %207 : vector<16x128xi1>, vector<16x128xbf16>
    %c3_156 = arith.constant 3 : index
    %c0_157 = arith.constant 0 : index
    %c0_158 = arith.constant 0 : index
    %211 = vector.load %arg6[%c3_156, %c0_157, %c0_158] : memref<9x128x128xbf16, #tpu.memory_space<vmem>>, vector<1x128x128xbf16>
    %212 = vector.shape_cast %211 : vector<1x128x128xbf16> to vector<128x128xbf16>
    %cst_159 = arith.constant dense<0.000000e+00> : vector<16x128xf32>
    %213 = tpu.matmul %210, %212, %cst_159 {dimension_numbers = #tpu.dot_dimension_numbers<[1], [0], [0], [1], [0, 0, 1, 1], [], []>} : vector<16x128xbf16>, vector<128x128xbf16>, vector<16x128xf32> -> vector<16x128xf32>
    %214 = arith.addf %205, %213 : vector<16x128xf32>
    %c5_160 = arith.constant 5 : index
    %c0_161 = arith.constant 0 : index
    %215 = vector.load %arg13[%c5_160, %c0_161] : memref<26x128xbf16, #tpu.memory_space<vmem>>, vector<16x128xbf16>
    %c4_162 = arith.constant 4 : index
    %c0_163 = arith.constant 0 : index
    %c0_164 = arith.constant 0 : index
    %216 = vector.load %arg6[%c4_162, %c0_163, %c0_164] : memref<9x128x128xbf16, #tpu.memory_space<vmem>>, vector<1x128x128xbf16>
    %217 = vector.shape_cast %216 : vector<1x128x128xbf16> to vector<128x128xbf16>
    %cst_165 = arith.constant dense<0.000000e+00> : vector<16x128xf32>
    %218 = tpu.matmul %215, %217, %cst_165 {dimension_numbers = #tpu.dot_dimension_numbers<[1], [0], [0], [1], [0, 0, 1, 1], [], []>} : vector<16x128xbf16>, vector<128x128xbf16>, vector<16x128xf32> -> vector<16x128xf32>
    %219 = arith.addf %214, %218 : vector<16x128xf32>
    %c6_166 = arith.constant 6 : index
    %c0_167 = arith.constant 0 : index
    %220 = vector.load %arg13[%c6_166, %c0_167] : memref<26x128xbf16, #tpu.memory_space<vmem>>, vector<16x128xbf16>
    %cst_168 = arith.constant 0.000000e+00 : bf16
    %221 = vector.broadcast %cst_168 : bf16 to vector<16x128xbf16>
    %222 = vector.shape_cast %23 : vector<16x1xi1> to vector<16x1xi1>
    %223 = vector.broadcast %222 : vector<16x1xi1> to vector<16x128xi1>
    %224 = arith.select %223, %220, %221 : vector<16x128xi1>, vector<16x128xbf16>
    %c5_169 = arith.constant 5 : index
    %c0_170 = arith.constant 0 : index
    %c0_171 = arith.constant 0 : index
    %225 = vector.load %arg6[%c5_169, %c0_170, %c0_171] : memref<9x128x128xbf16, #tpu.memory_space<vmem>>, vector<1x128x128xbf16>
    %226 = vector.shape_cast %225 : vector<1x128x128xbf16> to vector<128x128xbf16>
    %cst_172 = arith.constant dense<0.000000e+00> : vector<16x128xf32>
    %227 = tpu.matmul %224, %226, %cst_172 {dimension_numbers = #tpu.dot_dimension_numbers<[1], [0], [0], [1], [0, 0, 1, 1], [], []>} : vector<16x128xbf16>, vector<128x128xbf16>, vector<16x128xf32> -> vector<16x128xf32>
    %228 = arith.addf %219, %227 : vector<16x128xf32>
    %c8_173 = arith.constant 8 : index
    %c0_174 = arith.constant 0 : index
    %229 = vector.load %arg13[%c8_173, %c0_174] : memref<26x128xbf16, #tpu.memory_space<vmem>>, vector<16x128xbf16>
    %cst_175 = arith.constant 0.000000e+00 : bf16
    %230 = vector.broadcast %cst_175 : bf16 to vector<16x128xbf16>
    %231 = vector.shape_cast %21 : vector<16x1xi1> to vector<16x1xi1>
    %232 = vector.broadcast %231 : vector<16x1xi1> to vector<16x128xi1>
    %233 = arith.select %232, %229, %230 : vector<16x128xi1>, vector<16x128xbf16>
    %c6_176 = arith.constant 6 : index
    %c0_177 = arith.constant 0 : index
    %c0_178 = arith.constant 0 : index
    %234 = vector.load %arg6[%c6_176, %c0_177, %c0_178] : memref<9x128x128xbf16, #tpu.memory_space<vmem>>, vector<1x128x128xbf16>
    %235 = vector.shape_cast %234 : vector<1x128x128xbf16> to vector<128x128xbf16>
    %cst_179 = arith.constant dense<0.000000e+00> : vector<16x128xf32>
    %236 = tpu.matmul %233, %235, %cst_179 {dimension_numbers = #tpu.dot_dimension_numbers<[1], [0], [0], [1], [0, 0, 1, 1], [], []>} : vector<16x128xbf16>, vector<128x128xbf16>, vector<16x128xf32> -> vector<16x128xf32>
    %237 = arith.addf %228, %236 : vector<16x128xf32>
    %c9_180 = arith.constant 9 : index
    %c0_181 = arith.constant 0 : index
    %238 = vector.load %arg13[%c9_180, %c0_181] : memref<26x128xbf16, #tpu.memory_space<vmem>>, vector<16x128xbf16>
    %c7_182 = arith.constant 7 : index
    %c0_183 = arith.constant 0 : index
    %c0_184 = arith.constant 0 : index
    %239 = vector.load %arg6[%c7_182, %c0_183, %c0_184] : memref<9x128x128xbf16, #tpu.memory_space<vmem>>, vector<1x128x128xbf16>
    %240 = vector.shape_cast %239 : vector<1x128x128xbf16> to vector<128x128xbf16>
    %cst_185 = arith.constant dense<0.000000e+00> : vector<16x128xf32>
    %241 = tpu.matmul %238, %240, %cst_185 {dimension_numbers = #tpu.dot_dimension_numbers<[1], [0], [0], [1], [0, 0, 1, 1], [], []>} : vector<16x128xbf16>, vector<128x128xbf16>, vector<16x128xf32> -> vector<16x128xf32>
    %242 = arith.addf %237, %241 : vector<16x128xf32>
    %c10_186 = arith.constant 10 : index
    %c0_187 = arith.constant 0 : index
    %243 = vector.load %arg13[%c10_186, %c0_187] : memref<26x128xbf16, #tpu.memory_space<vmem>>, vector<16x128xbf16>
    %cst_188 = arith.constant 0.000000e+00 : bf16
    %244 = vector.broadcast %cst_188 : bf16 to vector<16x128xbf16>
    %245 = vector.shape_cast %23 : vector<16x1xi1> to vector<16x1xi1>
    %246 = vector.broadcast %245 : vector<16x1xi1> to vector<16x128xi1>
    %247 = arith.select %246, %243, %244 : vector<16x128xi1>, vector<16x128xbf16>
    %c8_189 = arith.constant 8 : index
    %c0_190 = arith.constant 0 : index
    %c0_191 = arith.constant 0 : index
    %248 = vector.load %arg6[%c8_189, %c0_190, %c0_191] : memref<9x128x128xbf16, #tpu.memory_space<vmem>>, vector<1x128x128xbf16>
    %249 = vector.shape_cast %248 : vector<1x128x128xbf16> to vector<128x128xbf16>
    %cst_192 = arith.constant dense<0.000000e+00> : vector<16x128xf32>
    %250 = tpu.matmul %247, %249, %cst_192 {dimension_numbers = #tpu.dot_dimension_numbers<[1], [0], [0], [1], [0, 0, 1, 1], [], []>} : vector<16x128xbf16>, vector<128x128xbf16>, vector<16x128xf32> -> vector<16x128xf32>
    %251 = arith.addf %242, %250 : vector<16x128xf32>
    %c0_193 = arith.constant 0 : index
    %c0_194 = arith.constant 0 : index
    %252 = vector.load %arg7[%c0_193, %c0_194] : memref<1x128xf32, #tpu.memory_space<vmem>>, vector<1x128xf32>
    %253 = vector.broadcast %252 : vector<1x128xf32> to vector<16x128xf32>
    %254 = arith.addf %251, %253 : vector<16x128xf32>
    %cst_195 = arith.constant 0.000000e+00 : f32
    %255 = vector.broadcast %cst_195 : f32 to vector<16x128xf32>
    %256 = arith.maximumf %254, %255 : vector<16x128xf32>
    %257 = arith.truncf %256 : vector<16x128xf32> to vector<16x128xbf16>
    %c5_196 = arith.constant 5 : index
    %c0_197 = arith.constant 0 : index
    %258 = vector.load %arg13[%c5_196, %c0_197] : memref<26x128xbf16, #tpu.memory_space<vmem>>, vector<16x128xbf16>
    tpu.vector_store %arg13[%c5_196, %c0_197], %257 {strides = array<i32>} : memref<26x128xbf16, #tpu.memory_space<vmem>>, vector<16x128xbf16>,
    %cst_198 = arith.constant 0.000000e+00 : f32
    %259 = vector.broadcast %cst_198 : f32 to vector<16x128xf32>
    %c0_199 = arith.constant 0 : index
    %c0_200 = arith.constant 0 : index
    %260 = vector.load %arg13[%c0_199, %c0_200] : memref<26x128xbf16, #tpu.memory_space<vmem>>, vector<16x128xbf16>
    %cst_201 = arith.constant 0.000000e+00 : bf16
    %261 = vector.broadcast %cst_201 : bf16 to vector<16x128xbf16>
    %262 = vector.shape_cast %21 : vector<16x1xi1> to vector<16x1xi1>
    %263 = vector.broadcast %262 : vector<16x1xi1> to vector<16x128xi1>
    %264 = arith.select %263, %260, %261 : vector<16x128xi1>, vector<16x128xbf16>
    %c0_202 = arith.constant 0 : index
    %c0_203 = arith.constant 0 : index
    %c0_204 = arith.constant 0 : index
    %265 = vector.load %arg8[%c0_202, %c0_203, %c0_204] : memref<9x128x128xbf16, #tpu.memory_space<vmem>>, vector<1x128x128xbf16>
    %266 = vector.shape_cast %265 : vector<1x128x128xbf16> to vector<128x128xbf16>
    %cst_205 = arith.constant dense<0.000000e+00> : vector<16x128xf32>
    %267 = tpu.matmul %264, %266, %cst_205 {dimension_numbers = #tpu.dot_dimension_numbers<[1], [0], [0], [1], [0, 0, 1, 1], [], []>} : vector<16x128xbf16>, vector<128x128xbf16>, vector<16x128xf32> -> vector<16x128xf32>
    %268 = arith.addf %259, %267 : vector<16x128xf32>
    %c1_206 = arith.constant 1 : index
    %c0_207 = arith.constant 0 : index
    %269 = vector.load %arg13[%c1_206, %c0_207] : memref<26x128xbf16, #tpu.memory_space<vmem>>, vector<16x128xbf16>
    %c1_208 = arith.constant 1 : index
    %c0_209 = arith.constant 0 : index
    %c0_210 = arith.constant 0 : index
    %270 = vector.load %arg8[%c1_208, %c0_209, %c0_210] : memref<9x128x128xbf16, #tpu.memory_space<vmem>>, vector<1x128x128xbf16>
    %271 = vector.shape_cast %270 : vector<1x128x128xbf16> to vector<128x128xbf16>
    %cst_211 = arith.constant dense<0.000000e+00> : vector<16x128xf32>
    %272 = tpu.matmul %269, %271, %cst_211 {dimension_numbers = #tpu.dot_dimension_numbers<[1], [0], [0], [1], [0, 0, 1, 1], [], []>} : vector<16x128xbf16>, vector<128x128xbf16>, vector<16x128xf32> -> vector<16x128xf32>
    %273 = arith.addf %268, %272 : vector<16x128xf32>
    %c2_212 = arith.constant 2 : index
    %c0_213 = arith.constant 0 : index
    %274 = vector.load %arg13[%c2_212, %c0_213] : memref<26x128xbf16, #tpu.memory_space<vmem>>, vector<16x128xbf16>
    %cst_214 = arith.constant 0.000000e+00 : bf16
    %275 = vector.broadcast %cst_214 : bf16 to vector<16x128xbf16>
    %276 = vector.shape_cast %23 : vector<16x1xi1> to vector<16x1xi1>
    %277 = vector.broadcast %276 : vector<16x1xi1> to vector<16x128xi1>
    %278 = arith.select %277, %274, %275 : vector<16x128xi1>, vector<16x128xbf16>
    %c2_215 = arith.constant 2 : index
    %c0_216 = arith.constant 0 : index
    %c0_217 = arith.constant 0 : index
    %279 = vector.load %arg8[%c2_215, %c0_216, %c0_217] : memref<9x128x128xbf16, #tpu.memory_space<vmem>>, vector<1x128x128xbf16>
    %280 = vector.shape_cast %279 : vector<1x128x128xbf16> to vector<128x128xbf16>
    %cst_218 = arith.constant dense<0.000000e+00> : vector<16x128xf32>
    %281 = tpu.matmul %278, %280, %cst_218 {dimension_numbers = #tpu.dot_dimension_numbers<[1], [0], [0], [1], [0, 0, 1, 1], [], []>} : vector<16x128xbf16>, vector<128x128xbf16>, vector<16x128xf32> -> vector<16x128xf32>
    %282 = arith.addf %273, %281 : vector<16x128xf32>
    %c4_219 = arith.constant 4 : index
    %c0_220 = arith.constant 0 : index
    %283 = vector.load %arg13[%c4_219, %c0_220] : memref<26x128xbf16, #tpu.memory_space<vmem>>, vector<16x128xbf16>
    %cst_221 = arith.constant 0.000000e+00 : bf16
    %284 = vector.broadcast %cst_221 : bf16 to vector<16x128xbf16>
    %285 = vector.shape_cast %21 : vector<16x1xi1> to vector<16x1xi1>
    %286 = vector.broadcast %285 : vector<16x1xi1> to vector<16x128xi1>
    %287 = arith.select %286, %283, %284 : vector<16x128xi1>, vector<16x128xbf16>
    %c3_222 = arith.constant 3 : index
    %c0_223 = arith.constant 0 : index
    %c0_224 = arith.constant 0 : index
    %288 = vector.load %arg8[%c3_222, %c0_223, %c0_224] : memref<9x128x128xbf16, #tpu.memory_space<vmem>>, vector<1x128x128xbf16>
    %289 = vector.shape_cast %288 : vector<1x128x128xbf16> to vector<128x128xbf16>
    %cst_225 = arith.constant dense<0.000000e+00> : vector<16x128xf32>
    %290 = tpu.matmul %287, %289, %cst_225 {dimension_numbers = #tpu.dot_dimension_numbers<[1], [0], [0], [1], [0, 0, 1, 1], [], []>} : vector<16x128xbf16>, vector<128x128xbf16>, vector<16x128xf32> -> vector<16x128xf32>
    %291 = arith.addf %282, %290 : vector<16x128xf32>
    %c5_226 = arith.constant 5 : index
    %c0_227 = arith.constant 0 : index
    %292 = vector.load %arg13[%c5_226, %c0_227] : memref<26x128xbf16, #tpu.memory_space<vmem>>, vector<16x128xbf16>
    %c4_228 = arith.constant 4 : index
    %c0_229 = arith.constant 0 : index
    %c0_230 = arith.constant 0 : index
    %293 = vector.load %arg8[%c4_228, %c0_229, %c0_230] : memref<9x128x128xbf16, #tpu.memory_space<vmem>>, vector<1x128x128xbf16>
    %294 = vector.shape_cast %293 : vector<1x128x128xbf16> to vector<128x128xbf16>
    %cst_231 = arith.constant dense<0.000000e+00> : vector<16x128xf32>
    %295 = tpu.matmul %292, %294, %cst_231 {dimension_numbers = #tpu.dot_dimension_numbers<[1], [0], [0], [1], [0, 0, 1, 1], [], []>} : vector<16x128xbf16>, vector<128x128xbf16>, vector<16x128xf32> -> vector<16x128xf32>
    %296 = arith.addf %291, %295 : vector<16x128xf32>
    %c6_232 = arith.constant 6 : index
    %c0_233 = arith.constant 0 : index
    %297 = vector.load %arg13[%c6_232, %c0_233] : memref<26x128xbf16, #tpu.memory_space<vmem>>, vector<16x128xbf16>
    %cst_234 = arith.constant 0.000000e+00 : bf16
    %298 = vector.broadcast %cst_234 : bf16 to vector<16x128xbf16>
    %299 = vector.shape_cast %23 : vector<16x1xi1> to vector<16x1xi1>
    %300 = vector.broadcast %299 : vector<16x1xi1> to vector<16x128xi1>
    %301 = arith.select %300, %297, %298 : vector<16x128xi1>, vector<16x128xbf16>
    %c5_235 = arith.constant 5 : index
    %c0_236 = arith.constant 0 : index
    %c0_237 = arith.constant 0 : index
    %302 = vector.load %arg8[%c5_235, %c0_236, %c0_237] : memref<9x128x128xbf16, #tpu.memory_space<vmem>>, vector<1x128x128xbf16>
    %303 = vector.shape_cast %302 : vector<1x128x128xbf16> to vector<128x128xbf16>
    %cst_238 = arith.constant dense<0.000000e+00> : vector<16x128xf32>
    %304 = tpu.matmul %301, %303, %cst_238 {dimension_numbers = #tpu.dot_dimension_numbers<[1], [0], [0], [1], [0, 0, 1, 1], [], []>} : vector<16x128xbf16>, vector<128x128xbf16>, vector<16x128xf32> -> vector<16x128xf32>
    %305 = arith.addf %296, %304 : vector<16x128xf32>
    %c8_239 = arith.constant 8 : index
    %c0_240 = arith.constant 0 : index
    %306 = vector.load %arg13[%c8_239, %c0_240] : memref<26x128xbf16, #tpu.memory_space<vmem>>, vector<16x128xbf16>
    %cst_241 = arith.constant 0.000000e+00 : bf16
    %307 = vector.broadcast %cst_241 : bf16 to vector<16x128xbf16>
    %308 = vector.shape_cast %21 : vector<16x1xi1> to vector<16x1xi1>
    %309 = vector.broadcast %308 : vector<16x1xi1> to vector<16x128xi1>
    %310 = arith.select %309, %306, %307 : vector<16x128xi1>, vector<16x128xbf16>
    %c6_242 = arith.constant 6 : index
    %c0_243 = arith.constant 0 : index
    %c0_244 = arith.constant 0 : index
    %311 = vector.load %arg8[%c6_242, %c0_243, %c0_244] : memref<9x128x128xbf16, #tpu.memory_space<vmem>>, vector<1x128x128xbf16>
    %312 = vector.shape_cast %311 : vector<1x128x128xbf16> to vector<128x128xbf16>
    %cst_245 = arith.constant dense<0.000000e+00> : vector<16x128xf32>
    %313 = tpu.matmul %310, %312, %cst_245 {dimension_numbers = #tpu.dot_dimension_numbers<[1], [0], [0], [1], [0, 0, 1, 1], [], []>} : vector<16x128xbf16>, vector<128x128xbf16>, vector<16x128xf32> -> vector<16x128xf32>
    %314 = arith.addf %305, %313 : vector<16x128xf32>
    %c9_246 = arith.constant 9 : index
    %c0_247 = arith.constant 0 : index
    %315 = vector.load %arg13[%c9_246, %c0_247] : memref<26x128xbf16, #tpu.memory_space<vmem>>, vector<16x128xbf16>
    %c7_248 = arith.constant 7 : index
    %c0_249 = arith.constant 0 : index
    %c0_250 = arith.constant 0 : index
    %316 = vector.load %arg8[%c7_248, %c0_249, %c0_250] : memref<9x128x128xbf16, #tpu.memory_space<vmem>>, vector<1x128x128xbf16>
    %317 = vector.shape_cast %316 : vector<1x128x128xbf16> to vector<128x128xbf16>
    %cst_251 = arith.constant dense<0.000000e+00> : vector<16x128xf32>
    %318 = tpu.matmul %315, %317, %cst_251 {dimension_numbers = #tpu.dot_dimension_numbers<[1], [0], [0], [1], [0, 0, 1, 1], [], []>} : vector<16x128xbf16>, vector<128x128xbf16>, vector<16x128xf32> -> vector<16x128xf32>
    %319 = arith.addf %314, %318 : vector<16x128xf32>
    %c10_252 = arith.constant 10 : index
    %c0_253 = arith.constant 0 : index
    %320 = vector.load %arg13[%c10_252, %c0_253] : memref<26x128xbf16, #tpu.memory_space<vmem>>, vector<16x128xbf16>
    %cst_254 = arith.constant 0.000000e+00 : bf16
    %321 = vector.broadcast %cst_254 : bf16 to vector<16x128xbf16>
    %322 = vector.shape_cast %23 : vector<16x1xi1> to vector<16x1xi1>
    %323 = vector.broadcast %322 : vector<16x1xi1> to vector<16x128xi1>
    %324 = arith.select %323, %320, %321 : vector<16x128xi1>, vector<16x128xbf16>
    %c8_255 = arith.constant 8 : index
    %c0_256 = arith.constant 0 : index
    %c0_257 = arith.constant 0 : index
    %325 = vector.load %arg8[%c8_255, %c0_256, %c0_257] : memref<9x128x128xbf16, #tpu.memory_space<vmem>>, vector<1x128x128xbf16>
    %326 = vector.shape_cast %325 : vector<1x128x128xbf16> to vector<128x128xbf16>
    %cst_258 = arith.constant dense<0.000000e+00> : vector<16x128xf32>
    %327 = tpu.matmul %324, %326, %cst_258 {dimension_numbers = #tpu.dot_dimension_numbers<[1], [0], [0], [1], [0, 0, 1, 1], [], []>} : vector<16x128xbf16>, vector<128x128xbf16>, vector<16x128xf32> -> vector<16x128xf32>
    %328 = arith.addf %319, %327 : vector<16x128xf32>
    %c0_259 = arith.constant 0 : index
    %c0_260 = arith.constant 0 : index
    %329 = vector.load %arg9[%c0_259, %c0_260] : memref<1x128xf32, #tpu.memory_space<vmem>>, vector<1x128xf32>
    %330 = vector.broadcast %329 : vector<1x128xf32> to vector<16x128xf32>
    %331 = arith.addf %328, %330 : vector<16x128xf32>
    %cst_261 = arith.constant 0.000000e+00 : f32
    %332 = vector.broadcast %cst_261 : f32 to vector<16x128xf32>
    %333 = arith.maximumf %331, %332 : vector<16x128xf32>
    %334 = arith.extf %180 : vector<16x128xbf16> to vector<16x128xf32>
    %335 = arith.addf %333, %334 : vector<16x128xf32>
    %336 = arith.truncf %335 : vector<16x128xf32> to vector<16x128xbf16>
    %c0_262 = arith.constant 0 : index
    %c0_263 = arith.constant 0 : index
    %337 = vector.load %arg10[%c0_262, %c0_263] : memref<128x128xbf16, #tpu.memory_space<vmem>>, vector<128x128xbf16>
    %cst_264 = arith.constant dense<0.000000e+00> : vector<16x128xf32>
    %338 = tpu.matmul %336, %337, %cst_264 {dimension_numbers = #tpu.dot_dimension_numbers<[1], [0], [0], [1], [0, 0, 1, 1], [], []>} : vector<16x128xbf16>, vector<128x128xbf16>, vector<16x128xf32> -> vector<16x128xf32>
    %c0_265 = arith.constant 0 : index
    %c0_266 = arith.constant 0 : index
    %339 = vector.load %arg11[%c0_265, %c0_266] : memref<1x128xf32, #tpu.memory_space<vmem>>, vector<1x128xf32>
    %340 = vector.broadcast %339 : vector<1x128xf32> to vector<16x128xf32>
    %341 = arith.addf %338, %340 : vector<16x128xf32>
    %c0_267 = arith.constant 0 : index
    %c0_268 = arith.constant 0 : index
    %342 = vector.load %arg12[%c0_267, %c0_268] : memref<16x128xf32, #tpu.memory_space<vmem>>, vector<16x128xf32>
    tpu.vector_store %arg12[%c0_267, %c0_268], %341 {strides = array<i32>} : memref<16x128xf32, #tpu.memory_space<vmem>>, vector<16x128xf32>,
    return
  }
  func.func @transform_0(%arg0: i32) -> (i32, i32) {
    %c0_i32 = arith.constant 0 : i32
    %c0_i32_0 = arith.constant 0 : i32
    return %arg0, %c0_i32 : i32, i32
  }
  func.func @transform_1(%arg0: i32) -> (i32, i32, i32) {
    %c0_i32 = arith.constant 0 : i32
    %c0_i32_0 = arith.constant 0 : i32
    %c0_i32_1 = arith.constant 0 : i32
    %c0_i32_2 = arith.constant 0 : i32
    return %c0_i32, %c0_i32_0, %c0_i32_1 : i32, i32, i32
  }
  func.func @transform_2(%arg0: i32) -> (i32, i32) {
    %c0_i32 = arith.constant 0 : i32
    %c0_i32_0 = arith.constant 0 : i32
    %c0_i32_1 = arith.constant 0 : i32
    return %c0_i32, %c0_i32_0 : i32, i32
  }
  func.func @transform_3(%arg0: i32) -> (i32, i32, i32) {
    %c0_i32 = arith.constant 0 : i32
    %c0_i32_0 = arith.constant 0 : i32
    %c0_i32_1 = arith.constant 0 : i32
    %c0_i32_2 = arith.constant 0 : i32
    return %c0_i32, %c0_i32_0, %c0_i32_1 : i32, i32, i32
  }
  func.func @transform_4(%arg0: i32) -> (i32, i32) {
    %c0_i32 = arith.constant 0 : i32
    %c0_i32_0 = arith.constant 0 : i32
    %c0_i32_1 = arith.constant 0 : i32
    return %c0_i32, %c0_i32_0 : i32, i32
  }
  func.func @transform_5(%arg0: i32) -> (i32, i32, i32) {
    %c0_i32 = arith.constant 0 : i32
    %c0_i32_0 = arith.constant 0 : i32
    %c0_i32_1 = arith.constant 0 : i32
    %c0_i32_2 = arith.constant 0 : i32
    return %c0_i32, %c0_i32_0, %c0_i32_1 : i32, i32, i32
  }
  func.func @transform_6(%arg0: i32) -> (i32, i32) {
    %c0_i32 = arith.constant 0 : i32
    %c0_i32_0 = arith.constant 0 : i32
    %c0_i32_1 = arith.constant 0 : i32
    return %c0_i32, %c0_i32_0 : i32, i32
  }
  func.func @transform_7(%arg0: i32) -> (i32, i32, i32) {
    %c0_i32 = arith.constant 0 : i32
    %c0_i32_0 = arith.constant 0 : i32
    %c0_i32_1 = arith.constant 0 : i32
    %c0_i32_2 = arith.constant 0 : i32
    return %c0_i32, %c0_i32_0, %c0_i32_1 : i32, i32, i32
  }
  func.func @transform_8(%arg0: i32) -> (i32, i32) {
    %c0_i32 = arith.constant 0 : i32
    %c0_i32_0 = arith.constant 0 : i32
    %c0_i32_1 = arith.constant 0 : i32
    return %c0_i32, %c0_i32_0 : i32, i32
  }
  func.func @transform_9(%arg0: i32) -> (i32, i32) {
    %c0_i32 = arith.constant 0 : i32
    %c0_i32_0 = arith.constant 0 : i32
    %c0_i32_1 = arith.constant 0 : i32
    return %c0_i32, %c0_i32_0 : i32, i32
  }
  func.func @transform_10(%arg0: i32) -> (i32, i32) {
    %c0_i32 = arith.constant 0 : i32
    %c0_i32_0 = arith.constant 0 : i32
    %c0_i32_1 = arith.constant 0 : i32
    return %c0_i32, %c0_i32_0 : i32, i32
  }
  func.func @transform_11(%arg0: i32) -> (i32, i32) {
    %c0_i32 = arith.constant 0 : i32
    %c0_i32_0 = arith.constant 0 : i32
    return %arg0, %c0_i32 : i32, i32
  }
}

</mosaic_0001>

<llo_original>
// kernel: cvae_encoder_forward.3
$region0: #{cvae_encoder_forward.3}
  #allocation0 [shape = 'u32[]', space=smem, size = 0x4, offset = 0x4, fixed_abs, tag = 'smem constant byte address 0x4 - core index']
  #allocation1 [shape = 'u32[144,128]{1,0:T(1,128)}', space=vmem, size = 0x12000, scoped, tag = 'internal scratch']
  %s0 = inlined_call_operand.vmem [shape: bf16[128,16], index: 0, kind: input, shape index: {}]
  %s1 = inlined_call_operand.vmem [shape: bf16[16,128], index: 1, kind: input, shape index: {}]
  %s2 = inlined_call_operand.vmem [shape: f32[1,128], index: 2, kind: input, shape index: {}]
  %s3 = inlined_call_operand.vmem [shape: bf16[128,128], index: 3, kind: output, shape index: {}]
  %s4 = sld [smem:[#allocation0]]
  $region45: #{cvae_encoder_forward.3} parent=0
    _
  %s6 = ssub.s32 1, %s4
  %s7 = scalar_select 0, %s6, %s4
  loop: start=0, step=1, limit=4
  $region2: #{cvae_encoder_forward.3} parent=0 // loop_pre_header
    _
  $region3: #{cvae_encoder_forward.3} parent=0 // loop_header
    %s9 = sphi 0, %s13
    %p10 = scmp.ge.s32.totalorder %s9, 4
    %s19 = sphi 0, %s21
    %s22 = sphi 0, %s19
    %s23 = sphi 0, %s22
    %s39 = sphi 0, %s23
    %s43 = sphi 0, %s43
    %s45 = sphi 0, %s43
    %s46 = sphi 0, %s45
    %s60 = sphi 0, %s46
    %s64 = sphi 0, %s64
    %s66 = sphi 0, %s64
    %s67 = sphi 0, %s66
    %s81 = sphi 0, %s67
    %s87 = sphi 0, %s89
    %s90 = sphi 0, %s87
    %s91 = sphi 0, %s90
    %s107 = sphi 0, %s91
  $region4: #{cvae_encoder_forward.3} parent=0 // loop_header_branch
    %12 = sbr.rel (%p10) target = $region8
  $region5: #{cvae_encoder_forward.3} parent=0 // loop_body
    %s14 = ssub.s32 %s9, 1
    %s15 = ssub.s32 %s9, 2
    %s16 = sadd.s32 %s9, 1
    %s17 = ssub.s32 %s9, %s16
    %p18 = scmp.eq.s32.totalorder %s17, 0
    %s20 = sadd.s32 %s19, 1
    %s21 = scalar_select %p18, %s19, %s20
    %p24 = pneg %p18
    %p25 = scmp.eq.s32.totalorder %s9, 1
    %p26 = por %p24, %p25
    %p27 = scmp.ne.s32.totalorder %s19, %s22
    %p28 = scmp.eq.s32.totalorder %s9, 0
    %p29 = por %p27, %p28
    %p30 = scmp.ne.s32.totalorder %s19, %s22
    %p31 = scmp.eq.s32.totalorder %s14, 1
    %p32 = por %p30, %p31
    %p33 = scmp.ne.s32.totalorder %s22, %s23
    %p34 = scmp.eq.s32.totalorder %s14, 0
    %p35 = por %p33, %p34
    %p36 = scmp.ne.s32.totalorder %s22, %s23
    %p37 = scmp.eq.s32.totalorder %s15, 1
    %p38 = por %p36, %p37
    %p40 = scmp.ne.s32.totalorder %s23, %s39
    %p41 = scmp.eq.s32.totalorder %s15, 0
    %p42 = por %p40, %p41
    %s44 = sadd.s32 %s43, 1
    %p47 = scmp.eq.s32.totalorder %s9, 1
    %p48 = scmp.ne.s32.totalorder %s43, %s45
    %p49 = scmp.eq.s32.totalorder %s9, 0
    %p50 = por %p48, %p49
    %p51 = scmp.ne.s32.totalorder %s43, %s45
    %p52 = scmp.eq.s32.totalorder %s14, 1
    %p53 = por %p51, %p52
    %p54 = scmp.ne.s32.totalorder %s45, %s46
    %p55 = scmp.eq.s32.totalorder %s14, 0
    %p56 = por %p54, %p55
    %p57 = scmp.ne.s32.totalorder %s45, %s46
    %p58 = scmp.eq.s32.totalorder %s15, 1
    %p59 = por %p57, %p58
    %p61 = scmp.ne.s32.totalorder %s46, %s60
    %p62 = scmp.eq.s32.totalorder %s15, 0
    %p63 = por %p61, %p62
    %s65 = sadd.s32 %s64, 1
    %p68 = scmp.eq.s32.totalorder %s9, 1
    %p69 = scmp.ne.s32.totalorder %s64, %s66
    %p70 = scmp.eq.s32.totalorder %s9, 0
    %p71 = por %p69, %p70
    %p72 = scmp.ne.s32.totalorder %s64, %s66
    %p73 = scmp.eq.s32.totalorder %s14, 1
    %p74 = por %p72, %p73
    %p75 = scmp.ne.s32.totalorder %s66, %s67
    %p76 = scmp.eq.s32.totalorder %s14, 0
    %p77 = por %p75, %p76
    %p78 = scmp.ne.s32.totalorder %s66, %s67
    %p79 = scmp.eq.s32.totalorder %s15, 1
    %p80 = por %p78, %p79
    %p82 = scmp.ne.s32.totalorder %s67, %s81
    %p83 = scmp.eq.s32.totalorder %s15, 0
    %p84 = por %p82, %p83
    %s85 = ssub.s32 %s9, %s16
    %p86 = scmp.eq.s32.totalorder %s85, 0
    %s88 = sadd.s32 %s87, 1
    %s89 = scalar_select %p86, %s87, %s88
    %p92 = pneg %p86
    %p93 = scmp.eq.s32.totalorder %s9, 1
    %p94 = por %p92, %p93
    %p95 = scmp.ne.s32.totalorder %s87, %s90
    %p96 = scmp.eq.s32.totalorder %s9, 0
    %p97 = por %p95, %p96
    %p98 = scmp.ne.s32.totalorder %s87, %s90
    %p99 = scmp.eq.s32.totalorder %s14, 1
    %p100 = por %p98, %p99
    %p101 = scmp.ne.s32.totalorder %s90, %s91
    %p102 = scmp.eq.s32.totalorder %s14, 0
    %p103 = por %p101, %p102
    %p104 = scmp.ne.s32.totalorder %s90, %s91
    %p105 = scmp.eq.s32.totalorder %s15, 1
    %p106 = por %p104, %p105
    %p108 = scmp.ne.s32.totalorder %s91, %s107
    %p109 = scmp.eq.s32.totalorder %s15, 0
    %p110 = por %p108, %p109
    %p111 = scmp.le.s32.totalorder 1, %s9
    %p112 = scmp.lt.s32.totalorder %s9, 3
    %p113 = pnand %p111, %p112
    %p114 = pneg %p113
    // Predicated region
    $region9: #{cvae_encoder_forward.3} parent=5 // pred_check
      _
    $region10: #{cvae_encoder_forward.3} parent=5 // pred_check_branch
      %116 = sbr.rel (%p113) target = $region12
    $region11: #{cvae_encoder_forward.3} parent=5 // pred_region
      %s117 = ssub.s32 %s9, 1
      // Predicated region
      $region13: #{cvae_encoder_forward.3} parent=11 // pred_check
        %p118 = pneg %p56
      $region14: #{cvae_encoder_forward.3} parent=11 // pred_check_branch
        %120 = sbr.rel (%p118) target = $region16
      $region15: #{cvae_encoder_forward.3} parent=11 // pred_region
        _
      $region16: #{cvae_encoder_forward.3} parent=11 // pred_fallthru
        _
      // Predicated region
      $region17: #{cvae_encoder_forward.3} parent=11 // pred_check
        %p121 = pneg %p77
      $region18: #{cvae_encoder_forward.3} parent=11 // pred_check_branch
        %123 = sbr.rel (%p121) target = $region20
      $region19: #{cvae_encoder_forward.3} parent=11 // pred_region
        _
      $region20: #{cvae_encoder_forward.3} parent=11 // pred_fallthru
        _
    $region12: #{cvae_encoder_forward.3} parent=5 // pred_fallthru
      _
    %p124 = scmp.lt.s32.totalorder %s9, 2
    // Predicated region
    $region21: #{cvae_encoder_forward.3} parent=5 // pred_check
      %p125 = pneg %p124
    $region22: #{cvae_encoder_forward.3} parent=5 // pred_check_branch
      %127 = sbr.rel (%p125) target = $region24
    $region23: #{cvae_encoder_forward.3} parent=5 // pred_region
      // Predicated region
      $region25: #{cvae_encoder_forward.3} parent=23 // pred_check
        %p128 = pneg %p29
      $region26: #{cvae_encoder_forward.3} parent=23 // pred_check_branch
        %130 = sbr.rel (%p128) target = $region28
      $region27: #{cvae_encoder_forward.3} parent=23 // pred_region
        %s131 = smul.u32 8, %s9
        %p132 = scmp.lt.s32.totalorder %s131, 15
        %s133 = scalar_select %p132, %s131, 15
        %s134 = smul.addr %s133, 4
        %s135 = scalar_lea.vmem %s0, %s134
        %s136 = smul.u32 8, %s9
      $region28: #{cvae_encoder_forward.3} parent=23 // pred_fallthru
        _
    $region24: #{cvae_encoder_forward.3} parent=5 // pred_fallthru
      _
    %p137 = scmp.le.s32.totalorder 1, %s9
    %p138 = scmp.lt.s32.totalorder %s9, 3
    %p139 = pnand %p137, %p138
    %p140 = pneg %p139
    // Predicated region
    $region29: #{cvae_encoder_forward.3} parent=5 // pred_check
      _
    $region30: #{cvae_encoder_forward.3} parent=5 // pred_check_branch
      %142 = sbr.rel (%p139) target = $region32
    $region31: #{cvae_encoder_forward.3} parent=5 // pred_region
      %s143 = ssub.s32 %s9, 1
      %s144 = smul.u32 8, %s14
      %p145 = scmp.lt.s32.totalorder %s144, 15
      %s146 = scalar_select %p145, %s144, 15
      %s147 = smul.addr %s146, 4
      %s148 = scalar_lea.vmem %s0, %s147
      %p149 = pneg %p35
      %p150 = pneg %p32
      %p151 = pneg %p56
      %p152 = pneg %p53
      %p153 = pneg %p77
      %p154 = pneg %p74
      %p155 = pneg %p103
      %p156 = pneg %p100
      %s157 = smul.u32 8, %s14
      %p158 = scmp.lt.s32.totalorder %s157, 15
      %s159 = scalar_select %p158, %s157, 15
      %s160 = smul.addr %s159, 4
      %s161 = scalar_lea.vmem %s3, %s160
      %s162 = smul.u32 8, %s14
      %p163 = scmp.lt.s32.totalorder %s162, 15
      %s164 = scalar_select %p163, %s162, 15
      %s165 = smul.addr %s164, 4
      %s166 = scalar_lea.vmem %s0, %s165
      %s167 = smul.u32 8, %s14
      %s168 = smul.u32 8, %s14
      %p169 = scmp.lt.s32.totalorder %s168, 15
      %s170 = scalar_select %p169, %s168, 15
      %s171 = smul.addr %s170, 4
      %s172 = scalar_lea.vmem %s3, %s171
      %s173 = smul.u32 8, %s14
      %v175 = vld [vmem:[%s166] sm:$0xf]
      %v176 = vld [vmem:[%s166 + $0x4] sm:$0xf]
      %v177 = vld [vmem:[%s166 + $0x8] sm:$0xf]
      %v178 = vld [vmem:[%s166 + $0xc] sm:$0xf]
      %v179 = vld [vmem:[%s166 + $0x10] sm:$0xf]
      %v180 = vld [vmem:[%s166 + $0x14] sm:$0xf]
      %v181 = vld [vmem:[%s166 + $0x18] sm:$0xf]
      %v182 = vld [vmem:[%s166 + $0x1c] sm:$0xf]
      %v183 = vld [vmem:[%s1] sm:$0xf]
      %v184 = vld [vmem:[%s1 + $0x4] sm:$0xf]
      %v185 = vld [vmem:[%s2] sm:$0x1]
      %v187 = vlaneseq
      %v188 = vshrl.u32 %v187, 7
      %v189 = vsub.s32 0, %v188
      %v190 = vrot.slane %v185, %v189
      %v200 = vunpack.c.l.b16 %v175
      %v201 = vunpack.c.l.b16 %v176
      %v202 = vunpack.c.l.b16 %v177
      %v203 = vunpack.c.l.b16 %v178
      %v204 = vunpack.c.l.b16 %v179
      %v205 = vunpack.c.l.b16 %v180
      %v206 = vunpack.c.l.b16 %v181
      %v207 = vunpack.c.l.b16 %v182
      %v208 = vpack.c.b16 %v201, %v200
      %v209 = vpack.c.b16 %v203, %v202
      %v210 = vpack.c.b16 %v205, %v204
      %v211 = vpack.c.b16 %v207, %v206
      %v214 = vunpack.c.l.b16 %v183
      %v215 = vunpack.c.l.b16 %v184
      %v216 = vpack.c.b16 %v215, %v214
      %vm218 = vcmask 130048
      %v220 = vsel %vm218, %v208, 0
      %v223 = vsel %vm218, %v209, 0
      %v226 = vsel %vm218, %v210, 0
      %v229 = vsel %vm218, %v211, 0
      %231 = vmatprep.subr.bf16.mxu0 0
      %232 = vmatpush1.bf16.msra.mxu0 %v216
      %233 = vmatprep.subr.bf16.mxu0 0
      %234 = vmatpush1.bf16.msra.mxu0 0
      %235 = vmatprep.subr.bf16.mxu0 0
      %236 = vmatpush1.bf16.msra.mxu0 0
      %237 = vmatprep.subr.bf16.mxu0 0
      %238 = vmatpush1.bf16.msra.mxu0 0
      %239 = vmatprep.subr.bf16.mxu0 0
      %240 = vmatpush1.bf16.msra.mxu0 0
      %241 = vmatprep.subr.bf16.mxu0 0
      %242 = vmatpush1.bf16.msra.mxu0 0
      %243 = vmatprep.subr.bf16.mxu0 0
      %244 = vmatpush1.bf16.msra.mxu0 0
      %245 = vmatprep.subr.bf16.mxu0 0
      %246 = vmatpush1.bf16.msra.mxu0 0
      %247 = vmatprep.subr.bf16.mxu0 0
      %248 = vmatpush1.bf16.msra.mxu0 0
      %249 = vmatprep.subr.bf16.mxu0 0
      %250 = vmatpush1.bf16.msra.mxu0 0
      %251 = vmatprep.subr.bf16.mxu0 0
      %252 = vmatpush1.bf16.msra.mxu0 0
      %253 = vmatprep.subr.bf16.mxu0 0
      %254 = vmatpush1.bf16.msra.mxu0 0
      %255 = vmatprep.subr.bf16.mxu0 0
      %256 = vmatpush1.bf16.msra.mxu0 0
      %257 = vmatprep.subr.bf16.mxu0 0
      %258 = vmatpush1.bf16.msra.mxu0 0
      %259 = vmatprep.subr.bf16.mxu0 0
      %260 = vmatpush1.bf16.msra.mxu0 0
      %261 = vmatprep.subr.bf16.mxu0 0
      %262 = vmatpush1.bf16.msra.mxu0 0
      %263 = vmatprep.mubr.bf16.mxu0 0
      %264 = vmatmul.mubr.bf16.gmra.mrb[0].mxu0 %v220
      %v265 = vpop.f32.mrb[0].mxu0
      %v266 = vadd.f32 %v190, %v265
      %v267 = vpop.f32.mrb[0].mxu0
      %v268 = vpop.f32.mrb[0].mxu0
      %v269 = vadd.f32 %v190, %v268
      %v270 = vpop.f32.mrb[0].mxu0
      %271 = vmatprep.mubr.bf16.mxu0 0
      %272 = vmatmul.mubr.bf16.gmra.mrb[0].mxu0 %v223
      %v273 = vpop.f32.mrb[0].mxu0
      %v274 = vadd.f32 %v190, %v273
      %v275 = vpop.f32.mrb[0].mxu0
      %v276 = vpop.f32.mrb[0].mxu0
      %v277 = vadd.f32 %v190, %v276
      %v278 = vpop.f32.mrb[0].mxu0
      %279 = vmatprep.mubr.bf16.mxu0 0
      %280 = vmatmul.mubr.bf16.gmra.mrb[0].mxu0 %v226
      %v281 = vpop.f32.mrb[0].mxu0
      %v282 = vadd.f32 %v190, %v281
      %v283 = vpop.f32.mrb[0].mxu0
      %v284 = vpop.f32.mrb[0].mxu0
      %v285 = vadd.f32 %v190, %v284
      %v286 = vpop.f32.mrb[0].mxu0
      %287 = vmatprep.mubr.bf16.mxu0 0
      %288 = vmatmul.mubr.bf16.gmra.mrb[0].mxu0 %v229
      %v289 = vpop.f32.mrb[0].mxu0
      %v290 = vadd.f32 %v190, %v289
      %v291 = vpop.f32.mrb[0].mxu0
      %v292 = vpop.f32.mrb[0].mxu0
      %v293 = vadd.f32 %v190, %v292
      %v294 = vpop.f32.mrb[0].mxu0
      %295 = vdwg.mxu0
      %v296 = vmax.f32 %v266, 0.0
      %v297 = vmax.f32 %v269, 0.0
      %v298 = vmax.f32 %v274, 0.0
      %v299 = vmax.f32 %v277, 0.0
      %v300 = vmax.f32 %v282, 0.0
      %v301 = vmax.f32 %v285, 0.0
      %v302 = vmax.f32 %v290, 0.0
      %v303 = vmax.f32 %v293, 0.0
      %v304 = vpack.c.bf16 %v297, %v296
      %v305 = vpack.c.bf16 %v299, %v298
      %v306 = vpack.c.bf16 %v301, %v300
      %v307 = vpack.c.bf16 %v303, %v302
      %v312 = vunpack.c.l.b16 %v304
      %v313 = vunpack.c.h.b16 %v304
      %v314 = vunpack.c.l.b16 %v305
      %v315 = vunpack.c.h.b16 %v305
      %v316 = vunpack.c.l.b16 %v306
      %v317 = vunpack.c.h.b16 %v306
      %v318 = vunpack.c.l.b16 %v307
      %v319 = vunpack.c.h.b16 %v307
      %v320 = vpack.c.b16 %v312, %v312
      %v321 = vpack.c.b16 %v313, %v313
      %v322 = vpack.c.b16 %v314, %v314
      %v323 = vpack.c.b16 %v315, %v315
      %v324 = vpack.c.b16 %v316, %v316
      %v325 = vpack.c.b16 %v317, %v317
      %v326 = vpack.c.b16 %v318, %v318
      %v327 = vpack.c.b16 %v319, %v319
      %336 = vst [vmem:[%s172] sm:$0xf] %v320
      %337 = vst [vmem:[%s172 + $0x4] sm:$0xf] %v321
      %338 = vst [vmem:[%s172 + $0x8] sm:$0xf] %v322
      %339 = vst [vmem:[%s172 + $0xc] sm:$0xf] %v323
      %340 = vst [vmem:[%s172 + $0x10] sm:$0xf] %v324
      %341 = vst [vmem:[%s172 + $0x14] sm:$0xf] %v325
      %342 = vst [vmem:[%s172 + $0x18] sm:$0xf] %v326
      %343 = vst [vmem:[%s172 + $0x1c] sm:$0xf] %v327
      %s344 = smul.u32 8, %s14
      %p345 = scmp.lt.s32.totalorder %s344, 15
      %s346 = scalar_select %p345, %s344, 15
      %s347 = smul.addr %s346, 4
      %s348 = scalar_lea.vmem %s3, %s347
      // Predicated region
      $region33: #{cvae_encoder_forward.3} parent=31 // pred_check
        %p349 = pneg %p100
      $region34: #{cvae_encoder_forward.3} parent=31 // pred_check_branch
        %351 = sbr.rel (%p349) target = $region36
      $region35: #{cvae_encoder_forward.3} parent=31 // pred_region
        %s352 = smul.u32 8, %s14
      $region36: #{cvae_encoder_forward.3} parent=31 // pred_fallthru
        _
    $region32: #{cvae_encoder_forward.3} parent=5 // pred_fallthru
      _
    %p353 = scmp.le.s32.totalorder 2, %s9
    // Predicated region
    $region37: #{cvae_encoder_forward.3} parent=5 // pred_check
      %p354 = pneg %p353
    $region38: #{cvae_encoder_forward.3} parent=5 // pred_check_branch
      %356 = sbr.rel (%p354) target = $region40
    $region39: #{cvae_encoder_forward.3} parent=5 // pred_region
      %s357 = ssub.s32 %s9, 2
      // Predicated region
      $region41: #{cvae_encoder_forward.3} parent=39 // pred_check
        %p358 = pneg %p106
      $region42: #{cvae_encoder_forward.3} parent=39 // pred_check_branch
        %360 = sbr.rel (%p358) target = $region44
      $region43: #{cvae_encoder_forward.3} parent=39 // pred_region
        %s361 = smul.u32 8, %s15
        %p362 = scmp.lt.s32.totalorder %s361, 15
        %s363 = scalar_select %p362, %s361, 15
        %s364 = smul.addr %s363, 4
        %s365 = scalar_lea.vmem %s3, %s364
      $region44: #{cvae_encoder_forward.3} parent=39 // pred_fallthru
        _
    $region40: #{cvae_encoder_forward.3} parent=5 // pred_fallthru
      _
  $region6: #{cvae_encoder_forward.3} parent=0 // loop_footer
    %s13 = sadd.s32 1, %s9
  $region7: #{cvae_encoder_forward.3} parent=0 // loop_footer_branch
    %8 = sbr.rel target = $region3
  $region8: #{cvae_encoder_forward.3} parent=0 // loop_exit
    _

// kernel: cvae_encoder_forward.4
$region0: #{cvae_encoder_forward.4}
  #allocation0 [shape = 'u32[]', space=smem, size = 0x4, offset = 0x4, fixed_abs, tag = 'smem constant byte address 0x4 - core index']
  #allocation1 [shape = 'u32[144,128]{1,0:T(1,128)}', space=vmem, size = 0x12000, scoped, tag = 'internal scratch']
  %s0 = inlined_call_operand.vmem [shape: bf16[32,256], index: 0, kind: input, shape index: {}]
  %s1 = inlined_call_operand.vmem [shape: bf16[256,128], index: 1, kind: input, shape index: {}]
  %s2 = inlined_call_operand.vmem [shape: f32[1,128], index: 2, kind: input, shape index: {}]
  %s3 = inlined_call_operand.vmem [shape: bf16[32,128], index: 3, kind: output, shape index: {}]
  %s4 = sld [smem:[#allocation0]]
  $region45: #{cvae_encoder_forward.4} parent=0
    _
  %s6 = ssub.s32 1, %s4
  %s7 = scalar_select 0, %s6, %s4
  loop: start=0, step=1, limit=4
  $region2: #{cvae_encoder_forward.4} parent=0 // loop_pre_header
    _
  $region3: #{cvae_encoder_forward.4} parent=0 // loop_header
    %s9 = sphi 0, %s13
    %p10 = scmp.ge.s32.totalorder %s9, 4
    %s19 = sphi 0, %s21
    %s22 = sphi 0, %s19
    %s23 = sphi 0, %s22
    %s39 = sphi 0, %s23
    %s43 = sphi 0, %s43
    %s45 = sphi 0, %s43
    %s46 = sphi 0, %s45
    %s60 = sphi 0, %s46
    %s64 = sphi 0, %s64
    %s66 = sphi 0, %s64
    %s67 = sphi 0, %s66
    %s81 = sphi 0, %s67
    %s87 = sphi 0, %s89
    %s90 = sphi 0, %s87
    %s91 = sphi 0, %s90
    %s107 = sphi 0, %s91
  $region4: #{cvae_encoder_forward.4} parent=0 // loop_header_branch
    %12 = sbr.rel (%p10) target = $region8
  $region5: #{cvae_encoder_forward.4} parent=0 // loop_body
    %s14 = ssub.s32 %s9, 1
    %s15 = ssub.s32 %s9, 2
    %s16 = sadd.s32 %s9, 1
    %s17 = ssub.s32 %s9, %s16
    %p18 = scmp.eq.s32.totalorder %s17, 0
    %s20 = sadd.s32 %s19, 1
    %s21 = scalar_select %p18, %s19, %s20
    %p24 = pneg %p18
    %p25 = scmp.eq.s32.totalorder %s9, 1
    %p26 = por %p24, %p25
    %p27 = scmp.ne.s32.totalorder %s19, %s22
    %p28 = scmp.eq.s32.totalorder %s9, 0
    %p29 = por %p27, %p28
    %p30 = scmp.ne.s32.totalorder %s19, %s22
    %p31 = scmp.eq.s32.totalorder %s14, 1
    %p32 = por %p30, %p31
    %p33 = scmp.ne.s32.totalorder %s22, %s23
    %p34 = scmp.eq.s32.totalorder %s14, 0
    %p35 = por %p33, %p34
    %p36 = scmp.ne.s32.totalorder %s22, %s23
    %p37 = scmp.eq.s32.totalorder %s15, 1
    %p38 = por %p36, %p37
    %p40 = scmp.ne.s32.totalorder %s23, %s39
    %p41 = scmp.eq.s32.totalorder %s15, 0
    %p42 = por %p40, %p41
    %s44 = sadd.s32 %s43, 1
    %p47 = scmp.eq.s32.totalorder %s9, 1
    %p48 = scmp.ne.s32.totalorder %s43, %s45
    %p49 = scmp.eq.s32.totalorder %s9, 0
    %p50 = por %p48, %p49
    %p51 = scmp.ne.s32.totalorder %s43, %s45
    %p52 = scmp.eq.s32.totalorder %s14, 1
    %p53 = por %p51, %p52
    %p54 = scmp.ne.s32.totalorder %s45, %s46
    %p55 = scmp.eq.s32.totalorder %s14, 0
    %p56 = por %p54, %p55
    %p57 = scmp.ne.s32.totalorder %s45, %s46
    %p58 = scmp.eq.s32.totalorder %s15, 1
    %p59 = por %p57, %p58
    %p61 = scmp.ne.s32.totalorder %s46, %s60
    %p62 = scmp.eq.s32.totalorder %s15, 0
    %p63 = por %p61, %p62
    %s65 = sadd.s32 %s64, 1
    %p68 = scmp.eq.s32.totalorder %s9, 1
    %p69 = scmp.ne.s32.totalorder %s64, %s66
    %p70 = scmp.eq.s32.totalorder %s9, 0
    %p71 = por %p69, %p70
    %p72 = scmp.ne.s32.totalorder %s64, %s66
    %p73 = scmp.eq.s32.totalorder %s14, 1
    %p74 = por %p72, %p73
    %p75 = scmp.ne.s32.totalorder %s66, %s67
    %p76 = scmp.eq.s32.totalorder %s14, 0
    %p77 = por %p75, %p76
    %p78 = scmp.ne.s32.totalorder %s66, %s67
    %p79 = scmp.eq.s32.totalorder %s15, 1
    %p80 = por %p78, %p79
    %p82 = scmp.ne.s32.totalorder %s67, %s81
    %p83 = scmp.eq.s32.totalorder %s15, 0
    %p84 = por %p82, %p83
    %s85 = ssub.s32 %s9, %s16
    %p86 = scmp.eq.s32.totalorder %s85, 0
    %s88 = sadd.s32 %s87, 1
    %s89 = scalar_select %p86, %s87, %s88
    %p92 = pneg %p86
    %p93 = scmp.eq.s32.totalorder %s9, 1
    %p94 = por %p92, %p93
    %p95 = scmp.ne.s32.totalorder %s87, %s90
    %p96 = scmp.eq.s32.totalorder %s9, 0
    %p97 = por %p95, %p96
    %p98 = scmp.ne.s32.totalorder %s87, %s90
    %p99 = scmp.eq.s32.totalorder %s14, 1
    %p100 = por %p98, %p99
    %p101 = scmp.ne.s32.totalorder %s90, %s91
    %p102 = scmp.eq.s32.totalorder %s14, 0
    %p103 = por %p101, %p102
    %p104 = scmp.ne.s32.totalorder %s90, %s91
    %p105 = scmp.eq.s32.totalorder %s15, 1
    %p106 = por %p104, %p105
    %p108 = scmp.ne.s32.totalorder %s91, %s107
    %p109 = scmp.eq.s32.totalorder %s15, 0
    %p110 = por %p108, %p109
    %p111 = scmp.le.s32.totalorder 1, %s9
    %p112 = scmp.lt.s32.totalorder %s9, 3
    %p113 = pnand %p111, %p112
    %p114 = pneg %p113
    // Predicated region
    $region9: #{cvae_encoder_forward.4} parent=5 // pred_check
      _
    $region10: #{cvae_encoder_forward.4} parent=5 // pred_check_branch
      %116 = sbr.rel (%p113) target = $region12
    $region11: #{cvae_encoder_forward.4} parent=5 // pred_region
      %s117 = ssub.s32 %s9, 1
      // Predicated region
      $region13: #{cvae_encoder_forward.4} parent=11 // pred_check
        %p118 = pneg %p56
      $region14: #{cvae_encoder_forward.4} parent=11 // pred_check_branch
        %120 = sbr.rel (%p118) target = $region16
      $region15: #{cvae_encoder_forward.4} parent=11 // pred_region
        _
      $region16: #{cvae_encoder_forward.4} parent=11 // pred_fallthru
        _
      // Predicated region
      $region17: #{cvae_encoder_forward.4} parent=11 // pred_check
        %p121 = pneg %p77
      $region18: #{cvae_encoder_forward.4} parent=11 // pred_check_branch
        %123 = sbr.rel (%p121) target = $region20
      $region19: #{cvae_encoder_forward.4} parent=11 // pred_region
        _
      $region20: #{cvae_encoder_forward.4} parent=11 // pred_fallthru
        _
    $region12: #{cvae_encoder_forward.4} parent=5 // pred_fallthru
      _
    %p124 = scmp.lt.s32.totalorder %s9, 2
    // Predicated region
    $region21: #{cvae_encoder_forward.4} parent=5 // pred_check
      %p125 = pneg %p124
    $region22: #{cvae_encoder_forward.4} parent=5 // pred_check_branch
      %127 = sbr.rel (%p125) target = $region24
    $region23: #{cvae_encoder_forward.4} parent=5 // pred_region
      // Predicated region
      $region25: #{cvae_encoder_forward.4} parent=23 // pred_check
        %p128 = pneg %p29
      $region26: #{cvae_encoder_forward.4} parent=23 // pred_check_branch
        %130 = sbr.rel (%p128) target = $region28
      $region27: #{cvae_encoder_forward.4} parent=23 // pred_region
        %s131 = smul.u32 2, %s9
        %p132 = scmp.lt.s32.totalorder %s131, 3
        %s133 = scalar_select %p132, %s131, 3
        %s134 = smul.addr %s133, 2
        %s135 = smul.addr %s134, 4
        %s136 = scalar_lea.vmem %s0, %s135
        %s137 = smul.u32 2, %s9
      $region28: #{cvae_encoder_forward.4} parent=23 // pred_fallthru
        _
    $region24: #{cvae_encoder_forward.4} parent=5 // pred_fallthru
      _
    %p138 = scmp.le.s32.totalorder 1, %s9
    %p139 = scmp.lt.s32.totalorder %s9, 3
    %p140 = pnand %p138, %p139
    %p141 = pneg %p140
    // Predicated region
    $region29: #{cvae_encoder_forward.4} parent=5 // pred_check
      _
    $region30: #{cvae_encoder_forward.4} parent=5 // pred_check_branch
      %143 = sbr.rel (%p140) target = $region32
    $region31: #{cvae_encoder_forward.4} parent=5 // pred_region
      %s144 = ssub.s32 %s9, 1
      %s145 = smul.u32 2, %s14
      %p146 = scmp.lt.s32.totalorder %s145, 3
      %s147 = scalar_select %p146, %s145, 3
      %s148 = smul.addr %s147, 2
      %s149 = smul.addr %s148, 4
      %s150 = scalar_lea.vmem %s0, %s149
      %p151 = pneg %p35
      %p152 = pneg %p32
      %p153 = pneg %p56
      %p154 = pneg %p53
      %p155 = pneg %p77
      %p156 = pneg %p74
      %p157 = pneg %p103
      %p158 = pneg %p100
      %s159 = smul.u32 2, %s14
      %p160 = scmp.lt.s32.totalorder %s159, 3
      %s161 = scalar_select %p160, %s159, 3
      %s162 = smul.addr %s161, 4
      %s163 = scalar_lea.vmem %s3, %s162
      %s164 = smul.u32 2, %s14
      %p165 = scmp.lt.s32.totalorder %s164, 3
      %s166 = scalar_select %p165, %s164, 3
      %s167 = smul.addr %s166, 2
      %s168 = smul.addr %s167, 4
      %s169 = scalar_lea.vmem %s0, %s168
      %s170 = smul.u32 2, %s14
      %s171 = smul.u32 2, %s14
      %p172 = scmp.lt.s32.totalorder %s171, 3
      %s173 = scalar_select %p172, %s171, 3
      %s174 = smul.addr %s173, 4
      %s175 = scalar_lea.vmem %s3, %s174
      %s176 = smul.u32 2, %s14
      %v178 = vld [vmem:[%s169] sm:$0xff]
      %v179 = vld [vmem:[%s169 + $0x8] sm:$0xff]
      %v180 = vld [vmem:[%s1] sm:$0xf]
      %v181 = vld [vmem:[%s1 + $0x4] sm:$0xf]
      %v182 = vld [vmem:[%s1 + $0x8] sm:$0xf]
      %v183 = vld [vmem:[%s1 + $0xc] sm:$0xf]
      %v184 = vld [vmem:[%s1 + $0x10] sm:$0xf]
      %v185 = vld [vmem:[%s1 + $0x14] sm:$0xf]
      %v186 = vld [vmem:[%s1 + $0x18] sm:$0xf]
      %v187 = vld [vmem:[%s1 + $0x1c] sm:$0xf]
      %v188 = vld [vmem:[%s1 + $0x20] sm:$0xf]
      %v189 = vld [vmem:[%s1 + $0x24] sm:$0xf]
      %v190 = vld [vmem:[%s1 + $0x28] sm:$0xf]
      %v191 = vld [vmem:[%s1 + $0x2c] sm:$0xf]
      %v192 = vld [vmem:[%s1 + $0x30] sm:$0xf]
      %v193 = vld [vmem:[%s1 + $0x34] sm:$0xf]
      %v194 = vld [vmem:[%s1 + $0x38] sm:$0xf]
      %v195 = vld [vmem:[%s1 + $0x3c] sm:$0xf]
      %v196 = vld [vmem:[%s1 + $0x40] sm:$0xf]
      %v197 = vld [vmem:[%s1 + $0x44] sm:$0xf]
      %v198 = vld [vmem:[%s1 + $0x48] sm:$0xf]
      %v199 = vld [vmem:[%s1 + $0x4c] sm:$0xf]
      %v200 = vld [vmem:[%s1 + $0x50] sm:$0xf]
      %v201 = vld [vmem:[%s1 + $0x54] sm:$0xf]
      %v202 = vld [vmem:[%s1 + $0x58] sm:$0xf]
      %v203 = vld [vmem:[%s1 + $0x5c] sm:$0xf]
      %v204 = vld [vmem:[%s1 + $0x60] sm:$0xf]
      %v205 = vld [vmem:[%s1 + $0x64] sm:$0xf]
      %v206 = vld [vmem:[%s1 + $0x68] sm:$0xf]
      %v207 = vld [vmem:[%s1 + $0x6c] sm:$0xf]
      %v208 = vld [vmem:[%s1 + $0x70] sm:$0xf]
      %v209 = vld [vmem:[%s1 + $0x74] sm:$0xf]
      %v210 = vld [vmem:[%s1 + $0x78] sm:$0xf]
      %v211 = vld [vmem:[%s1 + $0x7c] sm:$0xf]
      %v212 = vld [vmem:[%s2] sm:$0x1]
      %v214 = vlaneseq
      %v215 = vshrl.u32 %v214, 7
      %v216 = vsub.s32 0, %v215
      %v217 = vrot.slane %v212, %v216
      %v221 = vunpack.c.l.b16 %v178
      %v222 = vunpack.c.h.b16 %v178
      %v223 = vunpack.c.l.b16 %v179
      %v224 = vunpack.c.h.b16 %v179
      %v225 = vpack.c.b16 %v223, %v221
      %v226 = vpack.c.b16 %v224, %v222
      %v261 = vunpack.c.l.b16 %v180
      %v262 = vunpack.c.l.b16 %v181
      %v263 = vunpack.c.l.b16 %v182
      %v264 = vunpack.c.l.b16 %v183
      %v265 = vunpack.c.l.b16 %v184
      %v266 = vunpack.c.l.b16 %v185
      %v267 = vunpack.c.l.b16 %v186
      %v268 = vunpack.c.l.b16 %v187
      %v269 = vunpack.c.l.b16 %v188
      %v270 = vunpack.c.l.b16 %v189
      %v271 = vunpack.c.l.b16 %v190
      %v272 = vunpack.c.l.b16 %v191
      %v273 = vunpack.c.l.b16 %v192
      %v274 = vunpack.c.l.b16 %v193
      %v275 = vunpack.c.l.b16 %v194
      %v276 = vunpack.c.l.b16 %v195
      %v277 = vunpack.c.l.b16 %v196
      %v278 = vunpack.c.l.b16 %v197
      %v279 = vunpack.c.l.b16 %v198
      %v280 = vunpack.c.l.b16 %v199
      %v281 = vunpack.c.l.b16 %v200
      %v282 = vunpack.c.l.b16 %v201
      %v283 = vunpack.c.l.b16 %v202
      %v284 = vunpack.c.l.b16 %v203
      %v285 = vunpack.c.l.b16 %v204
      %v286 = vunpack.c.l.b16 %v205
      %v287 = vunpack.c.l.b16 %v206
      %v288 = vunpack.c.l.b16 %v207
      %v289 = vunpack.c.l.b16 %v208
      %v290 = vunpack.c.l.b16 %v209
      %v291 = vunpack.c.l.b16 %v210
      %v292 = vunpack.c.l.b16 %v211
      %v293 = vpack.c.b16 %v262, %v261
      %v294 = vpack.c.b16 %v264, %v263
      %v295 = vpack.c.b16 %v266, %v265
      %v296 = vpack.c.b16 %v268, %v267
      %v297 = vpack.c.b16 %v270, %v269
      %v298 = vpack.c.b16 %v272, %v271
      %v299 = vpack.c.b16 %v274, %v273
      %v300 = vpack.c.b16 %v276, %v275
      %v301 = vpack.c.b16 %v278, %v277
      %v302 = vpack.c.b16 %v280, %v279
      %v303 = vpack.c.b16 %v282, %v281
      %v304 = vpack.c.b16 %v284, %v283
      %v305 = vpack.c.b16 %v286, %v285
      %v306 = vpack.c.b16 %v288, %v287
      %v307 = vpack.c.b16 %v290, %v289
      %v308 = vpack.c.b16 %v292, %v291
      %325 = vmatprep.subr.bf16.mxu0 0
      %326 = vmatpush1.bf16.msra.mxu0 %v293
      %327 = vmatprep.subr.bf16.mxu0 0
      %328 = vmatpush1.bf16.msra.mxu0 %v294
      %329 = vmatprep.subr.bf16.mxu0 0
      %330 = vmatpush1.bf16.msra.mxu0 %v295
      %331 = vmatprep.subr.bf16.mxu0 0
      %332 = vmatpush1.bf16.msra.mxu0 %v296
      %333 = vmatprep.subr.bf16.mxu0 0
      %334 = vmatpush1.bf16.msra.mxu0 %v297
      %335 = vmatprep.subr.bf16.mxu0 0
      %336 = vmatpush1.bf16.msra.mxu0 %v298
      %337 = vmatprep.subr.bf16.mxu0 0
      %338 = vmatpush1.bf16.msra.mxu0 %v299
      %339 = vmatprep.subr.bf16.mxu0 0
      %340 = vmatpush1.bf16.msra.mxu0 %v300
      %341 = vmatprep.subr.bf16.mxu0 0
      %342 = vmatpush1.bf16.msra.mxu0 %v301
      %343 = vmatprep.subr.bf16.mxu0 0
      %344 = vmatpush1.bf16.msra.mxu0 %v302
      %345 = vmatprep.subr.bf16.mxu0 0
      %346 = vmatpush1.bf16.msra.mxu0 %v303
      %347 = vmatprep.subr.bf16.mxu0 0
      %348 = vmatpush1.bf16.msra.mxu0 %v304
      %349 = vmatprep.subr.bf16.mxu0 0
      %350 = vmatpush1.bf16.msra.mxu0 %v305
      %351 = vmatprep.subr.bf16.mxu0 0
      %352 = vmatpush1.bf16.msra.mxu0 %v306
      %353 = vmatprep.subr.bf16.mxu0 0
      %354 = vmatpush1.bf16.msra.mxu0 %v307
      %355 = vmatprep.subr.bf16.mxu0 0
      %356 = vmatpush1.bf16.msra.mxu0 %v308
      %357 = vmatprep.mubr.bf16.mxu0 %v226
      %358 = vmatmul.mubr.bf16.gmra.mrb[0].mxu0 %v225
      %v359 = vpop.f32.mrb[0].mxu0
      %v360 = vadd.f32 %v217, %v359
      %v361 = vpop.f32.mrb[0].mxu0
      %v362 = vpop.f32.mrb[0].mxu0
      %v363 = vadd.f32 %v217, %v362
      %v364 = vpop.f32.mrb[0].mxu0
      %365 = vdwg.mxu0
      %v366 = vmax.f32 %v360, 0.0
      %v367 = vmax.f32 %v363, 0.0
      %v368 = vpack.c.bf16 %v367, %v366
      %v370 = vunpack.c.l.b16 %v368
      %v371 = vunpack.c.h.b16 %v368
      %v372 = vpack.c.b16 %v370, %v370
      %v373 = vpack.c.b16 %v371, %v371
      %376 = vst [vmem:[%s175] sm:$0xf] %v372
      %377 = vst [vmem:[%s175 + $0x4] sm:$0xf] %v373
      %s378 = smul.u32 2, %s14
      %p379 = scmp.lt.s32.totalorder %s378, 3
      %s380 = scalar_select %p379, %s378, 3
      %s381 = smul.addr %s380, 4
      %s382 = scalar_lea.vmem %s3, %s381
      // Predicated region
      $region33: #{cvae_encoder_forward.4} parent=31 // pred_check
        %p383 = pneg %p100
      $region34: #{cvae_encoder_forward.4} parent=31 // pred_check_branch
        %385 = sbr.rel (%p383) target = $region36
      $region35: #{cvae_encoder_forward.4} parent=31 // pred_region
        %s386 = smul.u32 2, %s14
      $region36: #{cvae_encoder_forward.4} parent=31 // pred_fallthru
        _
    $region32: #{cvae_encoder_forward.4} parent=5 // pred_fallthru
      _
    %p387 = scmp.le.s32.totalorder 2, %s9
    // Predicated region
    $region37: #{cvae_encoder_forward.4} parent=5 // pred_check
      %p388 = pneg %p387
    $region38: #{cvae_encoder_forward.4} parent=5 // pred_check_branch
      %390 = sbr.rel (%p388) target = $region40
    $region39: #{cvae_encoder_forward.4} parent=5 // pred_region
      %s391 = ssub.s32 %s9, 2
      // Predicated region
      $region41: #{cvae_encoder_forward.4} parent=39 // pred_check
        %p392 = pneg %p106
      $region42: #{cvae_encoder_forward.4} parent=39 // pred_check_branch
        %394 = sbr.rel (%p392) target = $region44
      $region43: #{cvae_encoder_forward.4} parent=39 // pred_region
        %s395 = smul.u32 2, %s15
        %p396 = scmp.lt.s32.totalorder %s395, 3
        %s397 = scalar_select %p396, %s395, 3
        %s398 = smul.addr %s397, 4
        %s399 = scalar_lea.vmem %s3, %s398
      $region44: #{cvae_encoder_forward.4} parent=39 // pred_fallthru
        _
    $region40: #{cvae_encoder_forward.4} parent=5 // pred_fallthru
      _
  $region6: #{cvae_encoder_forward.4} parent=0 // loop_footer
    %s13 = sadd.s32 1, %s9
  $region7: #{cvae_encoder_forward.4} parent=0 // loop_footer_branch
    %8 = sbr.rel target = $region3
  $region8: #{cvae_encoder_forward.4} parent=0 // loop_exit
    _

// kernel: cvae_encoder_forward.5
$region0: #{cvae_encoder_forward.5}
  #allocation0 [shape = 'u32[]', space=smem, size = 0x4, offset = 0x4, fixed_abs, tag = 'smem constant byte address 0x4 - core index']
  #allocation1 [shape = 'u32[144,128]{1,0:T(1,128)}', space=vmem, size = 0x12000, scoped, tag = 'internal scratch']
  #allocation2 [shape = 'bf16[26,128]{1,0:T(8,128)(2,1)}', space=vmem, size = 0x2000, scoped, tag = 'scratch operand']
  %s0 = inlined_call_operand.vmem [shape: bf16[32,128], index: 0, kind: input, shape index: {}]
  %s1 = inlined_call_operand.vmem [shape: bf16[9,128,128], index: 1, kind: input, shape index: {}]
  %s2 = inlined_call_operand.vmem [shape: f32[1,128], index: 2, kind: input, shape index: {}]
  %s3 = inlined_call_operand.vmem [shape: bf16[9,128,128], index: 3, kind: input, shape index: {}]
  %s4 = inlined_call_operand.vmem [shape: f32[1,128], index: 4, kind: input, shape index: {}]
  %s5 = inlined_call_operand.vmem [shape: bf16[9,128,128], index: 5, kind: input, shape index: {}]
  %s6 = inlined_call_operand.vmem [shape: f32[1,128], index: 6, kind: input, shape index: {}]
  %s7 = inlined_call_operand.vmem [shape: bf16[9,128,128], index: 7, kind: input, shape index: {}]
  %s8 = inlined_call_operand.vmem [shape: f32[1,128], index: 8, kind: input, shape index: {}]
  %s9 = inlined_call_operand.vmem [shape: bf16[128,128], index: 9, kind: input, shape index: {}]
  %s10 = inlined_call_operand.vmem [shape: f32[1,128], index: 10, kind: input, shape index: {}]
  %s11 = inlined_call_operand.vmem [shape: f32[32,128], index: 11, kind: output, shape index: {}]
  %s12 = sld [smem:[#allocation0]]
  $region77: #{cvae_encoder_forward.5} parent=0
    _
  %s14 = ssub.s32 1, %s12
  %s15 = scalar_select 0, %s14, %s12
  loop: start=0, step=1, limit=4
  $region2: #{cvae_encoder_forward.5} parent=0 // loop_pre_header
    _
  $region3: #{cvae_encoder_forward.5} parent=0 // loop_header
    %s17 = sphi 0, %s21
    %p18 = scmp.ge.s32.totalorder %s17, 4
    %s27 = sphi 0, %s29
    %s30 = sphi 0, %s27
    %s31 = sphi 0, %s30
    %s47 = sphi 0, %s31
    %s51 = sphi 0, %s51
    %s53 = sphi 0, %s51
    %s54 = sphi 0, %s53
    %s68 = sphi 0, %s54
    %s72 = sphi 0, %s72
    %s74 = sphi 0, %s72
    %s75 = sphi 0, %s74
    %s89 = sphi 0, %s75
    %s93 = sphi 0, %s93
    %s95 = sphi 0, %s93
    %s96 = sphi 0, %s95
    %s110 = sphi 0, %s96
    %s114 = sphi 0, %s114
    %s116 = sphi 0, %s114
    %s117 = sphi 0, %s116
    %s131 = sphi 0, %s117
    %s135 = sphi 0, %s135
    %s137 = sphi 0, %s135
    %s138 = sphi 0, %s137
    %s152 = sphi 0, %s138
    %s156 = sphi 0, %s156
    %s158 = sphi 0, %s156
    %s159 = sphi 0, %s158
    %s173 = sphi 0, %s159
    %s177 = sphi 0, %s177
    %s179 = sphi 0, %s177
    %s180 = sphi 0, %s179
    %s194 = sphi 0, %s180
    %s198 = sphi 0, %s198
    %s200 = sphi 0, %s198
    %s201 = sphi 0, %s200
    %s215 = sphi 0, %s201
    %s219 = sphi 0, %s219
    %s221 = sphi 0, %s219
    %s222 = sphi 0, %s221
    %s236 = sphi 0, %s222
    %s240 = sphi 0, %s240
    %s242 = sphi 0, %s240
    %s243 = sphi 0, %s242
    %s257 = sphi 0, %s243
    %s263 = sphi 0, %s265
    %s266 = sphi 0, %s263
    %s267 = sphi 0, %s266
    %s283 = sphi 0, %s267
  $region4: #{cvae_encoder_forward.5} parent=0 // loop_header_branch
    %20 = sbr.rel (%p18) target = $region8
  $region5: #{cvae_encoder_forward.5} parent=0 // loop_body
    %s22 = ssub.s32 %s17, 1
    %s23 = ssub.s32 %s17, 2
    %s24 = sadd.s32 %s17, 1
    %s25 = ssub.s32 %s17, %s24
    %p26 = scmp.eq.s32.totalorder %s25, 0
    %s28 = sadd.s32 %s27, 1
    %s29 = scalar_select %p26, %s27, %s28
    %p32 = pneg %p26
    %p33 = scmp.eq.s32.totalorder %s17, 1
    %p34 = por %p32, %p33
    %p35 = scmp.ne.s32.totalorder %s27, %s30
    %p36 = scmp.eq.s32.totalorder %s17, 0
    %p37 = por %p35, %p36
    %p38 = scmp.ne.s32.totalorder %s27, %s30
    %p39 = scmp.eq.s32.totalorder %s22, 1
    %p40 = por %p38, %p39
    %p41 = scmp.ne.s32.totalorder %s30, %s31
    %p42 = scmp.eq.s32.totalorder %s22, 0
    %p43 = por %p41, %p42
    %p44 = scmp.ne.s32.totalorder %s30, %s31
    %p45 = scmp.eq.s32.totalorder %s23, 1
    %p46 = por %p44, %p45
    %p48 = scmp.ne.s32.totalorder %s31, %s47
    %p49 = scmp.eq.s32.totalorder %s23, 0
    %p50 = por %p48, %p49
    %s52 = sadd.s32 %s51, 1
    %p55 = scmp.eq.s32.totalorder %s17, 1
    %p56 = scmp.ne.s32.totalorder %s51, %s53
    %p57 = scmp.eq.s32.totalorder %s17, 0
    %p58 = por %p56, %p57
    %p59 = scmp.ne.s32.totalorder %s51, %s53
    %p60 = scmp.eq.s32.totalorder %s22, 1
    %p61 = por %p59, %p60
    %p62 = scmp.ne.s32.totalorder %s53, %s54
    %p63 = scmp.eq.s32.totalorder %s22, 0
    %p64 = por %p62, %p63
    %p65 = scmp.ne.s32.totalorder %s53, %s54
    %p66 = scmp.eq.s32.totalorder %s23, 1
    %p67 = por %p65, %p66
    %p69 = scmp.ne.s32.totalorder %s54, %s68
    %p70 = scmp.eq.s32.totalorder %s23, 0
    %p71 = por %p69, %p70
    %s73 = sadd.s32 %s72, 1
    %p76 = scmp.eq.s32.totalorder %s17, 1
    %p77 = scmp.ne.s32.totalorder %s72, %s74
    %p78 = scmp.eq.s32.totalorder %s17, 0
    %p79 = por %p77, %p78
    %p80 = scmp.ne.s32.totalorder %s72, %s74
    %p81 = scmp.eq.s32.totalorder %s22, 1
    %p82 = por %p80, %p81
    %p83 = scmp.ne.s32.totalorder %s74, %s75
    %p84 = scmp.eq.s32.totalorder %s22, 0
    %p85 = por %p83, %p84
    %p86 = scmp.ne.s32.totalorder %s74, %s75
    %p87 = scmp.eq.s32.totalorder %s23, 1
    %p88 = por %p86, %p87
    %p90 = scmp.ne.s32.totalorder %s75, %s89
    %p91 = scmp.eq.s32.totalorder %s23, 0
    %p92 = por %p90, %p91
    %s94 = sadd.s32 %s93, 1
    %p97 = scmp.eq.s32.totalorder %s17, 1
    %p98 = scmp.ne.s32.totalorder %s93, %s95
    %p99 = scmp.eq.s32.totalorder %s17, 0
    %p100 = por %p98, %p99
    %p101 = scmp.ne.s32.totalorder %s93, %s95
    %p102 = scmp.eq.s32.totalorder %s22, 1
    %p103 = por %p101, %p102
    %p104 = scmp.ne.s32.totalorder %s95, %s96
    %p105 = scmp.eq.s32.totalorder %s22, 0
    %p106 = por %p104, %p105
    %p107 = scmp.ne.s32.totalorder %s95, %s96
    %p108 = scmp.eq.s32.totalorder %s23, 1
    %p109 = por %p107, %p108
    %p111 = scmp.ne.s32.totalorder %s96, %s110
    %p112 = scmp.eq.s32.totalorder %s23, 0
    %p113 = por %p111, %p112
    %s115 = sadd.s32 %s114, 1
    %p118 = scmp.eq.s32.totalorder %s17, 1
    %p119 = scmp.ne.s32.totalorder %s114, %s116
    %p120 = scmp.eq.s32.totalorder %s17, 0
    %p121 = por %p119, %p120
    %p122 = scmp.ne.s32.totalorder %s114, %s116
    %p123 = scmp.eq.s32.totalorder %s22, 1
    %p124 = por %p122, %p123
    %p125 = scmp.ne.s32.totalorder %s116, %s117
    %p126 = scmp.eq.s32.totalorder %s22, 0
    %p127 = por %p125, %p126
    %p128 = scmp.ne.s32.totalorder %s116, %s117
    %p129 = scmp.eq.s32.totalorder %s23, 1
    %p130 = por %p128, %p129
    %p132 = scmp.ne.s32.totalorder %s117, %s131
    %p133 = scmp.eq.s32.totalorder %s23, 0
    %p134 = por %p132, %p133
    %s136 = sadd.s32 %s135, 1
    %p139 = scmp.eq.s32.totalorder %s17, 1
    %p140 = scmp.ne.s32.totalorder %s135, %s137
    %p141 = scmp.eq.s32.totalorder %s17, 0
    %p142 = por %p140, %p141
    %p143 = scmp.ne.s32.totalorder %s135, %s137
    %p144 = scmp.eq.s32.totalorder %s22, 1
    %p145 = por %p143, %p144
    %p146 = scmp.ne.s32.totalorder %s137, %s138
    %p147 = scmp.eq.s32.totalorder %s22, 0
    %p148 = por %p146, %p147
    %p149 = scmp.ne.s32.totalorder %s137, %s138
    %p150 = scmp.eq.s32.totalorder %s23, 1
    %p151 = por %p149, %p150
    %p153 = scmp.ne.s32.totalorder %s138, %s152
    %p154 = scmp.eq.s32.totalorder %s23, 0
    %p155 = por %p153, %p154
    %s157 = sadd.s32 %s156, 1
    %p160 = scmp.eq.s32.totalorder %s17, 1
    %p161 = scmp.ne.s32.totalorder %s156, %s158
    %p162 = scmp.eq.s32.totalorder %s17, 0
    %p163 = por %p161, %p162
    %p164 = scmp.ne.s32.totalorder %s156, %s158
    %p165 = scmp.eq.s32.totalorder %s22, 1
    %p166 = por %p164, %p165
    %p167 = scmp.ne.s32.totalorder %s158, %s159
    %p168 = scmp.eq.s32.totalorder %s22, 0
    %p169 = por %p167, %p168
    %p170 = scmp.ne.s32.totalorder %s158, %s159
    %p171 = scmp.eq.s32.totalorder %s23, 1
    %p172 = por %p170, %p171
    %p174 = scmp.ne.s32.totalorder %s159, %s173
    %p175 = scmp.eq.s32.totalorder %s23, 0
    %p176 = por %p174, %p175
    %s178 = sadd.s32 %s177, 1
    %p181 = scmp.eq.s32.totalorder %s17, 1
    %p182 = scmp.ne.s32.totalorder %s177, %s179
    %p183 = scmp.eq.s32.totalorder %s17, 0
    %p184 = por %p182, %p183
    %p185 = scmp.ne.s32.totalorder %s177, %s179
    %p186 = scmp.eq.s32.totalorder %s22, 1
    %p187 = por %p185, %p186
    %p188 = scmp.ne.s32.totalorder %s179, %s180
    %p189 = scmp.eq.s32.totalorder %s22, 0
    %p190 = por %p188, %p189
    %p191 = scmp.ne.s32.totalorder %s179, %s180
    %p192 = scmp.eq.s32.totalorder %s23, 1
    %p193 = por %p191, %p192
    %p195 = scmp.ne.s32.totalorder %s180, %s194
    %p196 = scmp.eq.s32.totalorder %s23, 0
    %p197 = por %p195, %p196
    %s199 = sadd.s32 %s198, 1
    %p202 = scmp.eq.s32.totalorder %s17, 1
    %p203 = scmp.ne.s32.totalorder %s198, %s200
    %p204 = scmp.eq.s32.totalorder %s17, 0
    %p205 = por %p203, %p204
    %p206 = scmp.ne.s32.totalorder %s198, %s200
    %p207 = scmp.eq.s32.totalorder %s22, 1
    %p208 = por %p206, %p207
    %p209 = scmp.ne.s32.totalorder %s200, %s201
    %p210 = scmp.eq.s32.totalorder %s22, 0
    %p211 = por %p209, %p210
    %p212 = scmp.ne.s32.totalorder %s200, %s201
    %p213 = scmp.eq.s32.totalorder %s23, 1
    %p214 = por %p212, %p213
    %p216 = scmp.ne.s32.totalorder %s201, %s215
    %p217 = scmp.eq.s32.totalorder %s23, 0
    %p218 = por %p216, %p217
    %s220 = sadd.s32 %s219, 1
    %p223 = scmp.eq.s32.totalorder %s17, 1
    %p224 = scmp.ne.s32.totalorder %s219, %s221
    %p225 = scmp.eq.s32.totalorder %s17, 0
    %p226 = por %p224, %p225
    %p227 = scmp.ne.s32.totalorder %s219, %s221
    %p228 = scmp.eq.s32.totalorder %s22, 1
    %p229 = por %p227, %p228
    %p230 = scmp.ne.s32.totalorder %s221, %s222
    %p231 = scmp.eq.s32.totalorder %s22, 0
    %p232 = por %p230, %p231
    %p233 = scmp.ne.s32.totalorder %s221, %s222
    %p234 = scmp.eq.s32.totalorder %s23, 1
    %p235 = por %p233, %p234
    %p237 = scmp.ne.s32.totalorder %s222, %s236
    %p238 = scmp.eq.s32.totalorder %s23, 0
    %p239 = por %p237, %p238
    %s241 = sadd.s32 %s240, 1
    %p244 = scmp.eq.s32.totalorder %s17, 1
    %p245 = scmp.ne.s32.totalorder %s240, %s242
    %p246 = scmp.eq.s32.totalorder %s17, 0
    %p247 = por %p245, %p246
    %p248 = scmp.ne.s32.totalorder %s240, %s242
    %p249 = scmp.eq.s32.totalorder %s22, 1
    %p250 = por %p248, %p249
    %p251 = scmp.ne.s32.totalorder %s242, %s243
    %p252 = scmp.eq.s32.totalorder %s22, 0
    %p253 = por %p251, %p252
    %p254 = scmp.ne.s32.totalorder %s242, %s243
    %p255 = scmp.eq.s32.totalorder %s23, 1
    %p256 = por %p254, %p255
    %p258 = scmp.ne.s32.totalorder %s243, %s257
    %p259 = scmp.eq.s32.totalorder %s23, 0
    %p260 = por %p258, %p259
    %s261 = ssub.s32 %s17, %s24
    %p262 = scmp.eq.s32.totalorder %s261, 0
    %s264 = sadd.s32 %s263, 1
    %s265 = scalar_select %p262, %s263, %s264
    %p268 = pneg %p262
    %p269 = scmp.eq.s32.totalorder %s17, 1
    %p270 = por %p268, %p269
    %p271 = scmp.ne.s32.totalorder %s263, %s266
    %p272 = scmp.eq.s32.totalorder %s17, 0
    %p273 = por %p271, %p272
    %p274 = scmp.ne.s32.totalorder %s263, %s266
    %p275 = scmp.eq.s32.totalorder %s22, 1
    %p276 = por %p274, %p275
    %p277 = scmp.ne.s32.totalorder %s266, %s267
    %p278 = scmp.eq.s32.totalorder %s22, 0
    %p279 = por %p277, %p278
    %p280 = scmp.ne.s32.totalorder %s266, %s267
    %p281 = scmp.eq.s32.totalorder %s23, 1
    %p282 = por %p280, %p281
    %p284 = scmp.ne.s32.totalorder %s267, %s283
    %p285 = scmp.eq.s32.totalorder %s23, 0
    %p286 = por %p284, %p285
    %p287 = scmp.le.s32.totalorder 1, %s17
    %p288 = scmp.lt.s32.totalorder %s17, 3
    %p289 = pnand %p287, %p288
    %p290 = pneg %p289
    // Predicated region
    $region9: #{cvae_encoder_forward.5} parent=5 // pred_check
      _
    $region10: #{cvae_encoder_forward.5} parent=5 // pred_check_branch
      %292 = sbr.rel (%p289) target = $region12
    $region11: #{cvae_encoder_forward.5} parent=5 // pred_region
      %s293 = ssub.s32 %s17, 1
      // Predicated region
      $region13: #{cvae_encoder_forward.5} parent=11 // pred_check
        %p294 = pneg %p64
      $region14: #{cvae_encoder_forward.5} parent=11 // pred_check_branch
        %296 = sbr.rel (%p294) target = $region16
      $region15: #{cvae_encoder_forward.5} parent=11 // pred_region
        _
      $region16: #{cvae_encoder_forward.5} parent=11 // pred_fallthru
        _
      // Predicated region
      $region17: #{cvae_encoder_forward.5} parent=11 // pred_check
        %p297 = pneg %p85
      $region18: #{cvae_encoder_forward.5} parent=11 // pred_check_branch
        %299 = sbr.rel (%p297) target = $region20
      $region19: #{cvae_encoder_forward.5} parent=11 // pred_region
        _
      $region20: #{cvae_encoder_forward.5} parent=11 // pred_fallthru
        _
      // Predicated region
      $region21: #{cvae_encoder_forward.5} parent=11 // pred_check
        %p300 = pneg %p106
      $region22: #{cvae_encoder_forward.5} parent=11 // pred_check_branch
        %302 = sbr.rel (%p300) target = $region24
      $region23: #{cvae_encoder_forward.5} parent=11 // pred_region
        _
      $region24: #{cvae_encoder_forward.5} parent=11 // pred_fallthru
        _
      // Predicated region
      $region25: #{cvae_encoder_forward.5} parent=11 // pred_check
        %p303 = pneg %p127
      $region26: #{cvae_encoder_forward.5} parent=11 // pred_check_branch
        %305 = sbr.rel (%p303) target = $region28
      $region27: #{cvae_encoder_forward.5} parent=11 // pred_region
        _
      $region28: #{cvae_encoder_forward.5} parent=11 // pred_fallthru
        _
      // Predicated region
      $region29: #{cvae_encoder_forward.5} parent=11 // pred_check
        %p306 = pneg %p148
      $region30: #{cvae_encoder_forward.5} parent=11 // pred_check_branch
        %308 = sbr.rel (%p306) target = $region32
      $region31: #{cvae_encoder_forward.5} parent=11 // pred_region
        _
      $region32: #{cvae_encoder_forward.5} parent=11 // pred_fallthru
        _
      // Predicated region
      $region33: #{cvae_encoder_forward.5} parent=11 // pred_check
        %p309 = pneg %p169
      $region34: #{cvae_encoder_forward.5} parent=11 // pred_check_branch
        %311 = sbr.rel (%p309) target = $region36
      $region35: #{cvae_encoder_forward.5} parent=11 // pred_region
        _
      $region36: #{cvae_encoder_forward.5} parent=11 // pred_fallthru
        _
      // Predicated region
      $region37: #{cvae_encoder_forward.5} parent=11 // pred_check
        %p312 = pneg %p190
      $region38: #{cvae_encoder_forward.5} parent=11 // pred_check_branch
        %314 = sbr.rel (%p312) target = $region40
      $region39: #{cvae_encoder_forward.5} parent=11 // pred_region
        _
      $region40: #{cvae_encoder_forward.5} parent=11 // pred_fallthru
        _
      // Predicated region
      $region41: #{cvae_encoder_forward.5} parent=11 // pred_check
        %p315 = pneg %p211
      $region42: #{cvae_encoder_forward.5} parent=11 // pred_check_branch
        %317 = sbr.rel (%p315) target = $region44
      $region43: #{cvae_encoder_forward.5} parent=11 // pred_region
        _
      $region44: #{cvae_encoder_forward.5} parent=11 // pred_fallthru
        _
      // Predicated region
      $region45: #{cvae_encoder_forward.5} parent=11 // pred_check
        %p318 = pneg %p232
      $region46: #{cvae_encoder_forward.5} parent=11 // pred_check_branch
        %320 = sbr.rel (%p318) target = $region48
      $region47: #{cvae_encoder_forward.5} parent=11 // pred_region
        _
      $region48: #{cvae_encoder_forward.5} parent=11 // pred_fallthru
        _
      // Predicated region
      $region49: #{cvae_encoder_forward.5} parent=11 // pred_check
        %p321 = pneg %p253
      $region50: #{cvae_encoder_forward.5} parent=11 // pred_check_branch
        %323 = sbr.rel (%p321) target = $region52
      $region51: #{cvae_encoder_forward.5} parent=11 // pred_region
        _
      $region52: #{cvae_encoder_forward.5} parent=11 // pred_fallthru
        _
    $region12: #{cvae_encoder_forward.5} parent=5 // pred_fallthru
      _
    %p324 = scmp.lt.s32.totalorder %s17, 2
    // Predicated region
    $region53: #{cvae_encoder_forward.5} parent=5 // pred_check
      %p325 = pneg %p324
    $region54: #{cvae_encoder_forward.5} parent=5 // pred_check_branch
      %327 = sbr.rel (%p325) target = $region56
    $region55: #{cvae_encoder_forward.5} parent=5 // pred_region
      // Predicated region
      $region57: #{cvae_encoder_forward.5} parent=55 // pred_check
        %p328 = pneg %p37
      $region58: #{cvae_encoder_forward.5} parent=55 // pred_check_branch
        %330 = sbr.rel (%p328) target = $region60
      $region59: #{cvae_encoder_forward.5} parent=55 // pred_region
        %s331 = smul.u32 2, %s17
        %p332 = scmp.lt.s32.totalorder %s331, 3
        %s333 = scalar_select %p332, %s331, 3
        %s334 = smul.addr %s333, 4
        %s335 = scalar_lea.vmem %s0, %s334
        %s336 = smul.u32 2, %s17
      $region60: #{cvae_encoder_forward.5} parent=55 // pred_fallthru
        _
    $region56: #{cvae_encoder_forward.5} parent=5 // pred_fallthru
      _
    %p337 = scmp.le.s32.totalorder 1, %s17
    %p338 = scmp.lt.s32.totalorder %s17, 3
    %p339 = pnand %p337, %p338
    %p340 = pneg %p339
    // Predicated region
    $region61: #{cvae_encoder_forward.5} parent=5 // pred_check
      _
    $region62: #{cvae_encoder_forward.5} parent=5 // pred_check_branch
      %342 = sbr.rel (%p339) target = $region64
    $region63: #{cvae_encoder_forward.5} parent=5 // pred_region
      %s343 = ssub.s32 %s17, 1
      %s344 = smul.u32 2, %s22
      %p345 = scmp.lt.s32.totalorder %s344, 3
      %s346 = scalar_select %p345, %s344, 3
      %s347 = smul.addr %s346, 4
      %s348 = scalar_lea.vmem %s0, %s347
      %p349 = pneg %p43
      %p350 = pneg %p40
      %p351 = pneg %p64
      %p352 = pneg %p61
      %p353 = pneg %p85
      %p354 = pneg %p82
      %p355 = pneg %p106
      %p356 = pneg %p103
      %p357 = pneg %p127
      %p358 = pneg %p124
      %p359 = pneg %p148
      %p360 = pneg %p145
      %p361 = pneg %p169
      %p362 = pneg %p166
      %p363 = pneg %p190
      %p364 = pneg %p187
      %p365 = pneg %p211
      %p366 = pneg %p208
      %p367 = pneg %p232
      %p368 = pneg %p229
      %p369 = pneg %p253
      %p370 = pneg %p250
      %p371 = pneg %p279
      %p372 = pneg %p276
      %s373 = smul.u32 2, %s22
      %p374 = scmp.lt.s32.totalorder %s373, 3
      %s375 = scalar_select %p374, %s373, 3
      %s376 = smul.addr %s375, 8
      %s377 = scalar_lea.vmem %s11, %s376
      %s378 = smul.u32 2, %s22
      %p379 = scmp.lt.s32.totalorder %s378, 3
      %s380 = scalar_select %p379, %s378, 3
      %s381 = smul.addr %s380, 4
      %s382 = scalar_lea.vmem %s0, %s381
      %s383 = smul.u32 2, %s22
      %s384 = smul.u32 2, %s22
      %p385 = scmp.lt.s32.totalorder %s384, 3
      %s386 = scalar_select %p385, %s384, 3
      %s387 = smul.addr %s386, 8
      %s388 = scalar_lea.vmem %s11, %s387
      %s389 = smul.u32 2, %s22
      %vm393 = vcmask 1042432
      %vm394 = vsmask.f32 2304
      %vm395 = vmand %vm393, %vm394
      %v396 = vld [vmem:[#allocation2] sm:$0x7]
      %v397 = vsel %vm395, 0, %v396
      %398 = vst [vmem:[#allocation2] sm:$0x7] %v397
      %vm399 = vcmask 1043458
      %vm400 = vsmask.f32 7946
      %vm401 = vmand %vm399, %vm400
      %v402 = vld [vmem:[#allocation2 + $0x8] sm:$0xc]
      %v403 = vsel %vm401, 0, %v402
      %404 = vst [vmem:[#allocation2 + $0x8] sm:$0xc] %v403
      %405 = vst [vmem:[#allocation2 + $0xc] sm:$0x1] 0
      %v406 = vlaneseq
      %v407 = vshrl.u32 %v406, 7
      %v408 = vadd.s32 %v407, 8
      %vm409 = vcmp.lt.s32.totalorder %v407, 0
      %v410 = vsub.s32 0, %v407
      %v411 = vsel %vm409, %v410, %v407
      %v412 = vshrl.u32 %v411, 2
      %v413 = vand.u32 %v411, 3
      %v414 = vsub.s32 0, %v413
      %v415 = vsel %vm409, %v414, %v413
      %vm416 = vcmp.lt.s32.totalorder %v408, 0
      %v417 = vsub.s32 0, %v408
      %v418 = vsel %vm416, %v417, %v408
      %v419 = vshrl.u32 %v418, 2
      %v420 = vand.u32 %v418, 3
      %v421 = vsub.s32 0, %v420
      %v422 = vsel %vm416, %v421, %v420
      %vm423 = vcmp.ne.s32.totalorder %v415, 0
      %vm424 = vcmp.ne.s32.totalorder %v422, 0
      %vm425 = vcmp.lt.s32.totalorder %v415, 0
      %vm426 = vcmp.lt.s32.totalorder %v422, 0
      %vm427 = vmand %vm425, %vm423
      %vm428 = vmand %vm426, %vm424
      %v429 = vadd.s32 %v415, 4
      %v430 = vadd.s32 %v422, 4
      %v431 = vsel %vm427, %v429, %v415
      %v432 = vsel %vm428, %v430, %v422
      %vm433 = vcmp.ne.s32.totalorder %v431, 0
      %vm434 = vcmp.ne.s32.totalorder %v432, 0
      %vm435 = vcmp.ne.s32.totalorder %v431, 3
      %vm436 = vcmp.ne.s32.totalorder %v432, 3
      %v437 = vld [vmem:[%s382] sm:$0xf]
      %v438 = vld [vmem:[%s382 + $0x4] sm:$0xf]
      %vm439 = vsmask.f32 6416
      %vm440 = vmor %vm394, %vm439
      %v442 = vshrl.u32 %v437, 16
      %v444 = vrot.slane %v442, 5
      %v445 = vshll.u32 %v437, 16
      %v447 = vrot.slane %v445, 6
      %v448 = vor.u32 %v444, %v447
      %v449 = vrot.slane %v448, 4
      %v451 = vshrl.u32 %v438, 16
      %v453 = vrot.slane %v451, 5
      %v454 = vshll.u32 %v438, 16
      %v456 = vrot.slane %v454, 6
      %v457 = vor.u32 %v453, %v456
      %v458 = vsel %vm440, %v449, %v457
      %v459 = vrot.slane %v457, 4
      %v463 = vld [vmem:[#allocation2] sm:$0xc]
      %v464 = vsel %vm401, %v448, %v463
      %465 = vst [vmem:[#allocation2] sm:$0xc] %v464
      %466 = vst [vmem:[#allocation2 + $0x4] sm:$0xf] %v458
      %v467 = vld [vmem:[#allocation2 + $0x8] sm:$0x7]
      %v468 = vsel %vm395, %v459, %v467
      %469 = vst [vmem:[#allocation2 + $0x8] sm:$0x7] %v468
      %v470 = vld [vmem:[#allocation2] sm:$0xf]
      %v471 = vld [vmem:[#allocation2 + $0x4] sm:$0xf]
      %v472 = vsel %vm433, 1, 0
      %v473 = vsel %vm434, 1, 0
      %vm474 = vcmp.eq.s32.totalorder %v472, 1
      %vm475 = vcmp.eq.s32.totalorder %v473, 1
      %vm476 = vmpackc.low %vm474, %vm474
      %vm477 = vmpackc.low %vm475, %vm475
      %v478 = vsel %vm476, %v470, 0
      %v479 = vsel %vm477, %v471, 0
      %v480 = vld [vmem:[%s1] sm:$0xf]
      %v481 = vld [vmem:[%s1 + $0x4] sm:$0xf]
      %v482 = vld [vmem:[%s1 + $0x8] sm:$0xf]
      %v483 = vld [vmem:[%s1 + $0xc] sm:$0xf]
      %v484 = vld [vmem:[%s1 + $0x10] sm:$0xf]
      %v485 = vld [vmem:[%s1 + $0x14] sm:$0xf]
      %v486 = vld [vmem:[%s1 + $0x18] sm:$0xf]
      %v487 = vld [vmem:[%s1 + $0x1c] sm:$0xf]
      %v488 = vld [vmem:[%s1 + $0x20] sm:$0xf]
      %v489 = vld [vmem:[%s1 + $0x24] sm:$0xf]
      %v490 = vld [vmem:[%s1 + $0x28] sm:$0xf]
      %v491 = vld [vmem:[%s1 + $0x2c] sm:$0xf]
      %v492 = vld [vmem:[%s1 + $0x30] sm:$0xf]
      %v493 = vld [vmem:[%s1 + $0x34] sm:$0xf]
      %v494 = vld [vmem:[%s1 + $0x38] sm:$0xf]
      %v495 = vld [vmem:[%s1 + $0x3c] sm:$0xf]
      %v496 = vld [vmem:[#allocation2 + $0x8] sm:$0x1]
      %s497 = scalar_lea.vmem %s1, 64
      %v498 = vld [vmem:[%s497] sm:$0xf]
      %v499 = vld [vmem:[%s497 + $0x4] sm:$0xf]
      %v500 = vld [vmem:[%s497 + $0x8] sm:$0xf]
      %v501 = vld [vmem:[%s497 + $0xc] sm:$0xf]
      %v502 = vld [vmem:[%s497 + $0x10] sm:$0xf]
      %v503 = vld [vmem:[%s497 + $0x14] sm:$0xf]
      %v504 = vld [vmem:[%s497 + $0x18] sm:$0xf]
      %v505 = vld [vmem:[%s497 + $0x1c] sm:$0xf]
      %v506 = vld [vmem:[%s497 + $0x20] sm:$0xf]
      %v507 = vld [vmem:[%s497 + $0x24] sm:$0xf]
      %v508 = vld [vmem:[%s497 + $0x28] sm:$0xf]
      %v509 = vld [vmem:[%s497 + $0x2c] sm:$0xf]
      %v510 = vld [vmem:[%s497 + $0x30] sm:$0xf]
      %v511 = vld [vmem:[%s497 + $0x34] sm:$0xf]
      %v512 = vld [vmem:[%s497 + $0x38] sm:$0xf]
      %v513 = vld [vmem:[%s497 + $0x3c] sm:$0xf]
      %v517 = vunpack.c.l.b16 %v470
      %v518 = vunpack.c.l.b16 %v471
      %v519 = vunpack.c.l.b16 %v496
      %v520 = vpack.c.b16 %v518, %v517
      %v521 = vpack.c.b16 %v519, %v519
      %vm522 = vsmask.f32 7424
      %v524 = vshrl.u32 %v520, 16
      %v526 = vshll.u32 %v520, 16
      %v528 = vrot.slane %v526, 1
      %v529 = vor.u32 %v524, %v528
      %v531 = vshll.u32 %v521, 16
      %v533 = vrot.slane %v531, 1
      %v534 = vsel %vm522, %v529, %v533
      %v552 = vunpack.c.l.b16 %v498
      %v553 = vunpack.c.l.b16 %v499
      %v554 = vunpack.c.l.b16 %v500
      %v555 = vunpack.c.l.b16 %v501
      %v556 = vunpack.c.l.b16 %v502
      %v557 = vunpack.c.l.b16 %v503
      %v558 = vunpack.c.l.b16 %v504
      %v559 = vunpack.c.l.b16 %v505
      %v560 = vunpack.c.l.b16 %v506
      %v561 = vunpack.c.l.b16 %v507
      %v562 = vunpack.c.l.b16 %v508
      %v563 = vunpack.c.l.b16 %v509
      %v564 = vunpack.c.l.b16 %v510
      %v565 = vunpack.c.l.b16 %v511
      %v566 = vunpack.c.l.b16 %v512
      %v567 = vunpack.c.l.b16 %v513
      %v568 = vpack.c.b16 %v553, %v552
      %v569 = vpack.c.b16 %v555, %v554
      %v570 = vpack.c.b16 %v557, %v556
      %v571 = vpack.c.b16 %v559, %v558
      %v572 = vpack.c.b16 %v561, %v560
      %v573 = vpack.c.b16 %v563, %v562
      %v574 = vpack.c.b16 %v565, %v564
      %v575 = vpack.c.b16 %v567, %v566
      %584 = vmatprep.subr.bf16.mxu0 0
      %585 = vmatpush1.bf16.msra.mxu0 %v568
      %586 = vmatprep.subr.bf16.mxu0 0
      %587 = vmatpush1.bf16.msra.mxu0 %v569
      %588 = vmatprep.subr.bf16.mxu0 0
      %589 = vmatpush1.bf16.msra.mxu0 %v570
      %590 = vmatprep.subr.bf16.mxu0 0
      %591 = vmatpush1.bf16.msra.mxu0 %v571
      %592 = vmatprep.subr.bf16.mxu0 0
      %593 = vmatpush1.bf16.msra.mxu0 %v572
      %594 = vmatprep.subr.bf16.mxu0 0
      %595 = vmatpush1.bf16.msra.mxu0 %v573
      %596 = vmatprep.subr.bf16.mxu0 0
      %597 = vmatpush1.bf16.msra.mxu0 %v574
      %598 = vmatprep.subr.bf16.mxu0 0
      %599 = vmatpush1.bf16.msra.mxu0 %v575
      %600 = vmatprep.subr.bf16.mxu0 0
      %601 = vmatpush1.bf16.msra.mxu0 0
      %602 = vmatprep.subr.bf16.mxu0 0
      %603 = vmatpush1.bf16.msra.mxu0 0
      %604 = vmatprep.subr.bf16.mxu0 0
      %605 = vmatpush1.bf16.msra.mxu0 0
      %606 = vmatprep.subr.bf16.mxu0 0
      %607 = vmatpush1.bf16.msra.mxu0 0
      %608 = vmatprep.subr.bf16.mxu0 0
      %609 = vmatpush1.bf16.msra.mxu0 0
      %610 = vmatprep.subr.bf16.mxu0 0
      %611 = vmatpush1.bf16.msra.mxu0 0
      %612 = vmatprep.subr.bf16.mxu0 0
      %613 = vmatpush1.bf16.msra.mxu0 0
      %614 = vmatprep.subr.bf16.mxu0 0
      %615 = vmatpush1.bf16.msra.mxu0 0
      %616 = vmatprep.mubr.bf16.mxu0 0
      %617 = vmatmul.mubr.bf16.gmra.mrb[0].mxu0 %v534
      %v618 = vpop.f32.mrb[0].mxu0
      %v619 = vadd.f32 0.0, %v618
      %v620 = vpop.f32.mrb[0].mxu0
      %v621 = vpop.f32.mrb[0].mxu0
      %v622 = vadd.f32 0.0, %v621
      %v623 = vpop.f32.mrb[0].mxu0
      %624 = vdwg.mxu0
      %v627 = vunpack.c.l.b16 %v478
      %v628 = vunpack.c.l.b16 %v479
      %v629 = vpack.c.b16 %v628, %v627
      %v647 = vunpack.c.l.b16 %v480
      %v648 = vunpack.c.l.b16 %v481
      %v649 = vunpack.c.l.b16 %v482
      %v650 = vunpack.c.l.b16 %v483
      %v651 = vunpack.c.l.b16 %v484
      %v652 = vunpack.c.l.b16 %v485
      %v653 = vunpack.c.l.b16 %v486
      %v654 = vunpack.c.l.b16 %v487
      %v655 = vunpack.c.l.b16 %v488
      %v656 = vunpack.c.l.b16 %v489
      %v657 = vunpack.c.l.b16 %v490
      %v658 = vunpack.c.l.b16 %v491
      %v659 = vunpack.c.l.b16 %v492
      %v660 = vunpack.c.l.b16 %v493
      %v661 = vunpack.c.l.b16 %v494
      %v662 = vunpack.c.l.b16 %v495
      %v663 = vpack.c.b16 %v648, %v647
      %v664 = vpack.c.b16 %v650, %v649
      %v665 = vpack.c.b16 %v652, %v651
      %v666 = vpack.c.b16 %v654, %v653
      %v667 = vpack.c.b16 %v656, %v655
      %v668 = vpack.c.b16 %v658, %v657
      %v669 = vpack.c.b16 %v660, %v659
      %v670 = vpack.c.b16 %v662, %v661
      %679 = vmatprep.subr.bf16.mxu0 0
      %680 = vmatpush1.bf16.msra.mxu0 %v663
      %681 = vmatprep.subr.bf16.mxu0 0
      %682 = vmatpush1.bf16.msra.mxu0 %v664
      %683 = vmatprep.subr.bf16.mxu0 0
      %684 = vmatpush1.bf16.msra.mxu0 %v665
      %685 = vmatprep.subr.bf16.mxu0 0
      %686 = vmatpush1.bf16.msra.mxu0 %v666
      %687 = vmatprep.subr.bf16.mxu0 0
      %688 = vmatpush1.bf16.msra.mxu0 %v667
      %689 = vmatprep.subr.bf16.mxu0 0
      %690 = vmatpush1.bf16.msra.mxu0 %v668
      %691 = vmatprep.subr.bf16.mxu0 0
      %692 = vmatpush1.bf16.msra.mxu0 %v669
      %693 = vmatprep.subr.bf16.mxu0 0
      %694 = vmatpush1.bf16.msra.mxu0 %v670
      %695 = vmatprep.subr.bf16.mxu0 0
      %696 = vmatpush1.bf16.msra.mxu0 0
      %697 = vmatprep.subr.bf16.mxu0 0
      %698 = vmatpush1.bf16.msra.mxu0 0
      %699 = vmatprep.subr.bf16.mxu0 0
      %700 = vmatpush1.bf16.msra.mxu0 0
      %701 = vmatprep.subr.bf16.mxu0 0
      %702 = vmatpush1.bf16.msra.mxu0 0
      %703 = vmatprep.subr.bf16.mxu0 0
      %704 = vmatpush1.bf16.msra.mxu0 0
      %705 = vmatprep.subr.bf16.mxu0 0
      %706 = vmatpush1.bf16.msra.mxu0 0
      %707 = vmatprep.subr.bf16.mxu0 0
      %708 = vmatpush1.bf16.msra.mxu0 0
      %709 = vmatprep.subr.bf16.mxu0 0
      %710 = vmatpush1.bf16.msra.mxu0 0
      %711 = vmatprep.mubr.bf16.mxu0 0
      %712 = vmatmul.mubr.bf16.gmra.mrb[0].mxu0 %v629
      %v713 = vpop.f32.mrb[0].mxu0
      %v714 = vadd.f32 %v619, %v713
      %v715 = vpop.f32.mrb[0].mxu0
      %v716 = vpop.f32.mrb[0].mxu0
      %v717 = vadd.f32 %v622, %v716
      %v718 = vpop.f32.mrb[0].mxu0
      %719 = vdwg.mxu0
      %v720 = vld [vmem:[#allocation2] sm:$0xe]
      %v721 = vsel %vm435, 1, 0
      %v722 = vsel %vm436, 1, 0
      %vm723 = vcmp.eq.s32.totalorder %v721, 1
      %vm724 = vcmp.eq.s32.totalorder %v722, 1
      %vm725 = vmpackc.low %vm723, %vm723
      %vm726 = vmpackc.low %vm724, %vm724
      %v727 = vsel %vm725, 65537, 0
      %v728 = vsel %vm726, 65537, 0
      %vm729 = vcmask 1040384
      %vm730 = vcmask 1044484
      %vm731 = vmor %vm729, %vm730
      %v732 = vrot.slane %v727, 7
      %v733 = vrot.slane %v732, 4
      %v734 = vrot.slane %v728, 7
      %v735 = vsel %vm731, %v733, %v734
      %v736 = vrot.slane %v734, 4
      %vm737 = vcmp.ne.s16.totalorder %v732, 0
      %vm738 = vcmp.ne.s16.totalorder %v735, 0
      %vm739 = vcmp.ne.s16.totalorder %v736, 0
      %v740 = vsel %vm737, %v720, 0
      %v741 = vsel %vm738, %v471, 0
      %v742 = vsel %vm739, %v496, 0
      %s743 = scalar_lea.vmem %s1, 128
      %v744 = vld [vmem:[%s743] sm:$0xf]
      %v745 = vld [vmem:[%s743 + $0x4] sm:$0xf]
      %v746 = vld [vmem:[%s743 + $0x8] sm:$0xf]
      %v747 = vld [vmem:[%s743 + $0xc] sm:$0xf]
      %v748 = vld [vmem:[%s743 + $0x10] sm:$0xf]
      %v749 = vld [vmem:[%s743 + $0x14] sm:$0xf]
      %v750 = vld [vmem:[%s743 + $0x18] sm:$0xf]
      %v751 = vld [vmem:[%s743 + $0x1c] sm:$0xf]
      %v752 = vld [vmem:[%s743 + $0x20] sm:$0xf]
      %v753 = vld [vmem:[%s743 + $0x24] sm:$0xf]
      %v754 = vld [vmem:[%s743 + $0x28] sm:$0xf]
      %v755 = vld [vmem:[%s743 + $0x2c] sm:$0xf]
      %v756 = vld [vmem:[%s743 + $0x30] sm:$0xf]
      %v757 = vld [vmem:[%s743 + $0x34] sm:$0xf]
      %v758 = vld [vmem:[%s743 + $0x38] sm:$0xf]
      %v759 = vld [vmem:[%s743 + $0x3c] sm:$0xf]
      %v763 = vunpack.c.l.b16 %v740
      %v764 = vunpack.c.l.b16 %v741
      %v765 = vunpack.c.l.b16 %v742
      %v766 = vpack.c.b16 %v764, %v763
      %v767 = vpack.c.b16 %v765, %v765
      %vm768 = vcmask 1046528
      %v769 = vrot.slane %v766, 1
      %v770 = vrot.slane %v767, 1
      %v771 = vsel %vm768, %v769, %v770
      %v789 = vunpack.c.l.b16 %v744
      %v790 = vunpack.c.l.b16 %v745
      %v791 = vunpack.c.l.b16 %v746
      %v792 = vunpack.c.l.b16 %v747
      %v793 = vunpack.c.l.b16 %v748
      %v794 = vunpack.c.l.b16 %v749
      %v795 = vunpack.c.l.b16 %v750
      %v796 = vunpack.c.l.b16 %v751
      %v797 = vunpack.c.l.b16 %v752
      %v798 = vunpack.c.l.b16 %v753
      %v799 = vunpack.c.l.b16 %v754
      %v800 = vunpack.c.l.b16 %v755
      %v801 = vunpack.c.l.b16 %v756
      %v802 = vunpack.c.l.b16 %v757
      %v803 = vunpack.c.l.b16 %v758
      %v804 = vunpack.c.l.b16 %v759
      %v805 = vpack.c.b16 %v790, %v789
      %v806 = vpack.c.b16 %v792, %v791
      %v807 = vpack.c.b16 %v794, %v793
      %v808 = vpack.c.b16 %v796, %v795
      %v809 = vpack.c.b16 %v798, %v797
      %v810 = vpack.c.b16 %v800, %v799
      %v811 = vpack.c.b16 %v802, %v801
      %v812 = vpack.c.b16 %v804, %v803
      %821 = vmatprep.subr.bf16.mxu0 0
      %822 = vmatpush1.bf16.msra.mxu0 %v805
      %823 = vmatprep.subr.bf16.mxu0 0
      %824 = vmatpush1.bf16.msra.mxu0 %v806
      %825 = vmatprep.subr.bf16.mxu0 0
      %826 = vmatpush1.bf16.msra.mxu0 %v807
      %827 = vmatprep.subr.bf16.mxu0 0
      %828 = vmatpush1.bf16.msra.mxu0 %v808
      %829 = vmatprep.subr.bf16.mxu0 0
      %830 = vmatpush1.bf16.msra.mxu0 %v809
      %831 = vmatprep.subr.bf16.mxu0 0
      %832 = vmatpush1.bf16.msra.mxu0 %v810
      %833 = vmatprep.subr.bf16.mxu0 0
      %834 = vmatpush1.bf16.msra.mxu0 %v811
      %835 = vmatprep.subr.bf16.mxu0 0
      %836 = vmatpush1.bf16.msra.mxu0 %v812
      %837 = vmatprep.subr.bf16.mxu0 0
      %838 = vmatpush1.bf16.msra.mxu0 0
      %839 = vmatprep.subr.bf16.mxu0 0
      %840 = vmatpush1.bf16.msra.mxu0 0
      %841 = vmatprep.subr.bf16.mxu0 0
      %842 = vmatpush1.bf16.msra.mxu0 0
      %843 = vmatprep.subr.bf16.mxu0 0
      %844 = vmatpush1.bf16.msra.mxu0 0
      %845 = vmatprep.subr.bf16.mxu0 0
      %846 = vmatpush1.bf16.msra.mxu0 0
      %847 = vmatprep.subr.bf16.mxu0 0
      %848 = vmatpush1.bf16.msra.mxu0 0
      %849 = vmatprep.subr.bf16.mxu0 0
      %850 = vmatpush1.bf16.msra.mxu0 0
      %851 = vmatprep.subr.bf16.mxu0 0
      %852 = vmatpush1.bf16.msra.mxu0 0
      %853 = vmatprep.mubr.bf16.mxu0 0
      %854 = vmatmul.mubr.bf16.gmra.mrb[0].mxu0 %v771
      %v855 = vpop.f32.mrb[0].mxu0
      %v856 = vadd.f32 0.0, %v855
      %v857 = vpop.f32.mrb[0].mxu0
      %v858 = vpop.f32.mrb[0].mxu0
      %v859 = vadd.f32 0.0, %v858
      %v860 = vpop.f32.mrb[0].mxu0
      %861 = vdwg.mxu0
      %v862 = vadd.f32 %v714, %v856
      %v863 = vadd.f32 %v717, %v859
      %v864 = vld [vmem:[#allocation2] sm:$0xc]
      %v865 = vld [vmem:[#allocation2 + $0x8] sm:$0x3]
      %v866 = vsel %vm476, 65537, 0
      %v867 = vsel %vm477, 65537, 0
      %vm868 = vcmask 1041408
      %vm869 = vcmask 1045508
      %vm870 = vmor %vm868, %vm869
      %v871 = vrot.slane %v866, 6
      %v872 = vrot.slane %v871, 4
      %v873 = vrot.slane %v867, 6
      %v874 = vsel %vm870, %v872, %v873
      %v875 = vrot.slane %v873, 4
      %vm876 = vcmp.ne.s16.totalorder %v871, 0
      %vm877 = vcmp.ne.s16.totalorder %v874, 0
      %vm878 = vcmp.ne.s16.totalorder %v875, 0
      %v879 = vsel %vm876, %v864, 0
      %v880 = vsel %vm877, %v471, 0
      %v881 = vsel %vm878, %v865, 0
      %s882 = scalar_lea.vmem %s1, 192
      %v883 = vld [vmem:[%s882] sm:$0xf]
      %v884 = vld [vmem:[%s882 + $0x4] sm:$0xf]
      %v885 = vld [vmem:[%s882 + $0x8] sm:$0xf]
      %v886 = vld [vmem:[%s882 + $0xc] sm:$0xf]
      %v887 = vld [vmem:[%s882 + $0x10] sm:$0xf]
      %v888 = vld [vmem:[%s882 + $0x14] sm:$0xf]
      %v889 = vld [vmem:[%s882 + $0x18] sm:$0xf]
      %v890 = vld [vmem:[%s882 + $0x1c] sm:$0xf]
      %v891 = vld [vmem:[%s882 + $0x20] sm:$0xf]
      %v892 = vld [vmem:[%s882 + $0x24] sm:$0xf]
      %v893 = vld [vmem:[%s882 + $0x28] sm:$0xf]
      %v894 = vld [vmem:[%s882 + $0x2c] sm:$0xf]
      %v895 = vld [vmem:[%s882 + $0x30] sm:$0xf]
      %v896 = vld [vmem:[%s882 + $0x34] sm:$0xf]
      %v897 = vld [vmem:[%s882 + $0x38] sm:$0xf]
      %v898 = vld [vmem:[%s882 + $0x3c] sm:$0xf]
      %v902 = vunpack.c.l.b16 %v879
      %v903 = vunpack.c.l.b16 %v880
      %v904 = vunpack.c.l.b16 %v881
      %v905 = vpack.c.b16 %v903, %v902
      %v906 = vpack.c.b16 %v904, %v904
      %vm907 = vcmask 1045504
      %v908 = vrot.slane %v905, 2
      %v909 = vrot.slane %v906, 2
      %v910 = vsel %vm907, %v908, %v909
      %v928 = vunpack.c.l.b16 %v883
      %v929 = vunpack.c.l.b16 %v884
      %v930 = vunpack.c.l.b16 %v885
      %v931 = vunpack.c.l.b16 %v886
      %v932 = vunpack.c.l.b16 %v887
      %v933 = vunpack.c.l.b16 %v888
      %v934 = vunpack.c.l.b16 %v889
      %v935 = vunpack.c.l.b16 %v890
      %v936 = vunpack.c.l.b16 %v891
      %v937 = vunpack.c.l.b16 %v892
      %v938 = vunpack.c.l.b16 %v893
      %v939 = vunpack.c.l.b16 %v894
      %v940 = vunpack.c.l.b16 %v895
      %v941 = vunpack.c.l.b16 %v896
      %v942 = vunpack.c.l.b16 %v897
      %v943 = vunpack.c.l.b16 %v898
      %v944 = vpack.c.b16 %v929, %v928
      %v945 = vpack.c.b16 %v931, %v930
      %v946 = vpack.c.b16 %v933, %v932
      %v947 = vpack.c.b16 %v935, %v934
      %v948 = vpack.c.b16 %v937, %v936
      %v949 = vpack.c.b16 %v939, %v938
      %v950 = vpack.c.b16 %v941, %v940
      %v951 = vpack.c.b16 %v943, %v942
      %960 = vmatprep.subr.bf16.mxu0 0
      %961 = vmatpush1.bf16.msra.mxu0 %v944
      %962 = vmatprep.subr.bf16.mxu0 0
      %963 = vmatpush1.bf16.msra.mxu0 %v945
      %964 = vmatprep.subr.bf16.mxu0 0
      %965 = vmatpush1.bf16.msra.mxu0 %v946
      %966 = vmatprep.subr.bf16.mxu0 0
      %967 = vmatpush1.bf16.msra.mxu0 %v947
      %968 = vmatprep.subr.bf16.mxu0 0
      %969 = vmatpush1.bf16.msra.mxu0 %v948
      %970 = vmatprep.subr.bf16.mxu0 0
      %971 = vmatpush1.bf16.msra.mxu0 %v949
      %972 = vmatprep.subr.bf16.mxu0 0
      %973 = vmatpush1.bf16.msra.mxu0 %v950
      %974 = vmatprep.subr.bf16.mxu0 0
      %975 = vmatpush1.bf16.msra.mxu0 %v951
      %976 = vmatprep.subr.bf16.mxu0 0
      %977 = vmatpush1.bf16.msra.mxu0 0
      %978 = vmatprep.subr.bf16.mxu0 0
      %979 = vmatpush1.bf16.msra.mxu0 0
      %980 = vmatprep.subr.bf16.mxu0 0
      %981 = vmatpush1.bf16.msra.mxu0 0
      %982 = vmatprep.subr.bf16.mxu0 0
      %983 = vmatpush1.bf16.msra.mxu0 0
      %984 = vmatprep.subr.bf16.mxu0 0
      %985 = vmatpush1.bf16.msra.mxu0 0
      %986 = vmatprep.subr.bf16.mxu0 0
      %987 = vmatpush1.bf16.msra.mxu0 0
      %988 = vmatprep.subr.bf16.mxu0 0
      %989 = vmatpush1.bf16.msra.mxu0 0
      %990 = vmatprep.subr.bf16.mxu0 0
      %991 = vmatpush1.bf16.msra.mxu0 0
      %992 = vmatprep.mubr.bf16.mxu0 0
      %993 = vmatmul.mubr.bf16.gmra.mrb[0].mxu0 %v910
      %v994 = vpop.f32.mrb[0].mxu0
      %v995 = vadd.f32 0.0, %v994
      %v996 = vpop.f32.mrb[0].mxu0
      %v997 = vpop.f32.mrb[0].mxu0
      %v998 = vadd.f32 0.0, %v997
      %v999 = vpop.f32.mrb[0].mxu0
      %1000 = vdwg.mxu0
      %v1001 = vadd.f32 %v862, %v995
      %v1002 = vadd.f32 %v863, %v998
      %v1003 = vld [vmem:[#allocation2 + $0x8] sm:$0x7]
      %s1004 = scalar_lea.vmem %s1, 256
      %v1005 = vld [vmem:[%s1004] sm:$0xf]
      %v1006 = vld [vmem:[%s1004 + $0x4] sm:$0xf]
      %v1007 = vld [vmem:[%s1004 + $0x8] sm:$0xf]
      %v1008 = vld [vmem:[%s1004 + $0xc] sm:$0xf]
      %v1009 = vld [vmem:[%s1004 + $0x10] sm:$0xf]
      %v1010 = vld [vmem:[%s1004 + $0x14] sm:$0xf]
      %v1011 = vld [vmem:[%s1004 + $0x18] sm:$0xf]
      %v1012 = vld [vmem:[%s1004 + $0x1c] sm:$0xf]
      %v1013 = vld [vmem:[%s1004 + $0x20] sm:$0xf]
      %v1014 = vld [vmem:[%s1004 + $0x24] sm:$0xf]
      %v1015 = vld [vmem:[%s1004 + $0x28] sm:$0xf]
      %v1016 = vld [vmem:[%s1004 + $0x2c] sm:$0xf]
      %v1017 = vld [vmem:[%s1004 + $0x30] sm:$0xf]
      %v1018 = vld [vmem:[%s1004 + $0x34] sm:$0xf]
      %v1019 = vld [vmem:[%s1004 + $0x38] sm:$0xf]
      %v1020 = vld [vmem:[%s1004 + $0x3c] sm:$0xf]
      %v1023 = vunpack.c.l.b16 %v864
      %v1024 = vunpack.c.l.b16 %v1003
      %v1025 = vpack.c.b16 %v518, %v1023
      %v1026 = vpack.c.b16 %v1024, %v1024
      %vm1027 = vsmask.f32 5376
      %v1029 = vshrl.u32 %v1025, 16
      %v1031 = vrot.slane %v1029, 2
      %v1032 = vshll.u32 %v1025, 16
      %v1034 = vrot.slane %v1032, 3
      %v1035 = vor.u32 %v1031, %v1034
      %v1037 = vshrl.u32 %v1026, 16
      %v1039 = vrot.slane %v1037, 2
      %v1040 = vshll.u32 %v1026, 16
      %v1042 = vrot.slane %v1040, 3
      %v1043 = vor.u32 %v1039, %v1042
      %v1044 = vsel %vm1027, %v1035, %v1043
      %v1062 = vunpack.c.l.b16 %v1005
      %v1063 = vunpack.c.l.b16 %v1006
      %v1064 = vunpack.c.l.b16 %v1007
      %v1065 = vunpack.c.l.b16 %v1008
      %v1066 = vunpack.c.l.b16 %v1009
      %v1067 = vunpack.c.l.b16 %v1010
      %v1068 = vunpack.c.l.b16 %v1011
      %v1069 = vunpack.c.l.b16 %v1012
      %v1070 = vunpack.c.l.b16 %v1013
      %v1071 = vunpack.c.l.b16 %v1014
      %v1072 = vunpack.c.l.b16 %v1015
      %v1073 = vunpack.c.l.b16 %v1016
      %v1074 = vunpack.c.l.b16 %v1017
      %v1075 = vunpack.c.l.b16 %v1018
      %v1076 = vunpack.c.l.b16 %v1019
      %v1077 = vunpack.c.l.b16 %v1020
      %v1078 = vpack.c.b16 %v1063, %v1062
      %v1079 = vpack.c.b16 %v1065, %v1064
      %v1080 = vpack.c.b16 %v1067, %v1066
      %v1081 = vpack.c.b16 %v1069, %v1068
      %v1082 = vpack.c.b16 %v1071, %v1070
      %v1083 = vpack.c.b16 %v1073, %v1072
      %v1084 = vpack.c.b16 %v1075, %v1074
      %v1085 = vpack.c.b16 %v1077, %v1076
      %1094 = vmatprep.subr.bf16.mxu0 0
      %1095 = vmatpush1.bf16.msra.mxu0 %v1078
      %1096 = vmatprep.subr.bf16.mxu0 0
      %1097 = vmatpush1.bf16.msra.mxu0 %v1079
      %1098 = vmatprep.subr.bf16.mxu0 0
      %1099 = vmatpush1.bf16.msra.mxu0 %v1080
      %1100 = vmatprep.subr.bf16.mxu0 0
      %1101 = vmatpush1.bf16.msra.mxu0 %v1081
      %1102 = vmatprep.subr.bf16.mxu0 0
      %1103 = vmatpush1.bf16.msra.mxu0 %v1082
      %1104 = vmatprep.subr.bf16.mxu0 0
      %1105 = vmatpush1.bf16.msra.mxu0 %v1083
      %1106 = vmatprep.subr.bf16.mxu0 0
      %1107 = vmatpush1.bf16.msra.mxu0 %v1084
      %1108 = vmatprep.subr.bf16.mxu0 0
      %1109 = vmatpush1.bf16.msra.mxu0 %v1085
      %1110 = vmatprep.subr.bf16.mxu0 0
      %1111 = vmatpush1.bf16.msra.mxu0 0
      %1112 = vmatprep.subr.bf16.mxu0 0
      %1113 = vmatpush1.bf16.msra.mxu0 0
      %1114 = vmatprep.subr.bf16.mxu0 0
      %1115 = vmatpush1.bf16.msra.mxu0 0
      %1116 = vmatprep.subr.bf16.mxu0 0
      %1117 = vmatpush1.bf16.msra.mxu0 0
      %1118 = vmatprep.subr.bf16.mxu0 0
      %1119 = vmatpush1.bf16.msra.mxu0 0
      %1120 = vmatprep.subr.bf16.mxu0 0
      %1121 = vmatpush1.bf16.msra.mxu0 0
      %1122 = vmatprep.subr.bf16.mxu0 0
      %1123 = vmatpush1.bf16.msra.mxu0 0
      %1124 = vmatprep.subr.bf16.mxu0 0
      %1125 = vmatpush1.bf16.msra.mxu0 0
      %1126 = vmatprep.mubr.bf16.mxu0 0
      %1127 = vmatmul.mubr.bf16.gmra.mrb[0].mxu0 %v1044
      %v1128 = vpop.f32.mrb[0].mxu0
      %v1129 = vadd.f32 0.0, %v1128
      %v1130 = vpop.f32.mrb[0].mxu0
      %v1131 = vpop.f32.mrb[0].mxu0
      %v1132 = vadd.f32 0.0, %v1131
      %v1133 = vpop.f32.mrb[0].mxu0
      %1134 = vdwg.mxu0
      %v1135 = vadd.f32 %v1001, %v1129
      %v1136 = vadd.f32 %v1002, %v1132
      %v1137 = vld [vmem:[#allocation2] sm:$0x8]
      %vm1138 = vcmask 1046532
      %vm1139 = vmor %vm393, %vm1138
      %v1140 = vrot.slane %v727, 5
      %v1141 = vrot.slane %v1140, 4
      %v1142 = vrot.slane %v728, 5
      %v1143 = vsel %vm1139, %v1141, %v1142
      %v1144 = vrot.slane %v1142, 4
      %vm1145 = vcmp.ne.s16.totalorder %v1140, 0
      %vm1146 = vcmp.ne.s16.totalorder %v1143, 0
      %vm1147 = vcmp.ne.s16.totalorder %v1144, 0
      %v1148 = vsel %vm1145, %v1137, 0
      %v1149 = vsel %vm1146, %v471, 0
      %v1150 = vsel %vm1147, %v1003, 0
      %s1151 = scalar_lea.vmem %s1, 320
      %v1152 = vld [vmem:[%s1151] sm:$0xf]
      %v1153 = vld [vmem:[%s1151 + $0x4] sm:$0xf]
      %v1154 = vld [vmem:[%s1151 + $0x8] sm:$0xf]
      %v1155 = vld [vmem:[%s1151 + $0xc] sm:$0xf]
      %v1156 = vld [vmem:[%s1151 + $0x10] sm:$0xf]
      %v1157 = vld [vmem:[%s1151 + $0x14] sm:$0xf]
      %v1158 = vld [vmem:[%s1151 + $0x18] sm:$0xf]
      %v1159 = vld [vmem:[%s1151 + $0x1c] sm:$0xf]
      %v1160 = vld [vmem:[%s1151 + $0x20] sm:$0xf]
      %v1161 = vld [vmem:[%s1151 + $0x24] sm:$0xf]
      %v1162 = vld [vmem:[%s1151 + $0x28] sm:$0xf]
      %v1163 = vld [vmem:[%s1151 + $0x2c] sm:$0xf]
      %v1164 = vld [vmem:[%s1151 + $0x30] sm:$0xf]
      %v1165 = vld [vmem:[%s1151 + $0x34] sm:$0xf]
      %v1166 = vld [vmem:[%s1151 + $0x38] sm:$0xf]
      %v1167 = vld [vmem:[%s1151 + $0x3c] sm:$0xf]
      %v1171 = vunpack.c.l.b16 %v1148
      %v1172 = vunpack.c.l.b16 %v1149
      %v1173 = vunpack.c.l.b16 %v1150
      %v1174 = vpack.c.b16 %v1172, %v1171
      %v1175 = vpack.c.b16 %v1173, %v1173
      %vm1176 = vcmask 1044480
      %v1177 = vrot.slane %v1174, 3
      %v1178 = vrot.slane %v1175, 3
      %v1179 = vsel %vm1176, %v1177, %v1178
      %v1197 = vunpack.c.l.b16 %v1152
      %v1198 = vunpack.c.l.b16 %v1153
      %v1199 = vunpack.c.l.b16 %v1154
      %v1200 = vunpack.c.l.b16 %v1155
      %v1201 = vunpack.c.l.b16 %v1156
      %v1202 = vunpack.c.l.b16 %v1157
      %v1203 = vunpack.c.l.b16 %v1158
      %v1204 = vunpack.c.l.b16 %v1159
      %v1205 = vunpack.c.l.b16 %v1160
      %v1206 = vunpack.c.l.b16 %v1161
      %v1207 = vunpack.c.l.b16 %v1162
      %v1208 = vunpack.c.l.b16 %v1163
      %v1209 = vunpack.c.l.b16 %v1164
      %v1210 = vunpack.c.l.b16 %v1165
      %v1211 = vunpack.c.l.b16 %v1166
      %v1212 = vunpack.c.l.b16 %v1167
      %v1213 = vpack.c.b16 %v1198, %v1197
      %v1214 = vpack.c.b16 %v1200, %v1199
      %v1215 = vpack.c.b16 %v1202, %v1201
      %v1216 = vpack.c.b16 %v1204, %v1203
      %v1217 = vpack.c.b16 %v1206, %v1205
      %v1218 = vpack.c.b16 %v1208, %v1207
      %v1219 = vpack.c.b16 %v1210, %v1209
      %v1220 = vpack.c.b16 %v1212, %v1211
      %1229 = vmatprep.subr.bf16.mxu0 0
      %1230 = vmatpush1.bf16.msra.mxu0 %v1213
      %1231 = vmatprep.subr.bf16.mxu0 0
      %1232 = vmatpush1.bf16.msra.mxu0 %v1214
      %1233 = vmatprep.subr.bf16.mxu0 0
      %1234 = vmatpush1.bf16.msra.mxu0 %v1215
      %1235 = vmatprep.subr.bf16.mxu0 0
      %1236 = vmatpush1.bf16.msra.mxu0 %v1216
      %1237 = vmatprep.subr.bf16.mxu0 0
      %1238 = vmatpush1.bf16.msra.mxu0 %v1217
      %1239 = vmatprep.subr.bf16.mxu0 0
      %1240 = vmatpush1.bf16.msra.mxu0 %v1218
      %1241 = vmatprep.subr.bf16.mxu0 0
      %1242 = vmatpush1.bf16.msra.mxu0 %v1219
      %1243 = vmatprep.subr.bf16.mxu0 0
      %1244 = vmatpush1.bf16.msra.mxu0 %v1220
      %1245 = vmatprep.subr.bf16.mxu0 0
      %1246 = vmatpush1.bf16.msra.mxu0 0
      %1247 = vmatprep.subr.bf16.mxu0 0
      %1248 = vmatpush1.bf16.msra.mxu0 0
      %1249 = vmatprep.subr.bf16.mxu0 0
      %1250 = vmatpush1.bf16.msra.mxu0 0
      %1251 = vmatprep.subr.bf16.mxu0 0
      %1252 = vmatpush1.bf16.msra.mxu0 0
      %1253 = vmatprep.subr.bf16.mxu0 0
      %1254 = vmatpush1.bf16.msra.mxu0 0
      %1255 = vmatprep.subr.bf16.mxu0 0
      %1256 = vmatpush1.bf16.msra.mxu0 0
      %1257 = vmatprep.subr.bf16.mxu0 0
      %1258 = vmatpush1.bf16.msra.mxu0 0
      %1259 = vmatprep.subr.bf16.mxu0 0
      %1260 = vmatpush1.bf16.msra.mxu0 0
      %1261 = vmatprep.mubr.bf16.mxu0 0
      %1262 = vmatmul.mubr.bf16.gmra.mrb[0].mxu0 %v1179
      %v1263 = vpop.f32.mrb[0].mxu0
      %v1264 = vadd.f32 0.0, %v1263
      %v1265 = vpop.f32.mrb[0].mxu0
      %v1266 = vpop.f32.mrb[0].mxu0
      %v1267 = vadd.f32 0.0, %v1266
      %v1268 = vpop.f32.mrb[0].mxu0
      %1269 = vdwg.mxu0
      %v1270 = vadd.f32 %v1135, %v1264
      %v1271 = vadd.f32 %v1136, %v1267
      %v1272 = vld [vmem:[#allocation2 + $0x8] sm:$0xf]
      %v1273 = vsel %vm476, %v471, 0
      %v1274 = vsel %vm477, %v1272, 0
      %s1275 = scalar_lea.vmem %s1, 384
      %v1276 = vld [vmem:[%s1275] sm:$0xf]
      %v1277 = vld [vmem:[%s1275 + $0x4] sm:$0xf]
      %v1278 = vld [vmem:[%s1275 + $0x8] sm:$0xf]
      %v1279 = vld [vmem:[%s1275 + $0xc] sm:$0xf]
      %v1280 = vld [vmem:[%s1275 + $0x10] sm:$0xf]
      %v1281 = vld [vmem:[%s1275 + $0x14] sm:$0xf]
      %v1282 = vld [vmem:[%s1275 + $0x18] sm:$0xf]
      %v1283 = vld [vmem:[%s1275 + $0x1c] sm:$0xf]
      %v1284 = vld [vmem:[%s1275 + $0x20] sm:$0xf]
      %v1285 = vld [vmem:[%s1275 + $0x24] sm:$0xf]
      %v1286 = vld [vmem:[%s1275 + $0x28] sm:$0xf]
      %v1287 = vld [vmem:[%s1275 + $0x2c] sm:$0xf]
      %v1288 = vld [vmem:[%s1275 + $0x30] sm:$0xf]
      %v1289 = vld [vmem:[%s1275 + $0x34] sm:$0xf]
      %v1290 = vld [vmem:[%s1275 + $0x38] sm:$0xf]
      %v1291 = vld [vmem:[%s1275 + $0x3c] sm:$0xf]
      %v1294 = vunpack.c.l.b16 %v1273
      %v1295 = vunpack.c.l.b16 %v1274
      %v1296 = vpack.c.b16 %v1295, %v1294
      %v1314 = vunpack.c.l.b16 %v1276
      %v1315 = vunpack.c.l.b16 %v1277
      %v1316 = vunpack.c.l.b16 %v1278
      %v1317 = vunpack.c.l.b16 %v1279
      %v1318 = vunpack.c.l.b16 %v1280
      %v1319 = vunpack.c.l.b16 %v1281
      %v1320 = vunpack.c.l.b16 %v1282
      %v1321 = vunpack.c.l.b16 %v1283
      %v1322 = vunpack.c.l.b16 %v1284
      %v1323 = vunpack.c.l.b16 %v1285
      %v1324 = vunpack.c.l.b16 %v1286
      %v1325 = vunpack.c.l.b16 %v1287
      %v1326 = vunpack.c.l.b16 %v1288
      %v1327 = vunpack.c.l.b16 %v1289
      %v1328 = vunpack.c.l.b16 %v1290
      %v1329 = vunpack.c.l.b16 %v1291
      %v1330 = vpack.c.b16 %v1315, %v1314
      %v1331 = vpack.c.b16 %v1317, %v1316
      %v1332 = vpack.c.b16 %v1319, %v1318
      %v1333 = vpack.c.b16 %v1321, %v1320
      %v1334 = vpack.c.b16 %v1323, %v1322
      %v1335 = vpack.c.b16 %v1325, %v1324
      %v1336 = vpack.c.b16 %v1327, %v1326
      %v1337 = vpack.c.b16 %v1329, %v1328
      %1346 = vmatprep.subr.bf16.mxu0 0
      %1347 = vmatpush1.bf16.msra.mxu0 %v1330
      %1348 = vmatprep.subr.bf16.mxu0 0
      %1349 = vmatpush1.bf16.msra.mxu0 %v1331
      %1350 = vmatprep.subr.bf16.mxu0 0
      %1351 = vmatpush1.bf16.msra.mxu0 %v1332
      %1352 = vmatprep.subr.bf16.mxu0 0
      %1353 = vmatpush1.bf16.msra.mxu0 %v1333
      %1354 = vmatprep.subr.bf16.mxu0 0
      %1355 = vmatpush1.bf16.msra.mxu0 %v1334
      %1356 = vmatprep.subr.bf16.mxu0 0
      %1357 = vmatpush1.bf16.msra.mxu0 %v1335
      %1358 = vmatprep.subr.bf16.mxu0 0
      %1359 = vmatpush1.bf16.msra.mxu0 %v1336
      %1360 = vmatprep.subr.bf16.mxu0 0
      %1361 = vmatpush1.bf16.msra.mxu0 %v1337
      %1362 = vmatprep.subr.bf16.mxu0 0
      %1363 = vmatpush1.bf16.msra.mxu0 0
      %1364 = vmatprep.subr.bf16.mxu0 0
      %1365 = vmatpush1.bf16.msra.mxu0 0
      %1366 = vmatprep.subr.bf16.mxu0 0
      %1367 = vmatpush1.bf16.msra.mxu0 0
      %1368 = vmatprep.subr.bf16.mxu0 0
      %1369 = vmatpush1.bf16.msra.mxu0 0
      %1370 = vmatprep.subr.bf16.mxu0 0
      %1371 = vmatpush1.bf16.msra.mxu0 0
      %1372 = vmatprep.subr.bf16.mxu0 0
      %1373 = vmatpush1.bf16.msra.mxu0 0
      %1374 = vmatprep.subr.bf16.mxu0 0
      %1375 = vmatpush1.bf16.msra.mxu0 0
      %1376 = vmatprep.subr.bf16.mxu0 0
      %1377 = vmatpush1.bf16.msra.mxu0 0
      %1378 = vmatprep.mubr.bf16.mxu0 0
      %1379 = vmatmul.mubr.bf16.gmra.mrb[0].mxu0 %v1296
      %v1380 = vpop.f32.mrb[0].mxu0
      %v1381 = vadd.f32 0.0, %v1380
      %v1382 = vpop.f32.mrb[0].mxu0
      %v1383 = vpop.f32.mrb[0].mxu0
      %v1384 = vadd.f32 0.0, %v1383
      %v1385 = vpop.f32.mrb[0].mxu0
      %1386 = vdwg.mxu0
      %v1387 = vadd.f32 %v1270, %v1381
      %v1388 = vadd.f32 %v1271, %v1384
      %v1389 = vld [vmem:[#allocation2 + $0x4] sm:$0xf]
      %v1390 = vld [vmem:[#allocation2 + $0x8] sm:$0xf]
      %v1391 = vld [vmem:[#allocation2 + $0xc] sm:$0x1]
      %s1392 = scalar_lea.vmem %s1, 448
      %v1393 = vld [vmem:[%s1392] sm:$0xf]
      %v1394 = vld [vmem:[%s1392 + $0x4] sm:$0xf]
      %v1395 = vld [vmem:[%s1392 + $0x8] sm:$0xf]
      %v1396 = vld [vmem:[%s1392 + $0xc] sm:$0xf]
      %v1397 = vld [vmem:[%s1392 + $0x10] sm:$0xf]
      %v1398 = vld [vmem:[%s1392 + $0x14] sm:$0xf]
      %v1399 = vld [vmem:[%s1392 + $0x18] sm:$0xf]
      %v1400 = vld [vmem:[%s1392 + $0x1c] sm:$0xf]
      %v1401 = vld [vmem:[%s1392 + $0x20] sm:$0xf]
      %v1402 = vld [vmem:[%s1392 + $0x24] sm:$0xf]
      %v1403 = vld [vmem:[%s1392 + $0x28] sm:$0xf]
      %v1404 = vld [vmem:[%s1392 + $0x2c] sm:$0xf]
      %v1405 = vld [vmem:[%s1392 + $0x30] sm:$0xf]
      %v1406 = vld [vmem:[%s1392 + $0x34] sm:$0xf]
      %v1407 = vld [vmem:[%s1392 + $0x38] sm:$0xf]
      %v1408 = vld [vmem:[%s1392 + $0x3c] sm:$0xf]
      %v1412 = vunpack.c.l.b16 %v1389
      %v1413 = vunpack.c.l.b16 %v1390
      %v1414 = vunpack.c.l.b16 %v1391
      %v1415 = vpack.c.b16 %v1413, %v1412
      %v1416 = vpack.c.b16 %v1414, %v1414
      %v1418 = vshrl.u32 %v1415, 16
      %v1420 = vshll.u32 %v1415, 16
      %v1422 = vrot.slane %v1420, 1
      %v1423 = vor.u32 %v1418, %v1422
      %v1425 = vshll.u32 %v1416, 16
      %v1427 = vrot.slane %v1425, 1
      %v1428 = vsel %vm522, %v1423, %v1427
      %v1446 = vunpack.c.l.b16 %v1393
      %v1447 = vunpack.c.l.b16 %v1394
      %v1448 = vunpack.c.l.b16 %v1395
      %v1449 = vunpack.c.l.b16 %v1396
      %v1450 = vunpack.c.l.b16 %v1397
      %v1451 = vunpack.c.l.b16 %v1398
      %v1452 = vunpack.c.l.b16 %v1399
      %v1453 = vunpack.c.l.b16 %v1400
      %v1454 = vunpack.c.l.b16 %v1401
      %v1455 = vunpack.c.l.b16 %v1402
      %v1456 = vunpack.c.l.b16 %v1403
      %v1457 = vunpack.c.l.b16 %v1404
      %v1458 = vunpack.c.l.b16 %v1405
      %v1459 = vunpack.c.l.b16 %v1406
      %v1460 = vunpack.c.l.b16 %v1407
      %v1461 = vunpack.c.l.b16 %v1408
      %v1462 = vpack.c.b16 %v1447, %v1446
      %v1463 = vpack.c.b16 %v1449, %v1448
      %v1464 = vpack.c.b16 %v1451, %v1450
      %v1465 = vpack.c.b16 %v1453, %v1452
      %v1466 = vpack.c.b16 %v1455, %v1454
      %v1467 = vpack.c.b16 %v1457, %v1456
      %v1468 = vpack.c.b16 %v1459, %v1458
      %v1469 = vpack.c.b16 %v1461, %v1460
      %1478 = vmatprep.subr.bf16.mxu0 0
      %1479 = vmatpush1.bf16.msra.mxu0 %v1462
      %1480 = vmatprep.subr.bf16.mxu0 0
      %1481 = vmatpush1.bf16.msra.mxu0 %v1463
      %1482 = vmatprep.subr.bf16.mxu0 0
      %1483 = vmatpush1.bf16.msra.mxu0 %v1464
      %1484 = vmatprep.subr.bf16.mxu0 0
      %1485 = vmatpush1.bf16.msra.mxu0 %v1465
      %1486 = vmatprep.subr.bf16.mxu0 0
      %1487 = vmatpush1.bf16.msra.mxu0 %v1466
      %1488 = vmatprep.subr.bf16.mxu0 0
      %1489 = vmatpush1.bf16.msra.mxu0 %v1467
      %1490 = vmatprep.subr.bf16.mxu0 0
      %1491 = vmatpush1.bf16.msra.mxu0 %v1468
      %1492 = vmatprep.subr.bf16.mxu0 0
      %1493 = vmatpush1.bf16.msra.mxu0 %v1469
      %1494 = vmatprep.subr.bf16.mxu0 0
      %1495 = vmatpush1.bf16.msra.mxu0 0
      %1496 = vmatprep.subr.bf16.mxu0 0
      %1497 = vmatpush1.bf16.msra.mxu0 0
      %1498 = vmatprep.subr.bf16.mxu0 0
      %1499 = vmatpush1.bf16.msra.mxu0 0
      %1500 = vmatprep.subr.bf16.mxu0 0
      %1501 = vmatpush1.bf16.msra.mxu0 0
      %1502 = vmatprep.subr.bf16.mxu0 0
      %1503 = vmatpush1.bf16.msra.mxu0 0
      %1504 = vmatprep.subr.bf16.mxu0 0
      %1505 = vmatpush1.bf16.msra.mxu0 0
      %1506 = vmatprep.subr.bf16.mxu0 0
      %1507 = vmatpush1.bf16.msra.mxu0 0
      %1508 = vmatprep.subr.bf16.mxu0 0
      %1509 = vmatpush1.bf16.msra.mxu0 0
      %1510 = vmatprep.mubr.bf16.mxu0 0
      %1511 = vmatmul.mubr.bf16.gmra.mrb[0].mxu0 %v1428
      %v1512 = vpop.f32.mrb[0].mxu0
      %v1513 = vadd.f32 0.0, %v1512
      %v1514 = vpop.f32.mrb[0].mxu0
      %v1515 = vpop.f32.mrb[0].mxu0
      %v1516 = vadd.f32 0.0, %v1515
      %v1517 = vpop.f32.mrb[0].mxu0
      %1518 = vdwg.mxu0
      %v1519 = vadd.f32 %v1387, %v1513
      %v1520 = vadd.f32 %v1388, %v1516
      %v1521 = vld [vmem:[#allocation2 + $0x4] sm:$0xe]
      %v1522 = vsel %vm737, %v1521, 0
      %v1523 = vsel %vm738, %v1390, 0
      %v1524 = vsel %vm739, %v1391, 0
      %s1525 = scalar_lea.vmem %s1, 512
      %v1526 = vld [vmem:[%s1525] sm:$0xf]
      %v1527 = vld [vmem:[%s1525 + $0x4] sm:$0xf]
      %v1528 = vld [vmem:[%s1525 + $0x8] sm:$0xf]
      %v1529 = vld [vmem:[%s1525 + $0xc] sm:$0xf]
      %v1530 = vld [vmem:[%s1525 + $0x10] sm:$0xf]
      %v1531 = vld [vmem:[%s1525 + $0x14] sm:$0xf]
      %v1532 = vld [vmem:[%s1525 + $0x18] sm:$0xf]
      %v1533 = vld [vmem:[%s1525 + $0x1c] sm:$0xf]
      %v1534 = vld [vmem:[%s1525 + $0x20] sm:$0xf]
      %v1535 = vld [vmem:[%s1525 + $0x24] sm:$0xf]
      %v1536 = vld [vmem:[%s1525 + $0x28] sm:$0xf]
      %v1537 = vld [vmem:[%s1525 + $0x2c] sm:$0xf]
      %v1538 = vld [vmem:[%s1525 + $0x30] sm:$0xf]
      %v1539 = vld [vmem:[%s1525 + $0x34] sm:$0xf]
      %v1540 = vld [vmem:[%s1525 + $0x38] sm:$0xf]
      %v1541 = vld [vmem:[%s1525 + $0x3c] sm:$0xf]
      %v1545 = vunpack.c.l.b16 %v1522
      %v1546 = vunpack.c.l.b16 %v1523
      %v1547 = vunpack.c.l.b16 %v1524
      %v1548 = vpack.c.b16 %v1546, %v1545
      %v1549 = vpack.c.b16 %v1547, %v1547
      %v1550 = vrot.slane %v1548, 1
      %v1551 = vrot.slane %v1549, 1
      %v1552 = vsel %vm768, %v1550, %v1551
      %v1570 = vunpack.c.l.b16 %v1526
      %v1571 = vunpack.c.l.b16 %v1527
      %v1572 = vunpack.c.l.b16 %v1528
      %v1573 = vunpack.c.l.b16 %v1529
      %v1574 = vunpack.c.l.b16 %v1530
      %v1575 = vunpack.c.l.b16 %v1531
      %v1576 = vunpack.c.l.b16 %v1532
      %v1577 = vunpack.c.l.b16 %v1533
      %v1578 = vunpack.c.l.b16 %v1534
      %v1579 = vunpack.c.l.b16 %v1535
      %v1580 = vunpack.c.l.b16 %v1536
      %v1581 = vunpack.c.l.b16 %v1537
      %v1582 = vunpack.c.l.b16 %v1538
      %v1583 = vunpack.c.l.b16 %v1539
      %v1584 = vunpack.c.l.b16 %v1540
      %v1585 = vunpack.c.l.b16 %v1541
      %v1586 = vpack.c.b16 %v1571, %v1570
      %v1587 = vpack.c.b16 %v1573, %v1572
      %v1588 = vpack.c.b16 %v1575, %v1574
      %v1589 = vpack.c.b16 %v1577, %v1576
      %v1590 = vpack.c.b16 %v1579, %v1578
      %v1591 = vpack.c.b16 %v1581, %v1580
      %v1592 = vpack.c.b16 %v1583, %v1582
      %v1593 = vpack.c.b16 %v1585, %v1584
      %1602 = vmatprep.subr.bf16.mxu0 0
      %1603 = vmatpush1.bf16.msra.mxu0 %v1586
      %1604 = vmatprep.subr.bf16.mxu0 0
      %1605 = vmatpush1.bf16.msra.mxu0 %v1587
      %1606 = vmatprep.subr.bf16.mxu0 0
      %1607 = vmatpush1.bf16.msra.mxu0 %v1588
      %1608 = vmatprep.subr.bf16.mxu0 0
      %1609 = vmatpush1.bf16.msra.mxu0 %v1589
      %1610 = vmatprep.subr.bf16.mxu0 0
      %1611 = vmatpush1.bf16.msra.mxu0 %v1590
      %1612 = vmatprep.subr.bf16.mxu0 0
      %1613 = vmatpush1.bf16.msra.mxu0 %v1591
      %1614 = vmatprep.subr.bf16.mxu0 0
      %1615 = vmatpush1.bf16.msra.mxu0 %v1592
      %1616 = vmatprep.subr.bf16.mxu0 0
      %1617 = vmatpush1.bf16.msra.mxu0 %v1593
      %1618 = vmatprep.subr.bf16.mxu0 0
      %1619 = vmatpush1.bf16.msra.mxu0 0
      %1620 = vmatprep.subr.bf16.mxu0 0
      %1621 = vmatpush1.bf16.msra.mxu0 0
      %1622 = vmatprep.subr.bf16.mxu0 0
      %1623 = vmatpush1.bf16.msra.mxu0 0
      %1624 = vmatprep.subr.bf16.mxu0 0
      %1625 = vmatpush1.bf16.msra.mxu0 0
      %1626 = vmatprep.subr.bf16.mxu0 0
      %1627 = vmatpush1.bf16.msra.mxu0 0
      %1628 = vmatprep.subr.bf16.mxu0 0
      %1629 = vmatpush1.bf16.msra.mxu0 0
      %1630 = vmatprep.subr.bf16.mxu0 0
      %1631 = vmatpush1.bf16.msra.mxu0 0
      %1632 = vmatprep.subr.bf16.mxu0 0
      %1633 = vmatpush1.bf16.msra.mxu0 0
      %1634 = vmatprep.mubr.bf16.mxu0 0
      %1635 = vmatmul.mubr.bf16.gmra.mrb[0].mxu0 %v1552
      %v1636 = vpop.f32.mrb[0].mxu0
      %v1637 = vadd.f32 0.0, %v1636
      %v1638 = vpop.f32.mrb[0].mxu0
      %v1639 = vpop.f32.mrb[0].mxu0
      %v1640 = vadd.f32 0.0, %v1639
      %v1641 = vpop.f32.mrb[0].mxu0
      %1642 = vdwg.mxu0
      %v1643 = vadd.f32 %v1519, %v1637
      %v1644 = vadd.f32 %v1520, %v1640
      %v1645 = vld [vmem:[%s2] sm:$0x1]
      %v1647 = vlaneseq
      %v1648 = vshrl.u32 %v1647, 7
      %v1649 = vsub.s32 0, %v1648
      %v1650 = vrot.slane %v1645, %v1649
      %v1652 = vadd.f32 %v1643, %v1650
      %v1653 = vadd.f32 %v1644, %v1650
      %v1654 = vmax.f32 %v1652, 0.0
      %v1655 = vmax.f32 %v1653, 0.0
      %v1656 = vpack.c.bf16 %v1655, %v1654
      %v1658 = vunpack.c.l.b16 %v1656
      %v1659 = vunpack.c.h.b16 %v1656
      %v1660 = vpack.c.b16 %v1658, %v1658
      %v1661 = vpack.c.b16 %v1659, %v1659
      %v1663 = vshrl.u32 %v1660, 16
      %v1665 = vrot.slane %v1663, 5
      %v1666 = vshll.u32 %v1660, 16
      %v1668 = vrot.slane %v1666, 6
      %v1669 = vor.u32 %v1665, %v1668
      %v1670 = vrot.slane %v1669, 4
      %v1672 = vshrl.u32 %v1661, 16
      %v1674 = vrot.slane %v1672, 5
      %v1675 = vshll.u32 %v1661, 16
      %v1677 = vrot.slane %v1675, 6
      %v1678 = vor.u32 %v1674, %v1677
      %v1679 = vsel %vm440, %v1670, %v1678
      %v1680 = vrot.slane %v1678, 4
      %v1684 = vsel %vm401, %v1669, %v864
      %1685 = vst [vmem:[#allocation2] sm:$0xc] %v1684
      %1686 = vst [vmem:[#allocation2 + $0x4] sm:$0xf] %v1679
      %v1687 = vld [vmem:[#allocation2 + $0x8] sm:$0x7]
      %v1688 = vsel %vm395, %v1680, %v1687
      %1689 = vst [vmem:[#allocation2 + $0x8] sm:$0x7] %v1688
      %v1690 = vld [vmem:[#allocation2] sm:$0xf]
      %v1691 = vld [vmem:[#allocation2 + $0x4] sm:$0xf]
      %v1692 = vsel %vm476, %v1690, 0
      %v1693 = vsel %vm477, %v1691, 0
      %v1694 = vld [vmem:[%s3] sm:$0xf]
      %v1695 = vld [vmem:[%s3 + $0x4] sm:$0xf]
      %v1696 = vld [vmem:[%s3 + $0x8] sm:$0xf]
      %v1697 = vld [vmem:[%s3 + $0xc] sm:$0xf]
      %v1698 = vld [vmem:[%s3 + $0x10] sm:$0xf]
      %v1699 = vld [vmem:[%s3 + $0x14] sm:$0xf]
      %v1700 = vld [vmem:[%s3 + $0x18] sm:$0xf]
      %v1701 = vld [vmem:[%s3 + $0x1c] sm:$0xf]
      %v1702 = vld [vmem:[%s3 + $0x20] sm:$0xf]
      %v1703 = vld [vmem:[%s3 + $0x24] sm:$0xf]
      %v1704 = vld [vmem:[%s3 + $0x28] sm:$0xf]
      %v1705 = vld [vmem:[%s3 + $0x2c] sm:$0xf]
      %v1706 = vld [vmem:[%s3 + $0x30] sm:$0xf]
      %v1707 = vld [vmem:[%s3 + $0x34] sm:$0xf]
      %v1708 = vld [vmem:[%s3 + $0x38] sm:$0xf]
      %v1709 = vld [vmem:[%s3 + $0x3c] sm:$0xf]
      %v1710 = vld [vmem:[#allocation2 + $0x8] sm:$0x1]
      %s1711 = scalar_lea.vmem %s3, 64
      %v1712 = vld [vmem:[%s1711] sm:$0xf]
      %v1713 = vld [vmem:[%s1711 + $0x4] sm:$0xf]
      %v1714 = vld [vmem:[%s1711 + $0x8] sm:$0xf]
      %v1715 = vld [vmem:[%s1711 + $0xc] sm:$0xf]
      %v1716 = vld [vmem:[%s1711 + $0x10] sm:$0xf]
      %v1717 = vld [vmem:[%s1711 + $0x14] sm:$0xf]
      %v1718 = vld [vmem:[%s1711 + $0x18] sm:$0xf]
      %v1719 = vld [vmem:[%s1711 + $0x1c] sm:$0xf]
      %v1720 = vld [vmem:[%s1711 + $0x20] sm:$0xf]
      %v1721 = vld [vmem:[%s1711 + $0x24] sm:$0xf]
      %v1722 = vld [vmem:[%s1711 + $0x28] sm:$0xf]
      %v1723 = vld [vmem:[%s1711 + $0x2c] sm:$0xf]
      %v1724 = vld [vmem:[%s1711 + $0x30] sm:$0xf]
      %v1725 = vld [vmem:[%s1711 + $0x34] sm:$0xf]
      %v1726 = vld [vmem:[%s1711 + $0x38] sm:$0xf]
      %v1727 = vld [vmem:[%s1711 + $0x3c] sm:$0xf]
      %v1731 = vunpack.c.l.b16 %v1690
      %v1732 = vunpack.c.l.b16 %v1691
      %v1733 = vunpack.c.l.b16 %v1710
      %v1734 = vpack.c.b16 %v1732, %v1731
      %v1735 = vpack.c.b16 %v1733, %v1733
      %v1737 = vshrl.u32 %v1734, 16
      %v1739 = vshll.u32 %v1734, 16
      %v1741 = vrot.slane %v1739, 1
      %v1742 = vor.u32 %v1737, %v1741
      %v1744 = vshll.u32 %v1735, 16
      %v1746 = vrot.slane %v1744, 1
      %v1747 = vsel %vm522, %v1742, %v1746
      %v1765 = vunpack.c.l.b16 %v1712
      %v1766 = vunpack.c.l.b16 %v1713
      %v1767 = vunpack.c.l.b16 %v1714
      %v1768 = vunpack.c.l.b16 %v1715
      %v1769 = vunpack.c.l.b16 %v1716
      %v1770 = vunpack.c.l.b16 %v1717
      %v1771 = vunpack.c.l.b16 %v1718
      %v1772 = vunpack.c.l.b16 %v1719
      %v1773 = vunpack.c.l.b16 %v1720
      %v1774 = vunpack.c.l.b16 %v1721
      %v1775 = vunpack.c.l.b16 %v1722
      %v1776 = vunpack.c.l.b16 %v1723
      %v1777 = vunpack.c.l.b16 %v1724
      %v1778 = vunpack.c.l.b16 %v1725
      %v1779 = vunpack.c.l.b16 %v1726
      %v1780 = vunpack.c.l.b16 %v1727
      %v1781 = vpack.c.b16 %v1766, %v1765
      %v1782 = vpack.c.b16 %v1768, %v1767
      %v1783 = vpack.c.b16 %v1770, %v1769
      %v1784 = vpack.c.b16 %v1772, %v1771
      %v1785 = vpack.c.b16 %v1774, %v1773
      %v1786 = vpack.c.b16 %v1776, %v1775
      %v1787 = vpack.c.b16 %v1778, %v1777
      %v1788 = vpack.c.b16 %v1780, %v1779
      %1797 = vmatprep.subr.bf16.mxu0 0
      %1798 = vmatpush1.bf16.msra.mxu0 %v1781
      %1799 = vmatprep.subr.bf16.mxu0 0
      %1800 = vmatpush1.bf16.msra.mxu0 %v1782
      %1801 = vmatprep.subr.bf16.mxu0 0
      %1802 = vmatpush1.bf16.msra.mxu0 %v1783
      %1803 = vmatprep.subr.bf16.mxu0 0
      %1804 = vmatpush1.bf16.msra.mxu0 %v1784
      %1805 = vmatprep.subr.bf16.mxu0 0
      %1806 = vmatpush1.bf16.msra.mxu0 %v1785
      %1807 = vmatprep.subr.bf16.mxu0 0
      %1808 = vmatpush1.bf16.msra.mxu0 %v1786
      %1809 = vmatprep.subr.bf16.mxu0 0
      %1810 = vmatpush1.bf16.msra.mxu0 %v1787
      %1811 = vmatprep.subr.bf16.mxu0 0
      %1812 = vmatpush1.bf16.msra.mxu0 %v1788
      %1813 = vmatprep.subr.bf16.mxu0 0
      %1814 = vmatpush1.bf16.msra.mxu0 0
      %1815 = vmatprep.subr.bf16.mxu0 0
      %1816 = vmatpush1.bf16.msra.mxu0 0
      %1817 = vmatprep.subr.bf16.mxu0 0
      %1818 = vmatpush1.bf16.msra.mxu0 0
      %1819 = vmatprep.subr.bf16.mxu0 0
      %1820 = vmatpush1.bf16.msra.mxu0 0
      %1821 = vmatprep.subr.bf16.mxu0 0
      %1822 = vmatpush1.bf16.msra.mxu0 0
      %1823 = vmatprep.subr.bf16.mxu0 0
      %1824 = vmatpush1.bf16.msra.mxu0 0
      %1825 = vmatprep.subr.bf16.mxu0 0
      %1826 = vmatpush1.bf16.msra.mxu0 0
      %1827 = vmatprep.subr.bf16.mxu0 0
      %1828 = vmatpush1.bf16.msra.mxu0 0
      %1829 = vmatprep.mubr.bf16.mxu0 0
      %1830 = vmatmul.mubr.bf16.gmra.mrb[0].mxu0 %v1747
      %v1831 = vpop.f32.mrb[0].mxu0
      %v1832 = vadd.f32 0.0, %v1831
      %v1833 = vpop.f32.mrb[0].mxu0
      %v1834 = vpop.f32.mrb[0].mxu0
      %v1835 = vadd.f32 0.0, %v1834
      %v1836 = vpop.f32.mrb[0].mxu0
      %1837 = vdwg.mxu0
      %v1840 = vunpack.c.l.b16 %v1692
      %v1841 = vunpack.c.l.b16 %v1693
      %v1842 = vpack.c.b16 %v1841, %v1840
      %v1860 = vunpack.c.l.b16 %v1694
      %v1861 = vunpack.c.l.b16 %v1695
      %v1862 = vunpack.c.l.b16 %v1696
      %v1863 = vunpack.c.l.b16 %v1697
      %v1864 = vunpack.c.l.b16 %v1698
      %v1865 = vunpack.c.l.b16 %v1699
      %v1866 = vunpack.c.l.b16 %v1700
      %v1867 = vunpack.c.l.b16 %v1701
      %v1868 = vunpack.c.l.b16 %v1702
      %v1869 = vunpack.c.l.b16 %v1703
      %v1870 = vunpack.c.l.b16 %v1704
      %v1871 = vunpack.c.l.b16 %v1705
      %v1872 = vunpack.c.l.b16 %v1706
      %v1873 = vunpack.c.l.b16 %v1707
      %v1874 = vunpack.c.l.b16 %v1708
      %v1875 = vunpack.c.l.b16 %v1709
      %v1876 = vpack.c.b16 %v1861, %v1860
      %v1877 = vpack.c.b16 %v1863, %v1862
      %v1878 = vpack.c.b16 %v1865, %v1864
      %v1879 = vpack.c.b16 %v1867, %v1866
      %v1880 = vpack.c.b16 %v1869, %v1868
      %v1881 = vpack.c.b16 %v1871, %v1870
      %v1882 = vpack.c.b16 %v1873, %v1872
      %v1883 = vpack.c.b16 %v1875, %v1874
      %1892 = vmatprep.subr.bf16.mxu0 0
      %1893 = vmatpush1.bf16.msra.mxu0 %v1876
      %1894 = vmatprep.subr.bf16.mxu0 0
      %1895 = vmatpush1.bf16.msra.mxu0 %v1877
      %1896 = vmatprep.subr.bf16.mxu0 0
      %1897 = vmatpush1.bf16.msra.mxu0 %v1878
      %1898 = vmatprep.subr.bf16.mxu0 0
      %1899 = vmatpush1.bf16.msra.mxu0 %v1879
      %1900 = vmatprep.subr.bf16.mxu0 0
      %1901 = vmatpush1.bf16.msra.mxu0 %v1880
      %1902 = vmatprep.subr.bf16.mxu0 0
      %1903 = vmatpush1.bf16.msra.mxu0 %v1881
      %1904 = vmatprep.subr.bf16.mxu0 0
      %1905 = vmatpush1.bf16.msra.mxu0 %v1882
      %1906 = vmatprep.subr.bf16.mxu0 0
      %1907 = vmatpush1.bf16.msra.mxu0 %v1883
      %1908 = vmatprep.subr.bf16.mxu0 0
      %1909 = vmatpush1.bf16.msra.mxu0 0
      %1910 = vmatprep.subr.bf16.mxu0 0
      %1911 = vmatpush1.bf16.msra.mxu0 0
      %1912 = vmatprep.subr.bf16.mxu0 0
      %1913 = vmatpush1.bf16.msra.mxu0 0
      %1914 = vmatprep.subr.bf16.mxu0 0
      %1915 = vmatpush1.bf16.msra.mxu0 0
      %1916 = vmatprep.subr.bf16.mxu0 0
      %1917 = vmatpush1.bf16.msra.mxu0 0
      %1918 = vmatprep.subr.bf16.mxu0 0
      %1919 = vmatpush1.bf16.msra.mxu0 0
      %1920 = vmatprep.subr.bf16.mxu0 0
      %1921 = vmatpush1.bf16.msra.mxu0 0
      %1922 = vmatprep.subr.bf16.mxu0 0
      %1923 = vmatpush1.bf16.msra.mxu0 0
      %1924 = vmatprep.mubr.bf16.mxu0 0
      %1925 = vmatmul.mubr.bf16.gmra.mrb[0].mxu0 %v1842
      %v1926 = vpop.f32.mrb[0].mxu0
      %v1927 = vadd.f32 %v1832, %v1926
      %v1928 = vpop.f32.mrb[0].mxu0
      %v1929 = vpop.f32.mrb[0].mxu0
      %v1930 = vadd.f32 %v1835, %v1929
      %v1931 = vpop.f32.mrb[0].mxu0
      %1932 = vdwg.mxu0
      %v1933 = vld [vmem:[#allocation2] sm:$0xe]
      %v1934 = vsel %vm737, %v1933, 0
      %v1935 = vsel %vm738, %v1691, 0
      %v1936 = vsel %vm739, %v1710, 0
      %s1937 = scalar_lea.vmem %s3, 128
      %v1938 = vld [vmem:[%s1937] sm:$0xf]
      %v1939 = vld [vmem:[%s1937 + $0x4] sm:$0xf]
      %v1940 = vld [vmem:[%s1937 + $0x8] sm:$0xf]
      %v1941 = vld [vmem:[%s1937 + $0xc] sm:$0xf]
      %v1942 = vld [vmem:[%s1937 + $0x10] sm:$0xf]
      %v1943 = vld [vmem:[%s1937 + $0x14] sm:$0xf]
      %v1944 = vld [vmem:[%s1937 + $0x18] sm:$0xf]
      %v1945 = vld [vmem:[%s1937 + $0x1c] sm:$0xf]
      %v1946 = vld [vmem:[%s1937 + $0x20] sm:$0xf]
      %v1947 = vld [vmem:[%s1937 + $0x24] sm:$0xf]
      %v1948 = vld [vmem:[%s1937 + $0x28] sm:$0xf]
      %v1949 = vld [vmem:[%s1937 + $0x2c] sm:$0xf]
      %v1950 = vld [vmem:[%s1937 + $0x30] sm:$0xf]
      %v1951 = vld [vmem:[%s1937 + $0x34] sm:$0xf]
      %v1952 = vld [vmem:[%s1937 + $0x38] sm:$0xf]
      %v1953 = vld [vmem:[%s1937 + $0x3c] sm:$0xf]
      %v1957 = vunpack.c.l.b16 %v1934
      %v1958 = vunpack.c.l.b16 %v1935
      %v1959 = vunpack.c.l.b16 %v1936
      %v1960 = vpack.c.b16 %v1958, %v1957
      %v1961 = vpack.c.b16 %v1959, %v1959
      %v1962 = vrot.slane %v1960, 1
      %v1963 = vrot.slane %v1961, 1
      %v1964 = vsel %vm768, %v1962, %v1963
      %v1982 = vunpack.c.l.b16 %v1938
      %v1983 = vunpack.c.l.b16 %v1939
      %v1984 = vunpack.c.l.b16 %v1940
      %v1985 = vunpack.c.l.b16 %v1941
      %v1986 = vunpack.c.l.b16 %v1942
      %v1987 = vunpack.c.l.b16 %v1943
      %v1988 = vunpack.c.l.b16 %v1944
      %v1989 = vunpack.c.l.b16 %v1945
      %v1990 = vunpack.c.l.b16 %v1946
      %v1991 = vunpack.c.l.b16 %v1947
      %v1992 = vunpack.c.l.b16 %v1948
      %v1993 = vunpack.c.l.b16 %v1949
      %v1994 = vunpack.c.l.b16 %v1950
      %v1995 = vunpack.c.l.b16 %v1951
      %v1996 = vunpack.c.l.b16 %v1952
      %v1997 = vunpack.c.l.b16 %v1953
      %v1998 = vpack.c.b16 %v1983, %v1982
      %v1999 = vpack.c.b16 %v1985, %v1984
      %v2000 = vpack.c.b16 %v1987, %v1986
      %v2001 = vpack.c.b16 %v1989, %v1988
      %v2002 = vpack.c.b16 %v1991, %v1990
      %v2003 = vpack.c.b16 %v1993, %v1992
      %v2004 = vpack.c.b16 %v1995, %v1994
      %v2005 = vpack.c.b16 %v1997, %v1996
      %2014 = vmatprep.subr.bf16.mxu0 0
      %2015 = vmatpush1.bf16.msra.mxu0 %v1998
      %2016 = vmatprep.subr.bf16.mxu0 0
      %2017 = vmatpush1.bf16.msra.mxu0 %v1999
      %2018 = vmatprep.subr.bf16.mxu0 0
      %2019 = vmatpush1.bf16.msra.mxu0 %v2000
      %2020 = vmatprep.subr.bf16.mxu0 0
      %2021 = vmatpush1.bf16.msra.mxu0 %v2001
      %2022 = vmatprep.subr.bf16.mxu0 0
      %2023 = vmatpush1.bf16.msra.mxu0 %v2002
      %2024 = vmatprep.subr.bf16.mxu0 0
      %2025 = vmatpush1.bf16.msra.mxu0 %v2003
      %2026 = vmatprep.subr.bf16.mxu0 0
      %2027 = vmatpush1.bf16.msra.mxu0 %v2004
      %2028 = vmatprep.subr.bf16.mxu0 0
      %2029 = vmatpush1.bf16.msra.mxu0 %v2005
      %2030 = vmatprep.subr.bf16.mxu0 0
      %2031 = vmatpush1.bf16.msra.mxu0 0
      %2032 = vmatprep.subr.bf16.mxu0 0
      %2033 = vmatpush1.bf16.msra.mxu0 0
      %2034 = vmatprep.subr.bf16.mxu0 0
      %2035 = vmatpush1.bf16.msra.mxu0 0
      %2036 = vmatprep.subr.bf16.mxu0 0
      %2037 = vmatpush1.bf16.msra.mxu0 0
      %2038 = vmatprep.subr.bf16.mxu0 0
      %2039 = vmatpush1.bf16.msra.mxu0 0
      %2040 = vmatprep.subr.bf16.mxu0 0
      %2041 = vmatpush1.bf16.msra.mxu0 0
      %2042 = vmatprep.subr.bf16.mxu0 0
      %2043 = vmatpush1.bf16.msra.mxu0 0
      %2044 = vmatprep.subr.bf16.mxu0 0
      %2045 = vmatpush1.bf16.msra.mxu0 0
      %2046 = vmatprep.mubr.bf16.mxu0 0
      %2047 = vmatmul.mubr.bf16.gmra.mrb[0].mxu0 %v1964
      %v2048 = vpop.f32.mrb[0].mxu0
      %v2049 = vadd.f32 0.0, %v2048
      %v2050 = vpop.f32.mrb[0].mxu0
      %v2051 = vpop.f32.mrb[0].mxu0
      %v2052 = vadd.f32 0.0, %v2051
      %v2053 = vpop.f32.mrb[0].mxu0
      %2054 = vdwg.mxu0
      %v2055 = vadd.f32 %v1927, %v2049
      %v2056 = vadd.f32 %v1930, %v2052
      %v2057 = vld [vmem:[#allocation2] sm:$0xc]
      %v2058 = vld [vmem:[#allocation2 + $0x8] sm:$0x3]
      %v2059 = vsel %vm876, %v2057, 0
      %v2060 = vsel %vm877, %v1691, 0
      %v2061 = vsel %vm878, %v2058, 0
      %s2062 = scalar_lea.vmem %s3, 192
      %v2063 = vld [vmem:[%s2062] sm:$0xf]
      %v2064 = vld [vmem:[%s2062 + $0x4] sm:$0xf]
      %v2065 = vld [vmem:[%s2062 + $0x8] sm:$0xf]
      %v2066 = vld [vmem:[%s2062 + $0xc] sm:$0xf]
      %v2067 = vld [vmem:[%s2062 + $0x10] sm:$0xf]
      %v2068 = vld [vmem:[%s2062 + $0x14] sm:$0xf]
      %v2069 = vld [vmem:[%s2062 + $0x18] sm:$0xf]
      %v2070 = vld [vmem:[%s2062 + $0x1c] sm:$0xf]
      %v2071 = vld [vmem:[%s2062 + $0x20] sm:$0xf]
      %v2072 = vld [vmem:[%s2062 + $0x24] sm:$0xf]
      %v2073 = vld [vmem:[%s2062 + $0x28] sm:$0xf]
      %v2074 = vld [vmem:[%s2062 + $0x2c] sm:$0xf]
      %v2075 = vld [vmem:[%s2062 + $0x30] sm:$0xf]
      %v2076 = vld [vmem:[%s2062 + $0x34] sm:$0xf]
      %v2077 = vld [vmem:[%s2062 + $0x38] sm:$0xf]
      %v2078 = vld [vmem:[%s2062 + $0x3c] sm:$0xf]
      %v2082 = vunpack.c.l.b16 %v2059
      %v2083 = vunpack.c.l.b16 %v2060
      %v2084 = vunpack.c.l.b16 %v2061
      %v2085 = vpack.c.b16 %v2083, %v2082
      %v2086 = vpack.c.b16 %v2084, %v2084
      %v2087 = vrot.slane %v2085, 2
      %v2088 = vrot.slane %v2086, 2
      %v2089 = vsel %vm907, %v2087, %v2088
      %v2107 = vunpack.c.l.b16 %v2063
      %v2108 = vunpack.c.l.b16 %v2064
      %v2109 = vunpack.c.l.b16 %v2065
      %v2110 = vunpack.c.l.b16 %v2066
      %v2111 = vunpack.c.l.b16 %v2067
      %v2112 = vunpack.c.l.b16 %v2068
      %v2113 = vunpack.c.l.b16 %v2069
      %v2114 = vunpack.c.l.b16 %v2070
      %v2115 = vunpack.c.l.b16 %v2071
      %v2116 = vunpack.c.l.b16 %v2072
      %v2117 = vunpack.c.l.b16 %v2073
      %v2118 = vunpack.c.l.b16 %v2074
      %v2119 = vunpack.c.l.b16 %v2075
      %v2120 = vunpack.c.l.b16 %v2076
      %v2121 = vunpack.c.l.b16 %v2077
      %v2122 = vunpack.c.l.b16 %v2078
      %v2123 = vpack.c.b16 %v2108, %v2107
      %v2124 = vpack.c.b16 %v2110, %v2109
      %v2125 = vpack.c.b16 %v2112, %v2111
      %v2126 = vpack.c.b16 %v2114, %v2113
      %v2127 = vpack.c.b16 %v2116, %v2115
      %v2128 = vpack.c.b16 %v2118, %v2117
      %v2129 = vpack.c.b16 %v2120, %v2119
      %v2130 = vpack.c.b16 %v2122, %v2121
      %2139 = vmatprep.subr.bf16.mxu0 0
      %2140 = vmatpush1.bf16.msra.mxu0 %v2123
      %2141 = vmatprep.subr.bf16.mxu0 0
      %2142 = vmatpush1.bf16.msra.mxu0 %v2124
      %2143 = vmatprep.subr.bf16.mxu0 0
      %2144 = vmatpush1.bf16.msra.mxu0 %v2125
      %2145 = vmatprep.subr.bf16.mxu0 0
      %2146 = vmatpush1.bf16.msra.mxu0 %v2126
      %2147 = vmatprep.subr.bf16.mxu0 0
      %2148 = vmatpush1.bf16.msra.mxu0 %v2127
      %2149 = vmatprep.subr.bf16.mxu0 0
      %2150 = vmatpush1.bf16.msra.mxu0 %v2128
      %2151 = vmatprep.subr.bf16.mxu0 0
      %2152 = vmatpush1.bf16.msra.mxu0 %v2129
      %2153 = vmatprep.subr.bf16.mxu0 0
      %2154 = vmatpush1.bf16.msra.mxu0 %v2130
      %2155 = vmatprep.subr.bf16.mxu0 0
      %2156 = vmatpush1.bf16.msra.mxu0 0
      %2157 = vmatprep.subr.bf16.mxu0 0
      %2158 = vmatpush1.bf16.msra.mxu0 0
      %2159 = vmatprep.subr.bf16.mxu0 0
      %2160 = vmatpush1.bf16.msra.mxu0 0
      %2161 = vmatprep.subr.bf16.mxu0 0
      %2162 = vmatpush1.bf16.msra.mxu0 0
      %2163 = vmatprep.subr.bf16.mxu0 0
      %2164 = vmatpush1.bf16.msra.mxu0 0
      %2165 = vmatprep.subr.bf16.mxu0 0
      %2166 = vmatpush1.bf16.msra.mxu0 0
      %2167 = vmatprep.subr.bf16.mxu0 0
      %2168 = vmatpush1.bf16.msra.mxu0 0
      %2169 = vmatprep.subr.bf16.mxu0 0
      %2170 = vmatpush1.bf16.msra.mxu0 0
      %2171 = vmatprep.mubr.bf16.mxu0 0
      %2172 = vmatmul.mubr.bf16.gmra.mrb[0].mxu0 %v2089
      %v2173 = vpop.f32.mrb[0].mxu0
      %v2174 = vadd.f32 0.0, %v2173
      %v2175 = vpop.f32.mrb[0].mxu0
      %v2176 = vpop.f32.mrb[0].mxu0
      %v2177 = vadd.f32 0.0, %v2176
      %v2178 = vpop.f32.mrb[0].mxu0
      %2179 = vdwg.mxu0
      %v2180 = vadd.f32 %v2055, %v2174
      %v2181 = vadd.f32 %v2056, %v2177
      %v2182 = vld [vmem:[#allocation2 + $0x8] sm:$0x7]
      %s2183 = scalar_lea.vmem %s3, 256
      %v2184 = vld [vmem:[%s2183] sm:$0xf]
      %v2185 = vld [vmem:[%s2183 + $0x4] sm:$0xf]
      %v2186 = vld [vmem:[%s2183 + $0x8] sm:$0xf]
      %v2187 = vld [vmem:[%s2183 + $0xc] sm:$0xf]
      %v2188 = vld [vmem:[%s2183 + $0x10] sm:$0xf]
      %v2189 = vld [vmem:[%s2183 + $0x14] sm:$0xf]
      %v2190 = vld [vmem:[%s2183 + $0x18] sm:$0xf]
      %v2191 = vld [vmem:[%s2183 + $0x1c] sm:$0xf]
      %v2192 = vld [vmem:[%s2183 + $0x20] sm:$0xf]
      %v2193 = vld [vmem:[%s2183 + $0x24] sm:$0xf]
      %v2194 = vld [vmem:[%s2183 + $0x28] sm:$0xf]
      %v2195 = vld [vmem:[%s2183 + $0x2c] sm:$0xf]
      %v2196 = vld [vmem:[%s2183 + $0x30] sm:$0xf]
      %v2197 = vld [vmem:[%s2183 + $0x34] sm:$0xf]
      %v2198 = vld [vmem:[%s2183 + $0x38] sm:$0xf]
      %v2199 = vld [vmem:[%s2183 + $0x3c] sm:$0xf]
      %v2202 = vunpack.c.l.b16 %v2057
      %v2203 = vunpack.c.l.b16 %v2182
      %v2204 = vpack.c.b16 %v1732, %v2202
      %v2205 = vpack.c.b16 %v2203, %v2203
      %v2207 = vshrl.u32 %v2204, 16
      %v2209 = vrot.slane %v2207, 2
      %v2210 = vshll.u32 %v2204, 16
      %v2212 = vrot.slane %v2210, 3
      %v2213 = vor.u32 %v2209, %v2212
      %v2215 = vshrl.u32 %v2205, 16
      %v2217 = vrot.slane %v2215, 2
      %v2218 = vshll.u32 %v2205, 16
      %v2220 = vrot.slane %v2218, 3
      %v2221 = vor.u32 %v2217, %v2220
      %v2222 = vsel %vm1027, %v2213, %v2221
      %v2240 = vunpack.c.l.b16 %v2184
      %v2241 = vunpack.c.l.b16 %v2185
      %v2242 = vunpack.c.l.b16 %v2186
      %v2243 = vunpack.c.l.b16 %v2187
      %v2244 = vunpack.c.l.b16 %v2188
      %v2245 = vunpack.c.l.b16 %v2189
      %v2246 = vunpack.c.l.b16 %v2190
      %v2247 = vunpack.c.l.b16 %v2191
      %v2248 = vunpack.c.l.b16 %v2192
      %v2249 = vunpack.c.l.b16 %v2193
      %v2250 = vunpack.c.l.b16 %v2194
      %v2251 = vunpack.c.l.b16 %v2195
      %v2252 = vunpack.c.l.b16 %v2196
      %v2253 = vunpack.c.l.b16 %v2197
      %v2254 = vunpack.c.l.b16 %v2198
      %v2255 = vunpack.c.l.b16 %v2199
      %v2256 = vpack.c.b16 %v2241, %v2240
      %v2257 = vpack.c.b16 %v2243, %v2242
      %v2258 = vpack.c.b16 %v2245, %v2244
      %v2259 = vpack.c.b16 %v2247, %v2246
      %v2260 = vpack.c.b16 %v2249, %v2248
      %v2261 = vpack.c.b16 %v2251, %v2250
      %v2262 = vpack.c.b16 %v2253, %v2252
      %v2263 = vpack.c.b16 %v2255, %v2254
      %2272 = vmatprep.subr.bf16.mxu0 0
      %2273 = vmatpush1.bf16.msra.mxu0 %v2256
      %2274 = vmatprep.subr.bf16.mxu0 0
      %2275 = vmatpush1.bf16.msra.mxu0 %v2257
      %2276 = vmatprep.subr.bf16.mxu0 0
      %2277 = vmatpush1.bf16.msra.mxu0 %v2258
      %2278 = vmatprep.subr.bf16.mxu0 0
      %2279 = vmatpush1.bf16.msra.mxu0 %v2259
      %2280 = vmatprep.subr.bf16.mxu0 0
      %2281 = vmatpush1.bf16.msra.mxu0 %v2260
      %2282 = vmatprep.subr.bf16.mxu0 0
      %2283 = vmatpush1.bf16.msra.mxu0 %v2261
      %2284 = vmatprep.subr.bf16.mxu0 0
      %2285 = vmatpush1.bf16.msra.mxu0 %v2262
      %2286 = vmatprep.subr.bf16.mxu0 0
      %2287 = vmatpush1.bf16.msra.mxu0 %v2263
      %2288 = vmatprep.subr.bf16.mxu0 0
      %2289 = vmatpush1.bf16.msra.mxu0 0
      %2290 = vmatprep.subr.bf16.mxu0 0
      %2291 = vmatpush1.bf16.msra.mxu0 0
      %2292 = vmatprep.subr.bf16.mxu0 0
      %2293 = vmatpush1.bf16.msra.mxu0 0
      %2294 = vmatprep.subr.bf16.mxu0 0
      %2295 = vmatpush1.bf16.msra.mxu0 0
      %2296 = vmatprep.subr.bf16.mxu0 0
      %2297 = vmatpush1.bf16.msra.mxu0 0
      %2298 = vmatprep.subr.bf16.mxu0 0
      %2299 = vmatpush1.bf16.msra.mxu0 0
      %2300 = vmatprep.subr.bf16.mxu0 0
      %2301 = vmatpush1.bf16.msra.mxu0 0
      %2302 = vmatprep.subr.bf16.mxu0 0
      %2303 = vmatpush1.bf16.msra.mxu0 0
      %2304 = vmatprep.mubr.bf16.mxu0 0
      %2305 = vmatmul.mubr.bf16.gmra.mrb[0].mxu0 %v2222
      %v2306 = vpop.f32.mrb[0].mxu0
      %v2307 = vadd.f32 0.0, %v2306
      %v2308 = vpop.f32.mrb[0].mxu0
      %v2309 = vpop.f32.mrb[0].mxu0
      %v2310 = vadd.f32 0.0, %v2309
      %v2311 = vpop.f32.mrb[0].mxu0
      %2312 = vdwg.mxu0
      %v2313 = vadd.f32 %v2180, %v2307
      %v2314 = vadd.f32 %v2181, %v2310
      %v2315 = vld [vmem:[#allocation2] sm:$0x8]
      %v2316 = vsel %vm1145, %v2315, 0
      %v2317 = vsel %vm1146, %v1691, 0
      %v2318 = vsel %vm1147, %v2182, 0
      %s2319 = scalar_lea.vmem %s3, 320
      %v2320 = vld [vmem:[%s2319] sm:$0xf]
      %v2321 = vld [vmem:[%s2319 + $0x4] sm:$0xf]
      %v2322 = vld [vmem:[%s2319 + $0x8] sm:$0xf]
      %v2323 = vld [vmem:[%s2319 + $0xc] sm:$0xf]
      %v2324 = vld [vmem:[%s2319 + $0x10] sm:$0xf]
      %v2325 = vld [vmem:[%s2319 + $0x14] sm:$0xf]
      %v2326 = vld [vmem:[%s2319 + $0x18] sm:$0xf]
      %v2327 = vld [vmem:[%s2319 + $0x1c] sm:$0xf]
      %v2328 = vld [vmem:[%s2319 + $0x20] sm:$0xf]
      %v2329 = vld [vmem:[%s2319 + $0x24] sm:$0xf]
      %v2330 = vld [vmem:[%s2319 + $0x28] sm:$0xf]
      %v2331 = vld [vmem:[%s2319 + $0x2c] sm:$0xf]
      %v2332 = vld [vmem:[%s2319 + $0x30] sm:$0xf]
      %v2333 = vld [vmem:[%s2319 + $0x34] sm:$0xf]
      %v2334 = vld [vmem:[%s2319 + $0x38] sm:$0xf]
      %v2335 = vld [vmem:[%s2319 + $0x3c] sm:$0xf]
      %v2339 = vunpack.c.l.b16 %v2316
      %v2340 = vunpack.c.l.b16 %v2317
      %v2341 = vunpack.c.l.b16 %v2318
      %v2342 = vpack.c.b16 %v2340, %v2339
      %v2343 = vpack.c.b16 %v2341, %v2341
      %v2344 = vrot.slane %v2342, 3
      %v2345 = vrot.slane %v2343, 3
      %v2346 = vsel %vm1176, %v2344, %v2345
      %v2364 = vunpack.c.l.b16 %v2320
      %v2365 = vunpack.c.l.b16 %v2321
      %v2366 = vunpack.c.l.b16 %v2322
      %v2367 = vunpack.c.l.b16 %v2323
      %v2368 = vunpack.c.l.b16 %v2324
      %v2369 = vunpack.c.l.b16 %v2325
      %v2370 = vunpack.c.l.b16 %v2326
      %v2371 = vunpack.c.l.b16 %v2327
      %v2372 = vunpack.c.l.b16 %v2328
      %v2373 = vunpack.c.l.b16 %v2329
      %v2374 = vunpack.c.l.b16 %v2330
      %v2375 = vunpack.c.l.b16 %v2331
      %v2376 = vunpack.c.l.b16 %v2332
      %v2377 = vunpack.c.l.b16 %v2333
      %v2378 = vunpack.c.l.b16 %v2334
      %v2379 = vunpack.c.l.b16 %v2335
      %v2380 = vpack.c.b16 %v2365, %v2364
      %v2381 = vpack.c.b16 %v2367, %v2366
      %v2382 = vpack.c.b16 %v2369, %v2368
      %v2383 = vpack.c.b16 %v2371, %v2370
      %v2384 = vpack.c.b16 %v2373, %v2372
      %v2385 = vpack.c.b16 %v2375, %v2374
      %v2386 = vpack.c.b16 %v2377, %v2376
      %v2387 = vpack.c.b16 %v2379, %v2378
      %2396 = vmatprep.subr.bf16.mxu0 0
      %2397 = vmatpush1.bf16.msra.mxu0 %v2380
      %2398 = vmatprep.subr.bf16.mxu0 0
      %2399 = vmatpush1.bf16.msra.mxu0 %v2381
      %2400 = vmatprep.subr.bf16.mxu0 0
      %2401 = vmatpush1.bf16.msra.mxu0 %v2382
      %2402 = vmatprep.subr.bf16.mxu0 0
      %2403 = vmatpush1.bf16.msra.mxu0 %v2383
      %2404 = vmatprep.subr.bf16.mxu0 0
      %2405 = vmatpush1.bf16.msra.mxu0 %v2384
      %2406 = vmatprep.subr.bf16.mxu0 0
      %2407 = vmatpush1.bf16.msra.mxu0 %v2385
      %2408 = vmatprep.subr.bf16.mxu0 0
      %2409 = vmatpush1.bf16.msra.mxu0 %v2386
      %2410 = vmatprep.subr.bf16.mxu0 0
      %2411 = vmatpush1.bf16.msra.mxu0 %v2387
      %2412 = vmatprep.subr.bf16.mxu0 0
      %2413 = vmatpush1.bf16.msra.mxu0 0
      %2414 = vmatprep.subr.bf16.mxu0 0
      %2415 = vmatpush1.bf16.msra.mxu0 0
      %2416 = vmatprep.subr.bf16.mxu0 0
      %2417 = vmatpush1.bf16.msra.mxu0 0
      %2418 = vmatprep.subr.bf16.mxu0 0
      %2419 = vmatpush1.bf16.msra.mxu0 0
      %2420 = vmatprep.subr.bf16.mxu0 0
      %2421 = vmatpush1.bf16.msra.mxu0 0
      %2422 = vmatprep.subr.bf16.mxu0 0
      %2423 = vmatpush1.bf16.msra.mxu0 0
      %2424 = vmatprep.subr.bf16.mxu0 0
      %2425 = vmatpush1.bf16.msra.mxu0 0
      %2426 = vmatprep.subr.bf16.mxu0 0
      %2427 = vmatpush1.bf16.msra.mxu0 0
      %2428 = vmatprep.mubr.bf16.mxu0 0
      %2429 = vmatmul.mubr.bf16.gmra.mrb[0].mxu0 %v2346
      %v2430 = vpop.f32.mrb[0].mxu0
      %v2431 = vadd.f32 0.0, %v2430
      %v2432 = vpop.f32.mrb[0].mxu0
      %v2433 = vpop.f32.mrb[0].mxu0
      %v2434 = vadd.f32 0.0, %v2433
      %v2435 = vpop.f32.mrb[0].mxu0
      %2436 = vdwg.mxu0
      %v2437 = vadd.f32 %v2313, %v2431
      %v2438 = vadd.f32 %v2314, %v2434
      %v2439 = vld [vmem:[#allocation2 + $0x8] sm:$0xf]
      %v2440 = vsel %vm476, %v1691, 0
      %v2441 = vsel %vm477, %v2439, 0
      %s2442 = scalar_lea.vmem %s3, 384
      %v2443 = vld [vmem:[%s2442] sm:$0xf]
      %v2444 = vld [vmem:[%s2442 + $0x4] sm:$0xf]
      %v2445 = vld [vmem:[%s2442 + $0x8] sm:$0xf]
      %v2446 = vld [vmem:[%s2442 + $0xc] sm:$0xf]
      %v2447 = vld [vmem:[%s2442 + $0x10] sm:$0xf]
      %v2448 = vld [vmem:[%s2442 + $0x14] sm:$0xf]
      %v2449 = vld [vmem:[%s2442 + $0x18] sm:$0xf]
      %v2450 = vld [vmem:[%s2442 + $0x1c] sm:$0xf]
      %v2451 = vld [vmem:[%s2442 + $0x20] sm:$0xf]
      %v2452 = vld [vmem:[%s2442 + $0x24] sm:$0xf]
      %v2453 = vld [vmem:[%s2442 + $0x28] sm:$0xf]
      %v2454 = vld [vmem:[%s2442 + $0x2c] sm:$0xf]
      %v2455 = vld [vmem:[%s2442 + $0x30] sm:$0xf]
      %v2456 = vld [vmem:[%s2442 + $0x34] sm:$0xf]
      %v2457 = vld [vmem:[%s2442 + $0x38] sm:$0xf]
      %v2458 = vld [vmem:[%s2442 + $0x3c] sm:$0xf]
      %v2461 = vunpack.c.l.b16 %v2440
      %v2462 = vunpack.c.l.b16 %v2441
      %v2463 = vpack.c.b16 %v2462, %v2461
      %v2481 = vunpack.c.l.b16 %v2443
      %v2482 = vunpack.c.l.b16 %v2444
      %v2483 = vunpack.c.l.b16 %v2445
      %v2484 = vunpack.c.l.b16 %v2446
      %v2485 = vunpack.c.l.b16 %v2447
      %v2486 = vunpack.c.l.b16 %v2448
      %v2487 = vunpack.c.l.b16 %v2449
      %v2488 = vunpack.c.l.b16 %v2450
      %v2489 = vunpack.c.l.b16 %v2451
      %v2490 = vunpack.c.l.b16 %v2452
      %v2491 = vunpack.c.l.b16 %v2453
      %v2492 = vunpack.c.l.b16 %v2454
      %v2493 = vunpack.c.l.b16 %v2455
      %v2494 = vunpack.c.l.b16 %v2456
      %v2495 = vunpack.c.l.b16 %v2457
      %v2496 = vunpack.c.l.b16 %v2458
      %v2497 = vpack.c.b16 %v2482, %v2481
      %v2498 = vpack.c.b16 %v2484, %v2483
      %v2499 = vpack.c.b16 %v2486, %v2485
      %v2500 = vpack.c.b16 %v2488, %v2487
      %v2501 = vpack.c.b16 %v2490, %v2489
      %v2502 = vpack.c.b16 %v2492, %v2491
      %v2503 = vpack.c.b16 %v2494, %v2493
      %v2504 = vpack.c.b16 %v2496, %v2495
      %2513 = vmatprep.subr.bf16.mxu0 0
      %2514 = vmatpush1.bf16.msra.mxu0 %v2497
      %2515 = vmatprep.subr.bf16.mxu0 0
      %2516 = vmatpush1.bf16.msra.mxu0 %v2498
      %2517 = vmatprep.subr.bf16.mxu0 0
      %2518 = vmatpush1.bf16.msra.mxu0 %v2499
      %2519 = vmatprep.subr.bf16.mxu0 0
      %2520 = vmatpush1.bf16.msra.mxu0 %v2500
      %2521 = vmatprep.subr.bf16.mxu0 0
      %2522 = vmatpush1.bf16.msra.mxu0 %v2501
      %2523 = vmatprep.subr.bf16.mxu0 0
      %2524 = vmatpush1.bf16.msra.mxu0 %v2502
      %2525 = vmatprep.subr.bf16.mxu0 0
      %2526 = vmatpush1.bf16.msra.mxu0 %v2503
      %2527 = vmatprep.subr.bf16.mxu0 0
      %2528 = vmatpush1.bf16.msra.mxu0 %v2504
      %2529 = vmatprep.subr.bf16.mxu0 0
      %2530 = vmatpush1.bf16.msra.mxu0 0
      %2531 = vmatprep.subr.bf16.mxu0 0
      %2532 = vmatpush1.bf16.msra.mxu0 0
      %2533 = vmatprep.subr.bf16.mxu0 0
      %2534 = vmatpush1.bf16.msra.mxu0 0
      %2535 = vmatprep.subr.bf16.mxu0 0
      %2536 = vmatpush1.bf16.msra.mxu0 0
      %2537 = vmatprep.subr.bf16.mxu0 0
      %2538 = vmatpush1.bf16.msra.mxu0 0
      %2539 = vmatprep.subr.bf16.mxu0 0
      %2540 = vmatpush1.bf16.msra.mxu0 0
      %2541 = vmatprep.subr.bf16.mxu0 0
      %2542 = vmatpush1.bf16.msra.mxu0 0
      %2543 = vmatprep.subr.bf16.mxu0 0
      %2544 = vmatpush1.bf16.msra.mxu0 0
      %2545 = vmatprep.mubr.bf16.mxu0 0
      %2546 = vmatmul.mubr.bf16.gmra.mrb[0].mxu0 %v2463
      %v2547 = vpop.f32.mrb[0].mxu0
      %v2548 = vadd.f32 0.0, %v2547
      %v2549 = vpop.f32.mrb[0].mxu0
      %v2550 = vpop.f32.mrb[0].mxu0
      %v2551 = vadd.f32 0.0, %v2550
      %v2552 = vpop.f32.mrb[0].mxu0
      %2553 = vdwg.mxu0
      %v2554 = vadd.f32 %v2437, %v2548
      %v2555 = vadd.f32 %v2438, %v2551
      %v2556 = vld [vmem:[#allocation2 + $0x4] sm:$0xf]
      %v2557 = vld [vmem:[#allocation2 + $0x8] sm:$0xf]
      %v2558 = vld [vmem:[#allocation2 + $0xc] sm:$0x1]
      %s2559 = scalar_lea.vmem %s3, 448
      %v2560 = vld [vmem:[%s2559] sm:$0xf]
      %v2561 = vld [vmem:[%s2559 + $0x4] sm:$0xf]
      %v2562 = vld [vmem:[%s2559 + $0x8] sm:$0xf]
      %v2563 = vld [vmem:[%s2559 + $0xc] sm:$0xf]
      %v2564 = vld [vmem:[%s2559 + $0x10] sm:$0xf]
      %v2565 = vld [vmem:[%s2559 + $0x14] sm:$0xf]
      %v2566 = vld [vmem:[%s2559 + $0x18] sm:$0xf]
      %v2567 = vld [vmem:[%s2559 + $0x1c] sm:$0xf]
      %v2568 = vld [vmem:[%s2559 + $0x20] sm:$0xf]
      %v2569 = vld [vmem:[%s2559 + $0x24] sm:$0xf]
      %v2570 = vld [vmem:[%s2559 + $0x28] sm:$0xf]
      %v2571 = vld [vmem:[%s2559 + $0x2c] sm:$0xf]
      %v2572 = vld [vmem:[%s2559 + $0x30] sm:$0xf]
      %v2573 = vld [vmem:[%s2559 + $0x34] sm:$0xf]
      %v2574 = vld [vmem:[%s2559 + $0x38] sm:$0xf]
      %v2575 = vld [vmem:[%s2559 + $0x3c] sm:$0xf]
      %v2579 = vunpack.c.l.b16 %v2556
      %v2580 = vunpack.c.l.b16 %v2557
      %v2581 = vunpack.c.l.b16 %v2558
      %v2582 = vpack.c.b16 %v2580, %v2579
      %v2583 = vpack.c.b16 %v2581, %v2581
      %v2585 = vshrl.u32 %v2582, 16
      %v2587 = vshll.u32 %v2582, 16
      %v2589 = vrot.slane %v2587, 1
      %v2590 = vor.u32 %v2585, %v2589
      %v2592 = vshll.u32 %v2583, 16
      %v2594 = vrot.slane %v2592, 1
      %v2595 = vsel %vm522, %v2590, %v2594
      %v2613 = vunpack.c.l.b16 %v2560
      %v2614 = vunpack.c.l.b16 %v2561
      %v2615 = vunpack.c.l.b16 %v2562
      %v2616 = vunpack.c.l.b16 %v2563
      %v2617 = vunpack.c.l.b16 %v2564
      %v2618 = vunpack.c.l.b16 %v2565
      %v2619 = vunpack.c.l.b16 %v2566
      %v2620 = vunpack.c.l.b16 %v2567
      %v2621 = vunpack.c.l.b16 %v2568
      %v2622 = vunpack.c.l.b16 %v2569
      %v2623 = vunpack.c.l.b16 %v2570
      %v2624 = vunpack.c.l.b16 %v2571
      %v2625 = vunpack.c.l.b16 %v2572
      %v2626 = vunpack.c.l.b16 %v2573
      %v2627 = vunpack.c.l.b16 %v2574
      %v2628 = vunpack.c.l.b16 %v2575
      %v2629 = vpack.c.b16 %v2614, %v2613
      %v2630 = vpack.c.b16 %v2616, %v2615
      %v2631 = vpack.c.b16 %v2618, %v2617
      %v2632 = vpack.c.b16 %v2620, %v2619
      %v2633 = vpack.c.b16 %v2622, %v2621
      %v2634 = vpack.c.b16 %v2624, %v2623
      %v2635 = vpack.c.b16 %v2626, %v2625
      %v2636 = vpack.c.b16 %v2628, %v2627
      %2645 = vmatprep.subr.bf16.mxu0 0
      %2646 = vmatpush1.bf16.msra.mxu0 %v2629
      %2647 = vmatprep.subr.bf16.mxu0 0
      %2648 = vmatpush1.bf16.msra.mxu0 %v2630
      %2649 = vmatprep.subr.bf16.mxu0 0
      %2650 = vmatpush1.bf16.msra.mxu0 %v2631
      %2651 = vmatprep.subr.bf16.mxu0 0
      %2652 = vmatpush1.bf16.msra.mxu0 %v2632
      %2653 = vmatprep.subr.bf16.mxu0 0
      %2654 = vmatpush1.bf16.msra.mxu0 %v2633
      %2655 = vmatprep.subr.bf16.mxu0 0
      %2656 = vmatpush1.bf16.msra.mxu0 %v2634
      %2657 = vmatprep.subr.bf16.mxu0 0
      %2658 = vmatpush1.bf16.msra.mxu0 %v2635
      %2659 = vmatprep.subr.bf16.mxu0 0
      %2660 = vmatpush1.bf16.msra.mxu0 %v2636
      %2661 = vmatprep.subr.bf16.mxu0 0
      %2662 = vmatpush1.bf16.msra.mxu0 0
      %2663 = vmatprep.subr.bf16.mxu0 0
      %2664 = vmatpush1.bf16.msra.mxu0 0
      %2665 = vmatprep.subr.bf16.mxu0 0
      %2666 = vmatpush1.bf16.msra.mxu0 0
      %2667 = vmatprep.subr.bf16.mxu0 0
      %2668 = vmatpush1.bf16.msra.mxu0 0
      %2669 = vmatprep.subr.bf16.mxu0 0
      %2670 = vmatpush1.bf16.msra.mxu0 0
      %2671 = vmatprep.subr.bf16.mxu0 0
      %2672 = vmatpush1.bf16.msra.mxu0 0
      %2673 = vmatprep.subr.bf16.mxu0 0
      %2674 = vmatpush1.bf16.msra.mxu0 0
      %2675 = vmatprep.subr.bf16.mxu0 0
      %2676 = vmatpush1.bf16.msra.mxu0 0
      %2677 = vmatprep.mubr.bf16.mxu0 0
      %2678 = vmatmul.mubr.bf16.gmra.mrb[0].mxu0 %v2595
      %v2679 = vpop.f32.mrb[0].mxu0
      %v2680 = vadd.f32 0.0, %v2679
      %v2681 = vpop.f32.mrb[0].mxu0
      %v2682 = vpop.f32.mrb[0].mxu0
      %v2683 = vadd.f32 0.0, %v2682
      %v2684 = vpop.f32.mrb[0].mxu0
      %2685 = vdwg.mxu0
      %v2686 = vadd.f32 %v2554, %v2680
      %v2687 = vadd.f32 %v2555, %v2683
      %v2688 = vld [vmem:[#allocation2 + $0x4] sm:$0xe]
      %v2689 = vsel %vm737, %v2688, 0
      %v2690 = vsel %vm738, %v2557, 0
      %v2691 = vsel %vm739, %v2558, 0
      %s2692 = scalar_lea.vmem %s3, 512
      %v2693 = vld [vmem:[%s2692] sm:$0xf]
      %v2694 = vld [vmem:[%s2692 + $0x4] sm:$0xf]
      %v2695 = vld [vmem:[%s2692 + $0x8] sm:$0xf]
      %v2696 = vld [vmem:[%s2692 + $0xc] sm:$0xf]
      %v2697 = vld [vmem:[%s2692 + $0x10] sm:$0xf]
      %v2698 = vld [vmem:[%s2692 + $0x14] sm:$0xf]
      %v2699 = vld [vmem:[%s2692 + $0x18] sm:$0xf]
      %v2700 = vld [vmem:[%s2692 + $0x1c] sm:$0xf]
      %v2701 = vld [vmem:[%s2692 + $0x20] sm:$0xf]
      %v2702 = vld [vmem:[%s2692 + $0x24] sm:$0xf]
      %v2703 = vld [vmem:[%s2692 + $0x28] sm:$0xf]
      %v2704 = vld [vmem:[%s2692 + $0x2c] sm:$0xf]
      %v2705 = vld [vmem:[%s2692 + $0x30] sm:$0xf]
      %v2706 = vld [vmem:[%s2692 + $0x34] sm:$0xf]
      %v2707 = vld [vmem:[%s2692 + $0x38] sm:$0xf]
      %v2708 = vld [vmem:[%s2692 + $0x3c] sm:$0xf]
      %v2712 = vunpack.c.l.b16 %v2689
      %v2713 = vunpack.c.l.b16 %v2690
      %v2714 = vunpack.c.l.b16 %v2691
      %v2715 = vpack.c.b16 %v2713, %v2712
      %v2716 = vpack.c.b16 %v2714, %v2714
      %v2717 = vrot.slane %v2715, 1
      %v2718 = vrot.slane %v2716, 1
      %v2719 = vsel %vm768, %v2717, %v2718
      %v2737 = vunpack.c.l.b16 %v2693
      %v2738 = vunpack.c.l.b16 %v2694
      %v2739 = vunpack.c.l.b16 %v2695
      %v2740 = vunpack.c.l.b16 %v2696
      %v2741 = vunpack.c.l.b16 %v2697
      %v2742 = vunpack.c.l.b16 %v2698
      %v2743 = vunpack.c.l.b16 %v2699
      %v2744 = vunpack.c.l.b16 %v2700
      %v2745 = vunpack.c.l.b16 %v2701
      %v2746 = vunpack.c.l.b16 %v2702
      %v2747 = vunpack.c.l.b16 %v2703
      %v2748 = vunpack.c.l.b16 %v2704
      %v2749 = vunpack.c.l.b16 %v2705
      %v2750 = vunpack.c.l.b16 %v2706
      %v2751 = vunpack.c.l.b16 %v2707
      %v2752 = vunpack.c.l.b16 %v2708
      %v2753 = vpack.c.b16 %v2738, %v2737
      %v2754 = vpack.c.b16 %v2740, %v2739
      %v2755 = vpack.c.b16 %v2742, %v2741
      %v2756 = vpack.c.b16 %v2744, %v2743
      %v2757 = vpack.c.b16 %v2746, %v2745
      %v2758 = vpack.c.b16 %v2748, %v2747
      %v2759 = vpack.c.b16 %v2750, %v2749
      %v2760 = vpack.c.b16 %v2752, %v2751
      %2769 = vmatprep.subr.bf16.mxu0 0
      %2770 = vmatpush1.bf16.msra.mxu0 %v2753
      %2771 = vmatprep.subr.bf16.mxu0 0
      %2772 = vmatpush1.bf16.msra.mxu0 %v2754
      %2773 = vmatprep.subr.bf16.mxu0 0
      %2774 = vmatpush1.bf16.msra.mxu0 %v2755
      %2775 = vmatprep.subr.bf16.mxu0 0
      %2776 = vmatpush1.bf16.msra.mxu0 %v2756
      %2777 = vmatprep.subr.bf16.mxu0 0
      %2778 = vmatpush1.bf16.msra.mxu0 %v2757
      %2779 = vmatprep.subr.bf16.mxu0 0
      %2780 = vmatpush1.bf16.msra.mxu0 %v2758
      %2781 = vmatprep.subr.bf16.mxu0 0
      %2782 = vmatpush1.bf16.msra.mxu0 %v2759
      %2783 = vmatprep.subr.bf16.mxu0 0
      %2784 = vmatpush1.bf16.msra.mxu0 %v2760
      %2785 = vmatprep.subr.bf16.mxu0 0
      %2786 = vmatpush1.bf16.msra.mxu0 0
      %2787 = vmatprep.subr.bf16.mxu0 0
      %2788 = vmatpush1.bf16.msra.mxu0 0
      %2789 = vmatprep.subr.bf16.mxu0 0
      %2790 = vmatpush1.bf16.msra.mxu0 0
      %2791 = vmatprep.subr.bf16.mxu0 0
      %2792 = vmatpush1.bf16.msra.mxu0 0
      %2793 = vmatprep.subr.bf16.mxu0 0
      %2794 = vmatpush1.bf16.msra.mxu0 0
      %2795 = vmatprep.subr.bf16.mxu0 0
      %2796 = vmatpush1.bf16.msra.mxu0 0
      %2797 = vmatprep.subr.bf16.mxu0 0
      %2798 = vmatpush1.bf16.msra.mxu0 0
      %2799 = vmatprep.subr.bf16.mxu0 0
      %2800 = vmatpush1.bf16.msra.mxu0 0
      %2801 = vmatprep.mubr.bf16.mxu0 0
      %2802 = vmatmul.mubr.bf16.gmra.mrb[0].mxu0 %v2719
      %v2803 = vpop.f32.mrb[0].mxu0
      %v2804 = vadd.f32 0.0, %v2803
      %v2805 = vpop.f32.mrb[0].mxu0
      %v2806 = vpop.f32.mrb[0].mxu0
      %v2807 = vadd.f32 0.0, %v2806
      %v2808 = vpop.f32.mrb[0].mxu0
      %2809 = vdwg.mxu0
      %v2810 = vadd.f32 %v2686, %v2804
      %v2811 = vadd.f32 %v2687, %v2807
      %v2812 = vld [vmem:[%s4] sm:$0x1]
      %v2814 = vlaneseq
      %v2815 = vshrl.u32 %v2814, 7
      %v2816 = vsub.s32 0, %v2815
      %v2817 = vrot.slane %v2812, %v2816
      %v2819 = vadd.f32 %v2810, %v2817
      %v2820 = vadd.f32 %v2811, %v2817
      %v2821 = vmax.f32 %v2819, 0.0
      %v2822 = vmax.f32 %v2820, 0.0
      %v2823 = vunpack.c.l.bf16 %v437
      %v2824 = vunpack.c.l.bf16 %v438
      %v2825 = vadd.f32 %v2821, %v2823
      %v2826 = vadd.f32 %v2822, %v2824
      %v2827 = vpack.c.bf16 %v2826, %v2825
      %v2829 = vunpack.c.l.b16 %v2827
      %v2830 = vunpack.c.h.b16 %v2827
      %v2831 = vpack.c.b16 %v2829, %v2829
      %v2832 = vpack.c.b16 %v2830, %v2830
      %v2834 = vshrl.u32 %v2831, 16
      %v2836 = vrot.slane %v2834, 5
      %v2837 = vshll.u32 %v2831, 16
      %v2839 = vrot.slane %v2837, 6
      %v2840 = vor.u32 %v2836, %v2839
      %v2841 = vrot.slane %v2840, 4
      %v2843 = vshrl.u32 %v2832, 16
      %v2845 = vrot.slane %v2843, 5
      %v2846 = vshll.u32 %v2832, 16
      %v2848 = vrot.slane %v2846, 6
      %v2849 = vor.u32 %v2845, %v2848
      %v2850 = vsel %vm440, %v2841, %v2849
      %v2851 = vrot.slane %v2849, 4
      %v2855 = vsel %vm401, %v2840, %v2057
      %2856 = vst [vmem:[#allocation2] sm:$0xc] %v2855
      %2857 = vst [vmem:[#allocation2 + $0x4] sm:$0xf] %v2850
      %v2858 = vld [vmem:[#allocation2 + $0x8] sm:$0x7]
      %v2859 = vsel %vm395, %v2851, %v2858
      %2860 = vst [vmem:[#allocation2 + $0x8] sm:$0x7] %v2859
      %v2861 = vld [vmem:[#allocation2] sm:$0xf]
      %v2862 = vld [vmem:[#allocation2 + $0x4] sm:$0xf]
      %v2863 = vsel %vm476, %v2861, 0
      %v2864 = vsel %vm477, %v2862, 0
      %v2865 = vld [vmem:[%s5] sm:$0xf]
      %v2866 = vld [vmem:[%s5 + $0x4] sm:$0xf]
      %v2867 = vld [vmem:[%s5 + $0x8] sm:$0xf]
      %v2868 = vld [vmem:[%s5 + $0xc] sm:$0xf]
      %v2869 = vld [vmem:[%s5 + $0x10] sm:$0xf]
      %v2870 = vld [vmem:[%s5 + $0x14] sm:$0xf]
      %v2871 = vld [vmem:[%s5 + $0x18] sm:$0xf]
      %v2872 = vld [vmem:[%s5 + $0x1c] sm:$0xf]
      %v2873 = vld [vmem:[%s5 + $0x20] sm:$0xf]
      %v2874 = vld [vmem:[%s5 + $0x24] sm:$0xf]
      %v2875 = vld [vmem:[%s5 + $0x28] sm:$0xf]
      %v2876 = vld [vmem:[%s5 + $0x2c] sm:$0xf]
      %v2877 = vld [vmem:[%s5 + $0x30] sm:$0xf]
      %v2878 = vld [vmem:[%s5 + $0x34] sm:$0xf]
      %v2879 = vld [vmem:[%s5 + $0x38] sm:$0xf]
      %v2880 = vld [vmem:[%s5 + $0x3c] sm:$0xf]
      %v2881 = vld [vmem:[#allocation2 + $0x8] sm:$0x1]
      %s2882 = scalar_lea.vmem %s5, 64
      %v2883 = vld [vmem:[%s2882] sm:$0xf]
      %v2884 = vld [vmem:[%s2882 + $0x4] sm:$0xf]
      %v2885 = vld [vmem:[%s2882 + $0x8] sm:$0xf]
      %v2886 = vld [vmem:[%s2882 + $0xc] sm:$0xf]
      %v2887 = vld [vmem:[%s2882 + $0x10] sm:$0xf]
      %v2888 = vld [vmem:[%s2882 + $0x14] sm:$0xf]
      %v2889 = vld [vmem:[%s2882 + $0x18] sm:$0xf]
      %v2890 = vld [vmem:[%s2882 + $0x1c] sm:$0xf]
      %v2891 = vld [vmem:[%s2882 + $0x20] sm:$0xf]
      %v2892 = vld [vmem:[%s2882 + $0x24] sm:$0xf]
      %v2893 = vld [vmem:[%s2882 + $0x28] sm:$0xf]
      %v2894 = vld [vmem:[%s2882 + $0x2c] sm:$0xf]
      %v2895 = vld [vmem:[%s2882 + $0x30] sm:$0xf]
      %v2896 = vld [vmem:[%s2882 + $0x34] sm:$0xf]
      %v2897 = vld [vmem:[%s2882 + $0x38] sm:$0xf]
      %v2898 = vld [vmem:[%s2882 + $0x3c] sm:$0xf]
      %v2902 = vunpack.c.l.b16 %v2861
      %v2903 = vunpack.c.l.b16 %v2862
      %v2904 = vunpack.c.l.b16 %v2881
      %v2905 = vpack.c.b16 %v2903, %v2902
      %v2906 = vpack.c.b16 %v2904, %v2904
      %v2908 = vshrl.u32 %v2905, 16
      %v2910 = vshll.u32 %v2905, 16
      %v2912 = vrot.slane %v2910, 1
      %v2913 = vor.u32 %v2908, %v2912
      %v2915 = vshll.u32 %v2906, 16
      %v2917 = vrot.slane %v2915, 1
      %v2918 = vsel %vm522, %v2913, %v2917
      %v2936 = vunpack.c.l.b16 %v2883
      %v2937 = vunpack.c.l.b16 %v2884
      %v2938 = vunpack.c.l.b16 %v2885
      %v2939 = vunpack.c.l.b16 %v2886
      %v2940 = vunpack.c.l.b16 %v2887
      %v2941 = vunpack.c.l.b16 %v2888
      %v2942 = vunpack.c.l.b16 %v2889
      %v2943 = vunpack.c.l.b16 %v2890
      %v2944 = vunpack.c.l.b16 %v2891
      %v2945 = vunpack.c.l.b16 %v2892
      %v2946 = vunpack.c.l.b16 %v2893
      %v2947 = vunpack.c.l.b16 %v2894
      %v2948 = vunpack.c.l.b16 %v2895
      %v2949 = vunpack.c.l.b16 %v2896
      %v2950 = vunpack.c.l.b16 %v2897
      %v2951 = vunpack.c.l.b16 %v2898
      %v2952 = vpack.c.b16 %v2937, %v2936
      %v2953 = vpack.c.b16 %v2939, %v2938
      %v2954 = vpack.c.b16 %v2941, %v2940
      %v2955 = vpack.c.b16 %v2943, %v2942
      %v2956 = vpack.c.b16 %v2945, %v2944
      %v2957 = vpack.c.b16 %v2947, %v2946
      %v2958 = vpack.c.b16 %v2949, %v2948
      %v2959 = vpack.c.b16 %v2951, %v2950
      %2968 = vmatprep.subr.bf16.mxu0 0
      %2969 = vmatpush1.bf16.msra.mxu0 %v2952
      %2970 = vmatprep.subr.bf16.mxu0 0
      %2971 = vmatpush1.bf16.msra.mxu0 %v2953
      %2972 = vmatprep.subr.bf16.mxu0 0
      %2973 = vmatpush1.bf16.msra.mxu0 %v2954
      %2974 = vmatprep.subr.bf16.mxu0 0
      %2975 = vmatpush1.bf16.msra.mxu0 %v2955
      %2976 = vmatprep.subr.bf16.mxu0 0
      %2977 = vmatpush1.bf16.msra.mxu0 %v2956
      %2978 = vmatprep.subr.bf16.mxu0 0
      %2979 = vmatpush1.bf16.msra.mxu0 %v2957
      %2980 = vmatprep.subr.bf16.mxu0 0
      %2981 = vmatpush1.bf16.msra.mxu0 %v2958
      %2982 = vmatprep.subr.bf16.mxu0 0
      %2983 = vmatpush1.bf16.msra.mxu0 %v2959
      %2984 = vmatprep.subr.bf16.mxu0 0
      %2985 = vmatpush1.bf16.msra.mxu0 0
      %2986 = vmatprep.subr.bf16.mxu0 0
      %2987 = vmatpush1.bf16.msra.mxu0 0
      %2988 = vmatprep.subr.bf16.mxu0 0
      %2989 = vmatpush1.bf16.msra.mxu0 0
      %2990 = vmatprep.subr.bf16.mxu0 0
      %2991 = vmatpush1.bf16.msra.mxu0 0
      %2992 = vmatprep.subr.bf16.mxu0 0
      %2993 = vmatpush1.bf16.msra.mxu0 0
      %2994 = vmatprep.subr.bf16.mxu0 0
      %2995 = vmatpush1.bf16.msra.mxu0 0
      %2996 = vmatprep.subr.bf16.mxu0 0
      %2997 = vmatpush1.bf16.msra.mxu0 0
      %2998 = vmatprep.subr.bf16.mxu0 0
      %2999 = vmatpush1.bf16.msra.mxu0 0
      %3000 = vmatprep.mubr.bf16.mxu0 0
      %3001 = vmatmul.mubr.bf16.gmra.mrb[0].mxu0 %v2918
      %v3002 = vpop.f32.mrb[0].mxu0
      %v3003 = vadd.f32 0.0, %v3002
      %v3004 = vpop.f32.mrb[0].mxu0
      %v3005 = vpop.f32.mrb[0].mxu0
      %v3006 = vadd.f32 0.0, %v3005
      %v3007 = vpop.f32.mrb[0].mxu0
      %3008 = vdwg.mxu0
      %v3011 = vunpack.c.l.b16 %v2863
      %v3012 = vunpack.c.l.b16 %v2864
      %v3013 = vpack.c.b16 %v3012, %v3011
      %v3031 = vunpack.c.l.b16 %v2865
      %v3032 = vunpack.c.l.b16 %v2866
      %v3033 = vunpack.c.l.b16 %v2867
      %v3034 = vunpack.c.l.b16 %v2868
      %v3035 = vunpack.c.l.b16 %v2869
      %v3036 = vunpack.c.l.b16 %v2870
      %v3037 = vunpack.c.l.b16 %v2871
      %v3038 = vunpack.c.l.b16 %v2872
      %v3039 = vunpack.c.l.b16 %v2873
      %v3040 = vunpack.c.l.b16 %v2874
      %v3041 = vunpack.c.l.b16 %v2875
      %v3042 = vunpack.c.l.b16 %v2876
      %v3043 = vunpack.c.l.b16 %v2877
      %v3044 = vunpack.c.l.b16 %v2878
      %v3045 = vunpack.c.l.b16 %v2879
      %v3046 = vunpack.c.l.b16 %v2880
      %v3047 = vpack.c.b16 %v3032, %v3031
      %v3048 = vpack.c.b16 %v3034, %v3033
      %v3049 = vpack.c.b16 %v3036, %v3035
      %v3050 = vpack.c.b16 %v3038, %v3037
      %v3051 = vpack.c.b16 %v3040, %v3039
      %v3052 = vpack.c.b16 %v3042, %v3041
      %v3053 = vpack.c.b16 %v3044, %v3043
      %v3054 = vpack.c.b16 %v3046, %v3045
      %3063 = vmatprep.subr.bf16.mxu0 0
      %3064 = vmatpush1.bf16.msra.mxu0 %v3047
      %3065 = vmatprep.subr.bf16.mxu0 0
      %3066 = vmatpush1.bf16.msra.mxu0 %v3048
      %3067 = vmatprep.subr.bf16.mxu0 0
      %3068 = vmatpush1.bf16.msra.mxu0 %v3049
      %3069 = vmatprep.subr.bf16.mxu0 0
      %3070 = vmatpush1.bf16.msra.mxu0 %v3050
      %3071 = vmatprep.subr.bf16.mxu0 0
      %3072 = vmatpush1.bf16.msra.mxu0 %v3051
      %3073 = vmatprep.subr.bf16.mxu0 0
      %3074 = vmatpush1.bf16.msra.mxu0 %v3052
      %3075 = vmatprep.subr.bf16.mxu0 0
      %3076 = vmatpush1.bf16.msra.mxu0 %v3053
      %3077 = vmatprep.subr.bf16.mxu0 0
      %3078 = vmatpush1.bf16.msra.mxu0 %v3054
      %3079 = vmatprep.subr.bf16.mxu0 0
      %3080 = vmatpush1.bf16.msra.mxu0 0
      %3081 = vmatprep.subr.bf16.mxu0 0
      %3082 = vmatpush1.bf16.msra.mxu0 0
      %3083 = vmatprep.subr.bf16.mxu0 0
      %3084 = vmatpush1.bf16.msra.mxu0 0
      %3085 = vmatprep.subr.bf16.mxu0 0
      %3086 = vmatpush1.bf16.msra.mxu0 0
      %3087 = vmatprep.subr.bf16.mxu0 0
      %3088 = vmatpush1.bf16.msra.mxu0 0
      %3089 = vmatprep.subr.bf16.mxu0 0
      %3090 = vmatpush1.bf16.msra.mxu0 0
      %3091 = vmatprep.subr.bf16.mxu0 0
      %3092 = vmatpush1.bf16.msra.mxu0 0
      %3093 = vmatprep.subr.bf16.mxu0 0
      %3094 = vmatpush1.bf16.msra.mxu0 0
      %3095 = vmatprep.mubr.bf16.mxu0 0
      %3096 = vmatmul.mubr.bf16.gmra.mrb[0].mxu0 %v3013
      %v3097 = vpop.f32.mrb[0].mxu0
      %v3098 = vadd.f32 %v3003, %v3097
      %v3099 = vpop.f32.mrb[0].mxu0
      %v3100 = vpop.f32.mrb[0].mxu0
      %v3101 = vadd.f32 %v3006, %v3100
      %v3102 = vpop.f32.mrb[0].mxu0
      %3103 = vdwg.mxu0
      %v3104 = vld [vmem:[#allocation2] sm:$0xe]
      %v3105 = vsel %vm737, %v3104, 0
      %v3106 = vsel %vm738, %v2862, 0
      %v3107 = vsel %vm739, %v2881, 0
      %s3108 = scalar_lea.vmem %s5, 128
      %v3109 = vld [vmem:[%s3108] sm:$0xf]
      %v3110 = vld [vmem:[%s3108 + $0x4] sm:$0xf]
      %v3111 = vld [vmem:[%s3108 + $0x8] sm:$0xf]
      %v3112 = vld [vmem:[%s3108 + $0xc] sm:$0xf]
      %v3113 = vld [vmem:[%s3108 + $0x10] sm:$0xf]
      %v3114 = vld [vmem:[%s3108 + $0x14] sm:$0xf]
      %v3115 = vld [vmem:[%s3108 + $0x18] sm:$0xf]
      %v3116 = vld [vmem:[%s3108 + $0x1c] sm:$0xf]
      %v3117 = vld [vmem:[%s3108 + $0x20] sm:$0xf]
      %v3118 = vld [vmem:[%s3108 + $0x24] sm:$0xf]
      %v3119 = vld [vmem:[%s3108 + $0x28] sm:$0xf]
      %v3120 = vld [vmem:[%s3108 + $0x2c] sm:$0xf]
      %v3121 = vld [vmem:[%s3108 + $0x30] sm:$0xf]
      %v3122 = vld [vmem:[%s3108 + $0x34] sm:$0xf]
      %v3123 = vld [vmem:[%s3108 + $0x38] sm:$0xf]
      %v3124 = vld [vmem:[%s3108 + $0x3c] sm:$0xf]
      %v3128 = vunpack.c.l.b16 %v3105
      %v3129 = vunpack.c.l.b16 %v3106
      %v3130 = vunpack.c.l.b16 %v3107
      %v3131 = vpack.c.b16 %v3129, %v3128
      %v3132 = vpack.c.b16 %v3130, %v3130
      %v3133 = vrot.slane %v3131, 1
      %v3134 = vrot.slane %v3132, 1
      %v3135 = vsel %vm768, %v3133, %v3134
      %v3153 = vunpack.c.l.b16 %v3109
      %v3154 = vunpack.c.l.b16 %v3110
      %v3155 = vunpack.c.l.b16 %v3111
      %v3156 = vunpack.c.l.b16 %v3112
      %v3157 = vunpack.c.l.b16 %v3113
      %v3158 = vunpack.c.l.b16 %v3114
      %v3159 = vunpack.c.l.b16 %v3115
      %v3160 = vunpack.c.l.b16 %v3116
      %v3161 = vunpack.c.l.b16 %v3117
      %v3162 = vunpack.c.l.b16 %v3118
      %v3163 = vunpack.c.l.b16 %v3119
      %v3164 = vunpack.c.l.b16 %v3120
      %v3165 = vunpack.c.l.b16 %v3121
      %v3166 = vunpack.c.l.b16 %v3122
      %v3167 = vunpack.c.l.b16 %v3123
      %v3168 = vunpack.c.l.b16 %v3124
      %v3169 = vpack.c.b16 %v3154, %v3153
      %v3170 = vpack.c.b16 %v3156, %v3155
      %v3171 = vpack.c.b16 %v3158, %v3157
      %v3172 = vpack.c.b16 %v3160, %v3159
      %v3173 = vpack.c.b16 %v3162, %v3161
      %v3174 = vpack.c.b16 %v3164, %v3163
      %v3175 = vpack.c.b16 %v3166, %v3165
      %v3176 = vpack.c.b16 %v3168, %v3167
      %3185 = vmatprep.subr.bf16.mxu0 0
      %3186 = vmatpush1.bf16.msra.mxu0 %v3169
      %3187 = vmatprep.subr.bf16.mxu0 0
      %3188 = vmatpush1.bf16.msra.mxu0 %v3170
      %3189 = vmatprep.subr.bf16.mxu0 0
      %3190 = vmatpush1.bf16.msra.mxu0 %v3171
      %3191 = vmatprep.subr.bf16.mxu0 0
      %3192 = vmatpush1.bf16.msra.mxu0 %v3172
      %3193 = vmatprep.subr.bf16.mxu0 0
      %3194 = vmatpush1.bf16.msra.mxu0 %v3173
      %3195 = vmatprep.subr.bf16.mxu0 0
      %3196 = vmatpush1.bf16.msra.mxu0 %v3174
      %3197 = vmatprep.subr.bf16.mxu0 0
      %3198 = vmatpush1.bf16.msra.mxu0 %v3175
      %3199 = vmatprep.subr.bf16.mxu0 0
      %3200 = vmatpush1.bf16.msra.mxu0 %v3176
      %3201 = vmatprep.subr.bf16.mxu0 0
      %3202 = vmatpush1.bf16.msra.mxu0 0
      %3203 = vmatprep.subr.bf16.mxu0 0
      %3204 = vmatpush1.bf16.msra.mxu0 0
      %3205 = vmatprep.subr.bf16.mxu0 0
      %3206 = vmatpush1.bf16.msra.mxu0 0
      %3207 = vmatprep.subr.bf16.mxu0 0
      %3208 = vmatpush1.bf16.msra.mxu0 0
      %3209 = vmatprep.subr.bf16.mxu0 0
      %3210 = vmatpush1.bf16.msra.mxu0 0
      %3211 = vmatprep.subr.bf16.mxu0 0
      %3212 = vmatpush1.bf16.msra.mxu0 0
      %3213 = vmatprep.subr.bf16.mxu0 0
      %3214 = vmatpush1.bf16.msra.mxu0 0
      %3215 = vmatprep.subr.bf16.mxu0 0
      %3216 = vmatpush1.bf16.msra.mxu0 0
      %3217 = vmatprep.mubr.bf16.mxu0 0
      %3218 = vmatmul.mubr.bf16.gmra.mrb[0].mxu0 %v3135
      %v3219 = vpop.f32.mrb[0].mxu0
      %v3220 = vadd.f32 0.0, %v3219
      %v3221 = vpop.f32.mrb[0].mxu0
      %v3222 = vpop.f32.mrb[0].mxu0
      %v3223 = vadd.f32 0.0, %v3222
      %v3224 = vpop.f32.mrb[0].mxu0
      %3225 = vdwg.mxu0
      %v3226 = vadd.f32 %v3098, %v3220
      %v3227 = vadd.f32 %v3101, %v3223
      %v3228 = vld [vmem:[#allocation2] sm:$0xc]
      %v3229 = vld [vmem:[#allocation2 + $0x8] sm:$0x3]
      %v3230 = vsel %vm876, %v3228, 0
      %v3231 = vsel %vm877, %v2862, 0
      %v3232 = vsel %vm878, %v3229, 0
      %s3233 = scalar_lea.vmem %s5, 192
      %v3234 = vld [vmem:[%s3233] sm:$0xf]
      %v3235 = vld [vmem:[%s3233 + $0x4] sm:$0xf]
      %v3236 = vld [vmem:[%s3233 + $0x8] sm:$0xf]
      %v3237 = vld [vmem:[%s3233 + $0xc] sm:$0xf]
      %v3238 = vld [vmem:[%s3233 + $0x10] sm:$0xf]
      %v3239 = vld [vmem:[%s3233 + $0x14] sm:$0xf]
      %v3240 = vld [vmem:[%s3233 + $0x18] sm:$0xf]
      %v3241 = vld [vmem:[%s3233 + $0x1c] sm:$0xf]
      %v3242 = vld [vmem:[%s3233 + $0x20] sm:$0xf]
      %v3243 = vld [vmem:[%s3233 + $0x24] sm:$0xf]
      %v3244 = vld [vmem:[%s3233 + $0x28] sm:$0xf]
      %v3245 = vld [vmem:[%s3233 + $0x2c] sm:$0xf]
      %v3246 = vld [vmem:[%s3233 + $0x30] sm:$0xf]
      %v3247 = vld [vmem:[%s3233 + $0x34] sm:$0xf]
      %v3248 = vld [vmem:[%s3233 + $0x38] sm:$0xf]
      %v3249 = vld [vmem:[%s3233 + $0x3c] sm:$0xf]
      %v3253 = vunpack.c.l.b16 %v3230
      %v3254 = vunpack.c.l.b16 %v3231
      %v3255 = vunpack.c.l.b16 %v3232
      %v3256 = vpack.c.b16 %v3254, %v3253
      %v3257 = vpack.c.b16 %v3255, %v3255
      %v3258 = vrot.slane %v3256, 2
      %v3259 = vrot.slane %v3257, 2
      %v3260 = vsel %vm907, %v3258, %v3259
      %v3278 = vunpack.c.l.b16 %v3234
      %v3279 = vunpack.c.l.b16 %v3235
      %v3280 = vunpack.c.l.b16 %v3236
      %v3281 = vunpack.c.l.b16 %v3237
      %v3282 = vunpack.c.l.b16 %v3238
      %v3283 = vunpack.c.l.b16 %v3239
      %v3284 = vunpack.c.l.b16 %v3240
      %v3285 = vunpack.c.l.b16 %v3241
      %v3286 = vunpack.c.l.b16 %v3242
      %v3287 = vunpack.c.l.b16 %v3243
      %v3288 = vunpack.c.l.b16 %v3244
      %v3289 = vunpack.c.l.b16 %v3245
      %v3290 = vunpack.c.l.b16 %v3246
      %v3291 = vunpack.c.l.b16 %v3247
      %v3292 = vunpack.c.l.b16 %v3248
      %v3293 = vunpack.c.l.b16 %v3249
      %v3294 = vpack.c.b16 %v3279, %v3278
      %v3295 = vpack.c.b16 %v3281, %v3280
      %v3296 = vpack.c.b16 %v3283, %v3282
      %v3297 = vpack.c.b16 %v3285, %v3284
      %v3298 = vpack.c.b16 %v3287, %v3286
      %v3299 = vpack.c.b16 %v3289, %v3288
      %v3300 = vpack.c.b16 %v3291, %v3290
      %v3301 = vpack.c.b16 %v3293, %v3292
      %3310 = vmatprep.subr.bf16.mxu0 0
      %3311 = vmatpush1.bf16.msra.mxu0 %v3294
      %3312 = vmatprep.subr.bf16.mxu0 0
      %3313 = vmatpush1.bf16.msra.mxu0 %v3295
      %3314 = vmatprep.subr.bf16.mxu0 0
      %3315 = vmatpush1.bf16.msra.mxu0 %v3296
      %3316 = vmatprep.subr.bf16.mxu0 0
      %3317 = vmatpush1.bf16.msra.mxu0 %v3297
      %3318 = vmatprep.subr.bf16.mxu0 0
      %3319 = vmatpush1.bf16.msra.mxu0 %v3298
      %3320 = vmatprep.subr.bf16.mxu0 0
      %3321 = vmatpush1.bf16.msra.mxu0 %v3299
      %3322 = vmatprep.subr.bf16.mxu0 0
      %3323 = vmatpush1.bf16.msra.mxu0 %v3300
      %3324 = vmatprep.subr.bf16.mxu0 0
      %3325 = vmatpush1.bf16.msra.mxu0 %v3301
      %3326 = vmatprep.subr.bf16.mxu0 0
      %3327 = vmatpush1.bf16.msra.mxu0 0
      %3328 = vmatprep.subr.bf16.mxu0 0
      %3329 = vmatpush1.bf16.msra.mxu0 0
      %3330 = vmatprep.subr.bf16.mxu0 0
      %3331 = vmatpush1.bf16.msra.mxu0 0
      %3332 = vmatprep.subr.bf16.mxu0 0
      %3333 = vmatpush1.bf16.msra.mxu0 0
      %3334 = vmatprep.subr.bf16.mxu0 0
      %3335 = vmatpush1.bf16.msra.mxu0 0
      %3336 = vmatprep.subr.bf16.mxu0 0
      %3337 = vmatpush1.bf16.msra.mxu0 0
      %3338 = vmatprep.subr.bf16.mxu0 0
      %3339 = vmatpush1.bf16.msra.mxu0 0
      %3340 = vmatprep.subr.bf16.mxu0 0
      %3341 = vmatpush1.bf16.msra.mxu0 0
      %3342 = vmatprep.mubr.bf16.mxu0 0
      %3343 = vmatmul.mubr.bf16.gmra.mrb[0].mxu0 %v3260
      %v3344 = vpop.f32.mrb[0].mxu0
      %v3345 = vadd.f32 0.0, %v3344
      %v3346 = vpop.f32.mrb[0].mxu0
      %v3347 = vpop.f32.mrb[0].mxu0
      %v3348 = vadd.f32 0.0, %v3347
      %v3349 = vpop.f32.mrb[0].mxu0
      %3350 = vdwg.mxu0
      %v3351 = vadd.f32 %v3226, %v3345
      %v3352 = vadd.f32 %v3227, %v3348
      %v3353 = vld [vmem:[#allocation2 + $0x8] sm:$0x7]
      %s3354 = scalar_lea.vmem %s5, 256
      %v3355 = vld [vmem:[%s3354] sm:$0xf]
      %v3356 = vld [vmem:[%s3354 + $0x4] sm:$0xf]
      %v3357 = vld [vmem:[%s3354 + $0x8] sm:$0xf]
      %v3358 = vld [vmem:[%s3354 + $0xc] sm:$0xf]
      %v3359 = vld [vmem:[%s3354 + $0x10] sm:$0xf]
      %v3360 = vld [vmem:[%s3354 + $0x14] sm:$0xf]
      %v3361 = vld [vmem:[%s3354 + $0x18] sm:$0xf]
      %v3362 = vld [vmem:[%s3354 + $0x1c] sm:$0xf]
      %v3363 = vld [vmem:[%s3354 + $0x20] sm:$0xf]
      %v3364 = vld [vmem:[%s3354 + $0x24] sm:$0xf]
      %v3365 = vld [vmem:[%s3354 + $0x28] sm:$0xf]
      %v3366 = vld [vmem:[%s3354 + $0x2c] sm:$0xf]
      %v3367 = vld [vmem:[%s3354 + $0x30] sm:$0xf]
      %v3368 = vld [vmem:[%s3354 + $0x34] sm:$0xf]
      %v3369 = vld [vmem:[%s3354 + $0x38] sm:$0xf]
      %v3370 = vld [vmem:[%s3354 + $0x3c] sm:$0xf]
      %v3373 = vunpack.c.l.b16 %v3228
      %v3374 = vunpack.c.l.b16 %v3353
      %v3375 = vpack.c.b16 %v2903, %v3373
      %v3376 = vpack.c.b16 %v3374, %v3374
      %v3378 = vshrl.u32 %v3375, 16
      %v3380 = vrot.slane %v3378, 2
      %v3381 = vshll.u32 %v3375, 16
      %v3383 = vrot.slane %v3381, 3
      %v3384 = vor.u32 %v3380, %v3383
      %v3386 = vshrl.u32 %v3376, 16
      %v3388 = vrot.slane %v3386, 2
      %v3389 = vshll.u32 %v3376, 16
      %v3391 = vrot.slane %v3389, 3
      %v3392 = vor.u32 %v3388, %v3391
      %v3393 = vsel %vm1027, %v3384, %v3392
      %v3411 = vunpack.c.l.b16 %v3355
      %v3412 = vunpack.c.l.b16 %v3356
      %v3413 = vunpack.c.l.b16 %v3357
      %v3414 = vunpack.c.l.b16 %v3358
      %v3415 = vunpack.c.l.b16 %v3359
      %v3416 = vunpack.c.l.b16 %v3360
      %v3417 = vunpack.c.l.b16 %v3361
      %v3418 = vunpack.c.l.b16 %v3362
      %v3419 = vunpack.c.l.b16 %v3363
      %v3420 = vunpack.c.l.b16 %v3364
      %v3421 = vunpack.c.l.b16 %v3365
      %v3422 = vunpack.c.l.b16 %v3366
      %v3423 = vunpack.c.l.b16 %v3367
      %v3424 = vunpack.c.l.b16 %v3368
      %v3425 = vunpack.c.l.b16 %v3369
      %v3426 = vunpack.c.l.b16 %v3370
      %v3427 = vpack.c.b16 %v3412, %v3411
      %v3428 = vpack.c.b16 %v3414, %v3413
      %v3429 = vpack.c.b16 %v3416, %v3415
      %v3430 = vpack.c.b16 %v3418, %v3417
      %v3431 = vpack.c.b16 %v3420, %v3419
      %v3432 = vpack.c.b16 %v3422, %v3421
      %v3433 = vpack.c.b16 %v3424, %v3423
      %v3434 = vpack.c.b16 %v3426, %v3425
      %3443 = vmatprep.subr.bf16.mxu0 0
      %3444 = vmatpush1.bf16.msra.mxu0 %v3427
      %3445 = vmatprep.subr.bf16.mxu0 0
      %3446 = vmatpush1.bf16.msra.mxu0 %v3428
      %3447 = vmatprep.subr.bf16.mxu0 0
      %3448 = vmatpush1.bf16.msra.mxu0 %v3429
      %3449 = vmatprep.subr.bf16.mxu0 0
      %3450 = vmatpush1.bf16.msra.mxu0 %v3430
      %3451 = vmatprep.subr.bf16.mxu0 0
      %3452 = vmatpush1.bf16.msra.mxu0 %v3431
      %3453 = vmatprep.subr.bf16.mxu0 0
      %3454 = vmatpush1.bf16.msra.mxu0 %v3432
      %3455 = vmatprep.subr.bf16.mxu0 0
      %3456 = vmatpush1.bf16.msra.mxu0 %v3433
      %3457 = vmatprep.subr.bf16.mxu0 0
      %3458 = vmatpush1.bf16.msra.mxu0 %v3434
      %3459 = vmatprep.subr.bf16.mxu0 0
      %3460 = vmatpush1.bf16.msra.mxu0 0
      %3461 = vmatprep.subr.bf16.mxu0 0
      %3462 = vmatpush1.bf16.msra.mxu0 0
      %3463 = vmatprep.subr.bf16.mxu0 0
      %3464 = vmatpush1.bf16.msra.mxu0 0
      %3465 = vmatprep.subr.bf16.mxu0 0
      %3466 = vmatpush1.bf16.msra.mxu0 0
      %3467 = vmatprep.subr.bf16.mxu0 0
      %3468 = vmatpush1.bf16.msra.mxu0 0
      %3469 = vmatprep.subr.bf16.mxu0 0
      %3470 = vmatpush1.bf16.msra.mxu0 0
      %3471 = vmatprep.subr.bf16.mxu0 0
      %3472 = vmatpush1.bf16.msra.mxu0 0
      %3473 = vmatprep.subr.bf16.mxu0 0
      %3474 = vmatpush1.bf16.msra.mxu0 0
      %3475 = vmatprep.mubr.bf16.mxu0 0
      %3476 = vmatmul.mubr.bf16.gmra.mrb[0].mxu0 %v3393
      %v3477 = vpop.f32.mrb[0].mxu0
      %v3478 = vadd.f32 0.0, %v3477
      %v3479 = vpop.f32.mrb[0].mxu0
      %v3480 = vpop.f32.mrb[0].mxu0
      %v3481 = vadd.f32 0.0, %v3480
      %v3482 = vpop.f32.mrb[0].mxu0
      %3483 = vdwg.mxu0
      %v3484 = vadd.f32 %v3351, %v3478
      %v3485 = vadd.f32 %v3352, %v3481
      %v3486 = vld [vmem:[#allocation2] sm:$0x8]
      %v3487 = vsel %vm1145, %v3486, 0
      %v3488 = vsel %vm1146, %v2862, 0
      %v3489 = vsel %vm1147, %v3353, 0
      %s3490 = scalar_lea.vmem %s5, 320
      %v3491 = vld [vmem:[%s3490] sm:$0xf]
      %v3492 = vld [vmem:[%s3490 + $0x4] sm:$0xf]
      %v3493 = vld [vmem:[%s3490 + $0x8] sm:$0xf]
      %v3494 = vld [vmem:[%s3490 + $0xc] sm:$0xf]
      %v3495 = vld [vmem:[%s3490 + $0x10] sm:$0xf]
      %v3496 = vld [vmem:[%s3490 + $0x14] sm:$0xf]
      %v3497 = vld [vmem:[%s3490 + $0x18] sm:$0xf]
      %v3498 = vld [vmem:[%s3490 + $0x1c] sm:$0xf]
      %v3499 = vld [vmem:[%s3490 + $0x20] sm:$0xf]
      %v3500 = vld [vmem:[%s3490 + $0x24] sm:$0xf]
      %v3501 = vld [vmem:[%s3490 + $0x28] sm:$0xf]
      %v3502 = vld [vmem:[%s3490 + $0x2c] sm:$0xf]
      %v3503 = vld [vmem:[%s3490 + $0x30] sm:$0xf]
      %v3504 = vld [vmem:[%s3490 + $0x34] sm:$0xf]
      %v3505 = vld [vmem:[%s3490 + $0x38] sm:$0xf]
      %v3506 = vld [vmem:[%s3490 + $0x3c] sm:$0xf]
      %v3510 = vunpack.c.l.b16 %v3487
      %v3511 = vunpack.c.l.b16 %v3488
      %v3512 = vunpack.c.l.b16 %v3489
      %v3513 = vpack.c.b16 %v3511, %v3510
      %v3514 = vpack.c.b16 %v3512, %v3512
      %v3515 = vrot.slane %v3513, 3
      %v3516 = vrot.slane %v3514, 3
      %v3517 = vsel %vm1176, %v3515, %v3516
      %v3535 = vunpack.c.l.b16 %v3491
      %v3536 = vunpack.c.l.b16 %v3492
      %v3537 = vunpack.c.l.b16 %v3493
      %v3538 = vunpack.c.l.b16 %v3494
      %v3539 = vunpack.c.l.b16 %v3495
      %v3540 = vunpack.c.l.b16 %v3496
      %v3541 = vunpack.c.l.b16 %v3497
      %v3542 = vunpack.c.l.b16 %v3498
      %v3543 = vunpack.c.l.b16 %v3499
      %v3544 = vunpack.c.l.b16 %v3500
      %v3545 = vunpack.c.l.b16 %v3501
      %v3546 = vunpack.c.l.b16 %v3502
      %v3547 = vunpack.c.l.b16 %v3503
      %v3548 = vunpack.c.l.b16 %v3504
      %v3549 = vunpack.c.l.b16 %v3505
      %v3550 = vunpack.c.l.b16 %v3506
      %v3551 = vpack.c.b16 %v3536, %v3535
      %v3552 = vpack.c.b16 %v3538, %v3537
      %v3553 = vpack.c.b16 %v3540, %v3539
      %v3554 = vpack.c.b16 %v3542, %v3541
      %v3555 = vpack.c.b16 %v3544, %v3543
      %v3556 = vpack.c.b16 %v3546, %v3545
      %v3557 = vpack.c.b16 %v3548, %v3547
      %v3558 = vpack.c.b16 %v3550, %v3549
      %3567 = vmatprep.subr.bf16.mxu0 0
      %3568 = vmatpush1.bf16.msra.mxu0 %v3551
      %3569 = vmatprep.subr.bf16.mxu0 0
      %3570 = vmatpush1.bf16.msra.mxu0 %v3552
      %3571 = vmatprep.subr.bf16.mxu0 0
      %3572 = vmatpush1.bf16.msra.mxu0 %v3553
      %3573 = vmatprep.subr.bf16.mxu0 0
      %3574 = vmatpush1.bf16.msra.mxu0 %v3554
      %3575 = vmatprep.subr.bf16.mxu0 0
      %3576 = vmatpush1.bf16.msra.mxu0 %v3555
      %3577 = vmatprep.subr.bf16.mxu0 0
      %3578 = vmatpush1.bf16.msra.mxu0 %v3556
      %3579 = vmatprep.subr.bf16.mxu0 0
      %3580 = vmatpush1.bf16.msra.mxu0 %v3557
      %3581 = vmatprep.subr.bf16.mxu0 0
      %3582 = vmatpush1.bf16.msra.mxu0 %v3558
      %3583 = vmatprep.subr.bf16.mxu0 0
      %3584 = vmatpush1.bf16.msra.mxu0 0
      %3585 = vmatprep.subr.bf16.mxu0 0
      %3586 = vmatpush1.bf16.msra.mxu0 0
      %3587 = vmatprep.subr.bf16.mxu0 0
      %3588 = vmatpush1.bf16.msra.mxu0 0
      %3589 = vmatprep.subr.bf16.mxu0 0
      %3590 = vmatpush1.bf16.msra.mxu0 0
      %3591 = vmatprep.subr.bf16.mxu0 0
      %3592 = vmatpush1.bf16.msra.mxu0 0
      %3593 = vmatprep.subr.bf16.mxu0 0
      %3594 = vmatpush1.bf16.msra.mxu0 0
      %3595 = vmatprep.subr.bf16.mxu0 0
      %3596 = vmatpush1.bf16.msra.mxu0 0
      %3597 = vmatprep.subr.bf16.mxu0 0
      %3598 = vmatpush1.bf16.msra.mxu0 0
      %3599 = vmatprep.mubr.bf16.mxu0 0
      %3600 = vmatmul.mubr.bf16.gmra.mrb[0].mxu0 %v3517
      %v3601 = vpop.f32.mrb[0].mxu0
      %v3602 = vadd.f32 0.0, %v3601
      %v3603 = vpop.f32.mrb[0].mxu0
      %v3604 = vpop.f32.mrb[0].mxu0
      %v3605 = vadd.f32 0.0, %v3604
      %v3606 = vpop.f32.mrb[0].mxu0
      %3607 = vdwg.mxu0
      %v3608 = vadd.f32 %v3484, %v3602
      %v3609 = vadd.f32 %v3485, %v3605
      %v3610 = vld [vmem:[#allocation2 + $0x8] sm:$0xf]
      %v3611 = vsel %vm476, %v2862, 0
      %v3612 = vsel %vm477, %v3610, 0
      %s3613 = scalar_lea.vmem %s5, 384
      %v3614 = vld [vmem:[%s3613] sm:$0xf]
      %v3615 = vld [vmem:[%s3613 + $0x4] sm:$0xf]
      %v3616 = vld [vmem:[%s3613 + $0x8] sm:$0xf]
      %v3617 = vld [vmem:[%s3613 + $0xc] sm:$0xf]
      %v3618 = vld [vmem:[%s3613 + $0x10] sm:$0xf]
      %v3619 = vld [vmem:[%s3613 + $0x14] sm:$0xf]
      %v3620 = vld [vmem:[%s3613 + $0x18] sm:$0xf]
      %v3621 = vld [vmem:[%s3613 + $0x1c] sm:$0xf]
      %v3622 = vld [vmem:[%s3613 + $0x20] sm:$0xf]
      %v3623 = vld [vmem:[%s3613 + $0x24] sm:$0xf]
      %v3624 = vld [vmem:[%s3613 + $0x28] sm:$0xf]
      %v3625 = vld [vmem:[%s3613 + $0x2c] sm:$0xf]
      %v3626 = vld [vmem:[%s3613 + $0x30] sm:$0xf]
      %v3627 = vld [vmem:[%s3613 + $0x34] sm:$0xf]
      %v3628 = vld [vmem:[%s3613 + $0x38] sm:$0xf]
      %v3629 = vld [vmem:[%s3613 + $0x3c] sm:$0xf]
      %v3632 = vunpack.c.l.b16 %v3611
      %v3633 = vunpack.c.l.b16 %v3612
      %v3634 = vpack.c.b16 %v3633, %v3632
      %v3652 = vunpack.c.l.b16 %v3614
      %v3653 = vunpack.c.l.b16 %v3615
      %v3654 = vunpack.c.l.b16 %v3616
      %v3655 = vunpack.c.l.b16 %v3617
      %v3656 = vunpack.c.l.b16 %v3618
      %v3657 = vunpack.c.l.b16 %v3619
      %v3658 = vunpack.c.l.b16 %v3620
      %v3659 = vunpack.c.l.b16 %v3621
      %v3660 = vunpack.c.l.b16 %v3622
      %v3661 = vunpack.c.l.b16 %v3623
      %v3662 = vunpack.c.l.b16 %v3624
      %v3663 = vunpack.c.l.b16 %v3625
      %v3664 = vunpack.c.l.b16 %v3626
      %v3665 = vunpack.c.l.b16 %v3627
      %v3666 = vunpack.c.l.b16 %v3628
      %v3667 = vunpack.c.l.b16 %v3629
      %v3668 = vpack.c.b16 %v3653, %v3652
      %v3669 = vpack.c.b16 %v3655, %v3654
      %v3670 = vpack.c.b16 %v3657, %v3656
      %v3671 = vpack.c.b16 %v3659, %v3658
      %v3672 = vpack.c.b16 %v3661, %v3660
      %v3673 = vpack.c.b16 %v3663, %v3662
      %v3674 = vpack.c.b16 %v3665, %v3664
      %v3675 = vpack.c.b16 %v3667, %v3666
      %3684 = vmatprep.subr.bf16.mxu0 0
      %3685 = vmatpush1.bf16.msra.mxu0 %v3668
      %3686 = vmatprep.subr.bf16.mxu0 0
      %3687 = vmatpush1.bf16.msra.mxu0 %v3669
      %3688 = vmatprep.subr.bf16.mxu0 0
      %3689 = vmatpush1.bf16.msra.mxu0 %v3670
      %3690 = vmatprep.subr.bf16.mxu0 0
      %3691 = vmatpush1.bf16.msra.mxu0 %v3671
      %3692 = vmatprep.subr.bf16.mxu0 0
      %3693 = vmatpush1.bf16.msra.mxu0 %v3672
      %3694 = vmatprep.subr.bf16.mxu0 0
      %3695 = vmatpush1.bf16.msra.mxu0 %v3673
      %3696 = vmatprep.subr.bf16.mxu0 0
      %3697 = vmatpush1.bf16.msra.mxu0 %v3674
      %3698 = vmatprep.subr.bf16.mxu0 0
      %3699 = vmatpush1.bf16.msra.mxu0 %v3675
      %3700 = vmatprep.subr.bf16.mxu0 0
      %3701 = vmatpush1.bf16.msra.mxu0 0
      %3702 = vmatprep.subr.bf16.mxu0 0
      %3703 = vmatpush1.bf16.msra.mxu0 0
      %3704 = vmatprep.subr.bf16.mxu0 0
      %3705 = vmatpush1.bf16.msra.mxu0 0
      %3706 = vmatprep.subr.bf16.mxu0 0
      %3707 = vmatpush1.bf16.msra.mxu0 0
      %3708 = vmatprep.subr.bf16.mxu0 0
      %3709 = vmatpush1.bf16.msra.mxu0 0
      %3710 = vmatprep.subr.bf16.mxu0 0
      %3711 = vmatpush1.bf16.msra.mxu0 0
      %3712 = vmatprep.subr.bf16.mxu0 0
      %3713 = vmatpush1.bf16.msra.mxu0 0
      %3714 = vmatprep.subr.bf16.mxu0 0
      %3715 = vmatpush1.bf16.msra.mxu0 0
      %3716 = vmatprep.mubr.bf16.mxu0 0
      %3717 = vmatmul.mubr.bf16.gmra.mrb[0].mxu0 %v3634
      %v3718 = vpop.f32.mrb[0].mxu0
      %v3719 = vadd.f32 0.0, %v3718
      %v3720 = vpop.f32.mrb[0].mxu0
      %v3721 = vpop.f32.mrb[0].mxu0
      %v3722 = vadd.f32 0.0, %v3721
      %v3723 = vpop.f32.mrb[0].mxu0
      %3724 = vdwg.mxu0
      %v3725 = vadd.f32 %v3608, %v3719
      %v3726 = vadd.f32 %v3609, %v3722
      %v3727 = vld [vmem:[#allocation2 + $0x4] sm:$0xf]
      %v3728 = vld [vmem:[#allocation2 + $0x8] sm:$0xf]
      %v3729 = vld [vmem:[#allocation2 + $0xc] sm:$0x1]
      %s3730 = scalar_lea.vmem %s5, 448
      %v3731 = vld [vmem:[%s3730] sm:$0xf]
      %v3732 = vld [vmem:[%s3730 + $0x4] sm:$0xf]
      %v3733 = vld [vmem:[%s3730 + $0x8] sm:$0xf]
      %v3734 = vld [vmem:[%s3730 + $0xc] sm:$0xf]
      %v3735 = vld [vmem:[%s3730 + $0x10] sm:$0xf]
      %v3736 = vld [vmem:[%s3730 + $0x14] sm:$0xf]
      %v3737 = vld [vmem:[%s3730 + $0x18] sm:$0xf]
      %v3738 = vld [vmem:[%s3730 + $0x1c] sm:$0xf]
      %v3739 = vld [vmem:[%s3730 + $0x20] sm:$0xf]
      %v3740 = vld [vmem:[%s3730 + $0x24] sm:$0xf]
      %v3741 = vld [vmem:[%s3730 + $0x28] sm:$0xf]
      %v3742 = vld [vmem:[%s3730 + $0x2c] sm:$0xf]
      %v3743 = vld [vmem:[%s3730 + $0x30] sm:$0xf]
      %v3744 = vld [vmem:[%s3730 + $0x34] sm:$0xf]
      %v3745 = vld [vmem:[%s3730 + $0x38] sm:$0xf]
      %v3746 = vld [vmem:[%s3730 + $0x3c] sm:$0xf]
      %v3750 = vunpack.c.l.b16 %v3727
      %v3751 = vunpack.c.l.b16 %v3728
      %v3752 = vunpack.c.l.b16 %v3729
      %v3753 = vpack.c.b16 %v3751, %v3750
      %v3754 = vpack.c.b16 %v3752, %v3752
      %v3756 = vshrl.u32 %v3753, 16
      %v3758 = vshll.u32 %v3753, 16
      %v3760 = vrot.slane %v3758, 1
      %v3761 = vor.u32 %v3756, %v3760
      %v3763 = vshll.u32 %v3754, 16
      %v3765 = vrot.slane %v3763, 1
      %v3766 = vsel %vm522, %v3761, %v3765
      %v3784 = vunpack.c.l.b16 %v3731
      %v3785 = vunpack.c.l.b16 %v3732
      %v3786 = vunpack.c.l.b16 %v3733
      %v3787 = vunpack.c.l.b16 %v3734
      %v3788 = vunpack.c.l.b16 %v3735
      %v3789 = vunpack.c.l.b16 %v3736
      %v3790 = vunpack.c.l.b16 %v3737
      %v3791 = vunpack.c.l.b16 %v3738
      %v3792 = vunpack.c.l.b16 %v3739
      %v3793 = vunpack.c.l.b16 %v3740
      %v3794 = vunpack.c.l.b16 %v3741
      %v3795 = vunpack.c.l.b16 %v3742
      %v3796 = vunpack.c.l.b16 %v3743
      %v3797 = vunpack.c.l.b16 %v3744
      %v3798 = vunpack.c.l.b16 %v3745
      %v3799 = vunpack.c.l.b16 %v3746
      %v3800 = vpack.c.b16 %v3785, %v3784
      %v3801 = vpack.c.b16 %v3787, %v3786
      %v3802 = vpack.c.b16 %v3789, %v3788
      %v3803 = vpack.c.b16 %v3791, %v3790
      %v3804 = vpack.c.b16 %v3793, %v3792
      %v3805 = vpack.c.b16 %v3795, %v3794
      %v3806 = vpack.c.b16 %v3797, %v3796
      %v3807 = vpack.c.b16 %v3799, %v3798
      %3816 = vmatprep.subr.bf16.mxu0 0
      %3817 = vmatpush1.bf16.msra.mxu0 %v3800
      %3818 = vmatprep.subr.bf16.mxu0 0
      %3819 = vmatpush1.bf16.msra.mxu0 %v3801
      %3820 = vmatprep.subr.bf16.mxu0 0
      %3821 = vmatpush1.bf16.msra.mxu0 %v3802
      %3822 = vmatprep.subr.bf16.mxu0 0
      %3823 = vmatpush1.bf16.msra.mxu0 %v3803
      %3824 = vmatprep.subr.bf16.mxu0 0
      %3825 = vmatpush1.bf16.msra.mxu0 %v3804
      %3826 = vmatprep.subr.bf16.mxu0 0
      %3827 = vmatpush1.bf16.msra.mxu0 %v3805
      %3828 = vmatprep.subr.bf16.mxu0 0
      %3829 = vmatpush1.bf16.msra.mxu0 %v3806
      %3830 = vmatprep.subr.bf16.mxu0 0
      %3831 = vmatpush1.bf16.msra.mxu0 %v3807
      %3832 = vmatprep.subr.bf16.mxu0 0
      %3833 = vmatpush1.bf16.msra.mxu0 0
      %3834 = vmatprep.subr.bf16.mxu0 0
      %3835 = vmatpush1.bf16.msra.mxu0 0
      %3836 = vmatprep.subr.bf16.mxu0 0
      %3837 = vmatpush1.bf16.msra.mxu0 0
      %3838 = vmatprep.subr.bf16.mxu0 0
      %3839 = vmatpush1.bf16.msra.mxu0 0
      %3840 = vmatprep.subr.bf16.mxu0 0
      %3841 = vmatpush1.bf16.msra.mxu0 0
      %3842 = vmatprep.subr.bf16.mxu0 0
      %3843 = vmatpush1.bf16.msra.mxu0 0
      %3844 = vmatprep.subr.bf16.mxu0 0
      %3845 = vmatpush1.bf16.msra.mxu0 0
      %3846 = vmatprep.subr.bf16.mxu0 0
      %3847 = vmatpush1.bf16.msra.mxu0 0
      %3848 = vmatprep.mubr.bf16.mxu0 0
      %3849 = vmatmul.mubr.bf16.gmra.mrb[0].mxu0 %v3766
      %v3850 = vpop.f32.mrb[0].mxu0
      %v3851 = vadd.f32 0.0, %v3850
      %v3852 = vpop.f32.mrb[0].mxu0
      %v3853 = vpop.f32.mrb[0].mxu0
      %v3854 = vadd.f32 0.0, %v3853
      %v3855 = vpop.f32.mrb[0].mxu0
      %3856 = vdwg.mxu0
      %v3857 = vadd.f32 %v3725, %v3851
      %v3858 = vadd.f32 %v3726, %v3854
      %v3859 = vld [vmem:[#allocation2 + $0x4] sm:$0xe]
      %v3860 = vsel %vm737, %v3859, 0
      %v3861 = vsel %vm738, %v3728, 0
      %v3862 = vsel %vm739, %v3729, 0
      %s3863 = scalar_lea.vmem %s5, 512
      %v3864 = vld [vmem:[%s3863] sm:$0xf]
      %v3865 = vld [vmem:[%s3863 + $0x4] sm:$0xf]
      %v3866 = vld [vmem:[%s3863 + $0x8] sm:$0xf]
      %v3867 = vld [vmem:[%s3863 + $0xc] sm:$0xf]
      %v3868 = vld [vmem:[%s3863 + $0x10] sm:$0xf]
      %v3869 = vld [vmem:[%s3863 + $0x14] sm:$0xf]
      %v3870 = vld [vmem:[%s3863 + $0x18] sm:$0xf]
      %v3871 = vld [vmem:[%s3863 + $0x1c] sm:$0xf]
      %v3872 = vld [vmem:[%s3863 + $0x20] sm:$0xf]
      %v3873 = vld [vmem:[%s3863 + $0x24] sm:$0xf]
      %v3874 = vld [vmem:[%s3863 + $0x28] sm:$0xf]
      %v3875 = vld [vmem:[%s3863 + $0x2c] sm:$0xf]
      %v3876 = vld [vmem:[%s3863 + $0x30] sm:$0xf]
      %v3877 = vld [vmem:[%s3863 + $0x34] sm:$0xf]
      %v3878 = vld [vmem:[%s3863 + $0x38] sm:$0xf]
      %v3879 = vld [vmem:[%s3863 + $0x3c] sm:$0xf]
      %v3883 = vunpack.c.l.b16 %v3860
      %v3884 = vunpack.c.l.b16 %v3861
      %v3885 = vunpack.c.l.b16 %v3862
      %v3886 = vpack.c.b16 %v3884, %v3883
      %v3887 = vpack.c.b16 %v3885, %v3885
      %v3888 = vrot.slane %v3886, 1
      %v3889 = vrot.slane %v3887, 1
      %v3890 = vsel %vm768, %v3888, %v3889
      %v3908 = vunpack.c.l.b16 %v3864
      %v3909 = vunpack.c.l.b16 %v3865
      %v3910 = vunpack.c.l.b16 %v3866
      %v3911 = vunpack.c.l.b16 %v3867
      %v3912 = vunpack.c.l.b16 %v3868
      %v3913 = vunpack.c.l.b16 %v3869
      %v3914 = vunpack.c.l.b16 %v3870
      %v3915 = vunpack.c.l.b16 %v3871
      %v3916 = vunpack.c.l.b16 %v3872
      %v3917 = vunpack.c.l.b16 %v3873
      %v3918 = vunpack.c.l.b16 %v3874
      %v3919 = vunpack.c.l.b16 %v3875
      %v3920 = vunpack.c.l.b16 %v3876
      %v3921 = vunpack.c.l.b16 %v3877
      %v3922 = vunpack.c.l.b16 %v3878
      %v3923 = vunpack.c.l.b16 %v3879
      %v3924 = vpack.c.b16 %v3909, %v3908
      %v3925 = vpack.c.b16 %v3911, %v3910
      %v3926 = vpack.c.b16 %v3913, %v3912
      %v3927 = vpack.c.b16 %v3915, %v3914
      %v3928 = vpack.c.b16 %v3917, %v3916
      %v3929 = vpack.c.b16 %v3919, %v3918
      %v3930 = vpack.c.b16 %v3921, %v3920
      %v3931 = vpack.c.b16 %v3923, %v3922
      %3940 = vmatprep.subr.bf16.mxu0 0
      %3941 = vmatpush1.bf16.msra.mxu0 %v3924
      %3942 = vmatprep.subr.bf16.mxu0 0
      %3943 = vmatpush1.bf16.msra.mxu0 %v3925
      %3944 = vmatprep.subr.bf16.mxu0 0
      %3945 = vmatpush1.bf16.msra.mxu0 %v3926
      %3946 = vmatprep.subr.bf16.mxu0 0
      %3947 = vmatpush1.bf16.msra.mxu0 %v3927
      %3948 = vmatprep.subr.bf16.mxu0 0
      %3949 = vmatpush1.bf16.msra.mxu0 %v3928
      %3950 = vmatprep.subr.bf16.mxu0 0
      %3951 = vmatpush1.bf16.msra.mxu0 %v3929
      %3952 = vmatprep.subr.bf16.mxu0 0
      %3953 = vmatpush1.bf16.msra.mxu0 %v3930
      %3954 = vmatprep.subr.bf16.mxu0 0
      %3955 = vmatpush1.bf16.msra.mxu0 %v3931
      %3956 = vmatprep.subr.bf16.mxu0 0
      %3957 = vmatpush1.bf16.msra.mxu0 0
      %3958 = vmatprep.subr.bf16.mxu0 0
      %3959 = vmatpush1.bf16.msra.mxu0 0
      %3960 = vmatprep.subr.bf16.mxu0 0
      %3961 = vmatpush1.bf16.msra.mxu0 0
      %3962 = vmatprep.subr.bf16.mxu0 0
      %3963 = vmatpush1.bf16.msra.mxu0 0
      %3964 = vmatprep.subr.bf16.mxu0 0
      %3965 = vmatpush1.bf16.msra.mxu0 0
      %3966 = vmatprep.subr.bf16.mxu0 0
      %3967 = vmatpush1.bf16.msra.mxu0 0
      %3968 = vmatprep.subr.bf16.mxu0 0
      %3969 = vmatpush1.bf16.msra.mxu0 0
      %3970 = vmatprep.subr.bf16.mxu0 0
      %3971 = vmatpush1.bf16.msra.mxu0 0
      %3972 = vmatprep.mubr.bf16.mxu0 0
      %3973 = vmatmul.mubr.bf16.gmra.mrb[0].mxu0 %v3890
      %v3974 = vpop.f32.mrb[0].mxu0
      %v3975 = vadd.f32 0.0, %v3974
      %v3976 = vpop.f32.mrb[0].mxu0
      %v3977 = vpop.f32.mrb[0].mxu0
      %v3978 = vadd.f32 0.0, %v3977
      %v3979 = vpop.f32.mrb[0].mxu0
      %3980 = vdwg.mxu0
      %v3981 = vadd.f32 %v3857, %v3975
      %v3982 = vadd.f32 %v3858, %v3978
      %v3983 = vld [vmem:[%s6] sm:$0x1]
      %v3985 = vlaneseq
      %v3986 = vshrl.u32 %v3985, 7
      %v3987 = vsub.s32 0, %v3986
      %v3988 = vrot.slane %v3983, %v3987
      %v3990 = vadd.f32 %v3981, %v3988
      %v3991 = vadd.f32 %v3982, %v3988
      %v3992 = vmax.f32 %v3990, 0.0
      %v3993 = vmax.f32 %v3991, 0.0
      %v3994 = vpack.c.bf16 %v3993, %v3992
      %v3996 = vunpack.c.l.b16 %v3994
      %v3997 = vunpack.c.h.b16 %v3994
      %v3998 = vpack.c.b16 %v3996, %v3996
      %v3999 = vpack.c.b16 %v3997, %v3997
      %v4001 = vshrl.u32 %v3998, 16
      %v4003 = vrot.slane %v4001, 5
      %v4004 = vshll.u32 %v3998, 16
      %v4006 = vrot.slane %v4004, 6
      %v4007 = vor.u32 %v4003, %v4006
      %v4008 = vrot.slane %v4007, 4
      %v4010 = vshrl.u32 %v3999, 16
      %v4012 = vrot.slane %v4010, 5
      %v4013 = vshll.u32 %v3999, 16
      %v4015 = vrot.slane %v4013, 6
      %v4016 = vor.u32 %v4012, %v4015
      %v4017 = vsel %vm440, %v4008, %v4016
      %v4018 = vrot.slane %v4016, 4
      %v4022 = vsel %vm401, %v4007, %v3228
      %4023 = vst [vmem:[#allocation2] sm:$0xc] %v4022
      %4024 = vst [vmem:[#allocation2 + $0x4] sm:$0xf] %v4017
      %v4025 = vld [vmem:[#allocation2 + $0x8] sm:$0x7]
      %v4026 = vsel %vm395, %v4018, %v4025
      %4027 = vst [vmem:[#allocation2 + $0x8] sm:$0x7] %v4026
      %v4028 = vld [vmem:[#allocation2] sm:$0xf]
      %v4029 = vld [vmem:[#allocation2 + $0x4] sm:$0xf]
      %v4030 = vsel %vm476, %v4028, 0
      %v4031 = vsel %vm477, %v4029, 0
      %v4032 = vld [vmem:[%s7] sm:$0xf]
      %v4033 = vld [vmem:[%s7 + $0x4] sm:$0xf]
      %v4034 = vld [vmem:[%s7 + $0x8] sm:$0xf]
      %v4035 = vld [vmem:[%s7 + $0xc] sm:$0xf]
      %v4036 = vld [vmem:[%s7 + $0x10] sm:$0xf]
      %v4037 = vld [vmem:[%s7 + $0x14] sm:$0xf]
      %v4038 = vld [vmem:[%s7 + $0x18] sm:$0xf]
      %v4039 = vld [vmem:[%s7 + $0x1c] sm:$0xf]
      %v4040 = vld [vmem:[%s7 + $0x20] sm:$0xf]
      %v4041 = vld [vmem:[%s7 + $0x24] sm:$0xf]
      %v4042 = vld [vmem:[%s7 + $0x28] sm:$0xf]
      %v4043 = vld [vmem:[%s7 + $0x2c] sm:$0xf]
      %v4044 = vld [vmem:[%s7 + $0x30] sm:$0xf]
      %v4045 = vld [vmem:[%s7 + $0x34] sm:$0xf]
      %v4046 = vld [vmem:[%s7 + $0x38] sm:$0xf]
      %v4047 = vld [vmem:[%s7 + $0x3c] sm:$0xf]
      %v4048 = vld [vmem:[#allocation2 + $0x8] sm:$0x1]
      %s4049 = scalar_lea.vmem %s7, 64
      %v4050 = vld [vmem:[%s4049] sm:$0xf]
      %v4051 = vld [vmem:[%s4049 + $0x4] sm:$0xf]
      %v4052 = vld [vmem:[%s4049 + $0x8] sm:$0xf]
      %v4053 = vld [vmem:[%s4049 + $0xc] sm:$0xf]
      %v4054 = vld [vmem:[%s4049 + $0x10] sm:$0xf]
      %v4055 = vld [vmem:[%s4049 + $0x14] sm:$0xf]
      %v4056 = vld [vmem:[%s4049 + $0x18] sm:$0xf]
      %v4057 = vld [vmem:[%s4049 + $0x1c] sm:$0xf]
      %v4058 = vld [vmem:[%s4049 + $0x20] sm:$0xf]
      %v4059 = vld [vmem:[%s4049 + $0x24] sm:$0xf]
      %v4060 = vld [vmem:[%s4049 + $0x28] sm:$0xf]
      %v4061 = vld [vmem:[%s4049 + $0x2c] sm:$0xf]
      %v4062 = vld [vmem:[%s4049 + $0x30] sm:$0xf]
      %v4063 = vld [vmem:[%s4049 + $0x34] sm:$0xf]
      %v4064 = vld [vmem:[%s4049 + $0x38] sm:$0xf]
      %v4065 = vld [vmem:[%s4049 + $0x3c] sm:$0xf]
      %v4069 = vunpack.c.l.b16 %v4028
      %v4070 = vunpack.c.l.b16 %v4029
      %v4071 = vunpack.c.l.b16 %v4048
      %v4072 = vpack.c.b16 %v4070, %v4069
      %v4073 = vpack.c.b16 %v4071, %v4071
      %v4075 = vshrl.u32 %v4072, 16
      %v4077 = vshll.u32 %v4072, 16
      %v4079 = vrot.slane %v4077, 1
      %v4080 = vor.u32 %v4075, %v4079
      %v4082 = vshll.u32 %v4073, 16
      %v4084 = vrot.slane %v4082, 1
      %v4085 = vsel %vm522, %v4080, %v4084
      %v4103 = vunpack.c.l.b16 %v4050
      %v4104 = vunpack.c.l.b16 %v4051
      %v4105 = vunpack.c.l.b16 %v4052
      %v4106 = vunpack.c.l.b16 %v4053
      %v4107 = vunpack.c.l.b16 %v4054
      %v4108 = vunpack.c.l.b16 %v4055
      %v4109 = vunpack.c.l.b16 %v4056
      %v4110 = vunpack.c.l.b16 %v4057
      %v4111 = vunpack.c.l.b16 %v4058
      %v4112 = vunpack.c.l.b16 %v4059
      %v4113 = vunpack.c.l.b16 %v4060
      %v4114 = vunpack.c.l.b16 %v4061
      %v4115 = vunpack.c.l.b16 %v4062
      %v4116 = vunpack.c.l.b16 %v4063
      %v4117 = vunpack.c.l.b16 %v4064
      %v4118 = vunpack.c.l.b16 %v4065
      %v4119 = vpack.c.b16 %v4104, %v4103
      %v4120 = vpack.c.b16 %v4106, %v4105
      %v4121 = vpack.c.b16 %v4108, %v4107
      %v4122 = vpack.c.b16 %v4110, %v4109
      %v4123 = vpack.c.b16 %v4112, %v4111
      %v4124 = vpack.c.b16 %v4114, %v4113
      %v4125 = vpack.c.b16 %v4116, %v4115
      %v4126 = vpack.c.b16 %v4118, %v4117
      %4135 = vmatprep.subr.bf16.mxu0 0
      %4136 = vmatpush1.bf16.msra.mxu0 %v4119
      %4137 = vmatprep.subr.bf16.mxu0 0
      %4138 = vmatpush1.bf16.msra.mxu0 %v4120
      %4139 = vmatprep.subr.bf16.mxu0 0
      %4140 = vmatpush1.bf16.msra.mxu0 %v4121
      %4141 = vmatprep.subr.bf16.mxu0 0
      %4142 = vmatpush1.bf16.msra.mxu0 %v4122
      %4143 = vmatprep.subr.bf16.mxu0 0
      %4144 = vmatpush1.bf16.msra.mxu0 %v4123
      %4145 = vmatprep.subr.bf16.mxu0 0
      %4146 = vmatpush1.bf16.msra.mxu0 %v4124
      %4147 = vmatprep.subr.bf16.mxu0 0
      %4148 = vmatpush1.bf16.msra.mxu0 %v4125
      %4149 = vmatprep.subr.bf16.mxu0 0
      %4150 = vmatpush1.bf16.msra.mxu0 %v4126
      %4151 = vmatprep.subr.bf16.mxu0 0
      %4152 = vmatpush1.bf16.msra.mxu0 0
      %4153 = vmatprep.subr.bf16.mxu0 0
      %4154 = vmatpush1.bf16.msra.mxu0 0
      %4155 = vmatprep.subr.bf16.mxu0 0
      %4156 = vmatpush1.bf16.msra.mxu0 0
      %4157 = vmatprep.subr.bf16.mxu0 0
      %4158 = vmatpush1.bf16.msra.mxu0 0
      %4159 = vmatprep.subr.bf16.mxu0 0
      %4160 = vmatpush1.bf16.msra.mxu0 0
      %4161 = vmatprep.subr.bf16.mxu0 0
      %4162 = vmatpush1.bf16.msra.mxu0 0
      %4163 = vmatprep.subr.bf16.mxu0 0
      %4164 = vmatpush1.bf16.msra.mxu0 0
      %4165 = vmatprep.subr.bf16.mxu0 0
      %4166 = vmatpush1.bf16.msra.mxu0 0
      %4167 = vmatprep.mubr.bf16.mxu0 0
      %4168 = vmatmul.mubr.bf16.gmra.mrb[0].mxu0 %v4085
      %v4169 = vpop.f32.mrb[0].mxu0
      %v4170 = vadd.f32 0.0, %v4169
      %v4171 = vpop.f32.mrb[0].mxu0
      %v4172 = vpop.f32.mrb[0].mxu0
      %v4173 = vadd.f32 0.0, %v4172
      %v4174 = vpop.f32.mrb[0].mxu0
      %4175 = vdwg.mxu0
      %v4178 = vunpack.c.l.b16 %v4030
      %v4179 = vunpack.c.l.b16 %v4031
      %v4180 = vpack.c.b16 %v4179, %v4178
      %v4198 = vunpack.c.l.b16 %v4032
      %v4199 = vunpack.c.l.b16 %v4033
      %v4200 = vunpack.c.l.b16 %v4034
      %v4201 = vunpack.c.l.b16 %v4035
      %v4202 = vunpack.c.l.b16 %v4036
      %v4203 = vunpack.c.l.b16 %v4037
      %v4204 = vunpack.c.l.b16 %v4038
      %v4205 = vunpack.c.l.b16 %v4039
      %v4206 = vunpack.c.l.b16 %v4040
      %v4207 = vunpack.c.l.b16 %v4041
      %v4208 = vunpack.c.l.b16 %v4042
      %v4209 = vunpack.c.l.b16 %v4043
      %v4210 = vunpack.c.l.b16 %v4044
      %v4211 = vunpack.c.l.b16 %v4045
      %v4212 = vunpack.c.l.b16 %v4046
      %v4213 = vunpack.c.l.b16 %v4047
      %v4214 = vpack.c.b16 %v4199, %v4198
      %v4215 = vpack.c.b16 %v4201, %v4200
      %v4216 = vpack.c.b16 %v4203, %v4202
      %v4217 = vpack.c.b16 %v4205, %v4204
      %v4218 = vpack.c.b16 %v4207, %v4206
      %v4219 = vpack.c.b16 %v4209, %v4208
      %v4220 = vpack.c.b16 %v4211, %v4210
      %v4221 = vpack.c.b16 %v4213, %v4212
      %4230 = vmatprep.subr.bf16.mxu0 0
      %4231 = vmatpush1.bf16.msra.mxu0 %v4214
      %4232 = vmatprep.subr.bf16.mxu0 0
      %4233 = vmatpush1.bf16.msra.mxu0 %v4215
      %4234 = vmatprep.subr.bf16.mxu0 0
      %4235 = vmatpush1.bf16.msra.mxu0 %v4216
      %4236 = vmatprep.subr.bf16.mxu0 0
      %4237 = vmatpush1.bf16.msra.mxu0 %v4217
      %4238 = vmatprep.subr.bf16.mxu0 0
      %4239 = vmatpush1.bf16.msra.mxu0 %v4218
      %4240 = vmatprep.subr.bf16.mxu0 0
      %4241 = vmatpush1.bf16.msra.mxu0 %v4219
      %4242 = vmatprep.subr.bf16.mxu0 0
      %4243 = vmatpush1.bf16.msra.mxu0 %v4220
      %4244 = vmatprep.subr.bf16.mxu0 0
      %4245 = vmatpush1.bf16.msra.mxu0 %v4221
      %4246 = vmatprep.subr.bf16.mxu0 0
      %4247 = vmatpush1.bf16.msra.mxu0 0
      %4248 = vmatprep.subr.bf16.mxu0 0
      %4249 = vmatpush1.bf16.msra.mxu0 0
      %4250 = vmatprep.subr.bf16.mxu0 0
      %4251 = vmatpush1.bf16.msra.mxu0 0
      %4252 = vmatprep.subr.bf16.mxu0 0
      %4253 = vmatpush1.bf16.msra.mxu0 0
      %4254 = vmatprep.subr.bf16.mxu0 0
      %4255 = vmatpush1.bf16.msra.mxu0 0
      %4256 = vmatprep.subr.bf16.mxu0 0
      %4257 = vmatpush1.bf16.msra.mxu0 0
      %4258 = vmatprep.subr.bf16.mxu0 0
      %4259 = vmatpush1.bf16.msra.mxu0 0
      %4260 = vmatprep.subr.bf16.mxu0 0
      %4261 = vmatpush1.bf16.msra.mxu0 0
      %4262 = vmatprep.mubr.bf16.mxu0 0
      %4263 = vmatmul.mubr.bf16.gmra.mrb[0].mxu0 %v4180
      %v4264 = vpop.f32.mrb[0].mxu0
      %v4265 = vadd.f32 %v4170, %v4264
      %v4266 = vpop.f32.mrb[0].mxu0
      %v4267 = vpop.f32.mrb[0].mxu0
      %v4268 = vadd.f32 %v4173, %v4267
      %v4269 = vpop.f32.mrb[0].mxu0
      %4270 = vdwg.mxu0
      %v4271 = vld [vmem:[#allocation2] sm:$0xe]
      %v4272 = vsel %vm737, %v4271, 0
      %v4273 = vsel %vm738, %v4029, 0
      %v4274 = vsel %vm739, %v4048, 0
      %s4275 = scalar_lea.vmem %s7, 128
      %v4276 = vld [vmem:[%s4275] sm:$0xf]
      %v4277 = vld [vmem:[%s4275 + $0x4] sm:$0xf]
      %v4278 = vld [vmem:[%s4275 + $0x8] sm:$0xf]
      %v4279 = vld [vmem:[%s4275 + $0xc] sm:$0xf]
      %v4280 = vld [vmem:[%s4275 + $0x10] sm:$0xf]
      %v4281 = vld [vmem:[%s4275 + $0x14] sm:$0xf]
      %v4282 = vld [vmem:[%s4275 + $0x18] sm:$0xf]
      %v4283 = vld [vmem:[%s4275 + $0x1c] sm:$0xf]
      %v4284 = vld [vmem:[%s4275 + $0x20] sm:$0xf]
      %v4285 = vld [vmem:[%s4275 + $0x24] sm:$0xf]
      %v4286 = vld [vmem:[%s4275 + $0x28] sm:$0xf]
      %v4287 = vld [vmem:[%s4275 + $0x2c] sm:$0xf]
      %v4288 = vld [vmem:[%s4275 + $0x30] sm:$0xf]
      %v4289 = vld [vmem:[%s4275 + $0x34] sm:$0xf]
      %v4290 = vld [vmem:[%s4275 + $0x38] sm:$0xf]
      %v4291 = vld [vmem:[%s4275 + $0x3c] sm:$0xf]
      %v4295 = vunpack.c.l.b16 %v4272
      %v4296 = vunpack.c.l.b16 %v4273
      %v4297 = vunpack.c.l.b16 %v4274
      %v4298 = vpack.c.b16 %v4296, %v4295
      %v4299 = vpack.c.b16 %v4297, %v4297
      %v4300 = vrot.slane %v4298, 1
      %v4301 = vrot.slane %v4299, 1
      %v4302 = vsel %vm768, %v4300, %v4301
      %v4320 = vunpack.c.l.b16 %v4276
      %v4321 = vunpack.c.l.b16 %v4277
      %v4322 = vunpack.c.l.b16 %v4278
      %v4323 = vunpack.c.l.b16 %v4279
      %v4324 = vunpack.c.l.b16 %v4280
      %v4325 = vunpack.c.l.b16 %v4281
      %v4326 = vunpack.c.l.b16 %v4282
      %v4327 = vunpack.c.l.b16 %v4283
      %v4328 = vunpack.c.l.b16 %v4284
      %v4329 = vunpack.c.l.b16 %v4285
      %v4330 = vunpack.c.l.b16 %v4286
      %v4331 = vunpack.c.l.b16 %v4287
      %v4332 = vunpack.c.l.b16 %v4288
      %v4333 = vunpack.c.l.b16 %v4289
      %v4334 = vunpack.c.l.b16 %v4290
      %v4335 = vunpack.c.l.b16 %v4291
      %v4336 = vpack.c.b16 %v4321, %v4320
      %v4337 = vpack.c.b16 %v4323, %v4322
      %v4338 = vpack.c.b16 %v4325, %v4324
      %v4339 = vpack.c.b16 %v4327, %v4326
      %v4340 = vpack.c.b16 %v4329, %v4328
      %v4341 = vpack.c.b16 %v4331, %v4330
      %v4342 = vpack.c.b16 %v4333, %v4332
      %v4343 = vpack.c.b16 %v4335, %v4334
      %4352 = vmatprep.subr.bf16.mxu0 0
      %4353 = vmatpush1.bf16.msra.mxu0 %v4336
      %4354 = vmatprep.subr.bf16.mxu0 0
      %4355 = vmatpush1.bf16.msra.mxu0 %v4337
      %4356 = vmatprep.subr.bf16.mxu0 0
      %4357 = vmatpush1.bf16.msra.mxu0 %v4338
      %4358 = vmatprep.subr.bf16.mxu0 0
      %4359 = vmatpush1.bf16.msra.mxu0 %v4339
      %4360 = vmatprep.subr.bf16.mxu0 0
      %4361 = vmatpush1.bf16.msra.mxu0 %v4340
      %4362 = vmatprep.subr.bf16.mxu0 0
      %4363 = vmatpush1.bf16.msra.mxu0 %v4341
      %4364 = vmatprep.subr.bf16.mxu0 0
      %4365 = vmatpush1.bf16.msra.mxu0 %v4342
      %4366 = vmatprep.subr.bf16.mxu0 0
      %4367 = vmatpush1.bf16.msra.mxu0 %v4343
      %4368 = vmatprep.subr.bf16.mxu0 0
      %4369 = vmatpush1.bf16.msra.mxu0 0
      %4370 = vmatprep.subr.bf16.mxu0 0
      %4371 = vmatpush1.bf16.msra.mxu0 0
      %4372 = vmatprep.subr.bf16.mxu0 0
      %4373 = vmatpush1.bf16.msra.mxu0 0
      %4374 = vmatprep.subr.bf16.mxu0 0
      %4375 = vmatpush1.bf16.msra.mxu0 0
      %4376 = vmatprep.subr.bf16.mxu0 0
      %4377 = vmatpush1.bf16.msra.mxu0 0
      %4378 = vmatprep.subr.bf16.mxu0 0
      %4379 = vmatpush1.bf16.msra.mxu0 0
      %4380 = vmatprep.subr.bf16.mxu0 0
      %4381 = vmatpush1.bf16.msra.mxu0 0
      %4382 = vmatprep.subr.bf16.mxu0 0
      %4383 = vmatpush1.bf16.msra.mxu0 0
      %4384 = vmatprep.mubr.bf16.mxu0 0
      %4385 = vmatmul.mubr.bf16.gmra.mrb[0].mxu0 %v4302
      %v4386 = vpop.f32.mrb[0].mxu0
      %v4387 = vadd.f32 0.0, %v4386
      %v4388 = vpop.f32.mrb[0].mxu0
      %v4389 = vpop.f32.mrb[0].mxu0
      %v4390 = vadd.f32 0.0, %v4389
      %v4391 = vpop.f32.mrb[0].mxu0
      %4392 = vdwg.mxu0
      %v4393 = vadd.f32 %v4265, %v4387
      %v4394 = vadd.f32 %v4268, %v4390
      %v4395 = vld [vmem:[#allocation2] sm:$0xc]
      %v4396 = vld [vmem:[#allocation2 + $0x8] sm:$0x3]
      %v4397 = vsel %vm876, %v4395, 0
      %v4398 = vsel %vm877, %v4029, 0
      %v4399 = vsel %vm878, %v4396, 0
      %s4400 = scalar_lea.vmem %s7, 192
      %v4401 = vld [vmem:[%s4400] sm:$0xf]
      %v4402 = vld [vmem:[%s4400 + $0x4] sm:$0xf]
      %v4403 = vld [vmem:[%s4400 + $0x8] sm:$0xf]
      %v4404 = vld [vmem:[%s4400 + $0xc] sm:$0xf]
      %v4405 = vld [vmem:[%s4400 + $0x10] sm:$0xf]
      %v4406 = vld [vmem:[%s4400 + $0x14] sm:$0xf]
      %v4407 = vld [vmem:[%s4400 + $0x18] sm:$0xf]
      %v4408 = vld [vmem:[%s4400 + $0x1c] sm:$0xf]
      %v4409 = vld [vmem:[%s4400 + $0x20] sm:$0xf]
      %v4410 = vld [vmem:[%s4400 + $0x24] sm:$0xf]
      %v4411 = vld [vmem:[%s4400 + $0x28] sm:$0xf]
      %v4412 = vld [vmem:[%s4400 + $0x2c] sm:$0xf]
      %v4413 = vld [vmem:[%s4400 + $0x30] sm:$0xf]
      %v4414 = vld [vmem:[%s4400 + $0x34] sm:$0xf]
      %v4415 = vld [vmem:[%s4400 + $0x38] sm:$0xf]
      %v4416 = vld [vmem:[%s4400 + $0x3c] sm:$0xf]
      %v4420 = vunpack.c.l.b16 %v4397
      %v4421 = vunpack.c.l.b16 %v4398
      %v4422 = vunpack.c.l.b16 %v4399
      %v4423 = vpack.c.b16 %v4421, %v4420
      %v4424 = vpack.c.b16 %v4422, %v4422
      %v4425 = vrot.slane %v4423, 2
      %v4426 = vrot.slane %v4424, 2
      %v4427 = vsel %vm907, %v4425, %v4426
      %v4445 = vunpack.c.l.b16 %v4401
      %v4446 = vunpack.c.l.b16 %v4402
      %v4447 = vunpack.c.l.b16 %v4403
      %v4448 = vunpack.c.l.b16 %v4404
      %v4449 = vunpack.c.l.b16 %v4405
      %v4450 = vunpack.c.l.b16 %v4406
      %v4451 = vunpack.c.l.b16 %v4407
      %v4452 = vunpack.c.l.b16 %v4408
      %v4453 = vunpack.c.l.b16 %v4409
      %v4454 = vunpack.c.l.b16 %v4410
      %v4455 = vunpack.c.l.b16 %v4411
      %v4456 = vunpack.c.l.b16 %v4412
      %v4457 = vunpack.c.l.b16 %v4413
      %v4458 = vunpack.c.l.b16 %v4414
      %v4459 = vunpack.c.l.b16 %v4415
      %v4460 = vunpack.c.l.b16 %v4416
      %v4461 = vpack.c.b16 %v4446, %v4445
      %v4462 = vpack.c.b16 %v4448, %v4447
      %v4463 = vpack.c.b16 %v4450, %v4449
      %v4464 = vpack.c.b16 %v4452, %v4451
      %v4465 = vpack.c.b16 %v4454, %v4453
      %v4466 = vpack.c.b16 %v4456, %v4455
      %v4467 = vpack.c.b16 %v4458, %v4457
      %v4468 = vpack.c.b16 %v4460, %v4459
      %4477 = vmatprep.subr.bf16.mxu0 0
      %4478 = vmatpush1.bf16.msra.mxu0 %v4461
      %4479 = vmatprep.subr.bf16.mxu0 0
      %4480 = vmatpush1.bf16.msra.mxu0 %v4462
      %4481 = vmatprep.subr.bf16.mxu0 0
      %4482 = vmatpush1.bf16.msra.mxu0 %v4463
      %4483 = vmatprep.subr.bf16.mxu0 0
      %4484 = vmatpush1.bf16.msra.mxu0 %v4464
      %4485 = vmatprep.subr.bf16.mxu0 0
      %4486 = vmatpush1.bf16.msra.mxu0 %v4465
      %4487 = vmatprep.subr.bf16.mxu0 0
      %4488 = vmatpush1.bf16.msra.mxu0 %v4466
      %4489 = vmatprep.subr.bf16.mxu0 0
      %4490 = vmatpush1.bf16.msra.mxu0 %v4467
      %4491 = vmatprep.subr.bf16.mxu0 0
      %4492 = vmatpush1.bf16.msra.mxu0 %v4468
      %4493 = vmatprep.subr.bf16.mxu0 0
      %4494 = vmatpush1.bf16.msra.mxu0 0
      %4495 = vmatprep.subr.bf16.mxu0 0
      %4496 = vmatpush1.bf16.msra.mxu0 0
      %4497 = vmatprep.subr.bf16.mxu0 0
      %4498 = vmatpush1.bf16.msra.mxu0 0
      %4499 = vmatprep.subr.bf16.mxu0 0
      %4500 = vmatpush1.bf16.msra.mxu0 0
      %4501 = vmatprep.subr.bf16.mxu0 0
      %4502 = vmatpush1.bf16.msra.mxu0 0
      %4503 = vmatprep.subr.bf16.mxu0 0
      %4504 = vmatpush1.bf16.msra.mxu0 0
      %4505 = vmatprep.subr.bf16.mxu0 0
      %4506 = vmatpush1.bf16.msra.mxu0 0
      %4507 = vmatprep.subr.bf16.mxu0 0
      %4508 = vmatpush1.bf16.msra.mxu0 0
      %4509 = vmatprep.mubr.bf16.mxu0 0
      %4510 = vmatmul.mubr.bf16.gmra.mrb[0].mxu0 %v4427
      %v4511 = vpop.f32.mrb[0].mxu0
      %v4512 = vadd.f32 0.0, %v4511
      %v4513 = vpop.f32.mrb[0].mxu0
      %v4514 = vpop.f32.mrb[0].mxu0
      %v4515 = vadd.f32 0.0, %v4514
      %v4516 = vpop.f32.mrb[0].mxu0
      %4517 = vdwg.mxu0
      %v4518 = vadd.f32 %v4393, %v4512
      %v4519 = vadd.f32 %v4394, %v4515
      %v4520 = vld [vmem:[#allocation2 + $0x8] sm:$0x7]
      %s4521 = scalar_lea.vmem %s7, 256
      %v4522 = vld [vmem:[%s4521] sm:$0xf]
      %v4523 = vld [vmem:[%s4521 + $0x4] sm:$0xf]
      %v4524 = vld [vmem:[%s4521 + $0x8] sm:$0xf]
      %v4525 = vld [vmem:[%s4521 + $0xc] sm:$0xf]
      %v4526 = vld [vmem:[%s4521 + $0x10] sm:$0xf]
      %v4527 = vld [vmem:[%s4521 + $0x14] sm:$0xf]
      %v4528 = vld [vmem:[%s4521 + $0x18] sm:$0xf]
      %v4529 = vld [vmem:[%s4521 + $0x1c] sm:$0xf]
      %v4530 = vld [vmem:[%s4521 + $0x20] sm:$0xf]
      %v4531 = vld [vmem:[%s4521 + $0x24] sm:$0xf]
      %v4532 = vld [vmem:[%s4521 + $0x28] sm:$0xf]
      %v4533 = vld [vmem:[%s4521 + $0x2c] sm:$0xf]
      %v4534 = vld [vmem:[%s4521 + $0x30] sm:$0xf]
      %v4535 = vld [vmem:[%s4521 + $0x34] sm:$0xf]
      %v4536 = vld [vmem:[%s4521 + $0x38] sm:$0xf]
      %v4537 = vld [vmem:[%s4521 + $0x3c] sm:$0xf]
      %v4540 = vunpack.c.l.b16 %v4395
      %v4541 = vunpack.c.l.b16 %v4520
      %v4542 = vpack.c.b16 %v4070, %v4540
      %v4543 = vpack.c.b16 %v4541, %v4541
      %v4545 = vshrl.u32 %v4542, 16
      %v4547 = vrot.slane %v4545, 2
      %v4548 = vshll.u32 %v4542, 16
      %v4550 = vrot.slane %v4548, 3
      %v4551 = vor.u32 %v4547, %v4550
      %v4553 = vshrl.u32 %v4543, 16
      %v4555 = vrot.slane %v4553, 2
      %v4556 = vshll.u32 %v4543, 16
      %v4558 = vrot.slane %v4556, 3
      %v4559 = vor.u32 %v4555, %v4558
      %v4560 = vsel %vm1027, %v4551, %v4559
      %v4578 = vunpack.c.l.b16 %v4522
      %v4579 = vunpack.c.l.b16 %v4523
      %v4580 = vunpack.c.l.b16 %v4524
      %v4581 = vunpack.c.l.b16 %v4525
      %v4582 = vunpack.c.l.b16 %v4526
      %v4583 = vunpack.c.l.b16 %v4527
      %v4584 = vunpack.c.l.b16 %v4528
      %v4585 = vunpack.c.l.b16 %v4529
      %v4586 = vunpack.c.l.b16 %v4530
      %v4587 = vunpack.c.l.b16 %v4531
      %v4588 = vunpack.c.l.b16 %v4532
      %v4589 = vunpack.c.l.b16 %v4533
      %v4590 = vunpack.c.l.b16 %v4534
      %v4591 = vunpack.c.l.b16 %v4535
      %v4592 = vunpack.c.l.b16 %v4536
      %v4593 = vunpack.c.l.b16 %v4537
      %v4594 = vpack.c.b16 %v4579, %v4578
      %v4595 = vpack.c.b16 %v4581, %v4580
      %v4596 = vpack.c.b16 %v4583, %v4582
      %v4597 = vpack.c.b16 %v4585, %v4584
      %v4598 = vpack.c.b16 %v4587, %v4586
      %v4599 = vpack.c.b16 %v4589, %v4588
      %v4600 = vpack.c.b16 %v4591, %v4590
      %v4601 = vpack.c.b16 %v4593, %v4592
      %4610 = vmatprep.subr.bf16.mxu0 0
      %4611 = vmatpush1.bf16.msra.mxu0 %v4594
      %4612 = vmatprep.subr.bf16.mxu0 0
      %4613 = vmatpush1.bf16.msra.mxu0 %v4595
      %4614 = vmatprep.subr.bf16.mxu0 0
      %4615 = vmatpush1.bf16.msra.mxu0 %v4596
      %4616 = vmatprep.subr.bf16.mxu0 0
      %4617 = vmatpush1.bf16.msra.mxu0 %v4597
      %4618 = vmatprep.subr.bf16.mxu0 0
      %4619 = vmatpush1.bf16.msra.mxu0 %v4598
      %4620 = vmatprep.subr.bf16.mxu0 0
      %4621 = vmatpush1.bf16.msra.mxu0 %v4599
      %4622 = vmatprep.subr.bf16.mxu0 0
      %4623 = vmatpush1.bf16.msra.mxu0 %v4600
      %4624 = vmatprep.subr.bf16.mxu0 0
      %4625 = vmatpush1.bf16.msra.mxu0 %v4601
      %4626 = vmatprep.subr.bf16.mxu0 0
      %4627 = vmatpush1.bf16.msra.mxu0 0
      %4628 = vmatprep.subr.bf16.mxu0 0
      %4629 = vmatpush1.bf16.msra.mxu0 0
      %4630 = vmatprep.subr.bf16.mxu0 0
      %4631 = vmatpush1.bf16.msra.mxu0 0
      %4632 = vmatprep.subr.bf16.mxu0 0
      %4633 = vmatpush1.bf16.msra.mxu0 0
      %4634 = vmatprep.subr.bf16.mxu0 0
      %4635 = vmatpush1.bf16.msra.mxu0 0
      %4636 = vmatprep.subr.bf16.mxu0 0
      %4637 = vmatpush1.bf16.msra.mxu0 0
      %4638 = vmatprep.subr.bf16.mxu0 0
      %4639 = vmatpush1.bf16.msra.mxu0 0
      %4640 = vmatprep.subr.bf16.mxu0 0
      %4641 = vmatpush1.bf16.msra.mxu0 0
      %4642 = vmatprep.mubr.bf16.mxu0 0
      %4643 = vmatmul.mubr.bf16.gmra.mrb[0].mxu0 %v4560
      %v4644 = vpop.f32.mrb[0].mxu0
      %v4645 = vadd.f32 0.0, %v4644
      %v4646 = vpop.f32.mrb[0].mxu0
      %v4647 = vpop.f32.mrb[0].mxu0
      %v4648 = vadd.f32 0.0, %v4647
      %v4649 = vpop.f32.mrb[0].mxu0
      %4650 = vdwg.mxu0
      %v4651 = vadd.f32 %v4518, %v4645
      %v4652 = vadd.f32 %v4519, %v4648
      %v4653 = vld [vmem:[#allocation2] sm:$0x8]
      %v4654 = vsel %vm1145, %v4653, 0
      %v4655 = vsel %vm1146, %v4029, 0
      %v4656 = vsel %vm1147, %v4520, 0
      %s4657 = scalar_lea.vmem %s7, 320
      %v4658 = vld [vmem:[%s4657] sm:$0xf]
      %v4659 = vld [vmem:[%s4657 + $0x4] sm:$0xf]
      %v4660 = vld [vmem:[%s4657 + $0x8] sm:$0xf]
      %v4661 = vld [vmem:[%s4657 + $0xc] sm:$0xf]
      %v4662 = vld [vmem:[%s4657 + $0x10] sm:$0xf]
      %v4663 = vld [vmem:[%s4657 + $0x14] sm:$0xf]
      %v4664 = vld [vmem:[%s4657 + $0x18] sm:$0xf]
      %v4665 = vld [vmem:[%s4657 + $0x1c] sm:$0xf]
      %v4666 = vld [vmem:[%s4657 + $0x20] sm:$0xf]
      %v4667 = vld [vmem:[%s4657 + $0x24] sm:$0xf]
      %v4668 = vld [vmem:[%s4657 + $0x28] sm:$0xf]
      %v4669 = vld [vmem:[%s4657 + $0x2c] sm:$0xf]
      %v4670 = vld [vmem:[%s4657 + $0x30] sm:$0xf]
      %v4671 = vld [vmem:[%s4657 + $0x34] sm:$0xf]
      %v4672 = vld [vmem:[%s4657 + $0x38] sm:$0xf]
      %v4673 = vld [vmem:[%s4657 + $0x3c] sm:$0xf]
      %v4677 = vunpack.c.l.b16 %v4654
      %v4678 = vunpack.c.l.b16 %v4655
      %v4679 = vunpack.c.l.b16 %v4656
      %v4680 = vpack.c.b16 %v4678, %v4677
      %v4681 = vpack.c.b16 %v4679, %v4679
      %v4682 = vrot.slane %v4680, 3
      %v4683 = vrot.slane %v4681, 3
      %v4684 = vsel %vm1176, %v4682, %v4683
      %v4702 = vunpack.c.l.b16 %v4658
      %v4703 = vunpack.c.l.b16 %v4659
      %v4704 = vunpack.c.l.b16 %v4660
      %v4705 = vunpack.c.l.b16 %v4661
      %v4706 = vunpack.c.l.b16 %v4662
      %v4707 = vunpack.c.l.b16 %v4663
      %v4708 = vunpack.c.l.b16 %v4664
      %v4709 = vunpack.c.l.b16 %v4665
      %v4710 = vunpack.c.l.b16 %v4666
      %v4711 = vunpack.c.l.b16 %v4667
      %v4712 = vunpack.c.l.b16 %v4668
      %v4713 = vunpack.c.l.b16 %v4669
      %v4714 = vunpack.c.l.b16 %v4670
      %v4715 = vunpack.c.l.b16 %v4671
      %v4716 = vunpack.c.l.b16 %v4672
      %v4717 = vunpack.c.l.b16 %v4673
      %v4718 = vpack.c.b16 %v4703, %v4702
      %v4719 = vpack.c.b16 %v4705, %v4704
      %v4720 = vpack.c.b16 %v4707, %v4706
      %v4721 = vpack.c.b16 %v4709, %v4708
      %v4722 = vpack.c.b16 %v4711, %v4710
      %v4723 = vpack.c.b16 %v4713, %v4712
      %v4724 = vpack.c.b16 %v4715, %v4714
      %v4725 = vpack.c.b16 %v4717, %v4716
      %4734 = vmatprep.subr.bf16.mxu0 0
      %4735 = vmatpush1.bf16.msra.mxu0 %v4718
      %4736 = vmatprep.subr.bf16.mxu0 0
      %4737 = vmatpush1.bf16.msra.mxu0 %v4719
      %4738 = vmatprep.subr.bf16.mxu0 0
      %4739 = vmatpush1.bf16.msra.mxu0 %v4720
      %4740 = vmatprep.subr.bf16.mxu0 0
      %4741 = vmatpush1.bf16.msra.mxu0 %v4721
      %4742 = vmatprep.subr.bf16.mxu0 0
      %4743 = vmatpush1.bf16.msra.mxu0 %v4722
      %4744 = vmatprep.subr.bf16.mxu0 0
      %4745 = vmatpush1.bf16.msra.mxu0 %v4723
      %4746 = vmatprep.subr.bf16.mxu0 0
      %4747 = vmatpush1.bf16.msra.mxu0 %v4724
      %4748 = vmatprep.subr.bf16.mxu0 0
      %4749 = vmatpush1.bf16.msra.mxu0 %v4725
      %4750 = vmatprep.subr.bf16.mxu0 0
      %4751 = vmatpush1.bf16.msra.mxu0 0
      %4752 = vmatprep.subr.bf16.mxu0 0
      %4753 = vmatpush1.bf16.msra.mxu0 0
      %4754 = vmatprep.subr.bf16.mxu0 0
      %4755 = vmatpush1.bf16.msra.mxu0 0
      %4756 = vmatprep.subr.bf16.mxu0 0
      %4757 = vmatpush1.bf16.msra.mxu0 0
      %4758 = vmatprep.subr.bf16.mxu0 0
      %4759 = vmatpush1.bf16.msra.mxu0 0
      %4760 = vmatprep.subr.bf16.mxu0 0
      %4761 = vmatpush1.bf16.msra.mxu0 0
      %4762 = vmatprep.subr.bf16.mxu0 0
      %4763 = vmatpush1.bf16.msra.mxu0 0
      %4764 = vmatprep.subr.bf16.mxu0 0
      %4765 = vmatpush1.bf16.msra.mxu0 0
      %4766 = vmatprep.mubr.bf16.mxu0 0
      %4767 = vmatmul.mubr.bf16.gmra.mrb[0].mxu0 %v4684
      %v4768 = vpop.f32.mrb[0].mxu0
      %v4769 = vadd.f32 0.0, %v4768
      %v4770 = vpop.f32.mrb[0].mxu0
      %v4771 = vpop.f32.mrb[0].mxu0
      %v4772 = vadd.f32 0.0, %v4771
      %v4773 = vpop.f32.mrb[0].mxu0
      %4774 = vdwg.mxu0
      %v4775 = vadd.f32 %v4651, %v4769
      %v4776 = vadd.f32 %v4652, %v4772
      %v4777 = vld [vmem:[#allocation2 + $0x8] sm:$0xf]
      %v4778 = vsel %vm476, %v4029, 0
      %v4779 = vsel %vm477, %v4777, 0
      %s4780 = scalar_lea.vmem %s7, 384
      %v4781 = vld [vmem:[%s4780] sm:$0xf]
      %v4782 = vld [vmem:[%s4780 + $0x4] sm:$0xf]
      %v4783 = vld [vmem:[%s4780 + $0x8] sm:$0xf]
      %v4784 = vld [vmem:[%s4780 + $0xc] sm:$0xf]
      %v4785 = vld [vmem:[%s4780 + $0x10] sm:$0xf]
      %v4786 = vld [vmem:[%s4780 + $0x14] sm:$0xf]
      %v4787 = vld [vmem:[%s4780 + $0x18] sm:$0xf]
      %v4788 = vld [vmem:[%s4780 + $0x1c] sm:$0xf]
      %v4789 = vld [vmem:[%s4780 + $0x20] sm:$0xf]
      %v4790 = vld [vmem:[%s4780 + $0x24] sm:$0xf]
      %v4791 = vld [vmem:[%s4780 + $0x28] sm:$0xf]
      %v4792 = vld [vmem:[%s4780 + $0x2c] sm:$0xf]
      %v4793 = vld [vmem:[%s4780 + $0x30] sm:$0xf]
      %v4794 = vld [vmem:[%s4780 + $0x34] sm:$0xf]
      %v4795 = vld [vmem:[%s4780 + $0x38] sm:$0xf]
      %v4796 = vld [vmem:[%s4780 + $0x3c] sm:$0xf]
      %v4799 = vunpack.c.l.b16 %v4778
      %v4800 = vunpack.c.l.b16 %v4779
      %v4801 = vpack.c.b16 %v4800, %v4799
      %v4819 = vunpack.c.l.b16 %v4781
      %v4820 = vunpack.c.l.b16 %v4782
      %v4821 = vunpack.c.l.b16 %v4783
      %v4822 = vunpack.c.l.b16 %v4784
      %v4823 = vunpack.c.l.b16 %v4785
      %v4824 = vunpack.c.l.b16 %v4786
      %v4825 = vunpack.c.l.b16 %v4787
      %v4826 = vunpack.c.l.b16 %v4788
      %v4827 = vunpack.c.l.b16 %v4789
      %v4828 = vunpack.c.l.b16 %v4790
      %v4829 = vunpack.c.l.b16 %v4791
      %v4830 = vunpack.c.l.b16 %v4792
      %v4831 = vunpack.c.l.b16 %v4793
      %v4832 = vunpack.c.l.b16 %v4794
      %v4833 = vunpack.c.l.b16 %v4795
      %v4834 = vunpack.c.l.b16 %v4796
      %v4835 = vpack.c.b16 %v4820, %v4819
      %v4836 = vpack.c.b16 %v4822, %v4821
      %v4837 = vpack.c.b16 %v4824, %v4823
      %v4838 = vpack.c.b16 %v4826, %v4825
      %v4839 = vpack.c.b16 %v4828, %v4827
      %v4840 = vpack.c.b16 %v4830, %v4829
      %v4841 = vpack.c.b16 %v4832, %v4831
      %v4842 = vpack.c.b16 %v4834, %v4833
      %4851 = vmatprep.subr.bf16.mxu0 0
      %4852 = vmatpush1.bf16.msra.mxu0 %v4835
      %4853 = vmatprep.subr.bf16.mxu0 0
      %4854 = vmatpush1.bf16.msra.mxu0 %v4836
      %4855 = vmatprep.subr.bf16.mxu0 0
      %4856 = vmatpush1.bf16.msra.mxu0 %v4837
      %4857 = vmatprep.subr.bf16.mxu0 0
      %4858 = vmatpush1.bf16.msra.mxu0 %v4838
      %4859 = vmatprep.subr.bf16.mxu0 0
      %4860 = vmatpush1.bf16.msra.mxu0 %v4839
      %4861 = vmatprep.subr.bf16.mxu0 0
      %4862 = vmatpush1.bf16.msra.mxu0 %v4840
      %4863 = vmatprep.subr.bf16.mxu0 0
      %4864 = vmatpush1.bf16.msra.mxu0 %v4841
      %4865 = vmatprep.subr.bf16.mxu0 0
      %4866 = vmatpush1.bf16.msra.mxu0 %v4842
      %4867 = vmatprep.subr.bf16.mxu0 0
      %4868 = vmatpush1.bf16.msra.mxu0 0
      %4869 = vmatprep.subr.bf16.mxu0 0
      %4870 = vmatpush1.bf16.msra.mxu0 0
      %4871 = vmatprep.subr.bf16.mxu0 0
      %4872 = vmatpush1.bf16.msra.mxu0 0
      %4873 = vmatprep.subr.bf16.mxu0 0
      %4874 = vmatpush1.bf16.msra.mxu0 0
      %4875 = vmatprep.subr.bf16.mxu0 0
      %4876 = vmatpush1.bf16.msra.mxu0 0
      %4877 = vmatprep.subr.bf16.mxu0 0
      %4878 = vmatpush1.bf16.msra.mxu0 0
      %4879 = vmatprep.subr.bf16.mxu0 0
      %4880 = vmatpush1.bf16.msra.mxu0 0
      %4881 = vmatprep.subr.bf16.mxu0 0
      %4882 = vmatpush1.bf16.msra.mxu0 0
      %4883 = vmatprep.mubr.bf16.mxu0 0
      %4884 = vmatmul.mubr.bf16.gmra.mrb[0].mxu0 %v4801
      %v4885 = vpop.f32.mrb[0].mxu0
      %v4886 = vadd.f32 0.0, %v4885
      %v4887 = vpop.f32.mrb[0].mxu0
      %v4888 = vpop.f32.mrb[0].mxu0
      %v4889 = vadd.f32 0.0, %v4888
      %v4890 = vpop.f32.mrb[0].mxu0
      %4891 = vdwg.mxu0
      %v4892 = vadd.f32 %v4775, %v4886
      %v4893 = vadd.f32 %v4776, %v4889
      %v4894 = vld [vmem:[#allocation2 + $0x4] sm:$0xf]
      %v4895 = vld [vmem:[#allocation2 + $0x8] sm:$0xf]
      %v4896 = vld [vmem:[#allocation2 + $0xc] sm:$0x1]
      %s4897 = scalar_lea.vmem %s7, 448
      %v4898 = vld [vmem:[%s4897] sm:$0xf]
      %v4899 = vld [vmem:[%s4897 + $0x4] sm:$0xf]
      %v4900 = vld [vmem:[%s4897 + $0x8] sm:$0xf]
      %v4901 = vld [vmem:[%s4897 + $0xc] sm:$0xf]
      %v4902 = vld [vmem:[%s4897 + $0x10] sm:$0xf]
      %v4903 = vld [vmem:[%s4897 + $0x14] sm:$0xf]
      %v4904 = vld [vmem:[%s4897 + $0x18] sm:$0xf]
      %v4905 = vld [vmem:[%s4897 + $0x1c] sm:$0xf]
      %v4906 = vld [vmem:[%s4897 + $0x20] sm:$0xf]
      %v4907 = vld [vmem:[%s4897 + $0x24] sm:$0xf]
      %v4908 = vld [vmem:[%s4897 + $0x28] sm:$0xf]
      %v4909 = vld [vmem:[%s4897 + $0x2c] sm:$0xf]
      %v4910 = vld [vmem:[%s4897 + $0x30] sm:$0xf]
      %v4911 = vld [vmem:[%s4897 + $0x34] sm:$0xf]
      %v4912 = vld [vmem:[%s4897 + $0x38] sm:$0xf]
      %v4913 = vld [vmem:[%s4897 + $0x3c] sm:$0xf]
      %v4917 = vunpack.c.l.b16 %v4894
      %v4918 = vunpack.c.l.b16 %v4895
      %v4919 = vunpack.c.l.b16 %v4896
      %v4920 = vpack.c.b16 %v4918, %v4917
      %v4921 = vpack.c.b16 %v4919, %v4919
      %v4923 = vshrl.u32 %v4920, 16
      %v4925 = vshll.u32 %v4920, 16
      %v4927 = vrot.slane %v4925, 1
      %v4928 = vor.u32 %v4923, %v4927
      %v4930 = vshll.u32 %v4921, 16
      %v4932 = vrot.slane %v4930, 1
      %v4933 = vsel %vm522, %v4928, %v4932
      %v4951 = vunpack.c.l.b16 %v4898
      %v4952 = vunpack.c.l.b16 %v4899
      %v4953 = vunpack.c.l.b16 %v4900
      %v4954 = vunpack.c.l.b16 %v4901
      %v4955 = vunpack.c.l.b16 %v4902
      %v4956 = vunpack.c.l.b16 %v4903
      %v4957 = vunpack.c.l.b16 %v4904
      %v4958 = vunpack.c.l.b16 %v4905
      %v4959 = vunpack.c.l.b16 %v4906
      %v4960 = vunpack.c.l.b16 %v4907
      %v4961 = vunpack.c.l.b16 %v4908
      %v4962 = vunpack.c.l.b16 %v4909
      %v4963 = vunpack.c.l.b16 %v4910
      %v4964 = vunpack.c.l.b16 %v4911
      %v4965 = vunpack.c.l.b16 %v4912
      %v4966 = vunpack.c.l.b16 %v4913
      %v4967 = vpack.c.b16 %v4952, %v4951
      %v4968 = vpack.c.b16 %v4954, %v4953
      %v4969 = vpack.c.b16 %v4956, %v4955
      %v4970 = vpack.c.b16 %v4958, %v4957
      %v4971 = vpack.c.b16 %v4960, %v4959
      %v4972 = vpack.c.b16 %v4962, %v4961
      %v4973 = vpack.c.b16 %v4964, %v4963
      %v4974 = vpack.c.b16 %v4966, %v4965
      %4983 = vmatprep.subr.bf16.mxu0 0
      %4984 = vmatpush1.bf16.msra.mxu0 %v4967
      %4985 = vmatprep.subr.bf16.mxu0 0
      %4986 = vmatpush1.bf16.msra.mxu0 %v4968
      %4987 = vmatprep.subr.bf16.mxu0 0
      %4988 = vmatpush1.bf16.msra.mxu0 %v4969
      %4989 = vmatprep.subr.bf16.mxu0 0
      %4990 = vmatpush1.bf16.msra.mxu0 %v4970
      %4991 = vmatprep.subr.bf16.mxu0 0
      %4992 = vmatpush1.bf16.msra.mxu0 %v4971
      %4993 = vmatprep.subr.bf16.mxu0 0
      %4994 = vmatpush1.bf16.msra.mxu0 %v4972
      %4995 = vmatprep.subr.bf16.mxu0 0
      %4996 = vmatpush1.bf16.msra.mxu0 %v4973
      %4997 = vmatprep.subr.bf16.mxu0 0
      %4998 = vmatpush1.bf16.msra.mxu0 %v4974
      %4999 = vmatprep.subr.bf16.mxu0 0
      %5000 = vmatpush1.bf16.msra.mxu0 0
      %5001 = vmatprep.subr.bf16.mxu0 0
      %5002 = vmatpush1.bf16.msra.mxu0 0
      %5003 = vmatprep.subr.bf16.mxu0 0
      %5004 = vmatpush1.bf16.msra.mxu0 0
      %5005 = vmatprep.subr.bf16.mxu0 0
      %5006 = vmatpush1.bf16.msra.mxu0 0
      %5007 = vmatprep.subr.bf16.mxu0 0
      %5008 = vmatpush1.bf16.msra.mxu0 0
      %5009 = vmatprep.subr.bf16.mxu0 0
      %5010 = vmatpush1.bf16.msra.mxu0 0
      %5011 = vmatprep.subr.bf16.mxu0 0
      %5012 = vmatpush1.bf16.msra.mxu0 0
      %5013 = vmatprep.subr.bf16.mxu0 0
      %5014 = vmatpush1.bf16.msra.mxu0 0
      %5015 = vmatprep.mubr.bf16.mxu0 0
      %5016 = vmatmul.mubr.bf16.gmra.mrb[0].mxu0 %v4933
      %v5017 = vpop.f32.mrb[0].mxu0
      %v5018 = vadd.f32 0.0, %v5017
      %v5019 = vpop.f32.mrb[0].mxu0
      %v5020 = vpop.f32.mrb[0].mxu0
      %v5021 = vadd.f32 0.0, %v5020
      %v5022 = vpop.f32.mrb[0].mxu0
      %5023 = vdwg.mxu0
      %v5024 = vadd.f32 %v4892, %v5018
      %v5025 = vadd.f32 %v4893, %v5021
      %v5026 = vld [vmem:[#allocation2 + $0x4] sm:$0xe]
      %v5027 = vsel %vm737, %v5026, 0
      %v5028 = vsel %vm738, %v4895, 0
      %v5029 = vsel %vm739, %v4896, 0
      %s5030 = scalar_lea.vmem %s7, 512
      %v5031 = vld [vmem:[%s5030] sm:$0xf]
      %v5032 = vld [vmem:[%s5030 + $0x4] sm:$0xf]
      %v5033 = vld [vmem:[%s5030 + $0x8] sm:$0xf]
      %v5034 = vld [vmem:[%s5030 + $0xc] sm:$0xf]
      %v5035 = vld [vmem:[%s5030 + $0x10] sm:$0xf]
      %v5036 = vld [vmem:[%s5030 + $0x14] sm:$0xf]
      %v5037 = vld [vmem:[%s5030 + $0x18] sm:$0xf]
      %v5038 = vld [vmem:[%s5030 + $0x1c] sm:$0xf]
      %v5039 = vld [vmem:[%s5030 + $0x20] sm:$0xf]
      %v5040 = vld [vmem:[%s5030 + $0x24] sm:$0xf]
      %v5041 = vld [vmem:[%s5030 + $0x28] sm:$0xf]
      %v5042 = vld [vmem:[%s5030 + $0x2c] sm:$0xf]
      %v5043 = vld [vmem:[%s5030 + $0x30] sm:$0xf]
      %v5044 = vld [vmem:[%s5030 + $0x34] sm:$0xf]
      %v5045 = vld [vmem:[%s5030 + $0x38] sm:$0xf]
      %v5046 = vld [vmem:[%s5030 + $0x3c] sm:$0xf]
      %v5050 = vunpack.c.l.b16 %v5027
      %v5051 = vunpack.c.l.b16 %v5028
      %v5052 = vunpack.c.l.b16 %v5029
      %v5053 = vpack.c.b16 %v5051, %v5050
      %v5054 = vpack.c.b16 %v5052, %v5052
      %v5055 = vrot.slane %v5053, 1
      %v5056 = vrot.slane %v5054, 1
      %v5057 = vsel %vm768, %v5055, %v5056
      %v5075 = vunpack.c.l.b16 %v5031
      %v5076 = vunpack.c.l.b16 %v5032
      %v5077 = vunpack.c.l.b16 %v5033
      %v5078 = vunpack.c.l.b16 %v5034
      %v5079 = vunpack.c.l.b16 %v5035
      %v5080 = vunpack.c.l.b16 %v5036
      %v5081 = vunpack.c.l.b16 %v5037
      %v5082 = vunpack.c.l.b16 %v5038
      %v5083 = vunpack.c.l.b16 %v5039
      %v5084 = vunpack.c.l.b16 %v5040
      %v5085 = vunpack.c.l.b16 %v5041
      %v5086 = vunpack.c.l.b16 %v5042
      %v5087 = vunpack.c.l.b16 %v5043
      %v5088 = vunpack.c.l.b16 %v5044
      %v5089 = vunpack.c.l.b16 %v5045
      %v5090 = vunpack.c.l.b16 %v5046
      %v5091 = vpack.c.b16 %v5076, %v5075
      %v5092 = vpack.c.b16 %v5078, %v5077
      %v5093 = vpack.c.b16 %v5080, %v5079
      %v5094 = vpack.c.b16 %v5082, %v5081
      %v5095 = vpack.c.b16 %v5084, %v5083
      %v5096 = vpack.c.b16 %v5086, %v5085
      %v5097 = vpack.c.b16 %v5088, %v5087
      %v5098 = vpack.c.b16 %v5090, %v5089
      %5107 = vmatprep.subr.bf16.mxu0 0
      %5108 = vmatpush1.bf16.msra.mxu0 %v5091
      %5109 = vmatprep.subr.bf16.mxu0 0
      %5110 = vmatpush1.bf16.msra.mxu0 %v5092
      %5111 = vmatprep.subr.bf16.mxu0 0
      %5112 = vmatpush1.bf16.msra.mxu0 %v5093
      %5113 = vmatprep.subr.bf16.mxu0 0
      %5114 = vmatpush1.bf16.msra.mxu0 %v5094
      %5115 = vmatprep.subr.bf16.mxu0 0
      %5116 = vmatpush1.bf16.msra.mxu0 %v5095
      %5117 = vmatprep.subr.bf16.mxu0 0
      %5118 = vmatpush1.bf16.msra.mxu0 %v5096
      %5119 = vmatprep.subr.bf16.mxu0 0
      %5120 = vmatpush1.bf16.msra.mxu0 %v5097
      %5121 = vmatprep.subr.bf16.mxu0 0
      %5122 = vmatpush1.bf16.msra.mxu0 %v5098
      %5123 = vmatprep.subr.bf16.mxu0 0
      %5124 = vmatpush1.bf16.msra.mxu0 0
      %5125 = vmatprep.subr.bf16.mxu0 0
      %5126 = vmatpush1.bf16.msra.mxu0 0
      %5127 = vmatprep.subr.bf16.mxu0 0
      %5128 = vmatpush1.bf16.msra.mxu0 0
      %5129 = vmatprep.subr.bf16.mxu0 0
      %5130 = vmatpush1.bf16.msra.mxu0 0
      %5131 = vmatprep.subr.bf16.mxu0 0
      %5132 = vmatpush1.bf16.msra.mxu0 0
      %5133 = vmatprep.subr.bf16.mxu0 0
      %5134 = vmatpush1.bf16.msra.mxu0 0
      %5135 = vmatprep.subr.bf16.mxu0 0
      %5136 = vmatpush1.bf16.msra.mxu0 0
      %5137 = vmatprep.subr.bf16.mxu0 0
      %5138 = vmatpush1.bf16.msra.mxu0 0
      %5139 = vmatprep.mubr.bf16.mxu0 0
      %5140 = vmatmul.mubr.bf16.gmra.mrb[0].mxu0 %v5057
      %v5141 = vpop.f32.mrb[0].mxu0
      %v5142 = vadd.f32 0.0, %v5141
      %v5143 = vpop.f32.mrb[0].mxu0
      %v5144 = vpop.f32.mrb[0].mxu0
      %v5145 = vadd.f32 0.0, %v5144
      %v5146 = vpop.f32.mrb[0].mxu0
      %5147 = vdwg.mxu0
      %v5148 = vadd.f32 %v5024, %v5142
      %v5149 = vadd.f32 %v5025, %v5145
      %v5150 = vld [vmem:[%s8] sm:$0x1]
      %v5152 = vlaneseq
      %v5153 = vshrl.u32 %v5152, 7
      %v5154 = vsub.s32 0, %v5153
      %v5155 = vrot.slane %v5150, %v5154
      %v5157 = vadd.f32 %v5148, %v5155
      %v5158 = vadd.f32 %v5149, %v5155
      %v5159 = vmax.f32 %v5157, 0.0
      %v5160 = vmax.f32 %v5158, 0.0
      %v5161 = vunpack.c.l.bf16 %v2827
      %v5162 = vunpack.c.h.bf16 %v2827
      %v5163 = vadd.f32 %v5159, %v5161
      %v5164 = vadd.f32 %v5160, %v5162
      %v5165 = vpack.c.bf16 %v5164, %v5163
      %v5166 = vld [vmem:[%s9] sm:$0xf]
      %v5167 = vld [vmem:[%s9 + $0x4] sm:$0xf]
      %v5168 = vld [vmem:[%s9 + $0x8] sm:$0xf]
      %v5169 = vld [vmem:[%s9 + $0xc] sm:$0xf]
      %v5170 = vld [vmem:[%s9 + $0x10] sm:$0xf]
      %v5171 = vld [vmem:[%s9 + $0x14] sm:$0xf]
      %v5172 = vld [vmem:[%s9 + $0x18] sm:$0xf]
      %v5173 = vld [vmem:[%s9 + $0x1c] sm:$0xf]
      %v5174 = vld [vmem:[%s9 + $0x20] sm:$0xf]
      %v5175 = vld [vmem:[%s9 + $0x24] sm:$0xf]
      %v5176 = vld [vmem:[%s9 + $0x28] sm:$0xf]
      %v5177 = vld [vmem:[%s9 + $0x2c] sm:$0xf]
      %v5178 = vld [vmem:[%s9 + $0x30] sm:$0xf]
      %v5179 = vld [vmem:[%s9 + $0x34] sm:$0xf]
      %v5180 = vld [vmem:[%s9 + $0x38] sm:$0xf]
      %v5181 = vld [vmem:[%s9 + $0x3c] sm:$0xf]
      %v5182 = vld [vmem:[%s10] sm:$0x1]
      %v5184 = vlaneseq
      %v5185 = vshrl.u32 %v5184, 7
      %v5186 = vsub.s32 0, %v5185
      %v5187 = vrot.slane %v5182, %v5186
      %v5205 = vunpack.c.l.b16 %v5166
      %v5206 = vunpack.c.l.b16 %v5167
      %v5207 = vunpack.c.l.b16 %v5168
      %v5208 = vunpack.c.l.b16 %v5169
      %v5209 = vunpack.c.l.b16 %v5170
      %v5210 = vunpack.c.l.b16 %v5171
      %v5211 = vunpack.c.l.b16 %v5172
      %v5212 = vunpack.c.l.b16 %v5173
      %v5213 = vunpack.c.l.b16 %v5174
      %v5214 = vunpack.c.l.b16 %v5175
      %v5215 = vunpack.c.l.b16 %v5176
      %v5216 = vunpack.c.l.b16 %v5177
      %v5217 = vunpack.c.l.b16 %v5178
      %v5218 = vunpack.c.l.b16 %v5179
      %v5219 = vunpack.c.l.b16 %v5180
      %v5220 = vunpack.c.l.b16 %v5181
      %v5221 = vpack.c.b16 %v5206, %v5205
      %v5222 = vpack.c.b16 %v5208, %v5207
      %v5223 = vpack.c.b16 %v5210, %v5209
      %v5224 = vpack.c.b16 %v5212, %v5211
      %v5225 = vpack.c.b16 %v5214, %v5213
      %v5226 = vpack.c.b16 %v5216, %v5215
      %v5227 = vpack.c.b16 %v5218, %v5217
      %v5228 = vpack.c.b16 %v5220, %v5219
      %5237 = vmatprep.subr.bf16.mxu0 0
      %5238 = vmatpush1.bf16.msra.mxu0 %v5221
      %5239 = vmatprep.subr.bf16.mxu0 0
      %5240 = vmatpush1.bf16.msra.mxu0 %v5222
      %5241 = vmatprep.subr.bf16.mxu0 0
      %5242 = vmatpush1.bf16.msra.mxu0 %v5223
      %5243 = vmatprep.subr.bf16.mxu0 0
      %5244 = vmatpush1.bf16.msra.mxu0 %v5224
      %5245 = vmatprep.subr.bf16.mxu0 0
      %5246 = vmatpush1.bf16.msra.mxu0 %v5225
      %5247 = vmatprep.subr.bf16.mxu0 0
      %5248 = vmatpush1.bf16.msra.mxu0 %v5226
      %5249 = vmatprep.subr.bf16.mxu0 0
      %5250 = vmatpush1.bf16.msra.mxu0 %v5227
      %5251 = vmatprep.subr.bf16.mxu0 0
      %5252 = vmatpush1.bf16.msra.mxu0 %v5228
      %5253 = vmatprep.subr.bf16.mxu0 0
      %5254 = vmatpush1.bf16.msra.mxu0 0
      %5255 = vmatprep.subr.bf16.mxu0 0
      %5256 = vmatpush1.bf16.msra.mxu0 0
      %5257 = vmatprep.subr.bf16.mxu0 0
      %5258 = vmatpush1.bf16.msra.mxu0 0
      %5259 = vmatprep.subr.bf16.mxu0 0
      %5260 = vmatpush1.bf16.msra.mxu0 0
      %5261 = vmatprep.subr.bf16.mxu0 0
      %5262 = vmatpush1.bf16.msra.mxu0 0
      %5263 = vmatprep.subr.bf16.mxu0 0
      %5264 = vmatpush1.bf16.msra.mxu0 0
      %5265 = vmatprep.subr.bf16.mxu0 0
      %5266 = vmatpush1.bf16.msra.mxu0 0
      %5267 = vmatprep.subr.bf16.mxu0 0
      %5268 = vmatpush1.bf16.msra.mxu0 0
      %5269 = vmatprep.mubr.bf16.mxu0 0
      %5270 = vmatmul.mubr.bf16.gmra.mrb[0].mxu0 %v5165
      %v5271 = vpop.f32.mrb[0].mxu0
      %v5272 = vadd.f32 %v5187, %v5271
      %v5273 = vpop.f32.mrb[0].mxu0
      %v5274 = vpop.f32.mrb[0].mxu0
      %v5275 = vadd.f32 %v5187, %v5274
      %v5276 = vpop.f32.mrb[0].mxu0
      %5277 = vdwg.mxu0
      %5278 = vst [vmem:[%s388] sm:$0xff] %v5272
      %5279 = vst [vmem:[%s388 + $0x8] sm:$0xff] %v5275
      %s5280 = smul.u32 2, %s22
      %p5281 = scmp.lt.s32.totalorder %s5280, 3
      %s5282 = scalar_select %p5281, %s5280, 3
      %s5283 = smul.addr %s5282, 8
      %s5284 = scalar_lea.vmem %s11, %s5283
      // Predicated region
      $region65: #{cvae_encoder_forward.5} parent=63 // pred_check
        %p5285 = pneg %p276
      $region66: #{cvae_encoder_forward.5} parent=63 // pred_check_branch
        %5287 = sbr.rel (%p5285) target = $region68
      $region67: #{cvae_encoder_forward.5} parent=63 // pred_region
        %s5288 = smul.u32 2, %s22
      $region68: #{cvae_encoder_forward.5} parent=63 // pred_fallthru
        _
    $region64: #{cvae_encoder_forward.5} parent=5 // pred_fallthru
      _
    %p5289 = scmp.le.s32.totalorder 2, %s17
    // Predicated region
    $region69: #{cvae_encoder_forward.5} parent=5 // pred_check
      %p5290 = pneg %p5289
    $region70: #{cvae_encoder_forward.5} parent=5 // pred_check_branch
      %5292 = sbr.rel (%p5290) target = $region72
    $region71: #{cvae_encoder_forward.5} parent=5 // pred_region
      %s5293 = ssub.s32 %s17, 2
      // Predicated region
      $region73: #{cvae_encoder_forward.5} parent=71 // pred_check
        %p5294 = pneg %p282
      $region74: #{cvae_encoder_forward.5} parent=71 // pred_check_branch
        %5296 = sbr.rel (%p5294) target = $region76
      $region75: #{cvae_encoder_forward.5} parent=71 // pred_region
        %s5297 = smul.u32 2, %s23
        %p5298 = scmp.lt.s32.totalorder %s5297, 3
        %s5299 = scalar_select %p5298, %s5297, 3
        %s5300 = smul.addr %s5299, 8
        %s5301 = scalar_lea.vmem %s11, %s5300
      $region76: #{cvae_encoder_forward.5} parent=71 // pred_fallthru
        _
    $region72: #{cvae_encoder_forward.5} parent=5 // pred_fallthru
      _
  $region6: #{cvae_encoder_forward.5} parent=0 // loop_footer
    %s21 = sadd.s32 1, %s17
  $region7: #{cvae_encoder_forward.5} parent=0 // loop_footer_branch
    %16 = sbr.rel target = $region3
  $region8: #{cvae_encoder_forward.5} parent=0 // loop_exit
    _

</llo_original>
